<compile_context>
chip_gen: v7x
topology: tpu7x:2x2x1
jax: 0.10.0
libtpu: 0.0.40
codegen_flags: <defaults>
</compile_context>

<pallas_src>
import functools

import jax
import jax.numpy as jnp
from jax.experimental import pallas as pl
from jax.experimental.pallas import tpu as pltpu

RELU_ALPHA = 0.2
MAP2 = 16  # map_size=4 -> 4*4 projection cells


def _leaky_relu(x, alpha=RELU_ALPHA):
    return jnp.where(x > 0, x, alpha * x)


def _rup(x, m):
    return m * ((x + m - 1) // m)


# ---------------------------------------------------------------------------
# Pallas kernel: fused ProjWeightModule MLP + weight normalization +
# projection (VPU broadcast-FMA over NS) fused per projection cell with the
# (16,1) proj_conv as accumulated MXU matmuls, over a (batch, point-tile) grid.
# ---------------------------------------------------------------------------
def fgconv_kernel(gxyz_ref, gfeat_ref,
                  w1_ref, b1_ref, w2_ref, b2_ref, w3_ref, b3_ref,
                  wp_ref, bp_ref, out_ref, *, pblk):
    TNP, NS, C = gfeat_ref.shape
    OUT_P = out_ref.shape[-1]
    conv_dtype = wp_ref.dtype

    # --- ProjWeightModule pointwise MLP (BN folded): 3 -> 8 -> 16 -> 16 -----
    # Layer 1 as three VPU broadcast-FMAs (no K=3 MXU matmul, no 3->8 pad).
    gxyz = gxyz_ref[...]                                        # (TNP*NS, 3)
    h = (gxyz[:, 0:1] * w1_ref[0:1, :] +
         gxyz[:, 1:2] * w1_ref[1:2, :] +
         gxyz[:, 2:3] * w1_ref[2:3, :] + b1_ref[...])
    h = jnp.maximum(h, 0.0)
    h = jnp.maximum(
        jnp.dot(h, w2_ref[...], preferred_element_type=jnp.float32) + b2_ref[...], 0.0)
    pw = jnp.dot(h, w3_ref[...], preferred_element_type=jnp.float32) + b3_ref[...]
    pw = pw.reshape(TNP, NS, MAP2)          # NS % 8 == 0 -> no relayout copy

    # --- projection-weight normalization (torch dims 1 then 3): rsqrt*mul ---
    pw2 = pw * pw
    s1 = jnp.maximum(jnp.sum(pw2, axis=-1, keepdims=True), 1e-8)   # over MAP2
    pw = pw * jax.lax.rsqrt(s1)
    s2 = jnp.maximum(jnp.sum(pw2, axis=1, keepdims=True), 1e-8)    # over NS
    pw = pw * jnp.minimum(jax.lax.rsqrt(s2), 1.0)   # == / max(sqrt(s2), 1)

    # Single upcast of the bf16 feature tile (v5e has no bf16 VALU).
    gfeat = gfeat_ref[...].astype(jnp.float32)                  # (TNP, NS, C)

    # --- fused projection + proj_conv, blocked over points -------------------
    for p0 in range(0, TNP, pblk):
        psl = slice(p0, p0 + pblk)
        o = jnp.zeros((pblk, OUT_P), jnp.float32) + bp_ref[...]
        for g in range(MAP2):
            pf_g = jnp.zeros((pblk, C), jnp.float32)
            for n in range(NS):
                pf_g = pf_g + pw[psl, n, g:g + 1] * gfeat[psl, n, :]
            pf_g = _leaky_relu(pf_g)
            o = o + jnp.dot(pf_g.astype(conv_dtype), wp_ref[g],
                            preferred_element_type=jnp.float32)
        out_ref[psl, :] = _leaky_relu(o)


# ---------------------------------------------------------------------------
# Tiling / VMEM helpers
# ---------------------------------------------------------------------------
def _point_block(tnp, c, max_vregs=16):
    """Largest divisor of TNP whose (rows, C) f32 accumulator stays within
    ~max_vregs vregs across the unrolled NS loop (register resident)."""
    lanes = _rup(max(c, 1), 128)
    max_rows = max(8, (max_vregs * 8 * 128) // lanes)
    best = 1
    for d in range(1, tnp + 1):
        if tnp % d == 0 and d <= max_rows:
            best = d
    return best


def _vmem_cost_bytes(tnp, ns, c, out_p, feat_bytes, conv_bytes):
    lane = lambda n: _rup(max(n, 1), 128)
    sub = lambda n, b: _rup(max(n, 1), 32 // b)      # 8 rows f32 / 16 rows bf16
    rows = tnp * ns
    # double-buffered streamed tiles (lane/sublane-padded VMEM footprint)
    gxyz_t = sub(rows, 4) * lane(3) * 4
    gfeat_t = tnp * sub(ns, feat_bytes) * lane(c) * feat_bytes
    out_t = sub(tnp, 4) * lane(out_p) * 4
    stream = 2 * (gxyz_t + gfeat_t + out_t)
    # live in-kernel intermediates (lane padded)
    mlp = 3 * sub(rows, 4) * lane(16) * 4            # h / pw / pw2
    gfeat_f32 = tnp * sub(ns, 4) * lane(c) * 4       # f32 upcast of the feature tile
    o_acc = sub(tnp, 4) * lane(out_p) * 4
    # resident small weights (double-buffered by the pipeline)
    weights = 2 * ((sub(3, 4) * lane(8) + sub(8, 4) * lane(16)
                    + sub(16, 4) * lane(16) + 3 * lane(16)) * 4
                   + MAP2 * sub(c, conv_bytes) * lane(out_p) * conv_bytes
                   + lane(out_p) * 4)
    scratch = 2 << 20                                # Mosaic internal scratch headroom
    return stream + mlp + gfeat_f32 + o_acc + weights + scratch


def _vmem_caps():
    """(physical VMEM bytes, per-step budget) derived from the actual chip."""
    try:
        info = pltpu.get_tpu_info()
        cap = int(getattr(info, "vmem_capacity_bytes", 0)) or (128 << 20)
    except Exception:
        cap = 128 << 20                              # v5e/v6e default
    budget = min(int(cap * 0.6), 64 << 20)           # ~38 MiB on v7x, 64 MiB on v5e/v6e
    return cap, budget


def _pick_tnp(batch, np_, ns, c, out_p, feat_bytes, conv_bytes, budget):
    cands = sorted({t for t in range(1, np_ + 1)
                    if np_ % t == 0 and (t % 8 == 0 or t == np_)})
    fit = [t for t in cands
           if _vmem_cost_bytes(t, ns, c, out_p, feat_bytes, conv_bytes) <= budget]
    if not fit:
        print("fgconv: WARNING - smallest point tile exceeds the VMEM budget; expect spills")
        fit = [cands[0]]
    # keep >= 2 parallel grid steps so both v7x TensorCores get work
    good = [t for t in fit if batch * (np_ // t) >= 2]
    return max(good if good else fit)


# ---------------------------------------------------------------------------
# Wrapper
# ---------------------------------------------------------------------------
def fgconv_pallas(gxyz, gfeat, params, *, tnp=None,
                  feat_dtype=jnp.bfloat16, conv_dtype=jnp.bfloat16):
    """gxyz: (B, NP*NS, 3) local coords, gfeat: (B, NP, NS, C) grouped features.
    Returns (B, NP, out_channel) channels-last (transpose outside if the
    PyTorch (B, out_channel, NP) layout is needed)."""
    B, NPNS, _ = gxyz.shape
    _, NP, NS, C = gfeat.shape
    assert NPNS == NP * NS
    assert NS % 8 == 0, "nsample must be a multiple of 8 (keeps pw reshape tile-aligned)"
    w1, b1, w2, b2, w3, b3, wp3, bp = params        # wp3: (MAP2, C, OUT)
    OUT = wp3.shape[-1]

    # Lane-dense output only when it does not inflate HBM writes: small
    # out_channel keeps its true width (masked vst), otherwise pad to 128*k.
    OUT_P = OUT if (OUT <= 128 or OUT % 128 == 0) else 128 * pl.cdiv(OUT, 128)
    if OUT_P != OUT:
        wp3 = jnp.pad(wp3, ((0, 0), (0, 0), (0, OUT_P - OUT)))
        bp = jnp.pad(bp, (0, OUT_P - OUT))
    wp_c = wp3.astype(conv_dtype)
    bp_c = bp.reshape(1, OUT_P).astype(jnp.float32)
    gfeat = gfeat.astype(feat_dtype)                # halve the dominant HBM stream
    gxyz = gxyz.astype(jnp.float32)

    feat_bytes = jnp.dtype(feat_dtype).itemsize
    conv_bytes = jnp.dtype(conv_dtype).itemsize
    cap, budget = _vmem_caps()
    if tnp is None:
        tnp = _pick_tnp(B, NP, NS, C, OUT_P, feat_bytes, conv_bytes, budget)
    assert NP % tnp == 0, "tnp must divide npoint"
    cost = _vmem_cost_bytes(tnp, NS, C, OUT_P, feat_bytes, conv_bytes)
    vmem_limit = int(min(cap * 0.9, max(cost + (8 << 20), 32 << 20)))

    pblk = _point_block(tnp, C)
    kernel = functools.partial(fgconv_kernel, pblk=pblk)
    grid = (B, NP // tnp)

    out = pl.pallas_call(
        kernel,
        out_shape=jax.ShapeDtypeStruct((B, NP, OUT_P), jnp.float32),
        grid_spec=pltpu.PrefetchScalarGridSpec(
            num_scalar_prefetch=0,
            grid=grid,
            in_specs=[
                pl.BlockSpec((None, tnp * NS, 3), lambda b, t: (b, t, 0)),
                pl.BlockSpec((None, tnp, NS, C), lambda b, t: (b, t, 0, 0)),
                pl.BlockSpec(w1.shape, lambda b, t: (0, 0)),
                pl.BlockSpec(b1.shape, lambda b, t: (0, 0)),
                pl.BlockSpec(w2.shape, lambda b, t: (0, 0)),
                pl.BlockSpec(b2.shape, lambda b, t: (0, 0)),
                pl.BlockSpec(w3.shape, lambda b, t: (0, 0)),
                pl.BlockSpec(b3.shape, lambda b, t: (0, 0)),
                pl.BlockSpec(wp_c.shape, lambda b, t: (0, 0, 0)),
                pl.BlockSpec(bp_c.shape, lambda b, t: (0, 0)),
            ],
            out_specs=pl.BlockSpec((None, tnp, OUT_P), lambda b, t: (b, t, 0)),
        ),
        compiler_params=pltpu.CompilerParams(
            dimension_semantics=("parallel", "parallel"),
            vmem_limit_bytes=vmem_limit),
    )(gxyz, gfeat, w1, b1, w2, b2, w3, b3, wp_c, bp_c)

    return out[..., :OUT] if OUT_P != OUT else out


# ---------------------------------------------------------------------------
# Plain-JAX glue: FPS, ball query, grouping (CUDA ops in the original repo).
# ---------------------------------------------------------------------------
def farthest_point_sample(xyz, npoint):
    B, N, _ = xyz.shape

    def body(i, state):
        dist, idxs, far = state
        idxs = idxs.at[:, i].set(far)
        centroid = jax.vmap(lambda x, f: x[f])(xyz, far)            # (B,3)
        d = jnp.sum((xyz - centroid[:, None, :]) ** 2, axis=-1)     # (B,N)
        dist = jnp.minimum(dist, d)
        far = jnp.argmax(dist, axis=-1).astype(jnp.int32)
        return dist, idxs, far

    state0 = (jnp.full((B, N), 1e10, jnp.float32),
              jnp.zeros((B, npoint), jnp.int32),
              jnp.zeros((B,), jnp.int32))
    _, idxs, _ = jax.lax.fori_loop(0, npoint, body, state0)
    return idxs


def ball_query(xyz, new_xyz, radius, nsample):
    B, N, _ = xyz.shape
    d2 = jnp.sum((new_xyz[:, :, None, :] - xyz[:, None, :, :]) ** 2, axis=-1)  # (B,np,N)
    mask = d2 < radius ** 2
    ar = jnp.arange(N)
    keys = jnp.where(mask, ar, ar + N)
    order = jnp.argsort(keys, axis=-1)[..., :nsample].astype(jnp.int32)
    cnt = jnp.sum(mask, axis=-1, keepdims=True)
    first = order[..., :1]
    slot = jnp.arange(nsample)[None, None, :]
    return jnp.where(slot < cnt, order, first)


# ---------------------------------------------------------------------------
# Pure-jnp reference of the kernel math (mirrors the kernel's bf16 cast points).
# ---------------------------------------------------------------------------
def reference(gxyz, gfeat, params, *, feat_dtype=jnp.bfloat16, conv_dtype=jnp.bfloat16):
    w1, b1, w2, b2, w3, b3, wp3, bp = params
    B, NP, NS, C = gfeat.shape
    gfeat = gfeat.astype(feat_dtype).astype(jnp.float32)   # same quantization as kernel DMA
    with jax.default_matmul_precision("float32"):
        h = jnp.maximum(gxyz @ w1 + b1, 0.0)
        h = jnp.maximum(h @ w2 + b2, 0.0)
        pw = (h @ w3 + b3).reshape(B, NP, NS, MAP2)
        pw2 = pw * pw
        s1 = jnp.sqrt(jnp.maximum(pw2.sum(-1, keepdims=True), 1e-8))
        pw = pw / s1
        s2 = jnp.maximum(jnp.sqrt(jnp.maximum(pw2.sum(2, keepdims=True), 1e-8)), 1.0)
        pw = pw / s2
        pf = _leaky_relu(jnp.einsum('bpng,bpnc->bpgc', pw, gfeat))
        pf = pf.astype(conv_dtype).astype(jnp.float32)       # kernel casts pf_g before the MXU
        wp = wp3.astype(conv_dtype).astype(jnp.float32)
        o = jnp.einsum('bpgc,gco->bpo', pf, wp) + bp[None, None, :]
    return _leaky_relu(o)


if __name__ == "__main__":
    B, N, C_IN, C_OUT = 2, 64, 4, 32
    NPOINT, NSAMPLE, RADIUS = 16, 8, 0.4
    TNP = 8   # 2 point-tiles per batch element -> grid (2, 2)

    keys = jax.random.split(jax.random.PRNGKey(0), 16)
    xyz = jax.random.uniform(keys[0], (B, N, 3), jnp.float32)            # B,N,3
    features = jax.random.normal(keys[1], (B, C_IN, N), jnp.float32)     # B,C,N

    # ---- deterministic parameters (BN folded to eval-mode affine) ----
    def bn_fold(w, kg, kb):
        out_dim = w.shape[-1]
        scale = 1.0 + 0.1 * jax.random.normal(kg, (out_dim,), jnp.float32)
        shift = 0.1 * jax.random.normal(kb, (out_dim,), jnp.float32)
        return w * scale, shift

    w1, b1 = bn_fold(0.5 * jax.random.normal(keys[2], (3, 8), jnp.float32), keys[3], keys[4])
    b1 = b1[None, :]
    w2, b2 = bn_fold(0.5 * jax.random.normal(keys[5], (8, 16), jnp.float32), keys[6], keys[7])
    b2 = b2[None, :]
    w3, b3 = bn_fold(0.5 * jax.random.normal(keys[8], (16, MAP2), jnp.float32), keys[9], keys[10])
    b3 = b3[None, :]

    # proj_conv weight: torch layout (out, C, 16, 1) -> kept as (MAP2, C, out)
    w_conv = 0.2 * jax.random.normal(keys[11], (C_OUT, C_IN, MAP2), jnp.float32)
    wp3 = jnp.transpose(w_conv, (2, 1, 0))                                # (MAP2, C, OUT)
    wp3, bp = bn_fold(wp3, keys[12], keys[13])
    params = (w1, b1, w2, b2, w3, b3, wp3, bp)

    # ---- sampling + grouping glue (plain JAX) ----
    fps_idx = farthest_point_sample(xyz, NPOINT)                          # (B,np)
    new_xyz = jax.vmap(lambda x, i: x[i])(xyz, fps_idx)                   # (B,np,3)
    grp_idx = ball_query(xyz, new_xyz, RADIUS, NSAMPLE)                   # (B,np,ns)
    grouped_xyz = jax.vmap(lambda x, i: x[i])(xyz, grp_idx)               # (B,np,ns,3)
    grouped_xyz = grouped_xyz - new_xyz[:, :, None, :]                    # local coords
    grouped_feat = jax.vmap(lambda f, i: f[i])(
        jnp.transpose(features, (0, 2, 1)), grp_idx)                      # (B,np,ns,C)
    gxyz = grouped_xyz.reshape(B, NPOINT * NSAMPLE, 3)                    # no 3->8 pad

    # ---- run the Pallas kernel (bf16 feature DMA + bf16 proj_conv, f32 acc) ----
    out = fgconv_pallas(gxyz, grouped_feat, params, tnp=TNP)              # (B,np,out)
    out = jax.block_until_ready(out)

    ref = reference(gxyz, grouped_feat, params)
    assert jnp.allclose(out, ref, atol=1e-2, rtol=1e-2), "kernel mismatch vs jnp reference"

    # PyTorch module returns (new_xyz (B,np,3), proj_feats (B,out_channel,np))
    proj_feats = jnp.transpose(out, (0, 2, 1))
    jax.block_until_ready((new_xyz, proj_feats))
    print("KERNEL_OK")
</pallas_src>

<mosaic_0001>
module attributes {stable_mosaic.version = 11 : i64} {
  func.func @fgconv_kernel(%arg0: i32, %arg1: i32, %arg2: memref<1x64x3xf32, #tpu.memory_space<vmem>>, %arg3: memref<1x8x8x4xbf16, #tpu.memory_space<vmem>>, %arg4: memref<3x8xf32, #tpu.memory_space<vmem>>, %arg5: memref<1x8xf32, #tpu.memory_space<vmem>>, %arg6: memref<8x16xf32, #tpu.memory_space<vmem>>, %arg7: memref<1x16xf32, #tpu.memory_space<vmem>>, %arg8: memref<16x16xf32, #tpu.memory_space<vmem>>, %arg9: memref<1x16xf32, #tpu.memory_space<vmem>>, %arg10: memref<16x4x32xbf16, #tpu.memory_space<vmem>>, %arg11: memref<1x32xf32, #tpu.memory_space<vmem>>, %arg12: memref<1x8x32xf32, #tpu.memory_space<vmem>>) attributes {dimension_semantics = [#tpu.dimension_semantics<parallel>, #tpu.dimension_semantics<parallel>], iteration_bounds = array<i64: 2, 2>, scalar_prefetch = 0 : i64, scratch_operands = 0 : i64, tpu.core_type = #tpu.core_type<tc>, window_params = [{transform_indices = @transform_0, window_bounds = array<i64: 1, 64, 3>}, {transform_indices = @transform_1, window_bounds = array<i64: 1, 8, 8, 4>}, {pipeline_mode = #tpu.pipeline_mode<synchronous>, transform_indices = @transform_2, window_bounds = array<i64: 3, 8>}, {pipeline_mode = #tpu.pipeline_mode<synchronous>, transform_indices = @transform_3, window_bounds = array<i64: 1, 8>}, {pipeline_mode = #tpu.pipeline_mode<synchronous>, transform_indices = @transform_4, window_bounds = array<i64: 8, 16>}, {pipeline_mode = #tpu.pipeline_mode<synchronous>, transform_indices = @transform_5, window_bounds = array<i64: 1, 16>}, {pipeline_mode = #tpu.pipeline_mode<synchronous>, transform_indices = @transform_6, window_bounds = array<i64: 16, 16>}, {pipeline_mode = #tpu.pipeline_mode<synchronous>, transform_indices = @transform_7, window_bounds = array<i64: 1, 16>}, {pipeline_mode = #tpu.pipeline_mode<synchronous>, transform_indices = @transform_8, window_bounds = array<i64: 16, 4, 32>}, {pipeline_mode = #tpu.pipeline_mode<synchronous>, transform_indices = @transform_9, window_bounds = array<i64: 1, 32>}, {transform_indices = @transform_10, window_bounds = array<i64: 1, 8, 32>}]} {
    %c0 = arith.constant 0 : index
    %c0_0 = arith.constant 0 : index
    %c0_1 = arith.constant 0 : index
    %0 = vector.load %arg2[%c0, %c0_0, %c0_1] : memref<1x64x3xf32, #tpu.memory_space<vmem>>, vector<1x64x3xf32>
    %1 = vector.shape_cast %0 : vector<1x64x3xf32> to vector<64x3xf32>
    %2 = vector.extract_strided_slice %1 {offsets = [0, 0], sizes = [64, 1], strides = [1, 1]} : vector<64x3xf32> to vector<64x1xf32>
    %c0_2 = arith.constant 0 : index
    %c0_3 = arith.constant 0 : index
    %3 = vector.load %arg4[%c0_2, %c0_3] : memref<3x8xf32, #tpu.memory_space<vmem>>, vector<1x8xf32>
    %4 = vector.broadcast %2 : vector<64x1xf32> to vector<64x8xf32>
    %5 = vector.broadcast %3 : vector<1x8xf32> to vector<64x8xf32>
    %6 = arith.mulf %4, %5 : vector<64x8xf32>
    %7 = vector.extract_strided_slice %1 {offsets = [0, 1], sizes = [64, 1], strides = [1, 1]} : vector<64x3xf32> to vector<64x1xf32>
    %c1 = arith.constant 1 : index
    %c0_4 = arith.constant 0 : index
    %8 = vector.load %arg4[%c1, %c0_4] : memref<3x8xf32, #tpu.memory_space<vmem>>, vector<1x8xf32>
    %9 = vector.broadcast %7 : vector<64x1xf32> to vector<64x8xf32>
    %10 = vector.broadcast %8 : vector<1x8xf32> to vector<64x8xf32>
    %11 = arith.mulf %9, %10 : vector<64x8xf32>
    %12 = arith.addf %6, %11 : vector<64x8xf32>
    %13 = vector.extract_strided_slice %1 {offsets = [0, 2], sizes = [64, 1], strides = [1, 1]} : vector<64x3xf32> to vector<64x1xf32>
    %c2 = arith.constant 2 : index
    %c0_5 = arith.constant 0 : index
    %14 = vector.load %arg4[%c2, %c0_5] : memref<3x8xf32, #tpu.memory_space<vmem>>, vector<1x8xf32>
    %15 = vector.broadcast %13 : vector<64x1xf32> to vector<64x8xf32>
    %16 = vector.broadcast %14 : vector<1x8xf32> to vector<64x8xf32>
    %17 = arith.mulf %15, %16 : vector<64x8xf32>
    %18 = arith.addf %12, %17 : vector<64x8xf32>
    %c0_6 = arith.constant 0 : index
    %c0_7 = arith.constant 0 : index
    %19 = vector.load %arg5[%c0_6, %c0_7] : memref<1x8xf32, #tpu.memory_space<vmem>>, vector<1x8xf32>
    %20 = vector.broadcast %19 : vector<1x8xf32> to vector<64x8xf32>
    %21 = arith.addf %18, %20 : vector<64x8xf32>
    %cst = arith.constant 0.000000e+00 : f32
    %22 = vector.broadcast %cst : f32 to vector<64x8xf32>
    %23 = arith.maximumf %21, %22 : vector<64x8xf32>
    %c0_8 = arith.constant 0 : index
    %c0_9 = arith.constant 0 : index
    %24 = vector.load %arg6[%c0_8, %c0_9] : memref<8x16xf32, #tpu.memory_space<vmem>>, vector<8x16xf32>
    %cst_10 = arith.constant dense<0.000000e+00> : vector<64x16xf32>
    %25 = tpu.matmul %23, %24, %cst_10 {dimension_numbers = #tpu.dot_dimension_numbers<[1], [0], [0], [1], [0, 0, 1, 1], [], []>} : vector<64x8xf32>, vector<8x16xf32>, vector<64x16xf32> -> vector<64x16xf32>
    %c0_11 = arith.constant 0 : index
    %c0_12 = arith.constant 0 : index
    %26 = vector.load %arg7[%c0_11, %c0_12] : memref<1x16xf32, #tpu.memory_space<vmem>>, vector<1x16xf32>
    %27 = vector.broadcast %26 : vector<1x16xf32> to vector<64x16xf32>
    %28 = arith.addf %25, %27 : vector<64x16xf32>
    %cst_13 = arith.constant 0.000000e+00 : f32
    %29 = vector.broadcast %cst_13 : f32 to vector<64x16xf32>
    %30 = arith.maximumf %28, %29 : vector<64x16xf32>
    %c0_14 = arith.constant 0 : index
    %c0_15 = arith.constant 0 : index
    %31 = vector.load %arg8[%c0_14, %c0_15] : memref<16x16xf32, #tpu.memory_space<vmem>>, vector<16x16xf32>
    %cst_16 = arith.constant dense<0.000000e+00> : vector<64x16xf32>
    %32 = tpu.matmul %30, %31, %cst_16 {dimension_numbers = #tpu.dot_dimension_numbers<[1], [0], [0], [1], [0, 0, 1, 1], [], []>} : vector<64x16xf32>, vector<16x16xf32>, vector<64x16xf32> -> vector<64x16xf32>
    %c0_17 = arith.constant 0 : index
    %c0_18 = arith.constant 0 : index
    %33 = vector.load %arg9[%c0_17, %c0_18] : memref<1x16xf32, #tpu.memory_space<vmem>>, vector<1x16xf32>
    %34 = vector.broadcast %33 : vector<1x16xf32> to vector<64x16xf32>
    %35 = arith.addf %32, %34 : vector<64x16xf32>
    %36 = vector.shape_cast %35 : vector<64x16xf32> to vector<8x8x16xf32>
    %37 = arith.mulf %36, %36 : vector<8x8x16xf32>
    %cst_19 = arith.constant dense<0.000000e+00> : vector<8x8xf32>
    %38 = vector.multi_reduction <add>, %37, %cst_19 [2] : vector<8x8x16xf32> to vector<8x8xf32>
    %39 = vector.shape_cast %38 : vector<8x8xf32> to vector<8x8x1xf32>
    %cst_20 = arith.constant 9.99999993E-9 : f32
    %40 = vector.broadcast %cst_20 : f32 to vector<8x8x1xf32>
    %41 = arith.maximumf %39, %40 : vector<8x8x1xf32>
    %42 = math.rsqrt %41 : vector<8x8x1xf32>
    %43 = vector.broadcast %42 : vector<8x8x1xf32> to vector<8x8x16xf32>
    %44 = arith.mulf %36, %43 : vector<8x8x16xf32>
    %cst_21 = arith.constant dense<0.000000e+00> : vector<8x16xf32>
    %45 = vector.multi_reduction <add>, %37, %cst_21 [1] : vector<8x8x16xf32> to vector<8x16xf32>
    %46 = vector.shape_cast %45 : vector<8x16xf32> to vector<8x1x16xf32>
    %cst_22 = arith.constant 9.99999993E-9 : f32
    %47 = vector.broadcast %cst_22 : f32 to vector<8x1x16xf32>
    %48 = arith.maximumf %46, %47 : vector<8x1x16xf32>
    %49 = math.rsqrt %48 : vector<8x1x16xf32>
    %cst_23 = arith.constant 1.000000e+00 : f32
    %50 = vector.broadcast %cst_23 : f32 to vector<8x1x16xf32>
    %51 = arith.minimumf %49, %50 : vector<8x1x16xf32>
    %52 = vector.broadcast %51 : vector<8x1x16xf32> to vector<8x8x16xf32>
    %53 = arith.mulf %44, %52 : vector<8x8x16xf32>
    %c0_24 = arith.constant 0 : index
    %c0_25 = arith.constant 0 : index
    %c0_26 = arith.constant 0 : index
    %c0_27 = arith.constant 0 : index
    %54 = vector.load %arg3[%c0_24, %c0_25, %c0_26, %c0_27] : memref<1x8x8x4xbf16, #tpu.memory_space<vmem>>, vector<1x8x8x4xbf16>
    %55 = vector.shape_cast %54 : vector<1x8x8x4xbf16> to vector<8x8x4xbf16>
    %56 = arith.extf %55 : vector<8x8x4xbf16> to vector<8x8x4xf32>
    %cst_28 = arith.constant 0.000000e+00 : f32
    %57 = vector.broadcast %cst_28 : f32 to vector<8x32xf32>
    %c0_29 = arith.constant 0 : index
    %c0_30 = arith.constant 0 : index
    %58 = vector.load %arg11[%c0_29, %c0_30] : memref<1x32xf32, #tpu.memory_space<vmem>>, vector<1x32xf32>
    %59 = vector.broadcast %58 : vector<1x32xf32> to vector<8x32xf32>
    %60 = arith.addf %57, %59 : vector<8x32xf32>
    %cst_31 = arith.constant 0.000000e+00 : f32
    %61 = vector.broadcast %cst_31 : f32 to vector<8x4xf32>
    %62 = vector.extract_strided_slice %53 {offsets = [0, 0, 0], sizes = [8, 1, 1], strides = [1, 1, 1]} : vector<8x8x16xf32> to vector<8x1x1xf32>
    %63 = vector.shape_cast %62 : vector<8x1x1xf32> to vector<8x1xf32>
    %64 = vector.extract_strided_slice %56 {offsets = [0, 0, 0], sizes = [8, 1, 4], strides = [1, 1, 1]} : vector<8x8x4xf32> to vector<8x1x4xf32>
    %65 = vector.shape_cast %64 : vector<8x1x4xf32> to vector<8x4xf32>
    %66 = vector.broadcast %63 : vector<8x1xf32> to vector<8x4xf32>
    %67 = arith.mulf %66, %65 : vector<8x4xf32>
    %68 = arith.addf %61, %67 : vector<8x4xf32>
    %69 = vector.extract_strided_slice %53 {offsets = [0, 1, 0], sizes = [8, 1, 1], strides = [1, 1, 1]} : vector<8x8x16xf32> to vector<8x1x1xf32>
    %70 = vector.shape_cast %69 : vector<8x1x1xf32> to vector<8x1xf32>
    %71 = vector.extract_strided_slice %56 {offsets = [0, 1, 0], sizes = [8, 1, 4], strides = [1, 1, 1]} : vector<8x8x4xf32> to vector<8x1x4xf32>
    %72 = vector.shape_cast %71 : vector<8x1x4xf32> to vector<8x4xf32>
    %73 = vector.broadcast %70 : vector<8x1xf32> to vector<8x4xf32>
    %74 = arith.mulf %73, %72 : vector<8x4xf32>
    %75 = arith.addf %68, %74 : vector<8x4xf32>
    %76 = vector.extract_strided_slice %53 {offsets = [0, 2, 0], sizes = [8, 1, 1], strides = [1, 1, 1]} : vector<8x8x16xf32> to vector<8x1x1xf32>
    %77 = vector.shape_cast %76 : vector<8x1x1xf32> to vector<8x1xf32>
    %78 = vector.extract_strided_slice %56 {offsets = [0, 2, 0], sizes = [8, 1, 4], strides = [1, 1, 1]} : vector<8x8x4xf32> to vector<8x1x4xf32>
    %79 = vector.shape_cast %78 : vector<8x1x4xf32> to vector<8x4xf32>
    %80 = vector.broadcast %77 : vector<8x1xf32> to vector<8x4xf32>
    %81 = arith.mulf %80, %79 : vector<8x4xf32>
    %82 = arith.addf %75, %81 : vector<8x4xf32>
    %83 = vector.extract_strided_slice %53 {offsets = [0, 3, 0], sizes = [8, 1, 1], strides = [1, 1, 1]} : vector<8x8x16xf32> to vector<8x1x1xf32>
    %84 = vector.shape_cast %83 : vector<8x1x1xf32> to vector<8x1xf32>
    %85 = vector.extract_strided_slice %56 {offsets = [0, 3, 0], sizes = [8, 1, 4], strides = [1, 1, 1]} : vector<8x8x4xf32> to vector<8x1x4xf32>
    %86 = vector.shape_cast %85 : vector<8x1x4xf32> to vector<8x4xf32>
    %87 = vector.broadcast %84 : vector<8x1xf32> to vector<8x4xf32>
    %88 = arith.mulf %87, %86 : vector<8x4xf32>
    %89 = arith.addf %82, %88 : vector<8x4xf32>
    %90 = vector.extract_strided_slice %53 {offsets = [0, 4, 0], sizes = [8, 1, 1], strides = [1, 1, 1]} : vector<8x8x16xf32> to vector<8x1x1xf32>
    %91 = vector.shape_cast %90 : vector<8x1x1xf32> to vector<8x1xf32>
    %92 = vector.extract_strided_slice %56 {offsets = [0, 4, 0], sizes = [8, 1, 4], strides = [1, 1, 1]} : vector<8x8x4xf32> to vector<8x1x4xf32>
    %93 = vector.shape_cast %92 : vector<8x1x4xf32> to vector<8x4xf32>
    %94 = vector.broadcast %91 : vector<8x1xf32> to vector<8x4xf32>
    %95 = arith.mulf %94, %93 : vector<8x4xf32>
    %96 = arith.addf %89, %95 : vector<8x4xf32>
    %97 = vector.extract_strided_slice %53 {offsets = [0, 5, 0], sizes = [8, 1, 1], strides = [1, 1, 1]} : vector<8x8x16xf32> to vector<8x1x1xf32>
    %98 = vector.shape_cast %97 : vector<8x1x1xf32> to vector<8x1xf32>
    %99 = vector.extract_strided_slice %56 {offsets = [0, 5, 0], sizes = [8, 1, 4], strides = [1, 1, 1]} : vector<8x8x4xf32> to vector<8x1x4xf32>
    %100 = vector.shape_cast %99 : vector<8x1x4xf32> to vector<8x4xf32>
    %101 = vector.broadcast %98 : vector<8x1xf32> to vector<8x4xf32>
    %102 = arith.mulf %101, %100 : vector<8x4xf32>
    %103 = arith.addf %96, %102 : vector<8x4xf32>
    %104 = vector.extract_strided_slice %53 {offsets = [0, 6, 0], sizes = [8, 1, 1], strides = [1, 1, 1]} : vector<8x8x16xf32> to vector<8x1x1xf32>
    %105 = vector.shape_cast %104 : vector<8x1x1xf32> to vector<8x1xf32>
    %106 = vector.extract_strided_slice %56 {offsets = [0, 6, 0], sizes = [8, 1, 4], strides = [1, 1, 1]} : vector<8x8x4xf32> to vector<8x1x4xf32>
    %107 = vector.shape_cast %106 : vector<8x1x4xf32> to vector<8x4xf32>
    %108 = vector.broadcast %105 : vector<8x1xf32> to vector<8x4xf32>
    %109 = arith.mulf %108, %107 : vector<8x4xf32>
    %110 = arith.addf %103, %109 : vector<8x4xf32>
    %111 = vector.extract_strided_slice %53 {offsets = [0, 7, 0], sizes = [8, 1, 1], strides = [1, 1, 1]} : vector<8x8x16xf32> to vector<8x1x1xf32>
    %112 = vector.shape_cast %111 : vector<8x1x1xf32> to vector<8x1xf32>
    %113 = vector.extract_strided_slice %56 {offsets = [0, 7, 0], sizes = [8, 1, 4], strides = [1, 1, 1]} : vector<8x8x4xf32> to vector<8x1x4xf32>
    %114 = vector.shape_cast %113 : vector<8x1x4xf32> to vector<8x4xf32>
    %115 = vector.broadcast %112 : vector<8x1xf32> to vector<8x4xf32>
    %116 = arith.mulf %115, %114 : vector<8x4xf32>
    %117 = arith.addf %110, %116 : vector<8x4xf32>
    %cst_32 = arith.constant 0.000000e+00 : f32
    %118 = vector.broadcast %cst_32 : f32 to vector<8x4xf32>
    %119 = arith.cmpf ogt, %117, %118 : vector<8x4xf32>
    %cst_33 = arith.constant 2.000000e-01 : f32
    %120 = vector.broadcast %cst_33 : f32 to vector<8x4xf32>
    %121 = arith.mulf %120, %117 : vector<8x4xf32>
    %122 = arith.select %119, %117, %121 : vector<8x4xi1>, vector<8x4xf32>
    %123 = arith.truncf %122 : vector<8x4xf32> to vector<8x4xbf16>
    %c0_34 = arith.constant 0 : index
    %c0_35 = arith.constant 0 : index
    %c0_36 = arith.constant 0 : index
    %124 = vector.load %arg10[%c0_34, %c0_35, %c0_36] : memref<16x4x32xbf16, #tpu.memory_space<vmem>>, vector<1x4x32xbf16>
    %125 = vector.shape_cast %124 : vector<1x4x32xbf16> to vector<4x32xbf16>
    %cst_37 = arith.constant dense<0.000000e+00> : vector<8x32xf32>
    %126 = tpu.matmul %123, %125, %cst_37 {dimension_numbers = #tpu.dot_dimension_numbers<[1], [0], [0], [1], [0, 0, 1, 1], [], []>} : vector<8x4xbf16>, vector<4x32xbf16>, vector<8x32xf32> -> vector<8x32xf32>
    %127 = arith.addf %60, %126 : vector<8x32xf32>
    %cst_38 = arith.constant 0.000000e+00 : f32
    %128 = vector.broadcast %cst_38 : f32 to vector<8x4xf32>
    %129 = vector.extract_strided_slice %53 {offsets = [0, 0, 1], sizes = [8, 1, 1], strides = [1, 1, 1]} : vector<8x8x16xf32> to vector<8x1x1xf32>
    %130 = vector.shape_cast %129 : vector<8x1x1xf32> to vector<8x1xf32>
    %131 = vector.extract_strided_slice %56 {offsets = [0, 0, 0], sizes = [8, 1, 4], strides = [1, 1, 1]} : vector<8x8x4xf32> to vector<8x1x4xf32>
    %132 = vector.shape_cast %131 : vector<8x1x4xf32> to vector<8x4xf32>
    %133 = vector.broadcast %130 : vector<8x1xf32> to vector<8x4xf32>
    %134 = arith.mulf %133, %132 : vector<8x4xf32>
    %135 = arith.addf %128, %134 : vector<8x4xf32>
    %136 = vector.extract_strided_slice %53 {offsets = [0, 1, 1], sizes = [8, 1, 1], strides = [1, 1, 1]} : vector<8x8x16xf32> to vector<8x1x1xf32>
    %137 = vector.shape_cast %136 : vector<8x1x1xf32> to vector<8x1xf32>
    %138 = vector.extract_strided_slice %56 {offsets = [0, 1, 0], sizes = [8, 1, 4], strides = [1, 1, 1]} : vector<8x8x4xf32> to vector<8x1x4xf32>
    %139 = vector.shape_cast %138 : vector<8x1x4xf32> to vector<8x4xf32>
    %140 = vector.broadcast %137 : vector<8x1xf32> to vector<8x4xf32>
    %141 = arith.mulf %140, %139 : vector<8x4xf32>
    %142 = arith.addf %135, %141 : vector<8x4xf32>
    %143 = vector.extract_strided_slice %53 {offsets = [0, 2, 1], sizes = [8, 1, 1], strides = [1, 1, 1]} : vector<8x8x16xf32> to vector<8x1x1xf32>
    %144 = vector.shape_cast %143 : vector<8x1x1xf32> to vector<8x1xf32>
    %145 = vector.extract_strided_slice %56 {offsets = [0, 2, 0], sizes = [8, 1, 4], strides = [1, 1, 1]} : vector<8x8x4xf32> to vector<8x1x4xf32>
    %146 = vector.shape_cast %145 : vector<8x1x4xf32> to vector<8x4xf32>
    %147 = vector.broadcast %144 : vector<8x1xf32> to vector<8x4xf32>
    %148 = arith.mulf %147, %146 : vector<8x4xf32>
    %149 = arith.addf %142, %148 : vector<8x4xf32>
    %150 = vector.extract_strided_slice %53 {offsets = [0, 3, 1], sizes = [8, 1, 1], strides = [1, 1, 1]} : vector<8x8x16xf32> to vector<8x1x1xf32>
    %151 = vector.shape_cast %150 : vector<8x1x1xf32> to vector<8x1xf32>
    %152 = vector.extract_strided_slice %56 {offsets = [0, 3, 0], sizes = [8, 1, 4], strides = [1, 1, 1]} : vector<8x8x4xf32> to vector<8x1x4xf32>
    %153 = vector.shape_cast %152 : vector<8x1x4xf32> to vector<8x4xf32>
    %154 = vector.broadcast %151 : vector<8x1xf32> to vector<8x4xf32>
    %155 = arith.mulf %154, %153 : vector<8x4xf32>
    %156 = arith.addf %149, %155 : vector<8x4xf32>
    %157 = vector.extract_strided_slice %53 {offsets = [0, 4, 1], sizes = [8, 1, 1], strides = [1, 1, 1]} : vector<8x8x16xf32> to vector<8x1x1xf32>
    %158 = vector.shape_cast %157 : vector<8x1x1xf32> to vector<8x1xf32>
    %159 = vector.extract_strided_slice %56 {offsets = [0, 4, 0], sizes = [8, 1, 4], strides = [1, 1, 1]} : vector<8x8x4xf32> to vector<8x1x4xf32>
    %160 = vector.shape_cast %159 : vector<8x1x4xf32> to vector<8x4xf32>
    %161 = vector.broadcast %158 : vector<8x1xf32> to vector<8x4xf32>
    %162 = arith.mulf %161, %160 : vector<8x4xf32>
    %163 = arith.addf %156, %162 : vector<8x4xf32>
    %164 = vector.extract_strided_slice %53 {offsets = [0, 5, 1], sizes = [8, 1, 1], strides = [1, 1, 1]} : vector<8x8x16xf32> to vector<8x1x1xf32>
    %165 = vector.shape_cast %164 : vector<8x1x1xf32> to vector<8x1xf32>
    %166 = vector.extract_strided_slice %56 {offsets = [0, 5, 0], sizes = [8, 1, 4], strides = [1, 1, 1]} : vector<8x8x4xf32> to vector<8x1x4xf32>
    %167 = vector.shape_cast %166 : vector<8x1x4xf32> to vector<8x4xf32>
    %168 = vector.broadcast %165 : vector<8x1xf32> to vector<8x4xf32>
    %169 = arith.mulf %168, %167 : vector<8x4xf32>
    %170 = arith.addf %163, %169 : vector<8x4xf32>
    %171 = vector.extract_strided_slice %53 {offsets = [0, 6, 1], sizes = [8, 1, 1], strides = [1, 1, 1]} : vector<8x8x16xf32> to vector<8x1x1xf32>
    %172 = vector.shape_cast %171 : vector<8x1x1xf32> to vector<8x1xf32>
    %173 = vector.extract_strided_slice %56 {offsets = [0, 6, 0], sizes = [8, 1, 4], strides = [1, 1, 1]} : vector<8x8x4xf32> to vector<8x1x4xf32>
    %174 = vector.shape_cast %173 : vector<8x1x4xf32> to vector<8x4xf32>
    %175 = vector.broadcast %172 : vector<8x1xf32> to vector<8x4xf32>
    %176 = arith.mulf %175, %174 : vector<8x4xf32>
    %177 = arith.addf %170, %176 : vector<8x4xf32>
    %178 = vector.extract_strided_slice %53 {offsets = [0, 7, 1], sizes = [8, 1, 1], strides = [1, 1, 1]} : vector<8x8x16xf32> to vector<8x1x1xf32>
    %179 = vector.shape_cast %178 : vector<8x1x1xf32> to vector<8x1xf32>
    %180 = vector.extract_strided_slice %56 {offsets = [0, 7, 0], sizes = [8, 1, 4], strides = [1, 1, 1]} : vector<8x8x4xf32> to vector<8x1x4xf32>
    %181 = vector.shape_cast %180 : vector<8x1x4xf32> to vector<8x4xf32>
    %182 = vector.broadcast %179 : vector<8x1xf32> to vector<8x4xf32>
    %183 = arith.mulf %182, %181 : vector<8x4xf32>
    %184 = arith.addf %177, %183 : vector<8x4xf32>
    %cst_39 = arith.constant 0.000000e+00 : f32
    %185 = vector.broadcast %cst_39 : f32 to vector<8x4xf32>
    %186 = arith.cmpf ogt, %184, %185 : vector<8x4xf32>
    %cst_40 = arith.constant 2.000000e-01 : f32
    %187 = vector.broadcast %cst_40 : f32 to vector<8x4xf32>
    %188 = arith.mulf %187, %184 : vector<8x4xf32>
    %189 = arith.select %186, %184, %188 : vector<8x4xi1>, vector<8x4xf32>
    %190 = arith.truncf %189 : vector<8x4xf32> to vector<8x4xbf16>
    %c1_41 = arith.constant 1 : index
    %c0_42 = arith.constant 0 : index
    %c0_43 = arith.constant 0 : index
    %191 = vector.load %arg10[%c1_41, %c0_42, %c0_43] : memref<16x4x32xbf16, #tpu.memory_space<vmem>>, vector<1x4x32xbf16>
    %192 = vector.shape_cast %191 : vector<1x4x32xbf16> to vector<4x32xbf16>
    %cst_44 = arith.constant dense<0.000000e+00> : vector<8x32xf32>
    %193 = tpu.matmul %190, %192, %cst_44 {dimension_numbers = #tpu.dot_dimension_numbers<[1], [0], [0], [1], [0, 0, 1, 1], [], []>} : vector<8x4xbf16>, vector<4x32xbf16>, vector<8x32xf32> -> vector<8x32xf32>
    %194 = arith.addf %127, %193 : vector<8x32xf32>
    %cst_45 = arith.constant 0.000000e+00 : f32
    %195 = vector.broadcast %cst_45 : f32 to vector<8x4xf32>
    %196 = vector.extract_strided_slice %53 {offsets = [0, 0, 2], sizes = [8, 1, 1], strides = [1, 1, 1]} : vector<8x8x16xf32> to vector<8x1x1xf32>
    %197 = vector.shape_cast %196 : vector<8x1x1xf32> to vector<8x1xf32>
    %198 = vector.extract_strided_slice %56 {offsets = [0, 0, 0], sizes = [8, 1, 4], strides = [1, 1, 1]} : vector<8x8x4xf32> to vector<8x1x4xf32>
    %199 = vector.shape_cast %198 : vector<8x1x4xf32> to vector<8x4xf32>
    %200 = vector.broadcast %197 : vector<8x1xf32> to vector<8x4xf32>
    %201 = arith.mulf %200, %199 : vector<8x4xf32>
    %202 = arith.addf %195, %201 : vector<8x4xf32>
    %203 = vector.extract_strided_slice %53 {offsets = [0, 1, 2], sizes = [8, 1, 1], strides = [1, 1, 1]} : vector<8x8x16xf32> to vector<8x1x1xf32>
    %204 = vector.shape_cast %203 : vector<8x1x1xf32> to vector<8x1xf32>
    %205 = vector.extract_strided_slice %56 {offsets = [0, 1, 0], sizes = [8, 1, 4], strides = [1, 1, 1]} : vector<8x8x4xf32> to vector<8x1x4xf32>
    %206 = vector.shape_cast %205 : vector<8x1x4xf32> to vector<8x4xf32>
    %207 = vector.broadcast %204 : vector<8x1xf32> to vector<8x4xf32>
    %208 = arith.mulf %207, %206 : vector<8x4xf32>
    %209 = arith.addf %202, %208 : vector<8x4xf32>
    %210 = vector.extract_strided_slice %53 {offsets = [0, 2, 2], sizes = [8, 1, 1], strides = [1, 1, 1]} : vector<8x8x16xf32> to vector<8x1x1xf32>
    %211 = vector.shape_cast %210 : vector<8x1x1xf32> to vector<8x1xf32>
    %212 = vector.extract_strided_slice %56 {offsets = [0, 2, 0], sizes = [8, 1, 4], strides = [1, 1, 1]} : vector<8x8x4xf32> to vector<8x1x4xf32>
    %213 = vector.shape_cast %212 : vector<8x1x4xf32> to vector<8x4xf32>
    %214 = vector.broadcast %211 : vector<8x1xf32> to vector<8x4xf32>
    %215 = arith.mulf %214, %213 : vector<8x4xf32>
    %216 = arith.addf %209, %215 : vector<8x4xf32>
    %217 = vector.extract_strided_slice %53 {offsets = [0, 3, 2], sizes = [8, 1, 1], strides = [1, 1, 1]} : vector<8x8x16xf32> to vector<8x1x1xf32>
    %218 = vector.shape_cast %217 : vector<8x1x1xf32> to vector<8x1xf32>
    %219 = vector.extract_strided_slice %56 {offsets = [0, 3, 0], sizes = [8, 1, 4], strides = [1, 1, 1]} : vector<8x8x4xf32> to vector<8x1x4xf32>
    %220 = vector.shape_cast %219 : vector<8x1x4xf32> to vector<8x4xf32>
    %221 = vector.broadcast %218 : vector<8x1xf32> to vector<8x4xf32>
    %222 = arith.mulf %221, %220 : vector<8x4xf32>
    %223 = arith.addf %216, %222 : vector<8x4xf32>
    %224 = vector.extract_strided_slice %53 {offsets = [0, 4, 2], sizes = [8, 1, 1], strides = [1, 1, 1]} : vector<8x8x16xf32> to vector<8x1x1xf32>
    %225 = vector.shape_cast %224 : vector<8x1x1xf32> to vector<8x1xf32>
    %226 = vector.extract_strided_slice %56 {offsets = [0, 4, 0], sizes = [8, 1, 4], strides = [1, 1, 1]} : vector<8x8x4xf32> to vector<8x1x4xf32>
    %227 = vector.shape_cast %226 : vector<8x1x4xf32> to vector<8x4xf32>
    %228 = vector.broadcast %225 : vector<8x1xf32> to vector<8x4xf32>
    %229 = arith.mulf %228, %227 : vector<8x4xf32>
    %230 = arith.addf %223, %229 : vector<8x4xf32>
    %231 = vector.extract_strided_slice %53 {offsets = [0, 5, 2], sizes = [8, 1, 1], strides = [1, 1, 1]} : vector<8x8x16xf32> to vector<8x1x1xf32>
    %232 = vector.shape_cast %231 : vector<8x1x1xf32> to vector<8x1xf32>
    %233 = vector.extract_strided_slice %56 {offsets = [0, 5, 0], sizes = [8, 1, 4], strides = [1, 1, 1]} : vector<8x8x4xf32> to vector<8x1x4xf32>
    %234 = vector.shape_cast %233 : vector<8x1x4xf32> to vector<8x4xf32>
    %235 = vector.broadcast %232 : vector<8x1xf32> to vector<8x4xf32>
    %236 = arith.mulf %235, %234 : vector<8x4xf32>
    %237 = arith.addf %230, %236 : vector<8x4xf32>
    %238 = vector.extract_strided_slice %53 {offsets = [0, 6, 2], sizes = [8, 1, 1], strides = [1, 1, 1]} : vector<8x8x16xf32> to vector<8x1x1xf32>
    %239 = vector.shape_cast %238 : vector<8x1x1xf32> to vector<8x1xf32>
    %240 = vector.extract_strided_slice %56 {offsets = [0, 6, 0], sizes = [8, 1, 4], strides = [1, 1, 1]} : vector<8x8x4xf32> to vector<8x1x4xf32>
    %241 = vector.shape_cast %240 : vector<8x1x4xf32> to vector<8x4xf32>
    %242 = vector.broadcast %239 : vector<8x1xf32> to vector<8x4xf32>
    %243 = arith.mulf %242, %241 : vector<8x4xf32>
    %244 = arith.addf %237, %243 : vector<8x4xf32>
    %245 = vector.extract_strided_slice %53 {offsets = [0, 7, 2], sizes = [8, 1, 1], strides = [1, 1, 1]} : vector<8x8x16xf32> to vector<8x1x1xf32>
    %246 = vector.shape_cast %245 : vector<8x1x1xf32> to vector<8x1xf32>
    %247 = vector.extract_strided_slice %56 {offsets = [0, 7, 0], sizes = [8, 1, 4], strides = [1, 1, 1]} : vector<8x8x4xf32> to vector<8x1x4xf32>
    %248 = vector.shape_cast %247 : vector<8x1x4xf32> to vector<8x4xf32>
    %249 = vector.broadcast %246 : vector<8x1xf32> to vector<8x4xf32>
    %250 = arith.mulf %249, %248 : vector<8x4xf32>
    %251 = arith.addf %244, %250 : vector<8x4xf32>
    %cst_46 = arith.constant 0.000000e+00 : f32
    %252 = vector.broadcast %cst_46 : f32 to vector<8x4xf32>
    %253 = arith.cmpf ogt, %251, %252 : vector<8x4xf32>
    %cst_47 = arith.constant 2.000000e-01 : f32
    %254 = vector.broadcast %cst_47 : f32 to vector<8x4xf32>
    %255 = arith.mulf %254, %251 : vector<8x4xf32>
    %256 = arith.select %253, %251, %255 : vector<8x4xi1>, vector<8x4xf32>
    %257 = arith.truncf %256 : vector<8x4xf32> to vector<8x4xbf16>
    %c2_48 = arith.constant 2 : index
    %c0_49 = arith.constant 0 : index
    %c0_50 = arith.constant 0 : index
    %258 = vector.load %arg10[%c2_48, %c0_49, %c0_50] : memref<16x4x32xbf16, #tpu.memory_space<vmem>>, vector<1x4x32xbf16>
    %259 = vector.shape_cast %258 : vector<1x4x32xbf16> to vector<4x32xbf16>
    %cst_51 = arith.constant dense<0.000000e+00> : vector<8x32xf32>
    %260 = tpu.matmul %257, %259, %cst_51 {dimension_numbers = #tpu.dot_dimension_numbers<[1], [0], [0], [1], [0, 0, 1, 1], [], []>} : vector<8x4xbf16>, vector<4x32xbf16>, vector<8x32xf32> -> vector<8x32xf32>
    %261 = arith.addf %194, %260 : vector<8x32xf32>
    %cst_52 = arith.constant 0.000000e+00 : f32
    %262 = vector.broadcast %cst_52 : f32 to vector<8x4xf32>
    %263 = vector.extract_strided_slice %53 {offsets = [0, 0, 3], sizes = [8, 1, 1], strides = [1, 1, 1]} : vector<8x8x16xf32> to vector<8x1x1xf32>
    %264 = vector.shape_cast %263 : vector<8x1x1xf32> to vector<8x1xf32>
    %265 = vector.extract_strided_slice %56 {offsets = [0, 0, 0], sizes = [8, 1, 4], strides = [1, 1, 1]} : vector<8x8x4xf32> to vector<8x1x4xf32>
    %266 = vector.shape_cast %265 : vector<8x1x4xf32> to vector<8x4xf32>
    %267 = vector.broadcast %264 : vector<8x1xf32> to vector<8x4xf32>
    %268 = arith.mulf %267, %266 : vector<8x4xf32>
    %269 = arith.addf %262, %268 : vector<8x4xf32>
    %270 = vector.extract_strided_slice %53 {offsets = [0, 1, 3], sizes = [8, 1, 1], strides = [1, 1, 1]} : vector<8x8x16xf32> to vector<8x1x1xf32>
    %271 = vector.shape_cast %270 : vector<8x1x1xf32> to vector<8x1xf32>
    %272 = vector.extract_strided_slice %56 {offsets = [0, 1, 0], sizes = [8, 1, 4], strides = [1, 1, 1]} : vector<8x8x4xf32> to vector<8x1x4xf32>
    %273 = vector.shape_cast %272 : vector<8x1x4xf32> to vector<8x4xf32>
    %274 = vector.broadcast %271 : vector<8x1xf32> to vector<8x4xf32>
    %275 = arith.mulf %274, %273 : vector<8x4xf32>
    %276 = arith.addf %269, %275 : vector<8x4xf32>
    %277 = vector.extract_strided_slice %53 {offsets = [0, 2, 3], sizes = [8, 1, 1], strides = [1, 1, 1]} : vector<8x8x16xf32> to vector<8x1x1xf32>
    %278 = vector.shape_cast %277 : vector<8x1x1xf32> to vector<8x1xf32>
    %279 = vector.extract_strided_slice %56 {offsets = [0, 2, 0], sizes = [8, 1, 4], strides = [1, 1, 1]} : vector<8x8x4xf32> to vector<8x1x4xf32>
    %280 = vector.shape_cast %279 : vector<8x1x4xf32> to vector<8x4xf32>
    %281 = vector.broadcast %278 : vector<8x1xf32> to vector<8x4xf32>
    %282 = arith.mulf %281, %280 : vector<8x4xf32>
    %283 = arith.addf %276, %282 : vector<8x4xf32>
    %284 = vector.extract_strided_slice %53 {offsets = [0, 3, 3], sizes = [8, 1, 1], strides = [1, 1, 1]} : vector<8x8x16xf32> to vector<8x1x1xf32>
    %285 = vector.shape_cast %284 : vector<8x1x1xf32> to vector<8x1xf32>
    %286 = vector.extract_strided_slice %56 {offsets = [0, 3, 0], sizes = [8, 1, 4], strides = [1, 1, 1]} : vector<8x8x4xf32> to vector<8x1x4xf32>
    %287 = vector.shape_cast %286 : vector<8x1x4xf32> to vector<8x4xf32>
    %288 = vector.broadcast %285 : vector<8x1xf32> to vector<8x4xf32>
    %289 = arith.mulf %288, %287 : vector<8x4xf32>
    %290 = arith.addf %283, %289 : vector<8x4xf32>
    %291 = vector.extract_strided_slice %53 {offsets = [0, 4, 3], sizes = [8, 1, 1], strides = [1, 1, 1]} : vector<8x8x16xf32> to vector<8x1x1xf32>
    %292 = vector.shape_cast %291 : vector<8x1x1xf32> to vector<8x1xf32>
    %293 = vector.extract_strided_slice %56 {offsets = [0, 4, 0], sizes = [8, 1, 4], strides = [1, 1, 1]} : vector<8x8x4xf32> to vector<8x1x4xf32>
    %294 = vector.shape_cast %293 : vector<8x1x4xf32> to vector<8x4xf32>
    %295 = vector.broadcast %292 : vector<8x1xf32> to vector<8x4xf32>
    %296 = arith.mulf %295, %294 : vector<8x4xf32>
    %297 = arith.addf %290, %296 : vector<8x4xf32>
    %298 = vector.extract_strided_slice %53 {offsets = [0, 5, 3], sizes = [8, 1, 1], strides = [1, 1, 1]} : vector<8x8x16xf32> to vector<8x1x1xf32>
    %299 = vector.shape_cast %298 : vector<8x1x1xf32> to vector<8x1xf32>
    %300 = vector.extract_strided_slice %56 {offsets = [0, 5, 0], sizes = [8, 1, 4], strides = [1, 1, 1]} : vector<8x8x4xf32> to vector<8x1x4xf32>
    %301 = vector.shape_cast %300 : vector<8x1x4xf32> to vector<8x4xf32>
    %302 = vector.broadcast %299 : vector<8x1xf32> to vector<8x4xf32>
    %303 = arith.mulf %302, %301 : vector<8x4xf32>
    %304 = arith.addf %297, %303 : vector<8x4xf32>
    %305 = vector.extract_strided_slice %53 {offsets = [0, 6, 3], sizes = [8, 1, 1], strides = [1, 1, 1]} : vector<8x8x16xf32> to vector<8x1x1xf32>
    %306 = vector.shape_cast %305 : vector<8x1x1xf32> to vector<8x1xf32>
    %307 = vector.extract_strided_slice %56 {offsets = [0, 6, 0], sizes = [8, 1, 4], strides = [1, 1, 1]} : vector<8x8x4xf32> to vector<8x1x4xf32>
    %308 = vector.shape_cast %307 : vector<8x1x4xf32> to vector<8x4xf32>
    %309 = vector.broadcast %306 : vector<8x1xf32> to vector<8x4xf32>
    %310 = arith.mulf %309, %308 : vector<8x4xf32>
    %311 = arith.addf %304, %310 : vector<8x4xf32>
    %312 = vector.extract_strided_slice %53 {offsets = [0, 7, 3], sizes = [8, 1, 1], strides = [1, 1, 1]} : vector<8x8x16xf32> to vector<8x1x1xf32>
    %313 = vector.shape_cast %312 : vector<8x1x1xf32> to vector<8x1xf32>
    %314 = vector.extract_strided_slice %56 {offsets = [0, 7, 0], sizes = [8, 1, 4], strides = [1, 1, 1]} : vector<8x8x4xf32> to vector<8x1x4xf32>
    %315 = vector.shape_cast %314 : vector<8x1x4xf32> to vector<8x4xf32>
    %316 = vector.broadcast %313 : vector<8x1xf32> to vector<8x4xf32>
    %317 = arith.mulf %316, %315 : vector<8x4xf32>
    %318 = arith.addf %311, %317 : vector<8x4xf32>
    %cst_53 = arith.constant 0.000000e+00 : f32
    %319 = vector.broadcast %cst_53 : f32 to vector<8x4xf32>
    %320 = arith.cmpf ogt, %318, %319 : vector<8x4xf32>
    %cst_54 = arith.constant 2.000000e-01 : f32
    %321 = vector.broadcast %cst_54 : f32 to vector<8x4xf32>
    %322 = arith.mulf %321, %318 : vector<8x4xf32>
    %323 = arith.select %320, %318, %322 : vector<8x4xi1>, vector<8x4xf32>
    %324 = arith.truncf %323 : vector<8x4xf32> to vector<8x4xbf16>
    %c3 = arith.constant 3 : index
    %c0_55 = arith.constant 0 : index
    %c0_56 = arith.constant 0 : index
    %325 = vector.load %arg10[%c3, %c0_55, %c0_56] : memref<16x4x32xbf16, #tpu.memory_space<vmem>>, vector<1x4x32xbf16>
    %326 = vector.shape_cast %325 : vector<1x4x32xbf16> to vector<4x32xbf16>
    %cst_57 = arith.constant dense<0.000000e+00> : vector<8x32xf32>
    %327 = tpu.matmul %324, %326, %cst_57 {dimension_numbers = #tpu.dot_dimension_numbers<[1], [0], [0], [1], [0, 0, 1, 1], [], []>} : vector<8x4xbf16>, vector<4x32xbf16>, vector<8x32xf32> -> vector<8x32xf32>
    %328 = arith.addf %261, %327 : vector<8x32xf32>
    %cst_58 = arith.constant 0.000000e+00 : f32
    %329 = vector.broadcast %cst_58 : f32 to vector<8x4xf32>
    %330 = vector.extract_strided_slice %53 {offsets = [0, 0, 4], sizes = [8, 1, 1], strides = [1, 1, 1]} : vector<8x8x16xf32> to vector<8x1x1xf32>
    %331 = vector.shape_cast %330 : vector<8x1x1xf32> to vector<8x1xf32>
    %332 = vector.extract_strided_slice %56 {offsets = [0, 0, 0], sizes = [8, 1, 4], strides = [1, 1, 1]} : vector<8x8x4xf32> to vector<8x1x4xf32>
    %333 = vector.shape_cast %332 : vector<8x1x4xf32> to vector<8x4xf32>
    %334 = vector.broadcast %331 : vector<8x1xf32> to vector<8x4xf32>
    %335 = arith.mulf %334, %333 : vector<8x4xf32>
    %336 = arith.addf %329, %335 : vector<8x4xf32>
    %337 = vector.extract_strided_slice %53 {offsets = [0, 1, 4], sizes = [8, 1, 1], strides = [1, 1, 1]} : vector<8x8x16xf32> to vector<8x1x1xf32>
    %338 = vector.shape_cast %337 : vector<8x1x1xf32> to vector<8x1xf32>
    %339 = vector.extract_strided_slice %56 {offsets = [0, 1, 0], sizes = [8, 1, 4], strides = [1, 1, 1]} : vector<8x8x4xf32> to vector<8x1x4xf32>
    %340 = vector.shape_cast %339 : vector<8x1x4xf32> to vector<8x4xf32>
    %341 = vector.broadcast %338 : vector<8x1xf32> to vector<8x4xf32>
    %342 = arith.mulf %341, %340 : vector<8x4xf32>
    %343 = arith.addf %336, %342 : vector<8x4xf32>
    %344 = vector.extract_strided_slice %53 {offsets = [0, 2, 4], sizes = [8, 1, 1], strides = [1, 1, 1]} : vector<8x8x16xf32> to vector<8x1x1xf32>
    %345 = vector.shape_cast %344 : vector<8x1x1xf32> to vector<8x1xf32>
    %346 = vector.extract_strided_slice %56 {offsets = [0, 2, 0], sizes = [8, 1, 4], strides = [1, 1, 1]} : vector<8x8x4xf32> to vector<8x1x4xf32>
    %347 = vector.shape_cast %346 : vector<8x1x4xf32> to vector<8x4xf32>
    %348 = vector.broadcast %345 : vector<8x1xf32> to vector<8x4xf32>
    %349 = arith.mulf %348, %347 : vector<8x4xf32>
    %350 = arith.addf %343, %349 : vector<8x4xf32>
    %351 = vector.extract_strided_slice %53 {offsets = [0, 3, 4], sizes = [8, 1, 1], strides = [1, 1, 1]} : vector<8x8x16xf32> to vector<8x1x1xf32>
    %352 = vector.shape_cast %351 : vector<8x1x1xf32> to vector<8x1xf32>
    %353 = vector.extract_strided_slice %56 {offsets = [0, 3, 0], sizes = [8, 1, 4], strides = [1, 1, 1]} : vector<8x8x4xf32> to vector<8x1x4xf32>
    %354 = vector.shape_cast %353 : vector<8x1x4xf32> to vector<8x4xf32>
    %355 = vector.broadcast %352 : vector<8x1xf32> to vector<8x4xf32>
    %356 = arith.mulf %355, %354 : vector<8x4xf32>
    %357 = arith.addf %350, %356 : vector<8x4xf32>
    %358 = vector.extract_strided_slice %53 {offsets = [0, 4, 4], sizes = [8, 1, 1], strides = [1, 1, 1]} : vector<8x8x16xf32> to vector<8x1x1xf32>
    %359 = vector.shape_cast %358 : vector<8x1x1xf32> to vector<8x1xf32>
    %360 = vector.extract_strided_slice %56 {offsets = [0, 4, 0], sizes = [8, 1, 4], strides = [1, 1, 1]} : vector<8x8x4xf32> to vector<8x1x4xf32>
    %361 = vector.shape_cast %360 : vector<8x1x4xf32> to vector<8x4xf32>
    %362 = vector.broadcast %359 : vector<8x1xf32> to vector<8x4xf32>
    %363 = arith.mulf %362, %361 : vector<8x4xf32>
    %364 = arith.addf %357, %363 : vector<8x4xf32>
    %365 = vector.extract_strided_slice %53 {offsets = [0, 5, 4], sizes = [8, 1, 1], strides = [1, 1, 1]} : vector<8x8x16xf32> to vector<8x1x1xf32>
    %366 = vector.shape_cast %365 : vector<8x1x1xf32> to vector<8x1xf32>
    %367 = vector.extract_strided_slice %56 {offsets = [0, 5, 0], sizes = [8, 1, 4], strides = [1, 1, 1]} : vector<8x8x4xf32> to vector<8x1x4xf32>
    %368 = vector.shape_cast %367 : vector<8x1x4xf32> to vector<8x4xf32>
    %369 = vector.broadcast %366 : vector<8x1xf32> to vector<8x4xf32>
    %370 = arith.mulf %369, %368 : vector<8x4xf32>
    %371 = arith.addf %364, %370 : vector<8x4xf32>
    %372 = vector.extract_strided_slice %53 {offsets = [0, 6, 4], sizes = [8, 1, 1], strides = [1, 1, 1]} : vector<8x8x16xf32> to vector<8x1x1xf32>
    %373 = vector.shape_cast %372 : vector<8x1x1xf32> to vector<8x1xf32>
    %374 = vector.extract_strided_slice %56 {offsets = [0, 6, 0], sizes = [8, 1, 4], strides = [1, 1, 1]} : vector<8x8x4xf32> to vector<8x1x4xf32>
    %375 = vector.shape_cast %374 : vector<8x1x4xf32> to vector<8x4xf32>
    %376 = vector.broadcast %373 : vector<8x1xf32> to vector<8x4xf32>
    %377 = arith.mulf %376, %375 : vector<8x4xf32>
    %378 = arith.addf %371, %377 : vector<8x4xf32>
    %379 = vector.extract_strided_slice %53 {offsets = [0, 7, 4], sizes = [8, 1, 1], strides = [1, 1, 1]} : vector<8x8x16xf32> to vector<8x1x1xf32>
    %380 = vector.shape_cast %379 : vector<8x1x1xf32> to vector<8x1xf32>
    %381 = vector.extract_strided_slice %56 {offsets = [0, 7, 0], sizes = [8, 1, 4], strides = [1, 1, 1]} : vector<8x8x4xf32> to vector<8x1x4xf32>
    %382 = vector.shape_cast %381 : vector<8x1x4xf32> to vector<8x4xf32>
    %383 = vector.broadcast %380 : vector<8x1xf32> to vector<8x4xf32>
    %384 = arith.mulf %383, %382 : vector<8x4xf32>
    %385 = arith.addf %378, %384 : vector<8x4xf32>
    %cst_59 = arith.constant 0.000000e+00 : f32
    %386 = vector.broadcast %cst_59 : f32 to vector<8x4xf32>
    %387 = arith.cmpf ogt, %385, %386 : vector<8x4xf32>
    %cst_60 = arith.constant 2.000000e-01 : f32
    %388 = vector.broadcast %cst_60 : f32 to vector<8x4xf32>
    %389 = arith.mulf %388, %385 : vector<8x4xf32>
    %390 = arith.select %387, %385, %389 : vector<8x4xi1>, vector<8x4xf32>
    %391 = arith.truncf %390 : vector<8x4xf32> to vector<8x4xbf16>
    %c4 = arith.constant 4 : index
    %c0_61 = arith.constant 0 : index
    %c0_62 = arith.constant 0 : index
    %392 = vector.load %arg10[%c4, %c0_61, %c0_62] : memref<16x4x32xbf16, #tpu.memory_space<vmem>>, vector<1x4x32xbf16>
    %393 = vector.shape_cast %392 : vector<1x4x32xbf16> to vector<4x32xbf16>
    %cst_63 = arith.constant dense<0.000000e+00> : vector<8x32xf32>
    %394 = tpu.matmul %391, %393, %cst_63 {dimension_numbers = #tpu.dot_dimension_numbers<[1], [0], [0], [1], [0, 0, 1, 1], [], []>} : vector<8x4xbf16>, vector<4x32xbf16>, vector<8x32xf32> -> vector<8x32xf32>
    %395 = arith.addf %328, %394 : vector<8x32xf32>
    %cst_64 = arith.constant 0.000000e+00 : f32
    %396 = vector.broadcast %cst_64 : f32 to vector<8x4xf32>
    %397 = vector.extract_strided_slice %53 {offsets = [0, 0, 5], sizes = [8, 1, 1], strides = [1, 1, 1]} : vector<8x8x16xf32> to vector<8x1x1xf32>
    %398 = vector.shape_cast %397 : vector<8x1x1xf32> to vector<8x1xf32>
    %399 = vector.extract_strided_slice %56 {offsets = [0, 0, 0], sizes = [8, 1, 4], strides = [1, 1, 1]} : vector<8x8x4xf32> to vector<8x1x4xf32>
    %400 = vector.shape_cast %399 : vector<8x1x4xf32> to vector<8x4xf32>
    %401 = vector.broadcast %398 : vector<8x1xf32> to vector<8x4xf32>
    %402 = arith.mulf %401, %400 : vector<8x4xf32>
    %403 = arith.addf %396, %402 : vector<8x4xf32>
    %404 = vector.extract_strided_slice %53 {offsets = [0, 1, 5], sizes = [8, 1, 1], strides = [1, 1, 1]} : vector<8x8x16xf32> to vector<8x1x1xf32>
    %405 = vector.shape_cast %404 : vector<8x1x1xf32> to vector<8x1xf32>
    %406 = vector.extract_strided_slice %56 {offsets = [0, 1, 0], sizes = [8, 1, 4], strides = [1, 1, 1]} : vector<8x8x4xf32> to vector<8x1x4xf32>
    %407 = vector.shape_cast %406 : vector<8x1x4xf32> to vector<8x4xf32>
    %408 = vector.broadcast %405 : vector<8x1xf32> to vector<8x4xf32>
    %409 = arith.mulf %408, %407 : vector<8x4xf32>
    %410 = arith.addf %403, %409 : vector<8x4xf32>
    %411 = vector.extract_strided_slice %53 {offsets = [0, 2, 5], sizes = [8, 1, 1], strides = [1, 1, 1]} : vector<8x8x16xf32> to vector<8x1x1xf32>
    %412 = vector.shape_cast %411 : vector<8x1x1xf32> to vector<8x1xf32>
    %413 = vector.extract_strided_slice %56 {offsets = [0, 2, 0], sizes = [8, 1, 4], strides = [1, 1, 1]} : vector<8x8x4xf32> to vector<8x1x4xf32>
    %414 = vector.shape_cast %413 : vector<8x1x4xf32> to vector<8x4xf32>
    %415 = vector.broadcast %412 : vector<8x1xf32> to vector<8x4xf32>
    %416 = arith.mulf %415, %414 : vector<8x4xf32>
    %417 = arith.addf %410, %416 : vector<8x4xf32>
    %418 = vector.extract_strided_slice %53 {offsets = [0, 3, 5], sizes = [8, 1, 1], strides = [1, 1, 1]} : vector<8x8x16xf32> to vector<8x1x1xf32>
    %419 = vector.shape_cast %418 : vector<8x1x1xf32> to vector<8x1xf32>
    %420 = vector.extract_strided_slice %56 {offsets = [0, 3, 0], sizes = [8, 1, 4], strides = [1, 1, 1]} : vector<8x8x4xf32> to vector<8x1x4xf32>
    %421 = vector.shape_cast %420 : vector<8x1x4xf32> to vector<8x4xf32>
    %422 = vector.broadcast %419 : vector<8x1xf32> to vector<8x4xf32>
    %423 = arith.mulf %422, %421 : vector<8x4xf32>
    %424 = arith.addf %417, %423 : vector<8x4xf32>
    %425 = vector.extract_strided_slice %53 {offsets = [0, 4, 5], sizes = [8, 1, 1], strides = [1, 1, 1]} : vector<8x8x16xf32> to vector<8x1x1xf32>
    %426 = vector.shape_cast %425 : vector<8x1x1xf32> to vector<8x1xf32>
    %427 = vector.extract_strided_slice %56 {offsets = [0, 4, 0], sizes = [8, 1, 4], strides = [1, 1, 1]} : vector<8x8x4xf32> to vector<8x1x4xf32>
    %428 = vector.shape_cast %427 : vector<8x1x4xf32> to vector<8x4xf32>
    %429 = vector.broadcast %426 : vector<8x1xf32> to vector<8x4xf32>
    %430 = arith.mulf %429, %428 : vector<8x4xf32>
    %431 = arith.addf %424, %430 : vector<8x4xf32>
    %432 = vector.extract_strided_slice %53 {offsets = [0, 5, 5], sizes = [8, 1, 1], strides = [1, 1, 1]} : vector<8x8x16xf32> to vector<8x1x1xf32>
    %433 = vector.shape_cast %432 : vector<8x1x1xf32> to vector<8x1xf32>
    %434 = vector.extract_strided_slice %56 {offsets = [0, 5, 0], sizes = [8, 1, 4], strides = [1, 1, 1]} : vector<8x8x4xf32> to vector<8x1x4xf32>
    %435 = vector.shape_cast %434 : vector<8x1x4xf32> to vector<8x4xf32>
    %436 = vector.broadcast %433 : vector<8x1xf32> to vector<8x4xf32>
    %437 = arith.mulf %436, %435 : vector<8x4xf32>
    %438 = arith.addf %431, %437 : vector<8x4xf32>
    %439 = vector.extract_strided_slice %53 {offsets = [0, 6, 5], sizes = [8, 1, 1], strides = [1, 1, 1]} : vector<8x8x16xf32> to vector<8x1x1xf32>
    %440 = vector.shape_cast %439 : vector<8x1x1xf32> to vector<8x1xf32>
    %441 = vector.extract_strided_slice %56 {offsets = [0, 6, 0], sizes = [8, 1, 4], strides = [1, 1, 1]} : vector<8x8x4xf32> to vector<8x1x4xf32>
    %442 = vector.shape_cast %441 : vector<8x1x4xf32> to vector<8x4xf32>
    %443 = vector.broadcast %440 : vector<8x1xf32> to vector<8x4xf32>
    %444 = arith.mulf %443, %442 : vector<8x4xf32>
    %445 = arith.addf %438, %444 : vector<8x4xf32>
    %446 = vector.extract_strided_slice %53 {offsets = [0, 7, 5], sizes = [8, 1, 1], strides = [1, 1, 1]} : vector<8x8x16xf32> to vector<8x1x1xf32>
    %447 = vector.shape_cast %446 : vector<8x1x1xf32> to vector<8x1xf32>
    %448 = vector.extract_strided_slice %56 {offsets = [0, 7, 0], sizes = [8, 1, 4], strides = [1, 1, 1]} : vector<8x8x4xf32> to vector<8x1x4xf32>
    %449 = vector.shape_cast %448 : vector<8x1x4xf32> to vector<8x4xf32>
    %450 = vector.broadcast %447 : vector<8x1xf32> to vector<8x4xf32>
    %451 = arith.mulf %450, %449 : vector<8x4xf32>
    %452 = arith.addf %445, %451 : vector<8x4xf32>
    %cst_65 = arith.constant 0.000000e+00 : f32
    %453 = vector.broadcast %cst_65 : f32 to vector<8x4xf32>
    %454 = arith.cmpf ogt, %452, %453 : vector<8x4xf32>
    %cst_66 = arith.constant 2.000000e-01 : f32
    %455 = vector.broadcast %cst_66 : f32 to vector<8x4xf32>
    %456 = arith.mulf %455, %452 : vector<8x4xf32>
    %457 = arith.select %454, %452, %456 : vector<8x4xi1>, vector<8x4xf32>
    %458 = arith.truncf %457 : vector<8x4xf32> to vector<8x4xbf16>
    %c5 = arith.constant 5 : index
    %c0_67 = arith.constant 0 : index
    %c0_68 = arith.constant 0 : index
    %459 = vector.load %arg10[%c5, %c0_67, %c0_68] : memref<16x4x32xbf16, #tpu.memory_space<vmem>>, vector<1x4x32xbf16>
    %460 = vector.shape_cast %459 : vector<1x4x32xbf16> to vector<4x32xbf16>
    %cst_69 = arith.constant dense<0.000000e+00> : vector<8x32xf32>
    %461 = tpu.matmul %458, %460, %cst_69 {dimension_numbers = #tpu.dot_dimension_numbers<[1], [0], [0], [1], [0, 0, 1, 1], [], []>} : vector<8x4xbf16>, vector<4x32xbf16>, vector<8x32xf32> -> vector<8x32xf32>
    %462 = arith.addf %395, %461 : vector<8x32xf32>
    %cst_70 = arith.constant 0.000000e+00 : f32
    %463 = vector.broadcast %cst_70 : f32 to vector<8x4xf32>
    %464 = vector.extract_strided_slice %53 {offsets = [0, 0, 6], sizes = [8, 1, 1], strides = [1, 1, 1]} : vector<8x8x16xf32> to vector<8x1x1xf32>
    %465 = vector.shape_cast %464 : vector<8x1x1xf32> to vector<8x1xf32>
    %466 = vector.extract_strided_slice %56 {offsets = [0, 0, 0], sizes = [8, 1, 4], strides = [1, 1, 1]} : vector<8x8x4xf32> to vector<8x1x4xf32>
    %467 = vector.shape_cast %466 : vector<8x1x4xf32> to vector<8x4xf32>
    %468 = vector.broadcast %465 : vector<8x1xf32> to vector<8x4xf32>
    %469 = arith.mulf %468, %467 : vector<8x4xf32>
    %470 = arith.addf %463, %469 : vector<8x4xf32>
    %471 = vector.extract_strided_slice %53 {offsets = [0, 1, 6], sizes = [8, 1, 1], strides = [1, 1, 1]} : vector<8x8x16xf32> to vector<8x1x1xf32>
    %472 = vector.shape_cast %471 : vector<8x1x1xf32> to vector<8x1xf32>
    %473 = vector.extract_strided_slice %56 {offsets = [0, 1, 0], sizes = [8, 1, 4], strides = [1, 1, 1]} : vector<8x8x4xf32> to vector<8x1x4xf32>
    %474 = vector.shape_cast %473 : vector<8x1x4xf32> to vector<8x4xf32>
    %475 = vector.broadcast %472 : vector<8x1xf32> to vector<8x4xf32>
    %476 = arith.mulf %475, %474 : vector<8x4xf32>
    %477 = arith.addf %470, %476 : vector<8x4xf32>
    %478 = vector.extract_strided_slice %53 {offsets = [0, 2, 6], sizes = [8, 1, 1], strides = [1, 1, 1]} : vector<8x8x16xf32> to vector<8x1x1xf32>
    %479 = vector.shape_cast %478 : vector<8x1x1xf32> to vector<8x1xf32>
    %480 = vector.extract_strided_slice %56 {offsets = [0, 2, 0], sizes = [8, 1, 4], strides = [1, 1, 1]} : vector<8x8x4xf32> to vector<8x1x4xf32>
    %481 = vector.shape_cast %480 : vector<8x1x4xf32> to vector<8x4xf32>
    %482 = vector.broadcast %479 : vector<8x1xf32> to vector<8x4xf32>
    %483 = arith.mulf %482, %481 : vector<8x4xf32>
    %484 = arith.addf %477, %483 : vector<8x4xf32>
    %485 = vector.extract_strided_slice %53 {offsets = [0, 3, 6], sizes = [8, 1, 1], strides = [1, 1, 1]} : vector<8x8x16xf32> to vector<8x1x1xf32>
    %486 = vector.shape_cast %485 : vector<8x1x1xf32> to vector<8x1xf32>
    %487 = vector.extract_strided_slice %56 {offsets = [0, 3, 0], sizes = [8, 1, 4], strides = [1, 1, 1]} : vector<8x8x4xf32> to vector<8x1x4xf32>
    %488 = vector.shape_cast %487 : vector<8x1x4xf32> to vector<8x4xf32>
    %489 = vector.broadcast %486 : vector<8x1xf32> to vector<8x4xf32>
    %490 = arith.mulf %489, %488 : vector<8x4xf32>
    %491 = arith.addf %484, %490 : vector<8x4xf32>
    %492 = vector.extract_strided_slice %53 {offsets = [0, 4, 6], sizes = [8, 1, 1], strides = [1, 1, 1]} : vector<8x8x16xf32> to vector<8x1x1xf32>
    %493 = vector.shape_cast %492 : vector<8x1x1xf32> to vector<8x1xf32>
    %494 = vector.extract_strided_slice %56 {offsets = [0, 4, 0], sizes = [8, 1, 4], strides = [1, 1, 1]} : vector<8x8x4xf32> to vector<8x1x4xf32>
    %495 = vector.shape_cast %494 : vector<8x1x4xf32> to vector<8x4xf32>
    %496 = vector.broadcast %493 : vector<8x1xf32> to vector<8x4xf32>
    %497 = arith.mulf %496, %495 : vector<8x4xf32>
    %498 = arith.addf %491, %497 : vector<8x4xf32>
    %499 = vector.extract_strided_slice %53 {offsets = [0, 5, 6], sizes = [8, 1, 1], strides = [1, 1, 1]} : vector<8x8x16xf32> to vector<8x1x1xf32>
    %500 = vector.shape_cast %499 : vector<8x1x1xf32> to vector<8x1xf32>
    %501 = vector.extract_strided_slice %56 {offsets = [0, 5, 0], sizes = [8, 1, 4], strides = [1, 1, 1]} : vector<8x8x4xf32> to vector<8x1x4xf32>
    %502 = vector.shape_cast %501 : vector<8x1x4xf32> to vector<8x4xf32>
    %503 = vector.broadcast %500 : vector<8x1xf32> to vector<8x4xf32>
    %504 = arith.mulf %503, %502 : vector<8x4xf32>
    %505 = arith.addf %498, %504 : vector<8x4xf32>
    %506 = vector.extract_strided_slice %53 {offsets = [0, 6, 6], sizes = [8, 1, 1], strides = [1, 1, 1]} : vector<8x8x16xf32> to vector<8x1x1xf32>
    %507 = vector.shape_cast %506 : vector<8x1x1xf32> to vector<8x1xf32>
    %508 = vector.extract_strided_slice %56 {offsets = [0, 6, 0], sizes = [8, 1, 4], strides = [1, 1, 1]} : vector<8x8x4xf32> to vector<8x1x4xf32>
    %509 = vector.shape_cast %508 : vector<8x1x4xf32> to vector<8x4xf32>
    %510 = vector.broadcast %507 : vector<8x1xf32> to vector<8x4xf32>
    %511 = arith.mulf %510, %509 : vector<8x4xf32>
    %512 = arith.addf %505, %511 : vector<8x4xf32>
    %513 = vector.extract_strided_slice %53 {offsets = [0, 7, 6], sizes = [8, 1, 1], strides = [1, 1, 1]} : vector<8x8x16xf32> to vector<8x1x1xf32>
    %514 = vector.shape_cast %513 : vector<8x1x1xf32> to vector<8x1xf32>
    %515 = vector.extract_strided_slice %56 {offsets = [0, 7, 0], sizes = [8, 1, 4], strides = [1, 1, 1]} : vector<8x8x4xf32> to vector<8x1x4xf32>
    %516 = vector.shape_cast %515 : vector<8x1x4xf32> to vector<8x4xf32>
    %517 = vector.broadcast %514 : vector<8x1xf32> to vector<8x4xf32>
    %518 = arith.mulf %517, %516 : vector<8x4xf32>
    %519 = arith.addf %512, %518 : vector<8x4xf32>
    %cst_71 = arith.constant 0.000000e+00 : f32
    %520 = vector.broadcast %cst_71 : f32 to vector<8x4xf32>
    %521 = arith.cmpf ogt, %519, %520 : vector<8x4xf32>
    %cst_72 = arith.constant 2.000000e-01 : f32
    %522 = vector.broadcast %cst_72 : f32 to vector<8x4xf32>
    %523 = arith.mulf %522, %519 : vector<8x4xf32>
    %524 = arith.select %521, %519, %523 : vector<8x4xi1>, vector<8x4xf32>
    %525 = arith.truncf %524 : vector<8x4xf32> to vector<8x4xbf16>
    %c6 = arith.constant 6 : index
    %c0_73 = arith.constant 0 : index
    %c0_74 = arith.constant 0 : index
    %526 = vector.load %arg10[%c6, %c0_73, %c0_74] : memref<16x4x32xbf16, #tpu.memory_space<vmem>>, vector<1x4x32xbf16>
    %527 = vector.shape_cast %526 : vector<1x4x32xbf16> to vector<4x32xbf16>
    %cst_75 = arith.constant dense<0.000000e+00> : vector<8x32xf32>
    %528 = tpu.matmul %525, %527, %cst_75 {dimension_numbers = #tpu.dot_dimension_numbers<[1], [0], [0], [1], [0, 0, 1, 1], [], []>} : vector<8x4xbf16>, vector<4x32xbf16>, vector<8x32xf32> -> vector<8x32xf32>
    %529 = arith.addf %462, %528 : vector<8x32xf32>
    %cst_76 = arith.constant 0.000000e+00 : f32
    %530 = vector.broadcast %cst_76 : f32 to vector<8x4xf32>
    %531 = vector.extract_strided_slice %53 {offsets = [0, 0, 7], sizes = [8, 1, 1], strides = [1, 1, 1]} : vector<8x8x16xf32> to vector<8x1x1xf32>
    %532 = vector.shape_cast %531 : vector<8x1x1xf32> to vector<8x1xf32>
    %533 = vector.extract_strided_slice %56 {offsets = [0, 0, 0], sizes = [8, 1, 4], strides = [1, 1, 1]} : vector<8x8x4xf32> to vector<8x1x4xf32>
    %534 = vector.shape_cast %533 : vector<8x1x4xf32> to vector<8x4xf32>
    %535 = vector.broadcast %532 : vector<8x1xf32> to vector<8x4xf32>
    %536 = arith.mulf %535, %534 : vector<8x4xf32>
    %537 = arith.addf %530, %536 : vector<8x4xf32>
    %538 = vector.extract_strided_slice %53 {offsets = [0, 1, 7], sizes = [8, 1, 1], strides = [1, 1, 1]} : vector<8x8x16xf32> to vector<8x1x1xf32>
    %539 = vector.shape_cast %538 : vector<8x1x1xf32> to vector<8x1xf32>
    %540 = vector.extract_strided_slice %56 {offsets = [0, 1, 0], sizes = [8, 1, 4], strides = [1, 1, 1]} : vector<8x8x4xf32> to vector<8x1x4xf32>
    %541 = vector.shape_cast %540 : vector<8x1x4xf32> to vector<8x4xf32>
    %542 = vector.broadcast %539 : vector<8x1xf32> to vector<8x4xf32>
    %543 = arith.mulf %542, %541 : vector<8x4xf32>
    %544 = arith.addf %537, %543 : vector<8x4xf32>
    %545 = vector.extract_strided_slice %53 {offsets = [0, 2, 7], sizes = [8, 1, 1], strides = [1, 1, 1]} : vector<8x8x16xf32> to vector<8x1x1xf32>
    %546 = vector.shape_cast %545 : vector<8x1x1xf32> to vector<8x1xf32>
    %547 = vector.extract_strided_slice %56 {offsets = [0, 2, 0], sizes = [8, 1, 4], strides = [1, 1, 1]} : vector<8x8x4xf32> to vector<8x1x4xf32>
    %548 = vector.shape_cast %547 : vector<8x1x4xf32> to vector<8x4xf32>
    %549 = vector.broadcast %546 : vector<8x1xf32> to vector<8x4xf32>
    %550 = arith.mulf %549, %548 : vector<8x4xf32>
    %551 = arith.addf %544, %550 : vector<8x4xf32>
    %552 = vector.extract_strided_slice %53 {offsets = [0, 3, 7], sizes = [8, 1, 1], strides = [1, 1, 1]} : vector<8x8x16xf32> to vector<8x1x1xf32>
    %553 = vector.shape_cast %552 : vector<8x1x1xf32> to vector<8x1xf32>
    %554 = vector.extract_strided_slice %56 {offsets = [0, 3, 0], sizes = [8, 1, 4], strides = [1, 1, 1]} : vector<8x8x4xf32> to vector<8x1x4xf32>
    %555 = vector.shape_cast %554 : vector<8x1x4xf32> to vector<8x4xf32>
    %556 = vector.broadcast %553 : vector<8x1xf32> to vector<8x4xf32>
    %557 = arith.mulf %556, %555 : vector<8x4xf32>
    %558 = arith.addf %551, %557 : vector<8x4xf32>
    %559 = vector.extract_strided_slice %53 {offsets = [0, 4, 7], sizes = [8, 1, 1], strides = [1, 1, 1]} : vector<8x8x16xf32> to vector<8x1x1xf32>
    %560 = vector.shape_cast %559 : vector<8x1x1xf32> to vector<8x1xf32>
    %561 = vector.extract_strided_slice %56 {offsets = [0, 4, 0], sizes = [8, 1, 4], strides = [1, 1, 1]} : vector<8x8x4xf32> to vector<8x1x4xf32>
    %562 = vector.shape_cast %561 : vector<8x1x4xf32> to vector<8x4xf32>
    %563 = vector.broadcast %560 : vector<8x1xf32> to vector<8x4xf32>
    %564 = arith.mulf %563, %562 : vector<8x4xf32>
    %565 = arith.addf %558, %564 : vector<8x4xf32>
    %566 = vector.extract_strided_slice %53 {offsets = [0, 5, 7], sizes = [8, 1, 1], strides = [1, 1, 1]} : vector<8x8x16xf32> to vector<8x1x1xf32>
    %567 = vector.shape_cast %566 : vector<8x1x1xf32> to vector<8x1xf32>
    %568 = vector.extract_strided_slice %56 {offsets = [0, 5, 0], sizes = [8, 1, 4], strides = [1, 1, 1]} : vector<8x8x4xf32> to vector<8x1x4xf32>
    %569 = vector.shape_cast %568 : vector<8x1x4xf32> to vector<8x4xf32>
    %570 = vector.broadcast %567 : vector<8x1xf32> to vector<8x4xf32>
    %571 = arith.mulf %570, %569 : vector<8x4xf32>
    %572 = arith.addf %565, %571 : vector<8x4xf32>
    %573 = vector.extract_strided_slice %53 {offsets = [0, 6, 7], sizes = [8, 1, 1], strides = [1, 1, 1]} : vector<8x8x16xf32> to vector<8x1x1xf32>
    %574 = vector.shape_cast %573 : vector<8x1x1xf32> to vector<8x1xf32>
    %575 = vector.extract_strided_slice %56 {offsets = [0, 6, 0], sizes = [8, 1, 4], strides = [1, 1, 1]} : vector<8x8x4xf32> to vector<8x1x4xf32>
    %576 = vector.shape_cast %575 : vector<8x1x4xf32> to vector<8x4xf32>
    %577 = vector.broadcast %574 : vector<8x1xf32> to vector<8x4xf32>
    %578 = arith.mulf %577, %576 : vector<8x4xf32>
    %579 = arith.addf %572, %578 : vector<8x4xf32>
    %580 = vector.extract_strided_slice %53 {offsets = [0, 7, 7], sizes = [8, 1, 1], strides = [1, 1, 1]} : vector<8x8x16xf32> to vector<8x1x1xf32>
    %581 = vector.shape_cast %580 : vector<8x1x1xf32> to vector<8x1xf32>
    %582 = vector.extract_strided_slice %56 {offsets = [0, 7, 0], sizes = [8, 1, 4], strides = [1, 1, 1]} : vector<8x8x4xf32> to vector<8x1x4xf32>
    %583 = vector.shape_cast %582 : vector<8x1x4xf32> to vector<8x4xf32>
    %584 = vector.broadcast %581 : vector<8x1xf32> to vector<8x4xf32>
    %585 = arith.mulf %584, %583 : vector<8x4xf32>
    %586 = arith.addf %579, %585 : vector<8x4xf32>
    %cst_77 = arith.constant 0.000000e+00 : f32
    %587 = vector.broadcast %cst_77 : f32 to vector<8x4xf32>
    %588 = arith.cmpf ogt, %586, %587 : vector<8x4xf32>
    %cst_78 = arith.constant 2.000000e-01 : f32
    %589 = vector.broadcast %cst_78 : f32 to vector<8x4xf32>
    %590 = arith.mulf %589, %586 : vector<8x4xf32>
    %591 = arith.select %588, %586, %590 : vector<8x4xi1>, vector<8x4xf32>
    %592 = arith.truncf %591 : vector<8x4xf32> to vector<8x4xbf16>
    %c7 = arith.constant 7 : index
    %c0_79 = arith.constant 0 : index
    %c0_80 = arith.constant 0 : index
    %593 = vector.load %arg10[%c7, %c0_79, %c0_80] : memref<16x4x32xbf16, #tpu.memory_space<vmem>>, vector<1x4x32xbf16>
    %594 = vector.shape_cast %593 : vector<1x4x32xbf16> to vector<4x32xbf16>
    %cst_81 = arith.constant dense<0.000000e+00> : vector<8x32xf32>
    %595 = tpu.matmul %592, %594, %cst_81 {dimension_numbers = #tpu.dot_dimension_numbers<[1], [0], [0], [1], [0, 0, 1, 1], [], []>} : vector<8x4xbf16>, vector<4x32xbf16>, vector<8x32xf32> -> vector<8x32xf32>
    %596 = arith.addf %529, %595 : vector<8x32xf32>
    %cst_82 = arith.constant 0.000000e+00 : f32
    %597 = vector.broadcast %cst_82 : f32 to vector<8x4xf32>
    %598 = vector.extract_strided_slice %53 {offsets = [0, 0, 8], sizes = [8, 1, 1], strides = [1, 1, 1]} : vector<8x8x16xf32> to vector<8x1x1xf32>
    %599 = vector.shape_cast %598 : vector<8x1x1xf32> to vector<8x1xf32>
    %600 = vector.extract_strided_slice %56 {offsets = [0, 0, 0], sizes = [8, 1, 4], strides = [1, 1, 1]} : vector<8x8x4xf32> to vector<8x1x4xf32>
    %601 = vector.shape_cast %600 : vector<8x1x4xf32> to vector<8x4xf32>
    %602 = vector.broadcast %599 : vector<8x1xf32> to vector<8x4xf32>
    %603 = arith.mulf %602, %601 : vector<8x4xf32>
    %604 = arith.addf %597, %603 : vector<8x4xf32>
    %605 = vector.extract_strided_slice %53 {offsets = [0, 1, 8], sizes = [8, 1, 1], strides = [1, 1, 1]} : vector<8x8x16xf32> to vector<8x1x1xf32>
    %606 = vector.shape_cast %605 : vector<8x1x1xf32> to vector<8x1xf32>
    %607 = vector.extract_strided_slice %56 {offsets = [0, 1, 0], sizes = [8, 1, 4], strides = [1, 1, 1]} : vector<8x8x4xf32> to vector<8x1x4xf32>
    %608 = vector.shape_cast %607 : vector<8x1x4xf32> to vector<8x4xf32>
    %609 = vector.broadcast %606 : vector<8x1xf32> to vector<8x4xf32>
    %610 = arith.mulf %609, %608 : vector<8x4xf32>
    %611 = arith.addf %604, %610 : vector<8x4xf32>
    %612 = vector.extract_strided_slice %53 {offsets = [0, 2, 8], sizes = [8, 1, 1], strides = [1, 1, 1]} : vector<8x8x16xf32> to vector<8x1x1xf32>
    %613 = vector.shape_cast %612 : vector<8x1x1xf32> to vector<8x1xf32>
    %614 = vector.extract_strided_slice %56 {offsets = [0, 2, 0], sizes = [8, 1, 4], strides = [1, 1, 1]} : vector<8x8x4xf32> to vector<8x1x4xf32>
    %615 = vector.shape_cast %614 : vector<8x1x4xf32> to vector<8x4xf32>
    %616 = vector.broadcast %613 : vector<8x1xf32> to vector<8x4xf32>
    %617 = arith.mulf %616, %615 : vector<8x4xf32>
    %618 = arith.addf %611, %617 : vector<8x4xf32>
    %619 = vector.extract_strided_slice %53 {offsets = [0, 3, 8], sizes = [8, 1, 1], strides = [1, 1, 1]} : vector<8x8x16xf32> to vector<8x1x1xf32>
    %620 = vector.shape_cast %619 : vector<8x1x1xf32> to vector<8x1xf32>
    %621 = vector.extract_strided_slice %56 {offsets = [0, 3, 0], sizes = [8, 1, 4], strides = [1, 1, 1]} : vector<8x8x4xf32> to vector<8x1x4xf32>
    %622 = vector.shape_cast %621 : vector<8x1x4xf32> to vector<8x4xf32>
    %623 = vector.broadcast %620 : vector<8x1xf32> to vector<8x4xf32>
    %624 = arith.mulf %623, %622 : vector<8x4xf32>
    %625 = arith.addf %618, %624 : vector<8x4xf32>
    %626 = vector.extract_strided_slice %53 {offsets = [0, 4, 8], sizes = [8, 1, 1], strides = [1, 1, 1]} : vector<8x8x16xf32> to vector<8x1x1xf32>
    %627 = vector.shape_cast %626 : vector<8x1x1xf32> to vector<8x1xf32>
    %628 = vector.extract_strided_slice %56 {offsets = [0, 4, 0], sizes = [8, 1, 4], strides = [1, 1, 1]} : vector<8x8x4xf32> to vector<8x1x4xf32>
    %629 = vector.shape_cast %628 : vector<8x1x4xf32> to vector<8x4xf32>
    %630 = vector.broadcast %627 : vector<8x1xf32> to vector<8x4xf32>
    %631 = arith.mulf %630, %629 : vector<8x4xf32>
    %632 = arith.addf %625, %631 : vector<8x4xf32>
    %633 = vector.extract_strided_slice %53 {offsets = [0, 5, 8], sizes = [8, 1, 1], strides = [1, 1, 1]} : vector<8x8x16xf32> to vector<8x1x1xf32>
    %634 = vector.shape_cast %633 : vector<8x1x1xf32> to vector<8x1xf32>
    %635 = vector.extract_strided_slice %56 {offsets = [0, 5, 0], sizes = [8, 1, 4], strides = [1, 1, 1]} : vector<8x8x4xf32> to vector<8x1x4xf32>
    %636 = vector.shape_cast %635 : vector<8x1x4xf32> to vector<8x4xf32>
    %637 = vector.broadcast %634 : vector<8x1xf32> to vector<8x4xf32>
    %638 = arith.mulf %637, %636 : vector<8x4xf32>
    %639 = arith.addf %632, %638 : vector<8x4xf32>
    %640 = vector.extract_strided_slice %53 {offsets = [0, 6, 8], sizes = [8, 1, 1], strides = [1, 1, 1]} : vector<8x8x16xf32> to vector<8x1x1xf32>
    %641 = vector.shape_cast %640 : vector<8x1x1xf32> to vector<8x1xf32>
    %642 = vector.extract_strided_slice %56 {offsets = [0, 6, 0], sizes = [8, 1, 4], strides = [1, 1, 1]} : vector<8x8x4xf32> to vector<8x1x4xf32>
    %643 = vector.shape_cast %642 : vector<8x1x4xf32> to vector<8x4xf32>
    %644 = vector.broadcast %641 : vector<8x1xf32> to vector<8x4xf32>
    %645 = arith.mulf %644, %643 : vector<8x4xf32>
    %646 = arith.addf %639, %645 : vector<8x4xf32>
    %647 = vector.extract_strided_slice %53 {offsets = [0, 7, 8], sizes = [8, 1, 1], strides = [1, 1, 1]} : vector<8x8x16xf32> to vector<8x1x1xf32>
    %648 = vector.shape_cast %647 : vector<8x1x1xf32> to vector<8x1xf32>
    %649 = vector.extract_strided_slice %56 {offsets = [0, 7, 0], sizes = [8, 1, 4], strides = [1, 1, 1]} : vector<8x8x4xf32> to vector<8x1x4xf32>
    %650 = vector.shape_cast %649 : vector<8x1x4xf32> to vector<8x4xf32>
    %651 = vector.broadcast %648 : vector<8x1xf32> to vector<8x4xf32>
    %652 = arith.mulf %651, %650 : vector<8x4xf32>
    %653 = arith.addf %646, %652 : vector<8x4xf32>
    %cst_83 = arith.constant 0.000000e+00 : f32
    %654 = vector.broadcast %cst_83 : f32 to vector<8x4xf32>
    %655 = arith.cmpf ogt, %653, %654 : vector<8x4xf32>
    %cst_84 = arith.constant 2.000000e-01 : f32
    %656 = vector.broadcast %cst_84 : f32 to vector<8x4xf32>
    %657 = arith.mulf %656, %653 : vector<8x4xf32>
    %658 = arith.select %655, %653, %657 : vector<8x4xi1>, vector<8x4xf32>
    %659 = arith.truncf %658 : vector<8x4xf32> to vector<8x4xbf16>
    %c8 = arith.constant 8 : index
    %c0_85 = arith.constant 0 : index
    %c0_86 = arith.constant 0 : index
    %660 = vector.load %arg10[%c8, %c0_85, %c0_86] : memref<16x4x32xbf16, #tpu.memory_space<vmem>>, vector<1x4x32xbf16>
    %661 = vector.shape_cast %660 : vector<1x4x32xbf16> to vector<4x32xbf16>
    %cst_87 = arith.constant dense<0.000000e+00> : vector<8x32xf32>
    %662 = tpu.matmul %659, %661, %cst_87 {dimension_numbers = #tpu.dot_dimension_numbers<[1], [0], [0], [1], [0, 0, 1, 1], [], []>} : vector<8x4xbf16>, vector<4x32xbf16>, vector<8x32xf32> -> vector<8x32xf32>
    %663 = arith.addf %596, %662 : vector<8x32xf32>
    %cst_88 = arith.constant 0.000000e+00 : f32
    %664 = vector.broadcast %cst_88 : f32 to vector<8x4xf32>
    %665 = vector.extract_strided_slice %53 {offsets = [0, 0, 9], sizes = [8, 1, 1], strides = [1, 1, 1]} : vector<8x8x16xf32> to vector<8x1x1xf32>
    %666 = vector.shape_cast %665 : vector<8x1x1xf32> to vector<8x1xf32>
    %667 = vector.extract_strided_slice %56 {offsets = [0, 0, 0], sizes = [8, 1, 4], strides = [1, 1, 1]} : vector<8x8x4xf32> to vector<8x1x4xf32>
    %668 = vector.shape_cast %667 : vector<8x1x4xf32> to vector<8x4xf32>
    %669 = vector.broadcast %666 : vector<8x1xf32> to vector<8x4xf32>
    %670 = arith.mulf %669, %668 : vector<8x4xf32>
    %671 = arith.addf %664, %670 : vector<8x4xf32>
    %672 = vector.extract_strided_slice %53 {offsets = [0, 1, 9], sizes = [8, 1, 1], strides = [1, 1, 1]} : vector<8x8x16xf32> to vector<8x1x1xf32>
    %673 = vector.shape_cast %672 : vector<8x1x1xf32> to vector<8x1xf32>
    %674 = vector.extract_strided_slice %56 {offsets = [0, 1, 0], sizes = [8, 1, 4], strides = [1, 1, 1]} : vector<8x8x4xf32> to vector<8x1x4xf32>
    %675 = vector.shape_cast %674 : vector<8x1x4xf32> to vector<8x4xf32>
    %676 = vector.broadcast %673 : vector<8x1xf32> to vector<8x4xf32>
    %677 = arith.mulf %676, %675 : vector<8x4xf32>
    %678 = arith.addf %671, %677 : vector<8x4xf32>
    %679 = vector.extract_strided_slice %53 {offsets = [0, 2, 9], sizes = [8, 1, 1], strides = [1, 1, 1]} : vector<8x8x16xf32> to vector<8x1x1xf32>
    %680 = vector.shape_cast %679 : vector<8x1x1xf32> to vector<8x1xf32>
    %681 = vector.extract_strided_slice %56 {offsets = [0, 2, 0], sizes = [8, 1, 4], strides = [1, 1, 1]} : vector<8x8x4xf32> to vector<8x1x4xf32>
    %682 = vector.shape_cast %681 : vector<8x1x4xf32> to vector<8x4xf32>
    %683 = vector.broadcast %680 : vector<8x1xf32> to vector<8x4xf32>
    %684 = arith.mulf %683, %682 : vector<8x4xf32>
    %685 = arith.addf %678, %684 : vector<8x4xf32>
    %686 = vector.extract_strided_slice %53 {offsets = [0, 3, 9], sizes = [8, 1, 1], strides = [1, 1, 1]} : vector<8x8x16xf32> to vector<8x1x1xf32>
    %687 = vector.shape_cast %686 : vector<8x1x1xf32> to vector<8x1xf32>
    %688 = vector.extract_strided_slice %56 {offsets = [0, 3, 0], sizes = [8, 1, 4], strides = [1, 1, 1]} : vector<8x8x4xf32> to vector<8x1x4xf32>
    %689 = vector.shape_cast %688 : vector<8x1x4xf32> to vector<8x4xf32>
    %690 = vector.broadcast %687 : vector<8x1xf32> to vector<8x4xf32>
    %691 = arith.mulf %690, %689 : vector<8x4xf32>
    %692 = arith.addf %685, %691 : vector<8x4xf32>
    %693 = vector.extract_strided_slice %53 {offsets = [0, 4, 9], sizes = [8, 1, 1], strides = [1, 1, 1]} : vector<8x8x16xf32> to vector<8x1x1xf32>
    %694 = vector.shape_cast %693 : vector<8x1x1xf32> to vector<8x1xf32>
    %695 = vector.extract_strided_slice %56 {offsets = [0, 4, 0], sizes = [8, 1, 4], strides = [1, 1, 1]} : vector<8x8x4xf32> to vector<8x1x4xf32>
    %696 = vector.shape_cast %695 : vector<8x1x4xf32> to vector<8x4xf32>
    %697 = vector.broadcast %694 : vector<8x1xf32> to vector<8x4xf32>
    %698 = arith.mulf %697, %696 : vector<8x4xf32>
    %699 = arith.addf %692, %698 : vector<8x4xf32>
    %700 = vector.extract_strided_slice %53 {offsets = [0, 5, 9], sizes = [8, 1, 1], strides = [1, 1, 1]} : vector<8x8x16xf32> to vector<8x1x1xf32>
    %701 = vector.shape_cast %700 : vector<8x1x1xf32> to vector<8x1xf32>
    %702 = vector.extract_strided_slice %56 {offsets = [0, 5, 0], sizes = [8, 1, 4], strides = [1, 1, 1]} : vector<8x8x4xf32> to vector<8x1x4xf32>
    %703 = vector.shape_cast %702 : vector<8x1x4xf32> to vector<8x4xf32>
    %704 = vector.broadcast %701 : vector<8x1xf32> to vector<8x4xf32>
    %705 = arith.mulf %704, %703 : vector<8x4xf32>
    %706 = arith.addf %699, %705 : vector<8x4xf32>
    %707 = vector.extract_strided_slice %53 {offsets = [0, 6, 9], sizes = [8, 1, 1], strides = [1, 1, 1]} : vector<8x8x16xf32> to vector<8x1x1xf32>
    %708 = vector.shape_cast %707 : vector<8x1x1xf32> to vector<8x1xf32>
    %709 = vector.extract_strided_slice %56 {offsets = [0, 6, 0], sizes = [8, 1, 4], strides = [1, 1, 1]} : vector<8x8x4xf32> to vector<8x1x4xf32>
    %710 = vector.shape_cast %709 : vector<8x1x4xf32> to vector<8x4xf32>
    %711 = vector.broadcast %708 : vector<8x1xf32> to vector<8x4xf32>
    %712 = arith.mulf %711, %710 : vector<8x4xf32>
    %713 = arith.addf %706, %712 : vector<8x4xf32>
    %714 = vector.extract_strided_slice %53 {offsets = [0, 7, 9], sizes = [8, 1, 1], strides = [1, 1, 1]} : vector<8x8x16xf32> to vector<8x1x1xf32>
    %715 = vector.shape_cast %714 : vector<8x1x1xf32> to vector<8x1xf32>
    %716 = vector.extract_strided_slice %56 {offsets = [0, 7, 0], sizes = [8, 1, 4], strides = [1, 1, 1]} : vector<8x8x4xf32> to vector<8x1x4xf32>
    %717 = vector.shape_cast %716 : vector<8x1x4xf32> to vector<8x4xf32>
    %718 = vector.broadcast %715 : vector<8x1xf32> to vector<8x4xf32>
    %719 = arith.mulf %718, %717 : vector<8x4xf32>
    %720 = arith.addf %713, %719 : vector<8x4xf32>
    %cst_89 = arith.constant 0.000000e+00 : f32
    %721 = vector.broadcast %cst_89 : f32 to vector<8x4xf32>
    %722 = arith.cmpf ogt, %720, %721 : vector<8x4xf32>
    %cst_90 = arith.constant 2.000000e-01 : f32
    %723 = vector.broadcast %cst_90 : f32 to vector<8x4xf32>
    %724 = arith.mulf %723, %720 : vector<8x4xf32>
    %725 = arith.select %722, %720, %724 : vector<8x4xi1>, vector<8x4xf32>
    %726 = arith.truncf %725 : vector<8x4xf32> to vector<8x4xbf16>
    %c9 = arith.constant 9 : index
    %c0_91 = arith.constant 0 : index
    %c0_92 = arith.constant 0 : index
    %727 = vector.load %arg10[%c9, %c0_91, %c0_92] : memref<16x4x32xbf16, #tpu.memory_space<vmem>>, vector<1x4x32xbf16>
    %728 = vector.shape_cast %727 : vector<1x4x32xbf16> to vector<4x32xbf16>
    %cst_93 = arith.constant dense<0.000000e+00> : vector<8x32xf32>
    %729 = tpu.matmul %726, %728, %cst_93 {dimension_numbers = #tpu.dot_dimension_numbers<[1], [0], [0], [1], [0, 0, 1, 1], [], []>} : vector<8x4xbf16>, vector<4x32xbf16>, vector<8x32xf32> -> vector<8x32xf32>
    %730 = arith.addf %663, %729 : vector<8x32xf32>
    %cst_94 = arith.constant 0.000000e+00 : f32
    %731 = vector.broadcast %cst_94 : f32 to vector<8x4xf32>
    %732 = vector.extract_strided_slice %53 {offsets = [0, 0, 10], sizes = [8, 1, 1], strides = [1, 1, 1]} : vector<8x8x16xf32> to vector<8x1x1xf32>
    %733 = vector.shape_cast %732 : vector<8x1x1xf32> to vector<8x1xf32>
    %734 = vector.extract_strided_slice %56 {offsets = [0, 0, 0], sizes = [8, 1, 4], strides = [1, 1, 1]} : vector<8x8x4xf32> to vector<8x1x4xf32>
    %735 = vector.shape_cast %734 : vector<8x1x4xf32> to vector<8x4xf32>
    %736 = vector.broadcast %733 : vector<8x1xf32> to vector<8x4xf32>
    %737 = arith.mulf %736, %735 : vector<8x4xf32>
    %738 = arith.addf %731, %737 : vector<8x4xf32>
    %739 = vector.extract_strided_slice %53 {offsets = [0, 1, 10], sizes = [8, 1, 1], strides = [1, 1, 1]} : vector<8x8x16xf32> to vector<8x1x1xf32>
    %740 = vector.shape_cast %739 : vector<8x1x1xf32> to vector<8x1xf32>
    %741 = vector.extract_strided_slice %56 {offsets = [0, 1, 0], sizes = [8, 1, 4], strides = [1, 1, 1]} : vector<8x8x4xf32> to vector<8x1x4xf32>
    %742 = vector.shape_cast %741 : vector<8x1x4xf32> to vector<8x4xf32>
    %743 = vector.broadcast %740 : vector<8x1xf32> to vector<8x4xf32>
    %744 = arith.mulf %743, %742 : vector<8x4xf32>
    %745 = arith.addf %738, %744 : vector<8x4xf32>
    %746 = vector.extract_strided_slice %53 {offsets = [0, 2, 10], sizes = [8, 1, 1], strides = [1, 1, 1]} : vector<8x8x16xf32> to vector<8x1x1xf32>
    %747 = vector.shape_cast %746 : vector<8x1x1xf32> to vector<8x1xf32>
    %748 = vector.extract_strided_slice %56 {offsets = [0, 2, 0], sizes = [8, 1, 4], strides = [1, 1, 1]} : vector<8x8x4xf32> to vector<8x1x4xf32>
    %749 = vector.shape_cast %748 : vector<8x1x4xf32> to vector<8x4xf32>
    %750 = vector.broadcast %747 : vector<8x1xf32> to vector<8x4xf32>
    %751 = arith.mulf %750, %749 : vector<8x4xf32>
    %752 = arith.addf %745, %751 : vector<8x4xf32>
    %753 = vector.extract_strided_slice %53 {offsets = [0, 3, 10], sizes = [8, 1, 1], strides = [1, 1, 1]} : vector<8x8x16xf32> to vector<8x1x1xf32>
    %754 = vector.shape_cast %753 : vector<8x1x1xf32> to vector<8x1xf32>
    %755 = vector.extract_strided_slice %56 {offsets = [0, 3, 0], sizes = [8, 1, 4], strides = [1, 1, 1]} : vector<8x8x4xf32> to vector<8x1x4xf32>
    %756 = vector.shape_cast %755 : vector<8x1x4xf32> to vector<8x4xf32>
    %757 = vector.broadcast %754 : vector<8x1xf32> to vector<8x4xf32>
    %758 = arith.mulf %757, %756 : vector<8x4xf32>
    %759 = arith.addf %752, %758 : vector<8x4xf32>
    %760 = vector.extract_strided_slice %53 {offsets = [0, 4, 10], sizes = [8, 1, 1], strides = [1, 1, 1]} : vector<8x8x16xf32> to vector<8x1x1xf32>
    %761 = vector.shape_cast %760 : vector<8x1x1xf32> to vector<8x1xf32>
    %762 = vector.extract_strided_slice %56 {offsets = [0, 4, 0], sizes = [8, 1, 4], strides = [1, 1, 1]} : vector<8x8x4xf32> to vector<8x1x4xf32>
    %763 = vector.shape_cast %762 : vector<8x1x4xf32> to vector<8x4xf32>
    %764 = vector.broadcast %761 : vector<8x1xf32> to vector<8x4xf32>
    %765 = arith.mulf %764, %763 : vector<8x4xf32>
    %766 = arith.addf %759, %765 : vector<8x4xf32>
    %767 = vector.extract_strided_slice %53 {offsets = [0, 5, 10], sizes = [8, 1, 1], strides = [1, 1, 1]} : vector<8x8x16xf32> to vector<8x1x1xf32>
    %768 = vector.shape_cast %767 : vector<8x1x1xf32> to vector<8x1xf32>
    %769 = vector.extract_strided_slice %56 {offsets = [0, 5, 0], sizes = [8, 1, 4], strides = [1, 1, 1]} : vector<8x8x4xf32> to vector<8x1x4xf32>
    %770 = vector.shape_cast %769 : vector<8x1x4xf32> to vector<8x4xf32>
    %771 = vector.broadcast %768 : vector<8x1xf32> to vector<8x4xf32>
    %772 = arith.mulf %771, %770 : vector<8x4xf32>
    %773 = arith.addf %766, %772 : vector<8x4xf32>
    %774 = vector.extract_strided_slice %53 {offsets = [0, 6, 10], sizes = [8, 1, 1], strides = [1, 1, 1]} : vector<8x8x16xf32> to vector<8x1x1xf32>
    %775 = vector.shape_cast %774 : vector<8x1x1xf32> to vector<8x1xf32>
    %776 = vector.extract_strided_slice %56 {offsets = [0, 6, 0], sizes = [8, 1, 4], strides = [1, 1, 1]} : vector<8x8x4xf32> to vector<8x1x4xf32>
    %777 = vector.shape_cast %776 : vector<8x1x4xf32> to vector<8x4xf32>
    %778 = vector.broadcast %775 : vector<8x1xf32> to vector<8x4xf32>
    %779 = arith.mulf %778, %777 : vector<8x4xf32>
    %780 = arith.addf %773, %779 : vector<8x4xf32>
    %781 = vector.extract_strided_slice %53 {offsets = [0, 7, 10], sizes = [8, 1, 1], strides = [1, 1, 1]} : vector<8x8x16xf32> to vector<8x1x1xf32>
    %782 = vector.shape_cast %781 : vector<8x1x1xf32> to vector<8x1xf32>
    %783 = vector.extract_strided_slice %56 {offsets = [0, 7, 0], sizes = [8, 1, 4], strides = [1, 1, 1]} : vector<8x8x4xf32> to vector<8x1x4xf32>
    %784 = vector.shape_cast %783 : vector<8x1x4xf32> to vector<8x4xf32>
    %785 = vector.broadcast %782 : vector<8x1xf32> to vector<8x4xf32>
    %786 = arith.mulf %785, %784 : vector<8x4xf32>
    %787 = arith.addf %780, %786 : vector<8x4xf32>
    %cst_95 = arith.constant 0.000000e+00 : f32
    %788 = vector.broadcast %cst_95 : f32 to vector<8x4xf32>
    %789 = arith.cmpf ogt, %787, %788 : vector<8x4xf32>
    %cst_96 = arith.constant 2.000000e-01 : f32
    %790 = vector.broadcast %cst_96 : f32 to vector<8x4xf32>
    %791 = arith.mulf %790, %787 : vector<8x4xf32>
    %792 = arith.select %789, %787, %791 : vector<8x4xi1>, vector<8x4xf32>
    %793 = arith.truncf %792 : vector<8x4xf32> to vector<8x4xbf16>
    %c10 = arith.constant 10 : index
    %c0_97 = arith.constant 0 : index
    %c0_98 = arith.constant 0 : index
    %794 = vector.load %arg10[%c10, %c0_97, %c0_98] : memref<16x4x32xbf16, #tpu.memory_space<vmem>>, vector<1x4x32xbf16>
    %795 = vector.shape_cast %794 : vector<1x4x32xbf16> to vector<4x32xbf16>
    %cst_99 = arith.constant dense<0.000000e+00> : vector<8x32xf32>
    %796 = tpu.matmul %793, %795, %cst_99 {dimension_numbers = #tpu.dot_dimension_numbers<[1], [0], [0], [1], [0, 0, 1, 1], [], []>} : vector<8x4xbf16>, vector<4x32xbf16>, vector<8x32xf32> -> vector<8x32xf32>
    %797 = arith.addf %730, %796 : vector<8x32xf32>
    %cst_100 = arith.constant 0.000000e+00 : f32
    %798 = vector.broadcast %cst_100 : f32 to vector<8x4xf32>
    %799 = vector.extract_strided_slice %53 {offsets = [0, 0, 11], sizes = [8, 1, 1], strides = [1, 1, 1]} : vector<8x8x16xf32> to vector<8x1x1xf32>
    %800 = vector.shape_cast %799 : vector<8x1x1xf32> to vector<8x1xf32>
    %801 = vector.extract_strided_slice %56 {offsets = [0, 0, 0], sizes = [8, 1, 4], strides = [1, 1, 1]} : vector<8x8x4xf32> to vector<8x1x4xf32>
    %802 = vector.shape_cast %801 : vector<8x1x4xf32> to vector<8x4xf32>
    %803 = vector.broadcast %800 : vector<8x1xf32> to vector<8x4xf32>
    %804 = arith.mulf %803, %802 : vector<8x4xf32>
    %805 = arith.addf %798, %804 : vector<8x4xf32>
    %806 = vector.extract_strided_slice %53 {offsets = [0, 1, 11], sizes = [8, 1, 1], strides = [1, 1, 1]} : vector<8x8x16xf32> to vector<8x1x1xf32>
    %807 = vector.shape_cast %806 : vector<8x1x1xf32> to vector<8x1xf32>
    %808 = vector.extract_strided_slice %56 {offsets = [0, 1, 0], sizes = [8, 1, 4], strides = [1, 1, 1]} : vector<8x8x4xf32> to vector<8x1x4xf32>
    %809 = vector.shape_cast %808 : vector<8x1x4xf32> to vector<8x4xf32>
    %810 = vector.broadcast %807 : vector<8x1xf32> to vector<8x4xf32>
    %811 = arith.mulf %810, %809 : vector<8x4xf32>
    %812 = arith.addf %805, %811 : vector<8x4xf32>
    %813 = vector.extract_strided_slice %53 {offsets = [0, 2, 11], sizes = [8, 1, 1], strides = [1, 1, 1]} : vector<8x8x16xf32> to vector<8x1x1xf32>
    %814 = vector.shape_cast %813 : vector<8x1x1xf32> to vector<8x1xf32>
    %815 = vector.extract_strided_slice %56 {offsets = [0, 2, 0], sizes = [8, 1, 4], strides = [1, 1, 1]} : vector<8x8x4xf32> to vector<8x1x4xf32>
    %816 = vector.shape_cast %815 : vector<8x1x4xf32> to vector<8x4xf32>
    %817 = vector.broadcast %814 : vector<8x1xf32> to vector<8x4xf32>
    %818 = arith.mulf %817, %816 : vector<8x4xf32>
    %819 = arith.addf %812, %818 : vector<8x4xf32>
    %820 = vector.extract_strided_slice %53 {offsets = [0, 3, 11], sizes = [8, 1, 1], strides = [1, 1, 1]} : vector<8x8x16xf32> to vector<8x1x1xf32>
    %821 = vector.shape_cast %820 : vector<8x1x1xf32> to vector<8x1xf32>
    %822 = vector.extract_strided_slice %56 {offsets = [0, 3, 0], sizes = [8, 1, 4], strides = [1, 1, 1]} : vector<8x8x4xf32> to vector<8x1x4xf32>
    %823 = vector.shape_cast %822 : vector<8x1x4xf32> to vector<8x4xf32>
    %824 = vector.broadcast %821 : vector<8x1xf32> to vector<8x4xf32>
    %825 = arith.mulf %824, %823 : vector<8x4xf32>
    %826 = arith.addf %819, %825 : vector<8x4xf32>
    %827 = vector.extract_strided_slice %53 {offsets = [0, 4, 11], sizes = [8, 1, 1], strides = [1, 1, 1]} : vector<8x8x16xf32> to vector<8x1x1xf32>
    %828 = vector.shape_cast %827 : vector<8x1x1xf32> to vector<8x1xf32>
    %829 = vector.extract_strided_slice %56 {offsets = [0, 4, 0], sizes = [8, 1, 4], strides = [1, 1, 1]} : vector<8x8x4xf32> to vector<8x1x4xf32>
    %830 = vector.shape_cast %829 : vector<8x1x4xf32> to vector<8x4xf32>
    %831 = vector.broadcast %828 : vector<8x1xf32> to vector<8x4xf32>
    %832 = arith.mulf %831, %830 : vector<8x4xf32>
    %833 = arith.addf %826, %832 : vector<8x4xf32>
    %834 = vector.extract_strided_slice %53 {offsets = [0, 5, 11], sizes = [8, 1, 1], strides = [1, 1, 1]} : vector<8x8x16xf32> to vector<8x1x1xf32>
    %835 = vector.shape_cast %834 : vector<8x1x1xf32> to vector<8x1xf32>
    %836 = vector.extract_strided_slice %56 {offsets = [0, 5, 0], sizes = [8, 1, 4], strides = [1, 1, 1]} : vector<8x8x4xf32> to vector<8x1x4xf32>
    %837 = vector.shape_cast %836 : vector<8x1x4xf32> to vector<8x4xf32>
    %838 = vector.broadcast %835 : vector<8x1xf32> to vector<8x4xf32>
    %839 = arith.mulf %838, %837 : vector<8x4xf32>
    %840 = arith.addf %833, %839 : vector<8x4xf32>
    %841 = vector.extract_strided_slice %53 {offsets = [0, 6, 11], sizes = [8, 1, 1], strides = [1, 1, 1]} : vector<8x8x16xf32> to vector<8x1x1xf32>
    %842 = vector.shape_cast %841 : vector<8x1x1xf32> to vector<8x1xf32>
    %843 = vector.extract_strided_slice %56 {offsets = [0, 6, 0], sizes = [8, 1, 4], strides = [1, 1, 1]} : vector<8x8x4xf32> to vector<8x1x4xf32>
    %844 = vector.shape_cast %843 : vector<8x1x4xf32> to vector<8x4xf32>
    %845 = vector.broadcast %842 : vector<8x1xf32> to vector<8x4xf32>
    %846 = arith.mulf %845, %844 : vector<8x4xf32>
    %847 = arith.addf %840, %846 : vector<8x4xf32>
    %848 = vector.extract_strided_slice %53 {offsets = [0, 7, 11], sizes = [8, 1, 1], strides = [1, 1, 1]} : vector<8x8x16xf32> to vector<8x1x1xf32>
    %849 = vector.shape_cast %848 : vector<8x1x1xf32> to vector<8x1xf32>
    %850 = vector.extract_strided_slice %56 {offsets = [0, 7, 0], sizes = [8, 1, 4], strides = [1, 1, 1]} : vector<8x8x4xf32> to vector<8x1x4xf32>
    %851 = vector.shape_cast %850 : vector<8x1x4xf32> to vector<8x4xf32>
    %852 = vector.broadcast %849 : vector<8x1xf32> to vector<8x4xf32>
    %853 = arith.mulf %852, %851 : vector<8x4xf32>
    %854 = arith.addf %847, %853 : vector<8x4xf32>
    %cst_101 = arith.constant 0.000000e+00 : f32
    %855 = vector.broadcast %cst_101 : f32 to vector<8x4xf32>
    %856 = arith.cmpf ogt, %854, %855 : vector<8x4xf32>
    %cst_102 = arith.constant 2.000000e-01 : f32
    %857 = vector.broadcast %cst_102 : f32 to vector<8x4xf32>
    %858 = arith.mulf %857, %854 : vector<8x4xf32>
    %859 = arith.select %856, %854, %858 : vector<8x4xi1>, vector<8x4xf32>
    %860 = arith.truncf %859 : vector<8x4xf32> to vector<8x4xbf16>
    %c11 = arith.constant 11 : index
    %c0_103 = arith.constant 0 : index
    %c0_104 = arith.constant 0 : index
    %861 = vector.load %arg10[%c11, %c0_103, %c0_104] : memref<16x4x32xbf16, #tpu.memory_space<vmem>>, vector<1x4x32xbf16>
    %862 = vector.shape_cast %861 : vector<1x4x32xbf16> to vector<4x32xbf16>
    %cst_105 = arith.constant dense<0.000000e+00> : vector<8x32xf32>
    %863 = tpu.matmul %860, %862, %cst_105 {dimension_numbers = #tpu.dot_dimension_numbers<[1], [0], [0], [1], [0, 0, 1, 1], [], []>} : vector<8x4xbf16>, vector<4x32xbf16>, vector<8x32xf32> -> vector<8x32xf32>
    %864 = arith.addf %797, %863 : vector<8x32xf32>
    %cst_106 = arith.constant 0.000000e+00 : f32
    %865 = vector.broadcast %cst_106 : f32 to vector<8x4xf32>
    %866 = vector.extract_strided_slice %53 {offsets = [0, 0, 12], sizes = [8, 1, 1], strides = [1, 1, 1]} : vector<8x8x16xf32> to vector<8x1x1xf32>
    %867 = vector.shape_cast %866 : vector<8x1x1xf32> to vector<8x1xf32>
    %868 = vector.extract_strided_slice %56 {offsets = [0, 0, 0], sizes = [8, 1, 4], strides = [1, 1, 1]} : vector<8x8x4xf32> to vector<8x1x4xf32>
    %869 = vector.shape_cast %868 : vector<8x1x4xf32> to vector<8x4xf32>
    %870 = vector.broadcast %867 : vector<8x1xf32> to vector<8x4xf32>
    %871 = arith.mulf %870, %869 : vector<8x4xf32>
    %872 = arith.addf %865, %871 : vector<8x4xf32>
    %873 = vector.extract_strided_slice %53 {offsets = [0, 1, 12], sizes = [8, 1, 1], strides = [1, 1, 1]} : vector<8x8x16xf32> to vector<8x1x1xf32>
    %874 = vector.shape_cast %873 : vector<8x1x1xf32> to vector<8x1xf32>
    %875 = vector.extract_strided_slice %56 {offsets = [0, 1, 0], sizes = [8, 1, 4], strides = [1, 1, 1]} : vector<8x8x4xf32> to vector<8x1x4xf32>
    %876 = vector.shape_cast %875 : vector<8x1x4xf32> to vector<8x4xf32>
    %877 = vector.broadcast %874 : vector<8x1xf32> to vector<8x4xf32>
    %878 = arith.mulf %877, %876 : vector<8x4xf32>
    %879 = arith.addf %872, %878 : vector<8x4xf32>
    %880 = vector.extract_strided_slice %53 {offsets = [0, 2, 12], sizes = [8, 1, 1], strides = [1, 1, 1]} : vector<8x8x16xf32> to vector<8x1x1xf32>
    %881 = vector.shape_cast %880 : vector<8x1x1xf32> to vector<8x1xf32>
    %882 = vector.extract_strided_slice %56 {offsets = [0, 2, 0], sizes = [8, 1, 4], strides = [1, 1, 1]} : vector<8x8x4xf32> to vector<8x1x4xf32>
    %883 = vector.shape_cast %882 : vector<8x1x4xf32> to vector<8x4xf32>
    %884 = vector.broadcast %881 : vector<8x1xf32> to vector<8x4xf32>
    %885 = arith.mulf %884, %883 : vector<8x4xf32>
    %886 = arith.addf %879, %885 : vector<8x4xf32>
    %887 = vector.extract_strided_slice %53 {offsets = [0, 3, 12], sizes = [8, 1, 1], strides = [1, 1, 1]} : vector<8x8x16xf32> to vector<8x1x1xf32>
    %888 = vector.shape_cast %887 : vector<8x1x1xf32> to vector<8x1xf32>
    %889 = vector.extract_strided_slice %56 {offsets = [0, 3, 0], sizes = [8, 1, 4], strides = [1, 1, 1]} : vector<8x8x4xf32> to vector<8x1x4xf32>
    %890 = vector.shape_cast %889 : vector<8x1x4xf32> to vector<8x4xf32>
    %891 = vector.broadcast %888 : vector<8x1xf32> to vector<8x4xf32>
    %892 = arith.mulf %891, %890 : vector<8x4xf32>
    %893 = arith.addf %886, %892 : vector<8x4xf32>
    %894 = vector.extract_strided_slice %53 {offsets = [0, 4, 12], sizes = [8, 1, 1], strides = [1, 1, 1]} : vector<8x8x16xf32> to vector<8x1x1xf32>
    %895 = vector.shape_cast %894 : vector<8x1x1xf32> to vector<8x1xf32>
    %896 = vector.extract_strided_slice %56 {offsets = [0, 4, 0], sizes = [8, 1, 4], strides = [1, 1, 1]} : vector<8x8x4xf32> to vector<8x1x4xf32>
    %897 = vector.shape_cast %896 : vector<8x1x4xf32> to vector<8x4xf32>
    %898 = vector.broadcast %895 : vector<8x1xf32> to vector<8x4xf32>
    %899 = arith.mulf %898, %897 : vector<8x4xf32>
    %900 = arith.addf %893, %899 : vector<8x4xf32>
    %901 = vector.extract_strided_slice %53 {offsets = [0, 5, 12], sizes = [8, 1, 1], strides = [1, 1, 1]} : vector<8x8x16xf32> to vector<8x1x1xf32>
    %902 = vector.shape_cast %901 : vector<8x1x1xf32> to vector<8x1xf32>
    %903 = vector.extract_strided_slice %56 {offsets = [0, 5, 0], sizes = [8, 1, 4], strides = [1, 1, 1]} : vector<8x8x4xf32> to vector<8x1x4xf32>
    %904 = vector.shape_cast %903 : vector<8x1x4xf32> to vector<8x4xf32>
    %905 = vector.broadcast %902 : vector<8x1xf32> to vector<8x4xf32>
    %906 = arith.mulf %905, %904 : vector<8x4xf32>
    %907 = arith.addf %900, %906 : vector<8x4xf32>
    %908 = vector.extract_strided_slice %53 {offsets = [0, 6, 12], sizes = [8, 1, 1], strides = [1, 1, 1]} : vector<8x8x16xf32> to vector<8x1x1xf32>
    %909 = vector.shape_cast %908 : vector<8x1x1xf32> to vector<8x1xf32>
    %910 = vector.extract_strided_slice %56 {offsets = [0, 6, 0], sizes = [8, 1, 4], strides = [1, 1, 1]} : vector<8x8x4xf32> to vector<8x1x4xf32>
    %911 = vector.shape_cast %910 : vector<8x1x4xf32> to vector<8x4xf32>
    %912 = vector.broadcast %909 : vector<8x1xf32> to vector<8x4xf32>
    %913 = arith.mulf %912, %911 : vector<8x4xf32>
    %914 = arith.addf %907, %913 : vector<8x4xf32>
    %915 = vector.extract_strided_slice %53 {offsets = [0, 7, 12], sizes = [8, 1, 1], strides = [1, 1, 1]} : vector<8x8x16xf32> to vector<8x1x1xf32>
    %916 = vector.shape_cast %915 : vector<8x1x1xf32> to vector<8x1xf32>
    %917 = vector.extract_strided_slice %56 {offsets = [0, 7, 0], sizes = [8, 1, 4], strides = [1, 1, 1]} : vector<8x8x4xf32> to vector<8x1x4xf32>
    %918 = vector.shape_cast %917 : vector<8x1x4xf32> to vector<8x4xf32>
    %919 = vector.broadcast %916 : vector<8x1xf32> to vector<8x4xf32>
    %920 = arith.mulf %919, %918 : vector<8x4xf32>
    %921 = arith.addf %914, %920 : vector<8x4xf32>
    %cst_107 = arith.constant 0.000000e+00 : f32
    %922 = vector.broadcast %cst_107 : f32 to vector<8x4xf32>
    %923 = arith.cmpf ogt, %921, %922 : vector<8x4xf32>
    %cst_108 = arith.constant 2.000000e-01 : f32
    %924 = vector.broadcast %cst_108 : f32 to vector<8x4xf32>
    %925 = arith.mulf %924, %921 : vector<8x4xf32>
    %926 = arith.select %923, %921, %925 : vector<8x4xi1>, vector<8x4xf32>
    %927 = arith.truncf %926 : vector<8x4xf32> to vector<8x4xbf16>
    %c12 = arith.constant 12 : index
    %c0_109 = arith.constant 0 : index
    %c0_110 = arith.constant 0 : index
    %928 = vector.load %arg10[%c12, %c0_109, %c0_110] : memref<16x4x32xbf16, #tpu.memory_space<vmem>>, vector<1x4x32xbf16>
    %929 = vector.shape_cast %928 : vector<1x4x32xbf16> to vector<4x32xbf16>
    %cst_111 = arith.constant dense<0.000000e+00> : vector<8x32xf32>
    %930 = tpu.matmul %927, %929, %cst_111 {dimension_numbers = #tpu.dot_dimension_numbers<[1], [0], [0], [1], [0, 0, 1, 1], [], []>} : vector<8x4xbf16>, vector<4x32xbf16>, vector<8x32xf32> -> vector<8x32xf32>
    %931 = arith.addf %864, %930 : vector<8x32xf32>
    %cst_112 = arith.constant 0.000000e+00 : f32
    %932 = vector.broadcast %cst_112 : f32 to vector<8x4xf32>
    %933 = vector.extract_strided_slice %53 {offsets = [0, 0, 13], sizes = [8, 1, 1], strides = [1, 1, 1]} : vector<8x8x16xf32> to vector<8x1x1xf32>
    %934 = vector.shape_cast %933 : vector<8x1x1xf32> to vector<8x1xf32>
    %935 = vector.extract_strided_slice %56 {offsets = [0, 0, 0], sizes = [8, 1, 4], strides = [1, 1, 1]} : vector<8x8x4xf32> to vector<8x1x4xf32>
    %936 = vector.shape_cast %935 : vector<8x1x4xf32> to vector<8x4xf32>
    %937 = vector.broadcast %934 : vector<8x1xf32> to vector<8x4xf32>
    %938 = arith.mulf %937, %936 : vector<8x4xf32>
    %939 = arith.addf %932, %938 : vector<8x4xf32>
    %940 = vector.extract_strided_slice %53 {offsets = [0, 1, 13], sizes = [8, 1, 1], strides = [1, 1, 1]} : vector<8x8x16xf32> to vector<8x1x1xf32>
    %941 = vector.shape_cast %940 : vector<8x1x1xf32> to vector<8x1xf32>
    %942 = vector.extract_strided_slice %56 {offsets = [0, 1, 0], sizes = [8, 1, 4], strides = [1, 1, 1]} : vector<8x8x4xf32> to vector<8x1x4xf32>
    %943 = vector.shape_cast %942 : vector<8x1x4xf32> to vector<8x4xf32>
    %944 = vector.broadcast %941 : vector<8x1xf32> to vector<8x4xf32>
    %945 = arith.mulf %944, %943 : vector<8x4xf32>
    %946 = arith.addf %939, %945 : vector<8x4xf32>
    %947 = vector.extract_strided_slice %53 {offsets = [0, 2, 13], sizes = [8, 1, 1], strides = [1, 1, 1]} : vector<8x8x16xf32> to vector<8x1x1xf32>
    %948 = vector.shape_cast %947 : vector<8x1x1xf32> to vector<8x1xf32>
    %949 = vector.extract_strided_slice %56 {offsets = [0, 2, 0], sizes = [8, 1, 4], strides = [1, 1, 1]} : vector<8x8x4xf32> to vector<8x1x4xf32>
    %950 = vector.shape_cast %949 : vector<8x1x4xf32> to vector<8x4xf32>
    %951 = vector.broadcast %948 : vector<8x1xf32> to vector<8x4xf32>
    %952 = arith.mulf %951, %950 : vector<8x4xf32>
    %953 = arith.addf %946, %952 : vector<8x4xf32>
    %954 = vector.extract_strided_slice %53 {offsets = [0, 3, 13], sizes = [8, 1, 1], strides = [1, 1, 1]} : vector<8x8x16xf32> to vector<8x1x1xf32>
    %955 = vector.shape_cast %954 : vector<8x1x1xf32> to vector<8x1xf32>
    %956 = vector.extract_strided_slice %56 {offsets = [0, 3, 0], sizes = [8, 1, 4], strides = [1, 1, 1]} : vector<8x8x4xf32> to vector<8x1x4xf32>
    %957 = vector.shape_cast %956 : vector<8x1x4xf32> to vector<8x4xf32>
    %958 = vector.broadcast %955 : vector<8x1xf32> to vector<8x4xf32>
    %959 = arith.mulf %958, %957 : vector<8x4xf32>
    %960 = arith.addf %953, %959 : vector<8x4xf32>
    %961 = vector.extract_strided_slice %53 {offsets = [0, 4, 13], sizes = [8, 1, 1], strides = [1, 1, 1]} : vector<8x8x16xf32> to vector<8x1x1xf32>
    %962 = vector.shape_cast %961 : vector<8x1x1xf32> to vector<8x1xf32>
    %963 = vector.extract_strided_slice %56 {offsets = [0, 4, 0], sizes = [8, 1, 4], strides = [1, 1, 1]} : vector<8x8x4xf32> to vector<8x1x4xf32>
    %964 = vector.shape_cast %963 : vector<8x1x4xf32> to vector<8x4xf32>
    %965 = vector.broadcast %962 : vector<8x1xf32> to vector<8x4xf32>
    %966 = arith.mulf %965, %964 : vector<8x4xf32>
    %967 = arith.addf %960, %966 : vector<8x4xf32>
    %968 = vector.extract_strided_slice %53 {offsets = [0, 5, 13], sizes = [8, 1, 1], strides = [1, 1, 1]} : vector<8x8x16xf32> to vector<8x1x1xf32>
    %969 = vector.shape_cast %968 : vector<8x1x1xf32> to vector<8x1xf32>
    %970 = vector.extract_strided_slice %56 {offsets = [0, 5, 0], sizes = [8, 1, 4], strides = [1, 1, 1]} : vector<8x8x4xf32> to vector<8x1x4xf32>
    %971 = vector.shape_cast %970 : vector<8x1x4xf32> to vector<8x4xf32>
    %972 = vector.broadcast %969 : vector<8x1xf32> to vector<8x4xf32>
    %973 = arith.mulf %972, %971 : vector<8x4xf32>
    %974 = arith.addf %967, %973 : vector<8x4xf32>
    %975 = vector.extract_strided_slice %53 {offsets = [0, 6, 13], sizes = [8, 1, 1], strides = [1, 1, 1]} : vector<8x8x16xf32> to vector<8x1x1xf32>
    %976 = vector.shape_cast %975 : vector<8x1x1xf32> to vector<8x1xf32>
    %977 = vector.extract_strided_slice %56 {offsets = [0, 6, 0], sizes = [8, 1, 4], strides = [1, 1, 1]} : vector<8x8x4xf32> to vector<8x1x4xf32>
    %978 = vector.shape_cast %977 : vector<8x1x4xf32> to vector<8x4xf32>
    %979 = vector.broadcast %976 : vector<8x1xf32> to vector<8x4xf32>
    %980 = arith.mulf %979, %978 : vector<8x4xf32>
    %981 = arith.addf %974, %980 : vector<8x4xf32>
    %982 = vector.extract_strided_slice %53 {offsets = [0, 7, 13], sizes = [8, 1, 1], strides = [1, 1, 1]} : vector<8x8x16xf32> to vector<8x1x1xf32>
    %983 = vector.shape_cast %982 : vector<8x1x1xf32> to vector<8x1xf32>
    %984 = vector.extract_strided_slice %56 {offsets = [0, 7, 0], sizes = [8, 1, 4], strides = [1, 1, 1]} : vector<8x8x4xf32> to vector<8x1x4xf32>
    %985 = vector.shape_cast %984 : vector<8x1x4xf32> to vector<8x4xf32>
    %986 = vector.broadcast %983 : vector<8x1xf32> to vector<8x4xf32>
    %987 = arith.mulf %986, %985 : vector<8x4xf32>
    %988 = arith.addf %981, %987 : vector<8x4xf32>
    %cst_113 = arith.constant 0.000000e+00 : f32
    %989 = vector.broadcast %cst_113 : f32 to vector<8x4xf32>
    %990 = arith.cmpf ogt, %988, %989 : vector<8x4xf32>
    %cst_114 = arith.constant 2.000000e-01 : f32
    %991 = vector.broadcast %cst_114 : f32 to vector<8x4xf32>
    %992 = arith.mulf %991, %988 : vector<8x4xf32>
    %993 = arith.select %990, %988, %992 : vector<8x4xi1>, vector<8x4xf32>
    %994 = arith.truncf %993 : vector<8x4xf32> to vector<8x4xbf16>
    %c13 = arith.constant 13 : index
    %c0_115 = arith.constant 0 : index
    %c0_116 = arith.constant 0 : index
    %995 = vector.load %arg10[%c13, %c0_115, %c0_116] : memref<16x4x32xbf16, #tpu.memory_space<vmem>>, vector<1x4x32xbf16>
    %996 = vector.shape_cast %995 : vector<1x4x32xbf16> to vector<4x32xbf16>
    %cst_117 = arith.constant dense<0.000000e+00> : vector<8x32xf32>
    %997 = tpu.matmul %994, %996, %cst_117 {dimension_numbers = #tpu.dot_dimension_numbers<[1], [0], [0], [1], [0, 0, 1, 1], [], []>} : vector<8x4xbf16>, vector<4x32xbf16>, vector<8x32xf32> -> vector<8x32xf32>
    %998 = arith.addf %931, %997 : vector<8x32xf32>
    %cst_118 = arith.constant 0.000000e+00 : f32
    %999 = vector.broadcast %cst_118 : f32 to vector<8x4xf32>
    %1000 = vector.extract_strided_slice %53 {offsets = [0, 0, 14], sizes = [8, 1, 1], strides = [1, 1, 1]} : vector<8x8x16xf32> to vector<8x1x1xf32>
    %1001 = vector.shape_cast %1000 : vector<8x1x1xf32> to vector<8x1xf32>
    %1002 = vector.extract_strided_slice %56 {offsets = [0, 0, 0], sizes = [8, 1, 4], strides = [1, 1, 1]} : vector<8x8x4xf32> to vector<8x1x4xf32>
    %1003 = vector.shape_cast %1002 : vector<8x1x4xf32> to vector<8x4xf32>
    %1004 = vector.broadcast %1001 : vector<8x1xf32> to vector<8x4xf32>
    %1005 = arith.mulf %1004, %1003 : vector<8x4xf32>
    %1006 = arith.addf %999, %1005 : vector<8x4xf32>
    %1007 = vector.extract_strided_slice %53 {offsets = [0, 1, 14], sizes = [8, 1, 1], strides = [1, 1, 1]} : vector<8x8x16xf32> to vector<8x1x1xf32>
    %1008 = vector.shape_cast %1007 : vector<8x1x1xf32> to vector<8x1xf32>
    %1009 = vector.extract_strided_slice %56 {offsets = [0, 1, 0], sizes = [8, 1, 4], strides = [1, 1, 1]} : vector<8x8x4xf32> to vector<8x1x4xf32>
    %1010 = vector.shape_cast %1009 : vector<8x1x4xf32> to vector<8x4xf32>
    %1011 = vector.broadcast %1008 : vector<8x1xf32> to vector<8x4xf32>
    %1012 = arith.mulf %1011, %1010 : vector<8x4xf32>
    %1013 = arith.addf %1006, %1012 : vector<8x4xf32>
    %1014 = vector.extract_strided_slice %53 {offsets = [0, 2, 14], sizes = [8, 1, 1], strides = [1, 1, 1]} : vector<8x8x16xf32> to vector<8x1x1xf32>
    %1015 = vector.shape_cast %1014 : vector<8x1x1xf32> to vector<8x1xf32>
    %1016 = vector.extract_strided_slice %56 {offsets = [0, 2, 0], sizes = [8, 1, 4], strides = [1, 1, 1]} : vector<8x8x4xf32> to vector<8x1x4xf32>
    %1017 = vector.shape_cast %1016 : vector<8x1x4xf32> to vector<8x4xf32>
    %1018 = vector.broadcast %1015 : vector<8x1xf32> to vector<8x4xf32>
    %1019 = arith.mulf %1018, %1017 : vector<8x4xf32>
    %1020 = arith.addf %1013, %1019 : vector<8x4xf32>
    %1021 = vector.extract_strided_slice %53 {offsets = [0, 3, 14], sizes = [8, 1, 1], strides = [1, 1, 1]} : vector<8x8x16xf32> to vector<8x1x1xf32>
    %1022 = vector.shape_cast %1021 : vector<8x1x1xf32> to vector<8x1xf32>
    %1023 = vector.extract_strided_slice %56 {offsets = [0, 3, 0], sizes = [8, 1, 4], strides = [1, 1, 1]} : vector<8x8x4xf32> to vector<8x1x4xf32>
    %1024 = vector.shape_cast %1023 : vector<8x1x4xf32> to vector<8x4xf32>
    %1025 = vector.broadcast %1022 : vector<8x1xf32> to vector<8x4xf32>
    %1026 = arith.mulf %1025, %1024 : vector<8x4xf32>
    %1027 = arith.addf %1020, %1026 : vector<8x4xf32>
    %1028 = vector.extract_strided_slice %53 {offsets = [0, 4, 14], sizes = [8, 1, 1], strides = [1, 1, 1]} : vector<8x8x16xf32> to vector<8x1x1xf32>
    %1029 = vector.shape_cast %1028 : vector<8x1x1xf32> to vector<8x1xf32>
    %1030 = vector.extract_strided_slice %56 {offsets = [0, 4, 0], sizes = [8, 1, 4], strides = [1, 1, 1]} : vector<8x8x4xf32> to vector<8x1x4xf32>
    %1031 = vector.shape_cast %1030 : vector<8x1x4xf32> to vector<8x4xf32>
    %1032 = vector.broadcast %1029 : vector<8x1xf32> to vector<8x4xf32>
    %1033 = arith.mulf %1032, %1031 : vector<8x4xf32>
    %1034 = arith.addf %1027, %1033 : vector<8x4xf32>
    %1035 = vector.extract_strided_slice %53 {offsets = [0, 5, 14], sizes = [8, 1, 1], strides = [1, 1, 1]} : vector<8x8x16xf32> to vector<8x1x1xf32>
    %1036 = vector.shape_cast %1035 : vector<8x1x1xf32> to vector<8x1xf32>
    %1037 = vector.extract_strided_slice %56 {offsets = [0, 5, 0], sizes = [8, 1, 4], strides = [1, 1, 1]} : vector<8x8x4xf32> to vector<8x1x4xf32>
    %1038 = vector.shape_cast %1037 : vector<8x1x4xf32> to vector<8x4xf32>
    %1039 = vector.broadcast %1036 : vector<8x1xf32> to vector<8x4xf32>
    %1040 = arith.mulf %1039, %1038 : vector<8x4xf32>
    %1041 = arith.addf %1034, %1040 : vector<8x4xf32>
    %1042 = vector.extract_strided_slice %53 {offsets = [0, 6, 14], sizes = [8, 1, 1], strides = [1, 1, 1]} : vector<8x8x16xf32> to vector<8x1x1xf32>
    %1043 = vector.shape_cast %1042 : vector<8x1x1xf32> to vector<8x1xf32>
    %1044 = vector.extract_strided_slice %56 {offsets = [0, 6, 0], sizes = [8, 1, 4], strides = [1, 1, 1]} : vector<8x8x4xf32> to vector<8x1x4xf32>
    %1045 = vector.shape_cast %1044 : vector<8x1x4xf32> to vector<8x4xf32>
    %1046 = vector.broadcast %1043 : vector<8x1xf32> to vector<8x4xf32>
    %1047 = arith.mulf %1046, %1045 : vector<8x4xf32>
    %1048 = arith.addf %1041, %1047 : vector<8x4xf32>
    %1049 = vector.extract_strided_slice %53 {offsets = [0, 7, 14], sizes = [8, 1, 1], strides = [1, 1, 1]} : vector<8x8x16xf32> to vector<8x1x1xf32>
    %1050 = vector.shape_cast %1049 : vector<8x1x1xf32> to vector<8x1xf32>
    %1051 = vector.extract_strided_slice %56 {offsets = [0, 7, 0], sizes = [8, 1, 4], strides = [1, 1, 1]} : vector<8x8x4xf32> to vector<8x1x4xf32>
    %1052 = vector.shape_cast %1051 : vector<8x1x4xf32> to vector<8x4xf32>
    %1053 = vector.broadcast %1050 : vector<8x1xf32> to vector<8x4xf32>
    %1054 = arith.mulf %1053, %1052 : vector<8x4xf32>
    %1055 = arith.addf %1048, %1054 : vector<8x4xf32>
    %cst_119 = arith.constant 0.000000e+00 : f32
    %1056 = vector.broadcast %cst_119 : f32 to vector<8x4xf32>
    %1057 = arith.cmpf ogt, %1055, %1056 : vector<8x4xf32>
    %cst_120 = arith.constant 2.000000e-01 : f32
    %1058 = vector.broadcast %cst_120 : f32 to vector<8x4xf32>
    %1059 = arith.mulf %1058, %1055 : vector<8x4xf32>
    %1060 = arith.select %1057, %1055, %1059 : vector<8x4xi1>, vector<8x4xf32>
    %1061 = arith.truncf %1060 : vector<8x4xf32> to vector<8x4xbf16>
    %c14 = arith.constant 14 : index
    %c0_121 = arith.constant 0 : index
    %c0_122 = arith.constant 0 : index
    %1062 = vector.load %arg10[%c14, %c0_121, %c0_122] : memref<16x4x32xbf16, #tpu.memory_space<vmem>>, vector<1x4x32xbf16>
    %1063 = vector.shape_cast %1062 : vector<1x4x32xbf16> to vector<4x32xbf16>
    %cst_123 = arith.constant dense<0.000000e+00> : vector<8x32xf32>
    %1064 = tpu.matmul %1061, %1063, %cst_123 {dimension_numbers = #tpu.dot_dimension_numbers<[1], [0], [0], [1], [0, 0, 1, 1], [], []>} : vector<8x4xbf16>, vector<4x32xbf16>, vector<8x32xf32> -> vector<8x32xf32>
    %1065 = arith.addf %998, %1064 : vector<8x32xf32>
    %cst_124 = arith.constant 0.000000e+00 : f32
    %1066 = vector.broadcast %cst_124 : f32 to vector<8x4xf32>
    %1067 = vector.extract_strided_slice %53 {offsets = [0, 0, 15], sizes = [8, 1, 1], strides = [1, 1, 1]} : vector<8x8x16xf32> to vector<8x1x1xf32>
    %1068 = vector.shape_cast %1067 : vector<8x1x1xf32> to vector<8x1xf32>
    %1069 = vector.extract_strided_slice %56 {offsets = [0, 0, 0], sizes = [8, 1, 4], strides = [1, 1, 1]} : vector<8x8x4xf32> to vector<8x1x4xf32>
    %1070 = vector.shape_cast %1069 : vector<8x1x4xf32> to vector<8x4xf32>
    %1071 = vector.broadcast %1068 : vector<8x1xf32> to vector<8x4xf32>
    %1072 = arith.mulf %1071, %1070 : vector<8x4xf32>
    %1073 = arith.addf %1066, %1072 : vector<8x4xf32>
    %1074 = vector.extract_strided_slice %53 {offsets = [0, 1, 15], sizes = [8, 1, 1], strides = [1, 1, 1]} : vector<8x8x16xf32> to vector<8x1x1xf32>
    %1075 = vector.shape_cast %1074 : vector<8x1x1xf32> to vector<8x1xf32>
    %1076 = vector.extract_strided_slice %56 {offsets = [0, 1, 0], sizes = [8, 1, 4], strides = [1, 1, 1]} : vector<8x8x4xf32> to vector<8x1x4xf32>
    %1077 = vector.shape_cast %1076 : vector<8x1x4xf32> to vector<8x4xf32>
    %1078 = vector.broadcast %1075 : vector<8x1xf32> to vector<8x4xf32>
    %1079 = arith.mulf %1078, %1077 : vector<8x4xf32>
    %1080 = arith.addf %1073, %1079 : vector<8x4xf32>
    %1081 = vector.extract_strided_slice %53 {offsets = [0, 2, 15], sizes = [8, 1, 1], strides = [1, 1, 1]} : vector<8x8x16xf32> to vector<8x1x1xf32>
    %1082 = vector.shape_cast %1081 : vector<8x1x1xf32> to vector<8x1xf32>
    %1083 = vector.extract_strided_slice %56 {offsets = [0, 2, 0], sizes = [8, 1, 4], strides = [1, 1, 1]} : vector<8x8x4xf32> to vector<8x1x4xf32>
    %1084 = vector.shape_cast %1083 : vector<8x1x4xf32> to vector<8x4xf32>
    %1085 = vector.broadcast %1082 : vector<8x1xf32> to vector<8x4xf32>
    %1086 = arith.mulf %1085, %1084 : vector<8x4xf32>
    %1087 = arith.addf %1080, %1086 : vector<8x4xf32>
    %1088 = vector.extract_strided_slice %53 {offsets = [0, 3, 15], sizes = [8, 1, 1], strides = [1, 1, 1]} : vector<8x8x16xf32> to vector<8x1x1xf32>
    %1089 = vector.shape_cast %1088 : vector<8x1x1xf32> to vector<8x1xf32>
    %1090 = vector.extract_strided_slice %56 {offsets = [0, 3, 0], sizes = [8, 1, 4], strides = [1, 1, 1]} : vector<8x8x4xf32> to vector<8x1x4xf32>
    %1091 = vector.shape_cast %1090 : vector<8x1x4xf32> to vector<8x4xf32>
    %1092 = vector.broadcast %1089 : vector<8x1xf32> to vector<8x4xf32>
    %1093 = arith.mulf %1092, %1091 : vector<8x4xf32>
    %1094 = arith.addf %1087, %1093 : vector<8x4xf32>
    %1095 = vector.extract_strided_slice %53 {offsets = [0, 4, 15], sizes = [8, 1, 1], strides = [1, 1, 1]} : vector<8x8x16xf32> to vector<8x1x1xf32>
    %1096 = vector.shape_cast %1095 : vector<8x1x1xf32> to vector<8x1xf32>
    %1097 = vector.extract_strided_slice %56 {offsets = [0, 4, 0], sizes = [8, 1, 4], strides = [1, 1, 1]} : vector<8x8x4xf32> to vector<8x1x4xf32>
    %1098 = vector.shape_cast %1097 : vector<8x1x4xf32> to vector<8x4xf32>
    %1099 = vector.broadcast %1096 : vector<8x1xf32> to vector<8x4xf32>
    %1100 = arith.mulf %1099, %1098 : vector<8x4xf32>
    %1101 = arith.addf %1094, %1100 : vector<8x4xf32>
    %1102 = vector.extract_strided_slice %53 {offsets = [0, 5, 15], sizes = [8, 1, 1], strides = [1, 1, 1]} : vector<8x8x16xf32> to vector<8x1x1xf32>
    %1103 = vector.shape_cast %1102 : vector<8x1x1xf32> to vector<8x1xf32>
    %1104 = vector.extract_strided_slice %56 {offsets = [0, 5, 0], sizes = [8, 1, 4], strides = [1, 1, 1]} : vector<8x8x4xf32> to vector<8x1x4xf32>
    %1105 = vector.shape_cast %1104 : vector<8x1x4xf32> to vector<8x4xf32>
    %1106 = vector.broadcast %1103 : vector<8x1xf32> to vector<8x4xf32>
    %1107 = arith.mulf %1106, %1105 : vector<8x4xf32>
    %1108 = arith.addf %1101, %1107 : vector<8x4xf32>
    %1109 = vector.extract_strided_slice %53 {offsets = [0, 6, 15], sizes = [8, 1, 1], strides = [1, 1, 1]} : vector<8x8x16xf32> to vector<8x1x1xf32>
    %1110 = vector.shape_cast %1109 : vector<8x1x1xf32> to vector<8x1xf32>
    %1111 = vector.extract_strided_slice %56 {offsets = [0, 6, 0], sizes = [8, 1, 4], strides = [1, 1, 1]} : vector<8x8x4xf32> to vector<8x1x4xf32>
    %1112 = vector.shape_cast %1111 : vector<8x1x4xf32> to vector<8x4xf32>
    %1113 = vector.broadcast %1110 : vector<8x1xf32> to vector<8x4xf32>
    %1114 = arith.mulf %1113, %1112 : vector<8x4xf32>
    %1115 = arith.addf %1108, %1114 : vector<8x4xf32>
    %1116 = vector.extract_strided_slice %53 {offsets = [0, 7, 15], sizes = [8, 1, 1], strides = [1, 1, 1]} : vector<8x8x16xf32> to vector<8x1x1xf32>
    %1117 = vector.shape_cast %1116 : vector<8x1x1xf32> to vector<8x1xf32>
    %1118 = vector.extract_strided_slice %56 {offsets = [0, 7, 0], sizes = [8, 1, 4], strides = [1, 1, 1]} : vector<8x8x4xf32> to vector<8x1x4xf32>
    %1119 = vector.shape_cast %1118 : vector<8x1x4xf32> to vector<8x4xf32>
    %1120 = vector.broadcast %1117 : vector<8x1xf32> to vector<8x4xf32>
    %1121 = arith.mulf %1120, %1119 : vector<8x4xf32>
    %1122 = arith.addf %1115, %1121 : vector<8x4xf32>
    %cst_125 = arith.constant 0.000000e+00 : f32
    %1123 = vector.broadcast %cst_125 : f32 to vector<8x4xf32>
    %1124 = arith.cmpf ogt, %1122, %1123 : vector<8x4xf32>
    %cst_126 = arith.constant 2.000000e-01 : f32
    %1125 = vector.broadcast %cst_126 : f32 to vector<8x4xf32>
    %1126 = arith.mulf %1125, %1122 : vector<8x4xf32>
    %1127 = arith.select %1124, %1122, %1126 : vector<8x4xi1>, vector<8x4xf32>
    %1128 = arith.truncf %1127 : vector<8x4xf32> to vector<8x4xbf16>
    %c15 = arith.constant 15 : index
    %c0_127 = arith.constant 0 : index
    %c0_128 = arith.constant 0 : index
    %1129 = vector.load %arg10[%c15, %c0_127, %c0_128] : memref<16x4x32xbf16, #tpu.memory_space<vmem>>, vector<1x4x32xbf16>
    %1130 = vector.shape_cast %1129 : vector<1x4x32xbf16> to vector<4x32xbf16>
    %cst_129 = arith.constant dense<0.000000e+00> : vector<8x32xf32>
    %1131 = tpu.matmul %1128, %1130, %cst_129 {dimension_numbers = #tpu.dot_dimension_numbers<[1], [0], [0], [1], [0, 0, 1, 1], [], []>} : vector<8x4xbf16>, vector<4x32xbf16>, vector<8x32xf32> -> vector<8x32xf32>
    %1132 = arith.addf %1065, %1131 : vector<8x32xf32>
    %cst_130 = arith.constant 0.000000e+00 : f32
    %1133 = vector.broadcast %cst_130 : f32 to vector<8x32xf32>
    %1134 = arith.cmpf ogt, %1132, %1133 : vector<8x32xf32>
    %cst_131 = arith.constant 2.000000e-01 : f32
    %1135 = vector.broadcast %cst_131 : f32 to vector<8x32xf32>
    %1136 = arith.mulf %1135, %1132 : vector<8x32xf32>
    %1137 = arith.select %1134, %1132, %1136 : vector<8x32xi1>, vector<8x32xf32>
    %c0_132 = arith.constant 0 : index
    %c0_133 = arith.constant 0 : index
    %c0_134 = arith.constant 0 : index
    %1138 = vector.load %arg12[%c0_132, %c0_133, %c0_134] : memref<1x8x32xf32, #tpu.memory_space<vmem>>, vector<1x8x32xf32>
    %1139 = vector.shape_cast %1138 : vector<1x8x32xf32> to vector<8x32xf32>
    %1140 = vector.shape_cast %1137 : vector<8x32xf32> to vector<1x8x32xf32>
    tpu.vector_store %arg12[%c0_132, %c0_133, %c0_134], %1140 {strides = array<i32>} : memref<1x8x32xf32, #tpu.memory_space<vmem>>, vector<1x8x32xf32>,
    return
  }
  func.func @transform_0(%arg0: i32, %arg1: i32) -> (i32, i32, i32) {
    %c0_i32 = arith.constant 0 : i32
    %c0_i32_0 = arith.constant 0 : i32
    return %arg0, %arg1, %c0_i32 : i32, i32, i32
  }
  func.func @transform_1(%arg0: i32, %arg1: i32) -> (i32, i32, i32, i32) {
    %c0_i32 = arith.constant 0 : i32
    %c0_i32_0 = arith.constant 0 : i32
    %c0_i32_1 = arith.constant 0 : i32
    return %arg0, %arg1, %c0_i32, %c0_i32_0 : i32, i32, i32, i32
  }
  func.func @transform_2(%arg0: i32, %arg1: i32) -> (i32, i32) {
    %c0_i32 = arith.constant 0 : i32
    %c0_i32_0 = arith.constant 0 : i32
    %c0_i32_1 = arith.constant 0 : i32
    return %c0_i32, %c0_i32_0 : i32, i32
  }
  func.func @transform_3(%arg0: i32, %arg1: i32) -> (i32, i32) {
    %c0_i32 = arith.constant 0 : i32
    %c0_i32_0 = arith.constant 0 : i32
    %c0_i32_1 = arith.constant 0 : i32
    return %c0_i32, %c0_i32_0 : i32, i32
  }
  func.func @transform_4(%arg0: i32, %arg1: i32) -> (i32, i32) {
    %c0_i32 = arith.constant 0 : i32
    %c0_i32_0 = arith.constant 0 : i32
    %c0_i32_1 = arith.constant 0 : i32
    return %c0_i32, %c0_i32_0 : i32, i32
  }
  func.func @transform_5(%arg0: i32, %arg1: i32) -> (i32, i32) {
    %c0_i32 = arith.constant 0 : i32
    %c0_i32_0 = arith.constant 0 : i32
    %c0_i32_1 = arith.constant 0 : i32
    return %c0_i32, %c0_i32_0 : i32, i32
  }
  func.func @transform_6(%arg0: i32, %arg1: i32) -> (i32, i32) {
    %c0_i32 = arith.constant 0 : i32
    %c0_i32_0 = arith.constant 0 : i32
    %c0_i32_1 = arith.constant 0 : i32
    return %c0_i32, %c0_i32_0 : i32, i32
  }
  func.func @transform_7(%arg0: i32, %arg1: i32) -> (i32, i32) {
    %c0_i32 = arith.constant 0 : i32
    %c0_i32_0 = arith.constant 0 : i32
    %c0_i32_1 = arith.constant 0 : i32
    return %c0_i32, %c0_i32_0 : i32, i32
  }
  func.func @transform_8(%arg0: i32, %arg1: i32) -> (i32, i32, i32) {
    %c0_i32 = arith.constant 0 : i32
    %c0_i32_0 = arith.constant 0 : i32
    %c0_i32_1 = arith.constant 0 : i32
    %c0_i32_2 = arith.constant 0 : i32
    return %c0_i32, %c0_i32_0, %c0_i32_1 : i32, i32, i32
  }
  func.func @transform_9(%arg0: i32, %arg1: i32) -> (i32, i32) {
    %c0_i32 = arith.constant 0 : i32
    %c0_i32_0 = arith.constant 0 : i32
    %c0_i32_1 = arith.constant 0 : i32
    return %c0_i32, %c0_i32_0 : i32, i32
  }
  func.func @transform_10(%arg0: i32, %arg1: i32) -> (i32, i32, i32) {
    %c0_i32 = arith.constant 0 : i32
    %c0_i32_0 = arith.constant 0 : i32
    return %arg0, %arg1, %c0_i32 : i32, i32, i32
  }
}

</mosaic_0001>

<llo_original>
// kernel: tpu_custom_call.1
$region0: #{tpu_custom_call.1}
  #allocation0 [shape = 'u32[]', space=smem, size = 0x4, offset = 0x4, fixed_abs, tag = 'smem constant byte address 0x4 - core index']
  #allocation1 [shape = 'u32[144,128]{1,0:T(1,128)}', space=vmem, size = 0x12000, scoped, tag = 'internal scratch']
  %s0 = inlined_call_operand.vmem [shape: f32[2,128,3], index: 0, kind: input, shape index: {}]
  %s1 = inlined_call_operand.vmem [shape: bf16[2,16,8,4], index: 1, kind: input, shape index: {}]
  %s2 = inlined_call_operand.vmem [shape: f32[3,8], index: 2, kind: input, shape index: {}]
  %s3 = inlined_call_operand.vmem [shape: f32[1,8], index: 3, kind: input, shape index: {}]
  %s4 = inlined_call_operand.vmem [shape: f32[8,16], index: 4, kind: input, shape index: {}]
  %s5 = inlined_call_operand.vmem [shape: f32[1,16], index: 5, kind: input, shape index: {}]
  %s6 = inlined_call_operand.vmem [shape: f32[16,16], index: 6, kind: input, shape index: {}]
  %s7 = inlined_call_operand.vmem [shape: f32[1,16], index: 7, kind: input, shape index: {}]
  %s8 = inlined_call_operand.vmem [shape: bf16[16,4,32], index: 8, kind: input, shape index: {}]
  %s9 = inlined_call_operand.vmem [shape: f32[1,32], index: 9, kind: input, shape index: {}]
  %s10 = inlined_call_operand.hbm [shape: f32[2,16,32], index: 10, kind: output, shape index: {}]
  %s11 = sld [smem:[#allocation0]]
  $region73: #{tpu_custom_call.1} parent=0
    _
  %s13 = ssub.s32 1, %s11
  %s14 = scalar_select 0, %s13, %s11
  $region1: #{tpu_custom_call.1} parent=0
    #allocation2 [shape = 'u8[8192]{0}', space=vmem, size = 0x2000, scoped, tag = 'output window, operand 0']
    #allocation3 [shape = 's32[2]{0}', space=sflag, size = 0x8, scoped, tag = 'scoped memory for tpu_custom_call.1']
    %15 = vsyncpa [#allocation3], 0
    %s16 = scalar_lea.sflag [#allocation3], 1
    %17 = vsyncpa %s16, 0
    loop: start=0, step=1, limit=6
    $region2: #{tpu_custom_call.1} parent=1 // loop_pre_header
      _
    $region3: #{tpu_custom_call.1} parent=1 // loop_header
      %s19 = sphi 0, %s23
      %p20 = scmp.ge.s32.totalorder %s19, 6
      %s26 = sphi 0, %s38
      %s27 = sphi 0, %s34
      %s28 = sphi 0, %s26
      %s29 = sphi 0, %s27
      %s30 = sphi 0, %s28
      %s31 = sphi 0, %s29
      %s43 = sphi 0, %s45
      %s46 = sphi 0, %s43
      %s47 = sphi 0, %s46
      %s63 = sphi 0, %s47
      %s71 = sphi 0, %s73
      %s74 = sphi 0, %s71
      %s75 = sphi 0, %s74
      %s91 = sphi 0, %s75
      %s95 = sphi 0, %s95
      %s97 = sphi 0, %s95
      %s98 = sphi 0, %s97
      %s112 = sphi 0, %s98
      %s116 = sphi 0, %s116
      %s118 = sphi 0, %s116
      %s119 = sphi 0, %s118
      %s133 = sphi 0, %s119
      %s137 = sphi 0, %s137
      %s139 = sphi 0, %s137
      %s140 = sphi 0, %s139
      %s154 = sphi 0, %s140
      %s158 = sphi 0, %s158
      %s160 = sphi 0, %s158
      %s161 = sphi 0, %s160
      %s175 = sphi 0, %s161
      %s179 = sphi 0, %s179
      %s181 = sphi 0, %s179
      %s182 = sphi 0, %s181
      %s196 = sphi 0, %s182
      %s200 = sphi 0, %s200
      %s202 = sphi 0, %s200
      %s203 = sphi 0, %s202
      %s217 = sphi 0, %s203
      %s221 = sphi 0, %s221
      %s223 = sphi 0, %s221
      %s224 = sphi 0, %s223
      %s238 = sphi 0, %s224
      %s242 = sphi 0, %s242
      %s244 = sphi 0, %s242
      %s245 = sphi 0, %s244
      %s259 = sphi 0, %s245
      %s267 = sphi 0, %s269
      %s270 = sphi 0, %s267
      %s271 = sphi 0, %s270
      %s287 = sphi 0, %s271
    $region4: #{tpu_custom_call.1} parent=1 // loop_header_branch
      %22 = sbr.rel (%p20) target = $region8
    $region5: #{tpu_custom_call.1} parent=1 // loop_body
      %s24 = ssub.s32 %s19, 1
      %s25 = ssub.s32 %s19, 2
      %s32 = sadd.s32 1, %s27
      %p33 = scmp.ge.s32.totalorder %s32, 2
      %s34 = scalar_select %p33, 0, %s32
      %s35 = sadd.s32 1, %s26
      %s36 = scalar_select %p33, %s35, %s26
      %p37 = scmp.ge.s32.totalorder %s36, 2
      %s38 = scalar_select %p37, 0, %s36
      %s39 = ssub.s32 %s26, %s38
      %s40 = ssub.s32 %s27, %s34
      %s41 = sor.u32 %s39, %s40
      %p42 = scmp.eq.s32.totalorder %s41, 0
      %s44 = sadd.s32 %s43, 1
      %s45 = scalar_select %p42, %s43, %s44
      %p48 = pneg %p42
      %p49 = scmp.eq.s32.totalorder %s19, 3
      %p50 = por %p48, %p49
      %p51 = scmp.ne.s32.totalorder %s43, %s46
      %p52 = scmp.eq.s32.totalorder %s19, 0
      %p53 = por %p51, %p52
      %p54 = scmp.ne.s32.totalorder %s43, %s46
      %p55 = scmp.eq.s32.totalorder %s24, 3
      %p56 = por %p54, %p55
      %p57 = scmp.ne.s32.totalorder %s46, %s47
      %p58 = scmp.eq.s32.totalorder %s24, 0
      %p59 = por %p57, %p58
      %p60 = scmp.ne.s32.totalorder %s46, %s47
      %p61 = scmp.eq.s32.totalorder %s25, 3
      %p62 = por %p60, %p61
      %p64 = scmp.ne.s32.totalorder %s47, %s63
      %p65 = scmp.eq.s32.totalorder %s25, 0
      %p66 = por %p64, %p65
      %s67 = ssub.s32 %s26, %s38
      %s68 = ssub.s32 %s27, %s34
      %s69 = sor.u32 %s67, %s68
      %p70 = scmp.eq.s32.totalorder %s69, 0
      %s72 = sadd.s32 %s71, 1
      %s73 = scalar_select %p70, %s71, %s72
      %p76 = pneg %p70
      %p77 = scmp.eq.s32.totalorder %s19, 3
      %p78 = por %p76, %p77
      %p79 = scmp.ne.s32.totalorder %s71, %s74
      %p80 = scmp.eq.s32.totalorder %s19, 0
      %p81 = por %p79, %p80
      %p82 = scmp.ne.s32.totalorder %s71, %s74
      %p83 = scmp.eq.s32.totalorder %s24, 3
      %p84 = por %p82, %p83
      %p85 = scmp.ne.s32.totalorder %s74, %s75
      %p86 = scmp.eq.s32.totalorder %s24, 0
      %p87 = por %p85, %p86
      %p88 = scmp.ne.s32.totalorder %s74, %s75
      %p89 = scmp.eq.s32.totalorder %s25, 3
      %p90 = por %p88, %p89
      %p92 = scmp.ne.s32.totalorder %s75, %s91
      %p93 = scmp.eq.s32.totalorder %s25, 0
      %p94 = por %p92, %p93
      %s96 = sadd.s32 %s95, 1
      %p99 = scmp.eq.s32.totalorder %s19, 3
      %p100 = scmp.ne.s32.totalorder %s95, %s97
      %p101 = scmp.eq.s32.totalorder %s19, 0
      %p102 = por %p100, %p101
      %p103 = scmp.ne.s32.totalorder %s95, %s97
      %p104 = scmp.eq.s32.totalorder %s24, 3
      %p105 = por %p103, %p104
      %p106 = scmp.ne.s32.totalorder %s97, %s98
      %p107 = scmp.eq.s32.totalorder %s24, 0
      %p108 = por %p106, %p107
      %p109 = scmp.ne.s32.totalorder %s97, %s98
      %p110 = scmp.eq.s32.totalorder %s25, 3
      %p111 = por %p109, %p110
      %p113 = scmp.ne.s32.totalorder %s98, %s112
      %p114 = scmp.eq.s32.totalorder %s25, 0
      %p115 = por %p113, %p114
      %s117 = sadd.s32 %s116, 1
      %p120 = scmp.eq.s32.totalorder %s19, 3
      %p121 = scmp.ne.s32.totalorder %s116, %s118
      %p122 = scmp.eq.s32.totalorder %s19, 0
      %p123 = por %p121, %p122
      %p124 = scmp.ne.s32.totalorder %s116, %s118
      %p125 = scmp.eq.s32.totalorder %s24, 3
      %p126 = por %p124, %p125
      %p127 = scmp.ne.s32.totalorder %s118, %s119
      %p128 = scmp.eq.s32.totalorder %s24, 0
      %p129 = por %p127, %p128
      %p130 = scmp.ne.s32.totalorder %s118, %s119
      %p131 = scmp.eq.s32.totalorder %s25, 3
      %p132 = por %p130, %p131
      %p134 = scmp.ne.s32.totalorder %s119, %s133
      %p135 = scmp.eq.s32.totalorder %s25, 0
      %p136 = por %p134, %p135
      %s138 = sadd.s32 %s137, 1
      %p141 = scmp.eq.s32.totalorder %s19, 3
      %p142 = scmp.ne.s32.totalorder %s137, %s139
      %p143 = scmp.eq.s32.totalorder %s19, 0
      %p144 = por %p142, %p143
      %p145 = scmp.ne.s32.totalorder %s137, %s139
      %p146 = scmp.eq.s32.totalorder %s24, 3
      %p147 = por %p145, %p146
      %p148 = scmp.ne.s32.totalorder %s139, %s140
      %p149 = scmp.eq.s32.totalorder %s24, 0
      %p150 = por %p148, %p149
      %p151 = scmp.ne.s32.totalorder %s139, %s140
      %p152 = scmp.eq.s32.totalorder %s25, 3
      %p153 = por %p151, %p152
      %p155 = scmp.ne.s32.totalorder %s140, %s154
      %p156 = scmp.eq.s32.totalorder %s25, 0
      %p157 = por %p155, %p156
      %s159 = sadd.s32 %s158, 1
      %p162 = scmp.eq.s32.totalorder %s19, 3
      %p163 = scmp.ne.s32.totalorder %s158, %s160
      %p164 = scmp.eq.s32.totalorder %s19, 0
      %p165 = por %p163, %p164
      %p166 = scmp.ne.s32.totalorder %s158, %s160
      %p167 = scmp.eq.s32.totalorder %s24, 3
      %p168 = por %p166, %p167
      %p169 = scmp.ne.s32.totalorder %s160, %s161
      %p170 = scmp.eq.s32.totalorder %s24, 0
      %p171 = por %p169, %p170
      %p172 = scmp.ne.s32.totalorder %s160, %s161
      %p173 = scmp.eq.s32.totalorder %s25, 3
      %p174 = por %p172, %p173
      %p176 = scmp.ne.s32.totalorder %s161, %s175
      %p177 = scmp.eq.s32.totalorder %s25, 0
      %p178 = por %p176, %p177
      %s180 = sadd.s32 %s179, 1
      %p183 = scmp.eq.s32.totalorder %s19, 3
      %p184 = scmp.ne.s32.totalorder %s179, %s181
      %p185 = scmp.eq.s32.totalorder %s19, 0
      %p186 = por %p184, %p185
      %p187 = scmp.ne.s32.totalorder %s179, %s181
      %p188 = scmp.eq.s32.totalorder %s24, 3
      %p189 = por %p187, %p188
      %p190 = scmp.ne.s32.totalorder %s181, %s182
      %p191 = scmp.eq.s32.totalorder %s24, 0
      %p192 = por %p190, %p191
      %p193 = scmp.ne.s32.totalorder %s181, %s182
      %p194 = scmp.eq.s32.totalorder %s25, 3
      %p195 = por %p193, %p194
      %p197 = scmp.ne.s32.totalorder %s182, %s196
      %p198 = scmp.eq.s32.totalorder %s25, 0
      %p199 = por %p197, %p198
      %s201 = sadd.s32 %s200, 1
      %p204 = scmp.eq.s32.totalorder %s19, 3
      %p205 = scmp.ne.s32.totalorder %s200, %s202
      %p206 = scmp.eq.s32.totalorder %s19, 0
      %p207 = por %p205, %p206
      %p208 = scmp.ne.s32.totalorder %s200, %s202
      %p209 = scmp.eq.s32.totalorder %s24, 3
      %p210 = por %p208, %p209
      %p211 = scmp.ne.s32.totalorder %s202, %s203
      %p212 = scmp.eq.s32.totalorder %s24, 0
      %p213 = por %p211, %p212
      %p214 = scmp.ne.s32.totalorder %s202, %s203
      %p215 = scmp.eq.s32.totalorder %s25, 3
      %p216 = por %p214, %p215
      %p218 = scmp.ne.s32.totalorder %s203, %s217
      %p219 = scmp.eq.s32.totalorder %s25, 0
      %p220 = por %p218, %p219
      %s222 = sadd.s32 %s221, 1
      %p225 = scmp.eq.s32.totalorder %s19, 3
      %p226 = scmp.ne.s32.totalorder %s221, %s223
      %p227 = scmp.eq.s32.totalorder %s19, 0
      %p228 = por %p226, %p227
      %p229 = scmp.ne.s32.totalorder %s221, %s223
      %p230 = scmp.eq.s32.totalorder %s24, 3
      %p231 = por %p229, %p230
      %p232 = scmp.ne.s32.totalorder %s223, %s224
      %p233 = scmp.eq.s32.totalorder %s24, 0
      %p234 = por %p232, %p233
      %p235 = scmp.ne.s32.totalorder %s223, %s224
      %p236 = scmp.eq.s32.totalorder %s25, 3
      %p237 = por %p235, %p236
      %p239 = scmp.ne.s32.totalorder %s224, %s238
      %p240 = scmp.eq.s32.totalorder %s25, 0
      %p241 = por %p239, %p240
      %s243 = sadd.s32 %s242, 1
      %p246 = scmp.eq.s32.totalorder %s19, 3
      %p247 = scmp.ne.s32.totalorder %s242, %s244
      %p248 = scmp.eq.s32.totalorder %s19, 0
      %p249 = por %p247, %p248
      %p250 = scmp.ne.s32.totalorder %s242, %s244
      %p251 = scmp.eq.s32.totalorder %s24, 3
      %p252 = por %p250, %p251
      %p253 = scmp.ne.s32.totalorder %s244, %s245
      %p254 = scmp.eq.s32.totalorder %s24, 0
      %p255 = por %p253, %p254
      %p256 = scmp.ne.s32.totalorder %s244, %s245
      %p257 = scmp.eq.s32.totalorder %s25, 3
      %p258 = por %p256, %p257
      %p260 = scmp.ne.s32.totalorder %s245, %s259
      %p261 = scmp.eq.s32.totalorder %s25, 0
      %p262 = por %p260, %p261
      %s263 = ssub.s32 %s26, %s38
      %s264 = ssub.s32 %s27, %s34
      %s265 = sor.u32 %s263, %s264
      %p266 = scmp.eq.s32.totalorder %s265, 0
      %s268 = sadd.s32 %s267, 1
      %s269 = scalar_select %p266, %s267, %s268
      %p272 = pneg %p266
      %p273 = scmp.eq.s32.totalorder %s19, 3
      %p274 = por %p272, %p273
      %p275 = scmp.ne.s32.totalorder %s267, %s270
      %p276 = scmp.eq.s32.totalorder %s19, 0
      %p277 = por %p275, %p276
      %p278 = scmp.ne.s32.totalorder %s267, %s270
      %p279 = scmp.eq.s32.totalorder %s24, 3
      %p280 = por %p278, %p279
      %p281 = scmp.ne.s32.totalorder %s270, %s271
      %p282 = scmp.eq.s32.totalorder %s24, 0
      %p283 = por %p281, %p282
      %p284 = scmp.ne.s32.totalorder %s270, %s271
      %p285 = scmp.eq.s32.totalorder %s25, 3
      %p286 = por %p284, %p285
      %p288 = scmp.ne.s32.totalorder %s271, %s287
      %p289 = scmp.eq.s32.totalorder %s25, 0
      %p290 = por %p288, %p289
      %p291 = scmp.le.s32.totalorder 1, %s19
      %p292 = scmp.lt.s32.totalorder %s19, 5
      %p293 = pnand %p291, %p292
      %p294 = pneg %p293
      // Predicated region
      $region9: #{tpu_custom_call.1} parent=5 // pred_check
        _
      $region10: #{tpu_custom_call.1} parent=5 // pred_check_branch
        %296 = sbr.rel (%p293) target = $region12
      $region11: #{tpu_custom_call.1} parent=5 // pred_region
        %s297 = ssub.s32 %s19, 1
        // Predicated region
        $region13: #{tpu_custom_call.1} parent=11 // pred_check
          %p298 = pneg %p108
        $region14: #{tpu_custom_call.1} parent=11 // pred_check_branch
          %300 = sbr.rel (%p298) target = $region16
        $region15: #{tpu_custom_call.1} parent=11 // pred_region
          _
        $region16: #{tpu_custom_call.1} parent=11 // pred_fallthru
          _
        // Predicated region
        $region17: #{tpu_custom_call.1} parent=11 // pred_check
          %p301 = pneg %p129
        $region18: #{tpu_custom_call.1} parent=11 // pred_check_branch
          %303 = sbr.rel (%p301) target = $region20
        $region19: #{tpu_custom_call.1} parent=11 // pred_region
          _
        $region20: #{tpu_custom_call.1} parent=11 // pred_fallthru
          _
        // Predicated region
        $region21: #{tpu_custom_call.1} parent=11 // pred_check
          %p304 = pneg %p150
        $region22: #{tpu_custom_call.1} parent=11 // pred_check_branch
          %306 = sbr.rel (%p304) target = $region24
        $region23: #{tpu_custom_call.1} parent=11 // pred_region
          _
        $region24: #{tpu_custom_call.1} parent=11 // pred_fallthru
          _
        // Predicated region
        $region25: #{tpu_custom_call.1} parent=11 // pred_check
          %p307 = pneg %p171
        $region26: #{tpu_custom_call.1} parent=11 // pred_check_branch
          %309 = sbr.rel (%p307) target = $region28
        $region27: #{tpu_custom_call.1} parent=11 // pred_region
          _
        $region28: #{tpu_custom_call.1} parent=11 // pred_fallthru
          _
        // Predicated region
        $region29: #{tpu_custom_call.1} parent=11 // pred_check
          %p310 = pneg %p192
        $region30: #{tpu_custom_call.1} parent=11 // pred_check_branch
          %312 = sbr.rel (%p310) target = $region32
        $region31: #{tpu_custom_call.1} parent=11 // pred_region
          _
        $region32: #{tpu_custom_call.1} parent=11 // pred_fallthru
          _
        // Predicated region
        $region33: #{tpu_custom_call.1} parent=11 // pred_check
          %p313 = pneg %p213
        $region34: #{tpu_custom_call.1} parent=11 // pred_check_branch
          %315 = sbr.rel (%p313) target = $region36
        $region35: #{tpu_custom_call.1} parent=11 // pred_region
          _
        $region36: #{tpu_custom_call.1} parent=11 // pred_fallthru
          _
        // Predicated region
        $region37: #{tpu_custom_call.1} parent=11 // pred_check
          %p316 = pneg %p234
        $region38: #{tpu_custom_call.1} parent=11 // pred_check_branch
          %318 = sbr.rel (%p316) target = $region40
        $region39: #{tpu_custom_call.1} parent=11 // pred_region
          _
        $region40: #{tpu_custom_call.1} parent=11 // pred_fallthru
          _
        // Predicated region
        $region41: #{tpu_custom_call.1} parent=11 // pred_check
          %p319 = pneg %p255
        $region42: #{tpu_custom_call.1} parent=11 // pred_check_branch
          %321 = sbr.rel (%p319) target = $region44
        $region43: #{tpu_custom_call.1} parent=11 // pred_region
          _
        $region44: #{tpu_custom_call.1} parent=11 // pred_fallthru
          _
      $region12: #{tpu_custom_call.1} parent=5 // pred_fallthru
        _
      %p322 = scmp.lt.s32.totalorder %s19, 4
      // Predicated region
      $region45: #{tpu_custom_call.1} parent=5 // pred_check
        %p323 = pneg %p322
      $region46: #{tpu_custom_call.1} parent=5 // pred_check_branch
        %325 = sbr.rel (%p323) target = $region48
      $region47: #{tpu_custom_call.1} parent=5 // pred_region
        // Predicated region
        $region49: #{tpu_custom_call.1} parent=47 // pred_check
          %p326 = pneg %p53
        $region50: #{tpu_custom_call.1} parent=47 // pred_check_branch
          %328 = sbr.rel (%p326) target = $region52
        $region51: #{tpu_custom_call.1} parent=47 // pred_region
          %s329 = smul.u32 8, %s27
          %p330 = scmp.lt.s32.totalorder %s26, 1
          %s331 = scalar_select %p330, %s26, 1
          %p332 = scmp.lt.s32.totalorder %s329, 15
          %s333 = scalar_select %p332, %s329, 15
          %s334 = smul.addr %s331, 16
          %s335 = sadd.s32 %s333, %s334
          %s336 = smul.addr %s335, 8
          %s337 = scalar_lea.vmem %s0, %s336
          %s338 = smul.u32 8, %s27
        $region52: #{tpu_custom_call.1} parent=47 // pred_fallthru
          _
        // Predicated region
        $region53: #{tpu_custom_call.1} parent=47 // pred_check
          %p339 = pneg %p81
        $region54: #{tpu_custom_call.1} parent=47 // pred_check_branch
          %341 = sbr.rel (%p339) target = $region56
        $region55: #{tpu_custom_call.1} parent=47 // pred_region
          %s342 = smul.u32 8, %s27
          %p343 = scmp.lt.s32.totalorder %s26, 1
          %s344 = scalar_select %p343, %s26, 1
          %p345 = scmp.lt.s32.totalorder %s342, 15
          %s346 = scalar_select %p345, %s342, 15
          %s347 = smul.addr %s344, 16
          %s348 = sadd.s32 %s346, %s347
          %s349 = smul.addr %s348, 4
          %s350 = scalar_lea.vmem %s1, %s349
          %s351 = smul.u32 8, %s27
        $region56: #{tpu_custom_call.1} parent=47 // pred_fallthru
          _
      $region48: #{tpu_custom_call.1} parent=5 // pred_fallthru
        _
      %p352 = scmp.le.s32.totalorder 1, %s19
      %p353 = scmp.lt.s32.totalorder %s19, 5
      %p354 = pnand %p352, %p353
      %p355 = pneg %p354
      // Predicated region
      $region57: #{tpu_custom_call.1} parent=5 // pred_check
        _
      $region58: #{tpu_custom_call.1} parent=5 // pred_check_branch
        %357 = sbr.rel (%p354) target = $region60
      $region59: #{tpu_custom_call.1} parent=5 // pred_region
        %s358 = ssub.s32 %s19, 1
        %s359 = smul.u32 8, %s29
        %p360 = scmp.lt.s32.totalorder %s28, 1
        %s361 = scalar_select %p360, %s28, 1
        %p362 = scmp.lt.s32.totalorder %s359, 15
        %s363 = scalar_select %p362, %s359, 15
        %s364 = smul.addr %s361, 16
        %s365 = sadd.s32 %s363, %s364
        %s366 = smul.addr %s365, 8
        %s367 = scalar_lea.vmem %s0, %s366
        %p368 = pneg %p59
        %p369 = pneg %p56
        %s370 = smul.u32 8, %s29
        %p371 = scmp.lt.s32.totalorder %s28, 1
        %s372 = scalar_select %p371, %s28, 1
        %p373 = scmp.lt.s32.totalorder %s370, 15
        %s374 = scalar_select %p373, %s370, 15
        %s375 = smul.addr %s372, 16
        %s376 = sadd.s32 %s374, %s375
        %s377 = smul.addr %s376, 4
        %s378 = scalar_lea.vmem %s1, %s377
        %p379 = pneg %p87
        %p380 = pneg %p84
        %p381 = pneg %p108
        %p382 = pneg %p105
        %p383 = pneg %p129
        %p384 = pneg %p126
        %p385 = pneg %p150
        %p386 = pneg %p147
        %p387 = pneg %p171
        %p388 = pneg %p168
        %p389 = pneg %p192
        %p390 = pneg %p189
        %p391 = pneg %p213
        %p392 = pneg %p210
        %p393 = pneg %p234
        %p394 = pneg %p231
        %p395 = pneg %p255
        %p396 = pneg %p252
        %p397 = pneg %p283
        %p398 = pneg %p280
        %s399 = sand.u32 %s270, 1
        %s400 = scalar_lea.sflag [#allocation3], %s399
        %s401 = sand.u32 %s270, 1
        %s402 = smul.addr %s401, 8
        %s403 = scalar_lea.vmem [#allocation2], %s402
        %s404 = smul.u32 8, %s29
        %p405 = scmp.lt.s32.totalorder %s28, 1
        %s406 = scalar_select %p405, %s28, 1
        %p407 = scmp.lt.s32.totalorder %s404, 15
        %s408 = scalar_select %p407, %s404, 15
        %s409 = smul.addr %s406, 16
        %s410 = sadd.s32 %s408, %s409
        %s411 = smul.addr %s410, 8
        %s412 = scalar_lea.vmem %s0, %s411
        %s413 = smul.u32 8, %s29
        %s414 = smul.u32 8, %s29
        %p415 = scmp.lt.s32.totalorder %s28, 1
        %s416 = scalar_select %p415, %s28, 1
        %p417 = scmp.lt.s32.totalorder %s414, 15
        %s418 = scalar_select %p417, %s414, 15
        %s419 = smul.addr %s416, 16
        %s420 = sadd.s32 %s418, %s419
        %s421 = smul.addr %s420, 4
        %s422 = scalar_lea.vmem %s1, %s421
        %s423 = smul.u32 8, %s29
        %v425 = vld [vmem:[%s412] sm:$0xff]
        %v426 = vld [vmem:[%s412 + $0x8] sm:$0xff]
        %v427 = vld [vmem:[%s412 + $0x10] sm:$0xff]
        %v428 = vld [vmem:[%s412 + $0x18] sm:$0xff]
        %v429 = vld [vmem:[%s412 + $0x20] sm:$0xff]
        %v430 = vld [vmem:[%s412 + $0x28] sm:$0xff]
        %v431 = vld [vmem:[%s412 + $0x30] sm:$0xff]
        %v432 = vld [vmem:[%s412 + $0x38] sm:$0xff]
        %v433 = vld [vmem:[%s2] sm:$0x1]
        %435 = vset.pattern.permute.xlu0 0
        %436 = vperm.xlu0 %435, %v425
        %v437 = vpop.permute.xlu0 %436
        %440 = vset.pattern.permute.xlu0 0
        %441 = vperm.xlu0 %440, %v426
        %v442 = vpop.permute.xlu0 %441
        %445 = vset.pattern.permute.xlu0 0
        %446 = vperm.xlu0 %445, %v427
        %v447 = vpop.permute.xlu0 %446
        %450 = vset.pattern.permute.xlu0 0
        %451 = vperm.xlu0 %450, %v428
        %v452 = vpop.permute.xlu0 %451
        %455 = vset.pattern.permute.xlu0 0
        %456 = vperm.xlu0 %455, %v429
        %v457 = vpop.permute.xlu0 %456
        %460 = vset.pattern.permute.xlu0 0
        %461 = vperm.xlu0 %460, %v430
        %v462 = vpop.permute.xlu0 %461
        %465 = vset.pattern.permute.xlu0 0
        %466 = vperm.xlu0 %465, %v431
        %v467 = vpop.permute.xlu0 %466
        %470 = vset.pattern.permute.xlu0 0
        %471 = vperm.xlu0 %470, %v432
        %v472 = vpop.permute.xlu0 %471
        %v474 = vlaneseq
        %v475 = vshrl.u32 %v474, 7
        %v476 = vsub.s32 0, %v475
        %v477 = vrot.slane %v433, %v476
        %v478 = vmul.f32 %v437, %v477
        %v479 = vmul.f32 %v442, %v477
        %v480 = vmul.f32 %v447, %v477
        %v481 = vmul.f32 %v452, %v477
        %v482 = vmul.f32 %v457, %v477
        %v483 = vmul.f32 %v462, %v477
        %v484 = vmul.f32 %v467, %v477
        %v485 = vmul.f32 %v472, %v477
        %v486 = vld [vmem:[%s2 + $0x1] sm:$0x1]
        %487 = vset.pattern.permute.xlu0 1
        %488 = vperm.xlu0 %487, %v425
        %v489 = vpop.permute.xlu0 %488
        %491 = vset.pattern.permute.xlu0 1
        %492 = vperm.xlu0 %491, %v426
        %v493 = vpop.permute.xlu0 %492
        %495 = vset.pattern.permute.xlu0 1
        %496 = vperm.xlu0 %495, %v427
        %v497 = vpop.permute.xlu0 %496
        %499 = vset.pattern.permute.xlu0 1
        %500 = vperm.xlu0 %499, %v428
        %v501 = vpop.permute.xlu0 %500
        %503 = vset.pattern.permute.xlu0 1
        %504 = vperm.xlu0 %503, %v429
        %v505 = vpop.permute.xlu0 %504
        %507 = vset.pattern.permute.xlu0 1
        %508 = vperm.xlu0 %507, %v430
        %v509 = vpop.permute.xlu0 %508
        %511 = vset.pattern.permute.xlu0 1
        %512 = vperm.xlu0 %511, %v431
        %v513 = vpop.permute.xlu0 %512
        %515 = vset.pattern.permute.xlu0 1
        %516 = vperm.xlu0 %515, %v432
        %v517 = vpop.permute.xlu0 %516
        %v519 = vlaneseq
        %v520 = vshrl.u32 %v519, 7
        %v521 = vsub.s32 0, %v520
        %v522 = vrot.slane %v486, %v521
        %v523 = vmul.f32 %v489, %v522
        %v524 = vmul.f32 %v493, %v522
        %v525 = vmul.f32 %v497, %v522
        %v526 = vmul.f32 %v501, %v522
        %v527 = vmul.f32 %v505, %v522
        %v528 = vmul.f32 %v509, %v522
        %v529 = vmul.f32 %v513, %v522
        %v530 = vmul.f32 %v517, %v522
        %v531 = vadd.f32 %v478, %v523
        %v532 = vadd.f32 %v479, %v524
        %v533 = vadd.f32 %v480, %v525
        %v534 = vadd.f32 %v481, %v526
        %v535 = vadd.f32 %v482, %v527
        %v536 = vadd.f32 %v483, %v528
        %v537 = vadd.f32 %v484, %v529
        %v538 = vadd.f32 %v485, %v530
        %v539 = vld [vmem:[%s2 + $0x2] sm:$0x1]
        %540 = vset.pattern.permute.xlu0 2
        %541 = vperm.xlu0 %540, %v425
        %v542 = vpop.permute.xlu0 %541
        %544 = vset.pattern.permute.xlu0 2
        %545 = vperm.xlu0 %544, %v426
        %v546 = vpop.permute.xlu0 %545
        %548 = vset.pattern.permute.xlu0 2
        %549 = vperm.xlu0 %548, %v427
        %v550 = vpop.permute.xlu0 %549
        %552 = vset.pattern.permute.xlu0 2
        %553 = vperm.xlu0 %552, %v428
        %v554 = vpop.permute.xlu0 %553
        %556 = vset.pattern.permute.xlu0 2
        %557 = vperm.xlu0 %556, %v429
        %v558 = vpop.permute.xlu0 %557
        %560 = vset.pattern.permute.xlu0 2
        %561 = vperm.xlu0 %560, %v430
        %v562 = vpop.permute.xlu0 %561
        %564 = vset.pattern.permute.xlu0 2
        %565 = vperm.xlu0 %564, %v431
        %v566 = vpop.permute.xlu0 %565
        %568 = vset.pattern.permute.xlu0 2
        %569 = vperm.xlu0 %568, %v432
        %v570 = vpop.permute.xlu0 %569
        %v572 = vlaneseq
        %v573 = vshrl.u32 %v572, 7
        %v574 = vsub.s32 0, %v573
        %v575 = vrot.slane %v539, %v574
        %v576 = vmul.f32 %v542, %v575
        %v577 = vmul.f32 %v546, %v575
        %v578 = vmul.f32 %v550, %v575
        %v579 = vmul.f32 %v554, %v575
        %v580 = vmul.f32 %v558, %v575
        %v581 = vmul.f32 %v562, %v575
        %v582 = vmul.f32 %v566, %v575
        %v583 = vmul.f32 %v570, %v575
        %v584 = vadd.f32 %v531, %v576
        %v585 = vadd.f32 %v532, %v577
        %v586 = vadd.f32 %v533, %v578
        %v587 = vadd.f32 %v534, %v579
        %v588 = vadd.f32 %v535, %v580
        %v589 = vadd.f32 %v536, %v581
        %v590 = vadd.f32 %v537, %v582
        %v591 = vadd.f32 %v538, %v583
        %v592 = vld [vmem:[%s3] sm:$0x1]
        %v594 = vlaneseq
        %v595 = vshrl.u32 %v594, 7
        %v596 = vsub.s32 0, %v595
        %v597 = vrot.slane %v592, %v596
        %v599 = vadd.f32 %v584, %v597
        %v600 = vadd.f32 %v585, %v597
        %v601 = vadd.f32 %v586, %v597
        %v602 = vadd.f32 %v587, %v597
        %v603 = vadd.f32 %v588, %v597
        %v604 = vadd.f32 %v589, %v597
        %v605 = vadd.f32 %v590, %v597
        %v606 = vadd.f32 %v591, %v597
        %v607 = vmax.f32 %v599, 0.0
        %v608 = vmax.f32 %v600, 0.0
        %v609 = vmax.f32 %v601, 0.0
        %v610 = vmax.f32 %v602, 0.0
        %v611 = vmax.f32 %v603, 0.0
        %v612 = vmax.f32 %v604, 0.0
        %v613 = vmax.f32 %v605, 0.0
        %v614 = vmax.f32 %v606, 0.0
        %v615 = vld [vmem:[%s4] sm:$0xff]
        %v616 = vld [vmem:[%s5] sm:$0x1]
        %v618 = vlaneseq
        %v619 = vshrl.u32 %v618, 7
        %v620 = vsub.s32 0, %v619
        %v621 = vrot.slane %v616, %v620
        %vm623 = vcmask 64512
        %v625 = vsel %vm623, %v607, 0
        %v628 = vsel %vm623, %v608, 0
        %v631 = vsel %vm623, %v609, 0
        %v634 = vsel %vm623, %v610, 0
        %v637 = vsel %vm623, %v611, 0
        %v640 = vsel %vm623, %v612, 0
        %v643 = vsel %vm623, %v613, 0
        %v646 = vsel %vm623, %v614, 0
        %648 = vmatprep.subr.mxu0 0.0
        %649 = vmatpush1.msra.mxu0 %v615
        %650 = vmatprep.subr.mxu0 0.0
        %651 = vmatpush1.msra.mxu0 0.0
        %652 = vmatprep.subr.mxu0 0.0
        %653 = vmatpush1.msra.mxu0 0.0
        %654 = vmatprep.subr.mxu0 0.0
        %655 = vmatpush1.msra.mxu0 0.0
        %656 = vmatprep.subr.mxu0 0.0
        %657 = vmatpush1.msra.mxu0 0.0
        %658 = vmatprep.subr.mxu0 0.0
        %659 = vmatpush1.msra.mxu0 0.0
        %660 = vmatprep.subr.mxu0 0.0
        %661 = vmatpush1.msra.mxu0 0.0
        %662 = vmatprep.subr.mxu0 0.0
        %663 = vmatpush1.msra.mxu0 0.0
        %664 = vmatprep.subr.mxu0 0.0
        %665 = vmatpush1.msra.mxu0 0.0
        %666 = vmatprep.subr.mxu0 0.0
        %667 = vmatpush1.msra.mxu0 0.0
        %668 = vmatprep.subr.mxu0 0.0
        %669 = vmatpush1.msra.mxu0 0.0
        %670 = vmatprep.subr.mxu0 0.0
        %671 = vmatpush1.msra.mxu0 0.0
        %672 = vmatprep.subr.mxu0 0.0
        %673 = vmatpush1.msra.mxu0 0.0
        %674 = vmatprep.subr.mxu0 0.0
        %675 = vmatpush1.msra.mxu0 0.0
        %676 = vmatprep.subr.mxu0 0.0
        %677 = vmatpush1.msra.mxu0 0.0
        %678 = vmatprep.subr.mxu0 0.0
        %679 = vmatpush1.msra.mxu0 0.0
        %680 = vmatprep.subr.mxu0 0.0
        %681 = vmatpush1.msra.mxu0 0.0
        %682 = vmatprep.subr.mxu0 0.0
        %683 = vmatpush1.msra.mxu0 0.0
        %684 = vmatprep.subr.mxu0 0.0
        %685 = vmatpush1.msra.mxu0 0.0
        %686 = vmatprep.subr.mxu0 0.0
        %687 = vmatpush1.msra.mxu0 0.0
        %688 = vmatprep.subr.mxu0 0.0
        %689 = vmatpush1.msra.mxu0 0.0
        %690 = vmatprep.subr.mxu0 0.0
        %691 = vmatpush1.msra.mxu0 0.0
        %692 = vmatprep.subr.mxu0 0.0
        %693 = vmatpush1.msra.mxu0 0.0
        %694 = vmatprep.subr.mxu0 0.0
        %695 = vmatpush1.msra.mxu0 0.0
        %696 = vmatprep.subr.mxu0 0.0
        %697 = vmatpush1.msra.mxu0 0.0
        %698 = vmatprep.subr.mxu0 0.0
        %699 = vmatpush1.msra.mxu0 0.0
        %700 = vmatprep.subr.mxu0 0.0
        %701 = vmatpush1.msra.mxu0 0.0
        %702 = vmatprep.subr.mxu0 0.0
        %703 = vmatpush1.msra.mxu0 0.0
        %704 = vmatprep.subr.mxu0 0.0
        %705 = vmatpush1.msra.mxu0 0.0
        %706 = vmatprep.subr.mxu0 0.0
        %707 = vmatpush1.msra.mxu0 0.0
        %708 = vmatprep.subr.mxu0 0.0
        %709 = vmatpush1.msra.mxu0 0.0
        %710 = vmatprep.subr.mxu0 0.0
        %711 = vmatpush1.msra.mxu0 0.0
        %712 = vmatprep.mubr.f32.mxu0 0.0
        %713 = vmatmul.mubr.f32.gmra.mrb[0].mxu0 %v625
        %v714 = vpop.f32.mrb[0].mxu0
        %v715 = vadd.f32 %v621, %v714
        %v716 = vpop.f32.mrb[0].mxu0
        %717 = vmatprep.mubr.f32.mxu0 0.0
        %718 = vmatmul.mubr.f32.gmra.mrb[0].mxu0 %v628
        %v719 = vpop.f32.mrb[0].mxu0
        %v720 = vadd.f32 %v621, %v719
        %v721 = vpop.f32.mrb[0].mxu0
        %722 = vmatprep.mubr.f32.mxu0 0.0
        %723 = vmatmul.mubr.f32.gmra.mrb[0].mxu0 %v631
        %v724 = vpop.f32.mrb[0].mxu0
        %v725 = vadd.f32 %v621, %v724
        %v726 = vpop.f32.mrb[0].mxu0
        %727 = vmatprep.mubr.f32.mxu0 0.0
        %728 = vmatmul.mubr.f32.gmra.mrb[0].mxu0 %v634
        %v729 = vpop.f32.mrb[0].mxu0
        %v730 = vadd.f32 %v621, %v729
        %v731 = vpop.f32.mrb[0].mxu0
        %732 = vmatprep.mubr.f32.mxu0 0.0
        %733 = vmatmul.mubr.f32.gmra.mrb[0].mxu0 %v637
        %v734 = vpop.f32.mrb[0].mxu0
        %v735 = vadd.f32 %v621, %v734
        %v736 = vpop.f32.mrb[0].mxu0
        %737 = vmatprep.mubr.f32.mxu0 0.0
        %738 = vmatmul.mubr.f32.gmra.mrb[0].mxu0 %v640
        %v739 = vpop.f32.mrb[0].mxu0
        %v740 = vadd.f32 %v621, %v739
        %v741 = vpop.f32.mrb[0].mxu0
        %742 = vmatprep.mubr.f32.mxu0 0.0
        %743 = vmatmul.mubr.f32.gmra.mrb[0].mxu0 %v643
        %v744 = vpop.f32.mrb[0].mxu0
        %v745 = vadd.f32 %v621, %v744
        %v746 = vpop.f32.mrb[0].mxu0
        %747 = vmatprep.mubr.f32.mxu0 0.0
        %748 = vmatmul.mubr.f32.gmra.mrb[0].mxu0 %v646
        %v749 = vpop.f32.mrb[0].mxu0
        %v750 = vadd.f32 %v621, %v749
        %v751 = vpop.f32.mrb[0].mxu0
        %752 = vdwg.mxu0
        %v753 = vmax.f32 %v715, 0.0
        %v754 = vmax.f32 %v720, 0.0
        %v755 = vmax.f32 %v725, 0.0
        %v756 = vmax.f32 %v730, 0.0
        %v757 = vmax.f32 %v735, 0.0
        %v758 = vmax.f32 %v740, 0.0
        %v759 = vmax.f32 %v745, 0.0
        %v760 = vmax.f32 %v750, 0.0
        %v761 = vld [vmem:[%s6] sm:$0xff]
        %v762 = vld [vmem:[%s6 + $0x8] sm:$0xff]
        %v763 = vld [vmem:[%s7] sm:$0x1]
        %v765 = vlaneseq
        %v766 = vshrl.u32 %v765, 7
        %v767 = vsub.s32 0, %v766
        %v768 = vrot.slane %v763, %v767
        %vm770 = vcmask 130048
        %v772 = vsel %vm770, %v753, 0
        %v775 = vsel %vm770, %v754, 0
        %v778 = vsel %vm770, %v755, 0
        %v781 = vsel %vm770, %v756, 0
        %v784 = vsel %vm770, %v757, 0
        %v787 = vsel %vm770, %v758, 0
        %v790 = vsel %vm770, %v759, 0
        %v793 = vsel %vm770, %v760, 0
        %795 = vmatprep.subr.mxu0 0.0
        %796 = vmatpush1.msra.mxu0 %v761
        %797 = vmatprep.subr.mxu0 0.0
        %798 = vmatpush1.msra.mxu0 %v762
        %799 = vmatprep.subr.mxu0 0.0
        %800 = vmatpush1.msra.mxu0 0.0
        %801 = vmatprep.subr.mxu0 0.0
        %802 = vmatpush1.msra.mxu0 0.0
        %803 = vmatprep.subr.mxu0 0.0
        %804 = vmatpush1.msra.mxu0 0.0
        %805 = vmatprep.subr.mxu0 0.0
        %806 = vmatpush1.msra.mxu0 0.0
        %807 = vmatprep.subr.mxu0 0.0
        %808 = vmatpush1.msra.mxu0 0.0
        %809 = vmatprep.subr.mxu0 0.0
        %810 = vmatpush1.msra.mxu0 0.0
        %811 = vmatprep.subr.mxu0 0.0
        %812 = vmatpush1.msra.mxu0 0.0
        %813 = vmatprep.subr.mxu0 0.0
        %814 = vmatpush1.msra.mxu0 0.0
        %815 = vmatprep.subr.mxu0 0.0
        %816 = vmatpush1.msra.mxu0 0.0
        %817 = vmatprep.subr.mxu0 0.0
        %818 = vmatpush1.msra.mxu0 0.0
        %819 = vmatprep.subr.mxu0 0.0
        %820 = vmatpush1.msra.mxu0 0.0
        %821 = vmatprep.subr.mxu0 0.0
        %822 = vmatpush1.msra.mxu0 0.0
        %823 = vmatprep.subr.mxu0 0.0
        %824 = vmatpush1.msra.mxu0 0.0
        %825 = vmatprep.subr.mxu0 0.0
        %826 = vmatpush1.msra.mxu0 0.0
        %827 = vmatprep.subr.mxu0 0.0
        %828 = vmatpush1.msra.mxu0 0.0
        %829 = vmatprep.subr.mxu0 0.0
        %830 = vmatpush1.msra.mxu0 0.0
        %831 = vmatprep.subr.mxu0 0.0
        %832 = vmatpush1.msra.mxu0 0.0
        %833 = vmatprep.subr.mxu0 0.0
        %834 = vmatpush1.msra.mxu0 0.0
        %835 = vmatprep.subr.mxu0 0.0
        %836 = vmatpush1.msra.mxu0 0.0
        %837 = vmatprep.subr.mxu0 0.0
        %838 = vmatpush1.msra.mxu0 0.0
        %839 = vmatprep.subr.mxu0 0.0
        %840 = vmatpush1.msra.mxu0 0.0
        %841 = vmatprep.subr.mxu0 0.0
        %842 = vmatpush1.msra.mxu0 0.0
        %843 = vmatprep.subr.mxu0 0.0
        %844 = vmatpush1.msra.mxu0 0.0
        %845 = vmatprep.subr.mxu0 0.0
        %846 = vmatpush1.msra.mxu0 0.0
        %847 = vmatprep.subr.mxu0 0.0
        %848 = vmatpush1.msra.mxu0 0.0
        %849 = vmatprep.subr.mxu0 0.0
        %850 = vmatpush1.msra.mxu0 0.0
        %851 = vmatprep.subr.mxu0 0.0
        %852 = vmatpush1.msra.mxu0 0.0
        %853 = vmatprep.subr.mxu0 0.0
        %854 = vmatpush1.msra.mxu0 0.0
        %855 = vmatprep.subr.mxu0 0.0
        %856 = vmatpush1.msra.mxu0 0.0
        %857 = vmatprep.subr.mxu0 0.0
        %858 = vmatpush1.msra.mxu0 0.0
        %859 = vmatprep.mubr.f32.mxu0 0.0
        %860 = vmatmul.mubr.f32.gmra.mrb[0].mxu0 %v772
        %v861 = vpop.f32.mrb[0].mxu0
        %v862 = vadd.f32 %v768, %v861
        %v863 = vpop.f32.mrb[0].mxu0
        %864 = vmatprep.mubr.f32.mxu0 0.0
        %865 = vmatmul.mubr.f32.gmra.mrb[0].mxu0 %v775
        %v866 = vpop.f32.mrb[0].mxu0
        %v867 = vadd.f32 %v768, %v866
        %v868 = vpop.f32.mrb[0].mxu0
        %869 = vmatprep.mubr.f32.mxu0 0.0
        %870 = vmatmul.mubr.f32.gmra.mrb[0].mxu0 %v778
        %v871 = vpop.f32.mrb[0].mxu0
        %v872 = vadd.f32 %v768, %v871
        %v873 = vpop.f32.mrb[0].mxu0
        %874 = vmatprep.mubr.f32.mxu0 0.0
        %875 = vmatmul.mubr.f32.gmra.mrb[0].mxu0 %v781
        %v876 = vpop.f32.mrb[0].mxu0
        %v877 = vadd.f32 %v768, %v876
        %v878 = vpop.f32.mrb[0].mxu0
        %879 = vmatprep.mubr.f32.mxu0 0.0
        %880 = vmatmul.mubr.f32.gmra.mrb[0].mxu0 %v784
        %v881 = vpop.f32.mrb[0].mxu0
        %v882 = vadd.f32 %v768, %v881
        %v883 = vpop.f32.mrb[0].mxu0
        %884 = vmatprep.mubr.f32.mxu0 0.0
        %885 = vmatmul.mubr.f32.gmra.mrb[0].mxu0 %v787
        %v886 = vpop.f32.mrb[0].mxu0
        %v887 = vadd.f32 %v768, %v886
        %v888 = vpop.f32.mrb[0].mxu0
        %889 = vmatprep.mubr.f32.mxu0 0.0
        %890 = vmatmul.mubr.f32.gmra.mrb[0].mxu0 %v790
        %v891 = vpop.f32.mrb[0].mxu0
        %v892 = vadd.f32 %v768, %v891
        %v893 = vpop.f32.mrb[0].mxu0
        %894 = vmatprep.mubr.f32.mxu0 0.0
        %895 = vmatmul.mubr.f32.gmra.mrb[0].mxu0 %v793
        %v896 = vpop.f32.mrb[0].mxu0
        %v897 = vadd.f32 %v768, %v896
        %v898 = vpop.f32.mrb[0].mxu0
        %899 = vdwg.mxu0
        %v900 = vmul.f32 %v862, %v862
        %v901 = vmul.f32 %v867, %v867
        %v902 = vmul.f32 %v872, %v872
        %v903 = vmul.f32 %v877, %v877
        %v904 = vmul.f32 %v882, %v882
        %v905 = vmul.f32 %v887, %v887
        %v906 = vmul.f32 %v892, %v892
        %v907 = vmul.f32 %v897, %v897
        %v908 = vsel %vm770, %v900, 0.0
        %909 = vadd.xlane.f32.xlu0 %v908
        %v910 = vpop.xlane.xlu0 %909
        %v911 = vsel %vm770, %v901, 0.0
        %912 = vadd.xlane.f32.xlu0 %v911
        %v913 = vpop.xlane.xlu0 %912
        %v914 = vsel %vm770, %v902, 0.0
        %915 = vadd.xlane.f32.xlu0 %v914
        %v916 = vpop.xlane.xlu0 %915
        %v917 = vsel %vm770, %v903, 0.0
        %918 = vadd.xlane.f32.xlu0 %v917
        %v919 = vpop.xlane.xlu0 %918
        %v920 = vsel %vm770, %v904, 0.0
        %921 = vadd.xlane.f32.xlu0 %v920
        %v922 = vpop.xlane.xlu0 %921
        %v923 = vsel %vm770, %v905, 0.0
        %924 = vadd.xlane.f32.xlu0 %v923
        %v925 = vpop.xlane.xlu0 %924
        %v926 = vsel %vm770, %v906, 0.0
        %927 = vadd.xlane.f32.xlu0 %v926
        %v928 = vpop.xlane.xlu0 %927
        %v929 = vsel %vm770, %v907, 0.0
        %930 = vadd.xlane.f32.xlu0 %v929
        %v931 = vpop.xlane.xlu0 %930
        %v932 = vmax.f32 %v910, 1e-08
        %v933 = vmax.f32 %v913, 1e-08
        %v934 = vmax.f32 %v916, 1e-08
        %v935 = vmax.f32 %v919, 1e-08
        %v936 = vmax.f32 %v922, 1e-08
        %v937 = vmax.f32 %v925, 1e-08
        %v938 = vmax.f32 %v928, 1e-08
        %v939 = vmax.f32 %v931, 1e-08
        %v940 = vrsqrt.pop %v932
        %v941 = vrsqrt.pop %v933
        %v942 = vrsqrt.pop %v934
        %v943 = vrsqrt.pop %v935
        %v944 = vrsqrt.pop %v936
        %v945 = vrsqrt.pop %v937
        %v946 = vrsqrt.pop %v938
        %v947 = vrsqrt.pop %v939
        %v948 = vmul.f32 %v862, %v940
        %v949 = vmul.f32 %v867, %v941
        %v950 = vmul.f32 %v872, %v942
        %v951 = vmul.f32 %v877, %v943
        %v952 = vmul.f32 %v882, %v944
        %v953 = vmul.f32 %v887, %v945
        %v954 = vmul.f32 %v892, %v946
        %v955 = vmul.f32 %v897, %v947
        %v956 = vrot.slane %v908, 4
        %v957 = vadd.f32 %v908, %v956
        %v958 = vrot.slane %v957, 2
        %v959 = vadd.f32 %v957, %v958
        %v960 = vrot.slane %v959, 1
        %v961 = vadd.f32 %v959, %v960
        %v962 = vrot.slane %v911, 4
        %v963 = vadd.f32 %v911, %v962
        %v964 = vrot.slane %v963, 2
        %v965 = vadd.f32 %v963, %v964
        %v966 = vrot.slane %v965, 1
        %v967 = vadd.f32 %v965, %v966
        %v968 = vrot.slane %v914, 4
        %v969 = vadd.f32 %v914, %v968
        %v970 = vrot.slane %v969, 2
        %v971 = vadd.f32 %v969, %v970
        %v972 = vrot.slane %v971, 1
        %v973 = vadd.f32 %v971, %v972
        %v974 = vrot.slane %v917, 4
        %v975 = vadd.f32 %v917, %v974
        %v976 = vrot.slane %v975, 2
        %v977 = vadd.f32 %v975, %v976
        %v978 = vrot.slane %v977, 1
        %v979 = vadd.f32 %v977, %v978
        %v980 = vrot.slane %v920, 4
        %v981 = vadd.f32 %v920, %v980
        %v982 = vrot.slane %v981, 2
        %v983 = vadd.f32 %v981, %v982
        %v984 = vrot.slane %v983, 1
        %v985 = vadd.f32 %v983, %v984
        %v986 = vrot.slane %v923, 4
        %v987 = vadd.f32 %v923, %v986
        %v988 = vrot.slane %v987, 2
        %v989 = vadd.f32 %v987, %v988
        %v990 = vrot.slane %v989, 1
        %v991 = vadd.f32 %v989, %v990
        %v992 = vrot.slane %v926, 4
        %v993 = vadd.f32 %v926, %v992
        %v994 = vrot.slane %v993, 2
        %v995 = vadd.f32 %v993, %v994
        %v996 = vrot.slane %v995, 1
        %v997 = vadd.f32 %v995, %v996
        %v998 = vrot.slane %v929, 4
        %v999 = vadd.f32 %v929, %v998
        %v1000 = vrot.slane %v999, 2
        %v1001 = vadd.f32 %v999, %v1000
        %v1002 = vrot.slane %v1001, 1
        %v1003 = vadd.f32 %v1001, %v1002
        %v1004 = vmax.f32 %v961, 1e-08
        %v1005 = vmax.f32 %v967, 1e-08
        %v1006 = vmax.f32 %v973, 1e-08
        %v1007 = vmax.f32 %v979, 1e-08
        %v1008 = vmax.f32 %v985, 1e-08
        %v1009 = vmax.f32 %v991, 1e-08
        %v1010 = vmax.f32 %v997, 1e-08
        %v1011 = vmax.f32 %v1003, 1e-08
        %v1012 = vrsqrt.pop %v1004
        %v1013 = vrsqrt.pop %v1005
        %v1014 = vrsqrt.pop %v1006
        %v1015 = vrsqrt.pop %v1007
        %v1016 = vrsqrt.pop %v1008
        %v1017 = vrsqrt.pop %v1009
        %v1018 = vrsqrt.pop %v1010
        %v1019 = vrsqrt.pop %v1011
        %v1020 = vmin.f32 %v1012, 1.0
        %v1021 = vmin.f32 %v1013, 1.0
        %v1022 = vmin.f32 %v1014, 1.0
        %v1023 = vmin.f32 %v1015, 1.0
        %v1024 = vmin.f32 %v1016, 1.0
        %v1025 = vmin.f32 %v1017, 1.0
        %v1026 = vmin.f32 %v1018, 1.0
        %v1027 = vmin.f32 %v1019, 1.0
        %v1028 = vmul.f32 %v948, %v1020
        %v1029 = vmul.f32 %v949, %v1021
        %v1030 = vmul.f32 %v950, %v1022
        %v1031 = vmul.f32 %v951, %v1023
        %v1032 = vmul.f32 %v952, %v1024
        %v1033 = vmul.f32 %v953, %v1025
        %v1034 = vmul.f32 %v954, %v1026
        %v1035 = vmul.f32 %v955, %v1027
        %v1036 = vld [vmem:[%s422] sm:$0xf]
        %v1037 = vld [vmem:[%s422 + $0x4] sm:$0xf]
        %v1038 = vld [vmem:[%s422 + $0x8] sm:$0xf]
        %v1039 = vld [vmem:[%s422 + $0xc] sm:$0xf]
        %v1040 = vld [vmem:[%s422 + $0x10] sm:$0xf]
        %v1041 = vld [vmem:[%s422 + $0x14] sm:$0xf]
        %v1042 = vld [vmem:[%s422 + $0x18] sm:$0xf]
        %v1043 = vld [vmem:[%s422 + $0x1c] sm:$0xf]
        %v1044 = vunpack.c.l.bf16 %v1036
        %v1045 = vunpack.c.l.bf16 %v1037
        %v1046 = vunpack.c.l.bf16 %v1038
        %v1047 = vunpack.c.l.bf16 %v1039
        %v1048 = vunpack.c.l.bf16 %v1040
        %v1049 = vunpack.c.l.bf16 %v1041
        %v1050 = vunpack.c.l.bf16 %v1042
        %v1051 = vunpack.c.l.bf16 %v1043
        %v1052 = vld [vmem:[%s9] sm:$0x1]
        %v1054 = vlaneseq
        %v1055 = vshrl.u32 %v1054, 7
        %v1056 = vsub.s32 0, %v1055
        %v1057 = vrot.slane %v1052, %v1056
        %v1059 = vadd.f32 %v1057, 0.0
        %1061 = vset.pattern.permute.xlu0 0
        %1062 = vperm.xlu0 %1061, %v1028
        %v1063 = vpop.permute.xlu0 %1062
        %1066 = vset.pattern.permute.xlu0 0
        %1067 = vperm.xlu0 %1066, %v1029
        %v1068 = vpop.permute.xlu0 %1067
        %1071 = vset.pattern.permute.xlu0 0
        %1072 = vperm.xlu0 %1071, %v1030
        %v1073 = vpop.permute.xlu0 %1072
        %1076 = vset.pattern.permute.xlu0 0
        %1077 = vperm.xlu0 %1076, %v1031
        %v1078 = vpop.permute.xlu0 %1077
        %1081 = vset.pattern.permute.xlu0 0
        %1082 = vperm.xlu0 %1081, %v1032
        %v1083 = vpop.permute.xlu0 %1082
        %1086 = vset.pattern.permute.xlu0 0
        %1087 = vperm.xlu0 %1086, %v1033
        %v1088 = vpop.permute.xlu0 %1087
        %1091 = vset.pattern.permute.xlu0 0
        %1092 = vperm.xlu0 %1091, %v1034
        %v1093 = vpop.permute.xlu0 %1092
        %1096 = vset.pattern.permute.xlu0 0
        %1097 = vperm.xlu0 %1096, %v1035
        %v1098 = vpop.permute.xlu0 %1097
        %v1100 = vmul.f32 %v1063, %v1044
        %v1101 = vmul.f32 %v1068, %v1045
        %v1102 = vmul.f32 %v1073, %v1046
        %v1103 = vmul.f32 %v1078, %v1047
        %v1104 = vmul.f32 %v1083, %v1048
        %v1105 = vmul.f32 %v1088, %v1049
        %v1106 = vmul.f32 %v1093, %v1050
        %v1107 = vmul.f32 %v1098, %v1051
        %v1108 = vadd.f32 %v1100, 0.0
        %v1109 = vadd.f32 %v1101, 0.0
        %v1110 = vadd.f32 %v1102, 0.0
        %v1111 = vadd.f32 %v1103, 0.0
        %v1112 = vadd.f32 %v1104, 0.0
        %v1113 = vadd.f32 %v1105, 0.0
        %v1114 = vadd.f32 %v1106, 0.0
        %v1115 = vadd.f32 %v1107, 0.0
        %v1124 = vrot.slane %v1100, 1
        %v1125 = vrot.slane %v1101, 1
        %v1126 = vrot.slane %v1102, 1
        %v1127 = vrot.slane %v1103, 1
        %v1128 = vrot.slane %v1104, 1
        %v1129 = vrot.slane %v1105, 1
        %v1130 = vrot.slane %v1106, 1
        %v1131 = vrot.slane %v1107, 1
        %v1140 = vadd.f32 %v1108, %v1124
        %v1141 = vadd.f32 %v1109, %v1125
        %v1142 = vadd.f32 %v1110, %v1126
        %v1143 = vadd.f32 %v1111, %v1127
        %v1144 = vadd.f32 %v1112, %v1128
        %v1145 = vadd.f32 %v1113, %v1129
        %v1146 = vadd.f32 %v1114, %v1130
        %v1147 = vadd.f32 %v1115, %v1131
        %v1148 = vrot.slane %v1100, 2
        %v1149 = vrot.slane %v1101, 2
        %v1150 = vrot.slane %v1102, 2
        %v1151 = vrot.slane %v1103, 2
        %v1152 = vrot.slane %v1104, 2
        %v1153 = vrot.slane %v1105, 2
        %v1154 = vrot.slane %v1106, 2
        %v1155 = vrot.slane %v1107, 2
        %v1164 = vadd.f32 %v1140, %v1148
        %v1165 = vadd.f32 %v1141, %v1149
        %v1166 = vadd.f32 %v1142, %v1150
        %v1167 = vadd.f32 %v1143, %v1151
        %v1168 = vadd.f32 %v1144, %v1152
        %v1169 = vadd.f32 %v1145, %v1153
        %v1170 = vadd.f32 %v1146, %v1154
        %v1171 = vadd.f32 %v1147, %v1155
        %v1172 = vrot.slane %v1100, 3
        %v1173 = vrot.slane %v1101, 3
        %v1174 = vrot.slane %v1102, 3
        %v1175 = vrot.slane %v1103, 3
        %v1176 = vrot.slane %v1104, 3
        %v1177 = vrot.slane %v1105, 3
        %v1178 = vrot.slane %v1106, 3
        %v1179 = vrot.slane %v1107, 3
        %v1188 = vadd.f32 %v1164, %v1172
        %v1189 = vadd.f32 %v1165, %v1173
        %v1190 = vadd.f32 %v1166, %v1174
        %v1191 = vadd.f32 %v1167, %v1175
        %v1192 = vadd.f32 %v1168, %v1176
        %v1193 = vadd.f32 %v1169, %v1177
        %v1194 = vadd.f32 %v1170, %v1178
        %v1195 = vadd.f32 %v1171, %v1179
        %v1196 = vrot.slane %v1100, 4
        %v1197 = vrot.slane %v1101, 4
        %v1198 = vrot.slane %v1102, 4
        %v1199 = vrot.slane %v1103, 4
        %v1200 = vrot.slane %v1104, 4
        %v1201 = vrot.slane %v1105, 4
        %v1202 = vrot.slane %v1106, 4
        %v1203 = vrot.slane %v1107, 4
        %v1212 = vadd.f32 %v1188, %v1196
        %v1213 = vadd.f32 %v1189, %v1197
        %v1214 = vadd.f32 %v1190, %v1198
        %v1215 = vadd.f32 %v1191, %v1199
        %v1216 = vadd.f32 %v1192, %v1200
        %v1217 = vadd.f32 %v1193, %v1201
        %v1218 = vadd.f32 %v1194, %v1202
        %v1219 = vadd.f32 %v1195, %v1203
        %v1220 = vrot.slane %v1100, 5
        %v1221 = vrot.slane %v1101, 5
        %v1222 = vrot.slane %v1102, 5
        %v1223 = vrot.slane %v1103, 5
        %v1224 = vrot.slane %v1104, 5
        %v1225 = vrot.slane %v1105, 5
        %v1226 = vrot.slane %v1106, 5
        %v1227 = vrot.slane %v1107, 5
        %v1236 = vadd.f32 %v1212, %v1220
        %v1237 = vadd.f32 %v1213, %v1221
        %v1238 = vadd.f32 %v1214, %v1222
        %v1239 = vadd.f32 %v1215, %v1223
        %v1240 = vadd.f32 %v1216, %v1224
        %v1241 = vadd.f32 %v1217, %v1225
        %v1242 = vadd.f32 %v1218, %v1226
        %v1243 = vadd.f32 %v1219, %v1227
        %v1244 = vrot.slane %v1100, 6
        %v1245 = vrot.slane %v1101, 6
        %v1246 = vrot.slane %v1102, 6
        %v1247 = vrot.slane %v1103, 6
        %v1248 = vrot.slane %v1104, 6
        %v1249 = vrot.slane %v1105, 6
        %v1250 = vrot.slane %v1106, 6
        %v1251 = vrot.slane %v1107, 6
        %v1260 = vadd.f32 %v1236, %v1244
        %v1261 = vadd.f32 %v1237, %v1245
        %v1262 = vadd.f32 %v1238, %v1246
        %v1263 = vadd.f32 %v1239, %v1247
        %v1264 = vadd.f32 %v1240, %v1248
        %v1265 = vadd.f32 %v1241, %v1249
        %v1266 = vadd.f32 %v1242, %v1250
        %v1267 = vadd.f32 %v1243, %v1251
        %v1268 = vrot.slane %v1100, 7
        %v1269 = vrot.slane %v1101, 7
        %v1270 = vrot.slane %v1102, 7
        %v1271 = vrot.slane %v1103, 7
        %v1272 = vrot.slane %v1104, 7
        %v1273 = vrot.slane %v1105, 7
        %v1274 = vrot.slane %v1106, 7
        %v1275 = vrot.slane %v1107, 7
        %v1284 = vadd.f32 %v1260, %v1268
        %v1285 = vadd.f32 %v1261, %v1269
        %v1286 = vadd.f32 %v1262, %v1270
        %v1287 = vadd.f32 %v1263, %v1271
        %v1288 = vadd.f32 %v1264, %v1272
        %v1289 = vadd.f32 %v1265, %v1273
        %v1290 = vadd.f32 %v1266, %v1274
        %v1291 = vadd.f32 %v1267, %v1275
        %vm1292 = vcmp.gt.f32.partialorder %v1284, 0.0
        %vm1293 = vcmp.gt.f32.partialorder %v1285, 0.0
        %vm1294 = vcmp.gt.f32.partialorder %v1286, 0.0
        %vm1295 = vcmp.gt.f32.partialorder %v1287, 0.0
        %vm1296 = vcmp.gt.f32.partialorder %v1288, 0.0
        %vm1297 = vcmp.gt.f32.partialorder %v1289, 0.0
        %vm1298 = vcmp.gt.f32.partialorder %v1290, 0.0
        %vm1299 = vcmp.gt.f32.partialorder %v1291, 0.0
        %v1300 = vmul.f32 %v1284, 0.2
        %v1301 = vmul.f32 %v1285, 0.2
        %v1302 = vmul.f32 %v1286, 0.2
        %v1303 = vmul.f32 %v1287, 0.2
        %v1304 = vmul.f32 %v1288, 0.2
        %v1305 = vmul.f32 %v1289, 0.2
        %v1306 = vmul.f32 %v1290, 0.2
        %v1307 = vmul.f32 %v1291, 0.2
        %v1308 = vsel %vm1292, %v1284, %v1300
        %v1309 = vsel %vm1293, %v1285, %v1301
        %v1310 = vsel %vm1294, %v1286, %v1302
        %v1311 = vsel %vm1295, %v1287, %v1303
        %v1312 = vsel %vm1296, %v1288, %v1304
        %v1313 = vsel %vm1297, %v1289, %v1305
        %v1314 = vsel %vm1298, %v1290, %v1306
        %v1315 = vsel %vm1299, %v1291, %v1307
        %v1316 = vpack.c.bf16 %v1308, %v1308
        %v1317 = vpack.c.bf16 %v1309, %v1309
        %v1318 = vpack.c.bf16 %v1310, %v1310
        %v1319 = vpack.c.bf16 %v1311, %v1311
        %v1320 = vpack.c.bf16 %v1312, %v1312
        %v1321 = vpack.c.bf16 %v1313, %v1313
        %v1322 = vpack.c.bf16 %v1314, %v1314
        %v1323 = vpack.c.bf16 %v1315, %v1315
        %v1324 = vld [vmem:[%s8] sm:$0x3]
        %v1333 = vunpack.c.l.b16 %v1316
        %v1334 = vunpack.c.l.b16 %v1317
        %v1335 = vunpack.c.l.b16 %v1318
        %v1336 = vunpack.c.l.b16 %v1319
        %v1337 = vunpack.c.l.b16 %v1320
        %v1338 = vunpack.c.l.b16 %v1321
        %v1339 = vunpack.c.l.b16 %v1322
        %v1340 = vunpack.c.l.b16 %v1323
        %v1341 = vrot.slane %v1334, 7
        %vm1342 = vcmask 1041409
        %v1343 = vsel %vm1342, %v1341, %v1333
        %v1344 = vrot.slane %v1335, 6
        %vm1345 = vcmask 1042434
        %v1346 = vsel %vm1345, %v1344, %v1343
        %v1347 = vrot.slane %v1336, 5
        %vm1348 = vcmask 1043459
        %v1349 = vsel %vm1348, %v1347, %v1346
        %v1350 = vrot.slane %v1337, 4
        %vm1351 = vcmask 1044484
        %v1352 = vsel %vm1351, %v1350, %v1349
        %v1353 = vrot.slane %v1338, 3
        %vm1354 = vcmask 1045509
        %v1355 = vsel %vm1354, %v1353, %v1352
        %v1356 = vrot.slane %v1339, 2
        %vm1357 = vcmask 1046534
        %v1358 = vsel %vm1357, %v1356, %v1355
        %v1359 = vrot.slane %v1340, 1
        %vm1360 = vcmask 1047559
        %v1361 = vsel %vm1360, %v1359, %v1358
        %v1362 = vpack.c.b16 %v1361, %v1361
        %vm1363 = vcmask 31744
        %v1365 = vsel %vm1363, %v1362, 0
        %vm1367 = vcmask 1041408
        %v1369 = vsel %vm1367, %v1324, 0
        %1371 = vmatprep.subr.bf16.mxu0 0
        %1372 = vmatpush1.bf16.msra.mxu0 %v1369
        %1373 = vmatprep.subr.bf16.mxu0 0
        %1374 = vmatpush1.bf16.msra.mxu0 0
        %1375 = vmatprep.subr.bf16.mxu0 0
        %1376 = vmatpush1.bf16.msra.mxu0 0
        %1377 = vmatprep.subr.bf16.mxu0 0
        %1378 = vmatpush1.bf16.msra.mxu0 0
        %1379 = vmatprep.subr.bf16.mxu0 0
        %1380 = vmatpush1.bf16.msra.mxu0 0
        %1381 = vmatprep.subr.bf16.mxu0 0
        %1382 = vmatpush1.bf16.msra.mxu0 0
        %1383 = vmatprep.subr.bf16.mxu0 0
        %1384 = vmatpush1.bf16.msra.mxu0 0
        %1385 = vmatprep.subr.bf16.mxu0 0
        %1386 = vmatpush1.bf16.msra.mxu0 0
        %1387 = vmatprep.subr.bf16.mxu0 0
        %1388 = vmatpush1.bf16.msra.mxu0 0
        %1389 = vmatprep.subr.bf16.mxu0 0
        %1390 = vmatpush1.bf16.msra.mxu0 0
        %1391 = vmatprep.subr.bf16.mxu0 0
        %1392 = vmatpush1.bf16.msra.mxu0 0
        %1393 = vmatprep.subr.bf16.mxu0 0
        %1394 = vmatpush1.bf16.msra.mxu0 0
        %1395 = vmatprep.subr.bf16.mxu0 0
        %1396 = vmatpush1.bf16.msra.mxu0 0
        %1397 = vmatprep.subr.bf16.mxu0 0
        %1398 = vmatpush1.bf16.msra.mxu0 0
        %1399 = vmatprep.subr.bf16.mxu0 0
        %1400 = vmatpush1.bf16.msra.mxu0 0
        %1401 = vmatprep.subr.bf16.mxu0 0
        %1402 = vmatpush1.bf16.msra.mxu0 0
        %1403 = vmatprep.mubr.bf16.mxu0 0
        %1404 = vmatmul.mubr.bf16.gmra.mrb[0].mxu0 %v1365
        %v1405 = vpop.f32.mrb[0].mxu0
        %v1406 = vadd.f32 0.0, %v1405
        %v1407 = vpop.f32.mrb[0].mxu0
        %v1408 = vpop.f32.mrb[0].mxu0
        %v1409 = vpop.f32.mrb[0].mxu0
        %1410 = vdwg.mxu0
        %v1411 = vadd.f32 %v1059, %v1406
        %1412 = vset.pattern.permute.xlu0 1
        %1413 = vperm.xlu0 %1412, %v1028
        %v1414 = vpop.permute.xlu0 %1413
        %1416 = vset.pattern.permute.xlu0 1
        %1417 = vperm.xlu0 %1416, %v1029
        %v1418 = vpop.permute.xlu0 %1417
        %1420 = vset.pattern.permute.xlu0 1
        %1421 = vperm.xlu0 %1420, %v1030
        %v1422 = vpop.permute.xlu0 %1421
        %1424 = vset.pattern.permute.xlu0 1
        %1425 = vperm.xlu0 %1424, %v1031
        %v1426 = vpop.permute.xlu0 %1425
        %1428 = vset.pattern.permute.xlu0 1
        %1429 = vperm.xlu0 %1428, %v1032
        %v1430 = vpop.permute.xlu0 %1429
        %1432 = vset.pattern.permute.xlu0 1
        %1433 = vperm.xlu0 %1432, %v1033
        %v1434 = vpop.permute.xlu0 %1433
        %1436 = vset.pattern.permute.xlu0 1
        %1437 = vperm.xlu0 %1436, %v1034
        %v1438 = vpop.permute.xlu0 %1437
        %1440 = vset.pattern.permute.xlu0 1
        %1441 = vperm.xlu0 %1440, %v1035
        %v1442 = vpop.permute.xlu0 %1441
        %v1444 = vmul.f32 %v1414, %v1044
        %v1445 = vmul.f32 %v1418, %v1045
        %v1446 = vmul.f32 %v1422, %v1046
        %v1447 = vmul.f32 %v1426, %v1047
        %v1448 = vmul.f32 %v1430, %v1048
        %v1449 = vmul.f32 %v1434, %v1049
        %v1450 = vmul.f32 %v1438, %v1050
        %v1451 = vmul.f32 %v1442, %v1051
        %v1452 = vadd.f32 %v1444, 0.0
        %v1453 = vadd.f32 %v1445, 0.0
        %v1454 = vadd.f32 %v1446, 0.0
        %v1455 = vadd.f32 %v1447, 0.0
        %v1456 = vadd.f32 %v1448, 0.0
        %v1457 = vadd.f32 %v1449, 0.0
        %v1458 = vadd.f32 %v1450, 0.0
        %v1459 = vadd.f32 %v1451, 0.0
        %v1468 = vrot.slane %v1444, 1
        %v1469 = vrot.slane %v1445, 1
        %v1470 = vrot.slane %v1446, 1
        %v1471 = vrot.slane %v1447, 1
        %v1472 = vrot.slane %v1448, 1
        %v1473 = vrot.slane %v1449, 1
        %v1474 = vrot.slane %v1450, 1
        %v1475 = vrot.slane %v1451, 1
        %v1484 = vadd.f32 %v1452, %v1468
        %v1485 = vadd.f32 %v1453, %v1469
        %v1486 = vadd.f32 %v1454, %v1470
        %v1487 = vadd.f32 %v1455, %v1471
        %v1488 = vadd.f32 %v1456, %v1472
        %v1489 = vadd.f32 %v1457, %v1473
        %v1490 = vadd.f32 %v1458, %v1474
        %v1491 = vadd.f32 %v1459, %v1475
        %v1492 = vrot.slane %v1444, 2
        %v1493 = vrot.slane %v1445, 2
        %v1494 = vrot.slane %v1446, 2
        %v1495 = vrot.slane %v1447, 2
        %v1496 = vrot.slane %v1448, 2
        %v1497 = vrot.slane %v1449, 2
        %v1498 = vrot.slane %v1450, 2
        %v1499 = vrot.slane %v1451, 2
        %v1508 = vadd.f32 %v1484, %v1492
        %v1509 = vadd.f32 %v1485, %v1493
        %v1510 = vadd.f32 %v1486, %v1494
        %v1511 = vadd.f32 %v1487, %v1495
        %v1512 = vadd.f32 %v1488, %v1496
        %v1513 = vadd.f32 %v1489, %v1497
        %v1514 = vadd.f32 %v1490, %v1498
        %v1515 = vadd.f32 %v1491, %v1499
        %v1516 = vrot.slane %v1444, 3
        %v1517 = vrot.slane %v1445, 3
        %v1518 = vrot.slane %v1446, 3
        %v1519 = vrot.slane %v1447, 3
        %v1520 = vrot.slane %v1448, 3
        %v1521 = vrot.slane %v1449, 3
        %v1522 = vrot.slane %v1450, 3
        %v1523 = vrot.slane %v1451, 3
        %v1532 = vadd.f32 %v1508, %v1516
        %v1533 = vadd.f32 %v1509, %v1517
        %v1534 = vadd.f32 %v1510, %v1518
        %v1535 = vadd.f32 %v1511, %v1519
        %v1536 = vadd.f32 %v1512, %v1520
        %v1537 = vadd.f32 %v1513, %v1521
        %v1538 = vadd.f32 %v1514, %v1522
        %v1539 = vadd.f32 %v1515, %v1523
        %v1540 = vrot.slane %v1444, 4
        %v1541 = vrot.slane %v1445, 4
        %v1542 = vrot.slane %v1446, 4
        %v1543 = vrot.slane %v1447, 4
        %v1544 = vrot.slane %v1448, 4
        %v1545 = vrot.slane %v1449, 4
        %v1546 = vrot.slane %v1450, 4
        %v1547 = vrot.slane %v1451, 4
        %v1556 = vadd.f32 %v1532, %v1540
        %v1557 = vadd.f32 %v1533, %v1541
        %v1558 = vadd.f32 %v1534, %v1542
        %v1559 = vadd.f32 %v1535, %v1543
        %v1560 = vadd.f32 %v1536, %v1544
        %v1561 = vadd.f32 %v1537, %v1545
        %v1562 = vadd.f32 %v1538, %v1546
        %v1563 = vadd.f32 %v1539, %v1547
        %v1564 = vrot.slane %v1444, 5
        %v1565 = vrot.slane %v1445, 5
        %v1566 = vrot.slane %v1446, 5
        %v1567 = vrot.slane %v1447, 5
        %v1568 = vrot.slane %v1448, 5
        %v1569 = vrot.slane %v1449, 5
        %v1570 = vrot.slane %v1450, 5
        %v1571 = vrot.slane %v1451, 5
        %v1580 = vadd.f32 %v1556, %v1564
        %v1581 = vadd.f32 %v1557, %v1565
        %v1582 = vadd.f32 %v1558, %v1566
        %v1583 = vadd.f32 %v1559, %v1567
        %v1584 = vadd.f32 %v1560, %v1568
        %v1585 = vadd.f32 %v1561, %v1569
        %v1586 = vadd.f32 %v1562, %v1570
        %v1587 = vadd.f32 %v1563, %v1571
        %v1588 = vrot.slane %v1444, 6
        %v1589 = vrot.slane %v1445, 6
        %v1590 = vrot.slane %v1446, 6
        %v1591 = vrot.slane %v1447, 6
        %v1592 = vrot.slane %v1448, 6
        %v1593 = vrot.slane %v1449, 6
        %v1594 = vrot.slane %v1450, 6
        %v1595 = vrot.slane %v1451, 6
        %v1604 = vadd.f32 %v1580, %v1588
        %v1605 = vadd.f32 %v1581, %v1589
        %v1606 = vadd.f32 %v1582, %v1590
        %v1607 = vadd.f32 %v1583, %v1591
        %v1608 = vadd.f32 %v1584, %v1592
        %v1609 = vadd.f32 %v1585, %v1593
        %v1610 = vadd.f32 %v1586, %v1594
        %v1611 = vadd.f32 %v1587, %v1595
        %v1612 = vrot.slane %v1444, 7
        %v1613 = vrot.slane %v1445, 7
        %v1614 = vrot.slane %v1446, 7
        %v1615 = vrot.slane %v1447, 7
        %v1616 = vrot.slane %v1448, 7
        %v1617 = vrot.slane %v1449, 7
        %v1618 = vrot.slane %v1450, 7
        %v1619 = vrot.slane %v1451, 7
        %v1628 = vadd.f32 %v1604, %v1612
        %v1629 = vadd.f32 %v1605, %v1613
        %v1630 = vadd.f32 %v1606, %v1614
        %v1631 = vadd.f32 %v1607, %v1615
        %v1632 = vadd.f32 %v1608, %v1616
        %v1633 = vadd.f32 %v1609, %v1617
        %v1634 = vadd.f32 %v1610, %v1618
        %v1635 = vadd.f32 %v1611, %v1619
        %vm1636 = vcmp.gt.f32.partialorder %v1628, 0.0
        %vm1637 = vcmp.gt.f32.partialorder %v1629, 0.0
        %vm1638 = vcmp.gt.f32.partialorder %v1630, 0.0
        %vm1639 = vcmp.gt.f32.partialorder %v1631, 0.0
        %vm1640 = vcmp.gt.f32.partialorder %v1632, 0.0
        %vm1641 = vcmp.gt.f32.partialorder %v1633, 0.0
        %vm1642 = vcmp.gt.f32.partialorder %v1634, 0.0
        %vm1643 = vcmp.gt.f32.partialorder %v1635, 0.0
        %v1644 = vmul.f32 %v1628, 0.2
        %v1645 = vmul.f32 %v1629, 0.2
        %v1646 = vmul.f32 %v1630, 0.2
        %v1647 = vmul.f32 %v1631, 0.2
        %v1648 = vmul.f32 %v1632, 0.2
        %v1649 = vmul.f32 %v1633, 0.2
        %v1650 = vmul.f32 %v1634, 0.2
        %v1651 = vmul.f32 %v1635, 0.2
        %v1652 = vsel %vm1636, %v1628, %v1644
        %v1653 = vsel %vm1637, %v1629, %v1645
        %v1654 = vsel %vm1638, %v1630, %v1646
        %v1655 = vsel %vm1639, %v1631, %v1647
        %v1656 = vsel %vm1640, %v1632, %v1648
        %v1657 = vsel %vm1641, %v1633, %v1649
        %v1658 = vsel %vm1642, %v1634, %v1650
        %v1659 = vsel %vm1643, %v1635, %v1651
        %v1660 = vpack.c.bf16 %v1652, %v1652
        %v1661 = vpack.c.bf16 %v1653, %v1653
        %v1662 = vpack.c.bf16 %v1654, %v1654
        %v1663 = vpack.c.bf16 %v1655, %v1655
        %v1664 = vpack.c.bf16 %v1656, %v1656
        %v1665 = vpack.c.bf16 %v1657, %v1657
        %v1666 = vpack.c.bf16 %v1658, %v1658
        %v1667 = vpack.c.bf16 %v1659, %v1659
        %s1668 = scalar_lea.vmem %s8, 2
        %v1669 = vld [vmem:[%s1668] sm:$0x3]
        %v1678 = vunpack.c.l.b16 %v1660
        %v1679 = vunpack.c.l.b16 %v1661
        %v1680 = vunpack.c.l.b16 %v1662
        %v1681 = vunpack.c.l.b16 %v1663
        %v1682 = vunpack.c.l.b16 %v1664
        %v1683 = vunpack.c.l.b16 %v1665
        %v1684 = vunpack.c.l.b16 %v1666
        %v1685 = vunpack.c.l.b16 %v1667
        %v1686 = vrot.slane %v1679, 7
        %v1687 = vsel %vm1342, %v1686, %v1678
        %v1688 = vrot.slane %v1680, 6
        %v1689 = vsel %vm1345, %v1688, %v1687
        %v1690 = vrot.slane %v1681, 5
        %v1691 = vsel %vm1348, %v1690, %v1689
        %v1692 = vrot.slane %v1682, 4
        %v1693 = vsel %vm1351, %v1692, %v1691
        %v1694 = vrot.slane %v1683, 3
        %v1695 = vsel %vm1354, %v1694, %v1693
        %v1696 = vrot.slane %v1684, 2
        %v1697 = vsel %vm1357, %v1696, %v1695
        %v1698 = vrot.slane %v1685, 1
        %v1699 = vsel %vm1360, %v1698, %v1697
        %v1700 = vpack.c.b16 %v1699, %v1699
        %v1702 = vsel %vm1363, %v1700, 0
        %v1705 = vsel %vm1367, %v1669, 0
        %1707 = vmatprep.subr.bf16.mxu0 0
        %1708 = vmatpush1.bf16.msra.mxu0 %v1705
        %1709 = vmatprep.subr.bf16.mxu0 0
        %1710 = vmatpush1.bf16.msra.mxu0 0
        %1711 = vmatprep.subr.bf16.mxu0 0
        %1712 = vmatpush1.bf16.msra.mxu0 0
        %1713 = vmatprep.subr.bf16.mxu0 0
        %1714 = vmatpush1.bf16.msra.mxu0 0
        %1715 = vmatprep.subr.bf16.mxu0 0
        %1716 = vmatpush1.bf16.msra.mxu0 0
        %1717 = vmatprep.subr.bf16.mxu0 0
        %1718 = vmatpush1.bf16.msra.mxu0 0
        %1719 = vmatprep.subr.bf16.mxu0 0
        %1720 = vmatpush1.bf16.msra.mxu0 0
        %1721 = vmatprep.subr.bf16.mxu0 0
        %1722 = vmatpush1.bf16.msra.mxu0 0
        %1723 = vmatprep.subr.bf16.mxu0 0
        %1724 = vmatpush1.bf16.msra.mxu0 0
        %1725 = vmatprep.subr.bf16.mxu0 0
        %1726 = vmatpush1.bf16.msra.mxu0 0
        %1727 = vmatprep.subr.bf16.mxu0 0
        %1728 = vmatpush1.bf16.msra.mxu0 0
        %1729 = vmatprep.subr.bf16.mxu0 0
        %1730 = vmatpush1.bf16.msra.mxu0 0
        %1731 = vmatprep.subr.bf16.mxu0 0
        %1732 = vmatpush1.bf16.msra.mxu0 0
        %1733 = vmatprep.subr.bf16.mxu0 0
        %1734 = vmatpush1.bf16.msra.mxu0 0
        %1735 = vmatprep.subr.bf16.mxu0 0
        %1736 = vmatpush1.bf16.msra.mxu0 0
        %1737 = vmatprep.subr.bf16.mxu0 0
        %1738 = vmatpush1.bf16.msra.mxu0 0
        %1739 = vmatprep.mubr.bf16.mxu0 0
        %1740 = vmatmul.mubr.bf16.gmra.mrb[0].mxu0 %v1702
        %v1741 = vpop.f32.mrb[0].mxu0
        %v1742 = vadd.f32 0.0, %v1741
        %v1743 = vpop.f32.mrb[0].mxu0
        %v1744 = vpop.f32.mrb[0].mxu0
        %v1745 = vpop.f32.mrb[0].mxu0
        %1746 = vdwg.mxu0
        %v1747 = vadd.f32 %v1411, %v1742
        %1748 = vset.pattern.permute.xlu0 2
        %1749 = vperm.xlu0 %1748, %v1028
        %v1750 = vpop.permute.xlu0 %1749
        %1752 = vset.pattern.permute.xlu0 2
        %1753 = vperm.xlu0 %1752, %v1029
        %v1754 = vpop.permute.xlu0 %1753
        %1756 = vset.pattern.permute.xlu0 2
        %1757 = vperm.xlu0 %1756, %v1030
        %v1758 = vpop.permute.xlu0 %1757
        %1760 = vset.pattern.permute.xlu0 2
        %1761 = vperm.xlu0 %1760, %v1031
        %v1762 = vpop.permute.xlu0 %1761
        %1764 = vset.pattern.permute.xlu0 2
        %1765 = vperm.xlu0 %1764, %v1032
        %v1766 = vpop.permute.xlu0 %1765
        %1768 = vset.pattern.permute.xlu0 2
        %1769 = vperm.xlu0 %1768, %v1033
        %v1770 = vpop.permute.xlu0 %1769
        %1772 = vset.pattern.permute.xlu0 2
        %1773 = vperm.xlu0 %1772, %v1034
        %v1774 = vpop.permute.xlu0 %1773
        %1776 = vset.pattern.permute.xlu0 2
        %1777 = vperm.xlu0 %1776, %v1035
        %v1778 = vpop.permute.xlu0 %1777
        %v1780 = vmul.f32 %v1750, %v1044
        %v1781 = vmul.f32 %v1754, %v1045
        %v1782 = vmul.f32 %v1758, %v1046
        %v1783 = vmul.f32 %v1762, %v1047
        %v1784 = vmul.f32 %v1766, %v1048
        %v1785 = vmul.f32 %v1770, %v1049
        %v1786 = vmul.f32 %v1774, %v1050
        %v1787 = vmul.f32 %v1778, %v1051
        %v1788 = vadd.f32 %v1780, 0.0
        %v1789 = vadd.f32 %v1781, 0.0
        %v1790 = vadd.f32 %v1782, 0.0
        %v1791 = vadd.f32 %v1783, 0.0
        %v1792 = vadd.f32 %v1784, 0.0
        %v1793 = vadd.f32 %v1785, 0.0
        %v1794 = vadd.f32 %v1786, 0.0
        %v1795 = vadd.f32 %v1787, 0.0
        %v1804 = vrot.slane %v1780, 1
        %v1805 = vrot.slane %v1781, 1
        %v1806 = vrot.slane %v1782, 1
        %v1807 = vrot.slane %v1783, 1
        %v1808 = vrot.slane %v1784, 1
        %v1809 = vrot.slane %v1785, 1
        %v1810 = vrot.slane %v1786, 1
        %v1811 = vrot.slane %v1787, 1
        %v1820 = vadd.f32 %v1788, %v1804
        %v1821 = vadd.f32 %v1789, %v1805
        %v1822 = vadd.f32 %v1790, %v1806
        %v1823 = vadd.f32 %v1791, %v1807
        %v1824 = vadd.f32 %v1792, %v1808
        %v1825 = vadd.f32 %v1793, %v1809
        %v1826 = vadd.f32 %v1794, %v1810
        %v1827 = vadd.f32 %v1795, %v1811
        %v1828 = vrot.slane %v1780, 2
        %v1829 = vrot.slane %v1781, 2
        %v1830 = vrot.slane %v1782, 2
        %v1831 = vrot.slane %v1783, 2
        %v1832 = vrot.slane %v1784, 2
        %v1833 = vrot.slane %v1785, 2
        %v1834 = vrot.slane %v1786, 2
        %v1835 = vrot.slane %v1787, 2
        %v1844 = vadd.f32 %v1820, %v1828
        %v1845 = vadd.f32 %v1821, %v1829
        %v1846 = vadd.f32 %v1822, %v1830
        %v1847 = vadd.f32 %v1823, %v1831
        %v1848 = vadd.f32 %v1824, %v1832
        %v1849 = vadd.f32 %v1825, %v1833
        %v1850 = vadd.f32 %v1826, %v1834
        %v1851 = vadd.f32 %v1827, %v1835
        %v1852 = vrot.slane %v1780, 3
        %v1853 = vrot.slane %v1781, 3
        %v1854 = vrot.slane %v1782, 3
        %v1855 = vrot.slane %v1783, 3
        %v1856 = vrot.slane %v1784, 3
        %v1857 = vrot.slane %v1785, 3
        %v1858 = vrot.slane %v1786, 3
        %v1859 = vrot.slane %v1787, 3
        %v1868 = vadd.f32 %v1844, %v1852
        %v1869 = vadd.f32 %v1845, %v1853
        %v1870 = vadd.f32 %v1846, %v1854
        %v1871 = vadd.f32 %v1847, %v1855
        %v1872 = vadd.f32 %v1848, %v1856
        %v1873 = vadd.f32 %v1849, %v1857
        %v1874 = vadd.f32 %v1850, %v1858
        %v1875 = vadd.f32 %v1851, %v1859
        %v1876 = vrot.slane %v1780, 4
        %v1877 = vrot.slane %v1781, 4
        %v1878 = vrot.slane %v1782, 4
        %v1879 = vrot.slane %v1783, 4
        %v1880 = vrot.slane %v1784, 4
        %v1881 = vrot.slane %v1785, 4
        %v1882 = vrot.slane %v1786, 4
        %v1883 = vrot.slane %v1787, 4
        %v1892 = vadd.f32 %v1868, %v1876
        %v1893 = vadd.f32 %v1869, %v1877
        %v1894 = vadd.f32 %v1870, %v1878
        %v1895 = vadd.f32 %v1871, %v1879
        %v1896 = vadd.f32 %v1872, %v1880
        %v1897 = vadd.f32 %v1873, %v1881
        %v1898 = vadd.f32 %v1874, %v1882
        %v1899 = vadd.f32 %v1875, %v1883
        %v1900 = vrot.slane %v1780, 5
        %v1901 = vrot.slane %v1781, 5
        %v1902 = vrot.slane %v1782, 5
        %v1903 = vrot.slane %v1783, 5
        %v1904 = vrot.slane %v1784, 5
        %v1905 = vrot.slane %v1785, 5
        %v1906 = vrot.slane %v1786, 5
        %v1907 = vrot.slane %v1787, 5
        %v1916 = vadd.f32 %v1892, %v1900
        %v1917 = vadd.f32 %v1893, %v1901
        %v1918 = vadd.f32 %v1894, %v1902
        %v1919 = vadd.f32 %v1895, %v1903
        %v1920 = vadd.f32 %v1896, %v1904
        %v1921 = vadd.f32 %v1897, %v1905
        %v1922 = vadd.f32 %v1898, %v1906
        %v1923 = vadd.f32 %v1899, %v1907
        %v1924 = vrot.slane %v1780, 6
        %v1925 = vrot.slane %v1781, 6
        %v1926 = vrot.slane %v1782, 6
        %v1927 = vrot.slane %v1783, 6
        %v1928 = vrot.slane %v1784, 6
        %v1929 = vrot.slane %v1785, 6
        %v1930 = vrot.slane %v1786, 6
        %v1931 = vrot.slane %v1787, 6
        %v1940 = vadd.f32 %v1916, %v1924
        %v1941 = vadd.f32 %v1917, %v1925
        %v1942 = vadd.f32 %v1918, %v1926
        %v1943 = vadd.f32 %v1919, %v1927
        %v1944 = vadd.f32 %v1920, %v1928
        %v1945 = vadd.f32 %v1921, %v1929
        %v1946 = vadd.f32 %v1922, %v1930
        %v1947 = vadd.f32 %v1923, %v1931
        %v1948 = vrot.slane %v1780, 7
        %v1949 = vrot.slane %v1781, 7
        %v1950 = vrot.slane %v1782, 7
        %v1951 = vrot.slane %v1783, 7
        %v1952 = vrot.slane %v1784, 7
        %v1953 = vrot.slane %v1785, 7
        %v1954 = vrot.slane %v1786, 7
        %v1955 = vrot.slane %v1787, 7
        %v1964 = vadd.f32 %v1940, %v1948
        %v1965 = vadd.f32 %v1941, %v1949
        %v1966 = vadd.f32 %v1942, %v1950
        %v1967 = vadd.f32 %v1943, %v1951
        %v1968 = vadd.f32 %v1944, %v1952
        %v1969 = vadd.f32 %v1945, %v1953
        %v1970 = vadd.f32 %v1946, %v1954
        %v1971 = vadd.f32 %v1947, %v1955
        %vm1972 = vcmp.gt.f32.partialorder %v1964, 0.0
        %vm1973 = vcmp.gt.f32.partialorder %v1965, 0.0
        %vm1974 = vcmp.gt.f32.partialorder %v1966, 0.0
        %vm1975 = vcmp.gt.f32.partialorder %v1967, 0.0
        %vm1976 = vcmp.gt.f32.partialorder %v1968, 0.0
        %vm1977 = vcmp.gt.f32.partialorder %v1969, 0.0
        %vm1978 = vcmp.gt.f32.partialorder %v1970, 0.0
        %vm1979 = vcmp.gt.f32.partialorder %v1971, 0.0
        %v1980 = vmul.f32 %v1964, 0.2
        %v1981 = vmul.f32 %v1965, 0.2
        %v1982 = vmul.f32 %v1966, 0.2
        %v1983 = vmul.f32 %v1967, 0.2
        %v1984 = vmul.f32 %v1968, 0.2
        %v1985 = vmul.f32 %v1969, 0.2
        %v1986 = vmul.f32 %v1970, 0.2
        %v1987 = vmul.f32 %v1971, 0.2
        %v1988 = vsel %vm1972, %v1964, %v1980
        %v1989 = vsel %vm1973, %v1965, %v1981
        %v1990 = vsel %vm1974, %v1966, %v1982
        %v1991 = vsel %vm1975, %v1967, %v1983
        %v1992 = vsel %vm1976, %v1968, %v1984
        %v1993 = vsel %vm1977, %v1969, %v1985
        %v1994 = vsel %vm1978, %v1970, %v1986
        %v1995 = vsel %vm1979, %v1971, %v1987
        %v1996 = vpack.c.bf16 %v1988, %v1988
        %v1997 = vpack.c.bf16 %v1989, %v1989
        %v1998 = vpack.c.bf16 %v1990, %v1990
        %v1999 = vpack.c.bf16 %v1991, %v1991
        %v2000 = vpack.c.bf16 %v1992, %v1992
        %v2001 = vpack.c.bf16 %v1993, %v1993
        %v2002 = vpack.c.bf16 %v1994, %v1994
        %v2003 = vpack.c.bf16 %v1995, %v1995
        %s2004 = scalar_lea.vmem %s8, 4
        %v2005 = vld [vmem:[%s2004] sm:$0x3]
        %v2014 = vunpack.c.l.b16 %v1996
        %v2015 = vunpack.c.l.b16 %v1997
        %v2016 = vunpack.c.l.b16 %v1998
        %v2017 = vunpack.c.l.b16 %v1999
        %v2018 = vunpack.c.l.b16 %v2000
        %v2019 = vunpack.c.l.b16 %v2001
        %v2020 = vunpack.c.l.b16 %v2002
        %v2021 = vunpack.c.l.b16 %v2003
        %v2022 = vrot.slane %v2015, 7
        %v2023 = vsel %vm1342, %v2022, %v2014
        %v2024 = vrot.slane %v2016, 6
        %v2025 = vsel %vm1345, %v2024, %v2023
        %v2026 = vrot.slane %v2017, 5
        %v2027 = vsel %vm1348, %v2026, %v2025
        %v2028 = vrot.slane %v2018, 4
        %v2029 = vsel %vm1351, %v2028, %v2027
        %v2030 = vrot.slane %v2019, 3
        %v2031 = vsel %vm1354, %v2030, %v2029
        %v2032 = vrot.slane %v2020, 2
        %v2033 = vsel %vm1357, %v2032, %v2031
        %v2034 = vrot.slane %v2021, 1
        %v2035 = vsel %vm1360, %v2034, %v2033
        %v2036 = vpack.c.b16 %v2035, %v2035
        %v2038 = vsel %vm1363, %v2036, 0
        %v2041 = vsel %vm1367, %v2005, 0
        %2043 = vmatprep.subr.bf16.mxu0 0
        %2044 = vmatpush1.bf16.msra.mxu0 %v2041
        %2045 = vmatprep.subr.bf16.mxu0 0
        %2046 = vmatpush1.bf16.msra.mxu0 0
        %2047 = vmatprep.subr.bf16.mxu0 0
        %2048 = vmatpush1.bf16.msra.mxu0 0
        %2049 = vmatprep.subr.bf16.mxu0 0
        %2050 = vmatpush1.bf16.msra.mxu0 0
        %2051 = vmatprep.subr.bf16.mxu0 0
        %2052 = vmatpush1.bf16.msra.mxu0 0
        %2053 = vmatprep.subr.bf16.mxu0 0
        %2054 = vmatpush1.bf16.msra.mxu0 0
        %2055 = vmatprep.subr.bf16.mxu0 0
        %2056 = vmatpush1.bf16.msra.mxu0 0
        %2057 = vmatprep.subr.bf16.mxu0 0
        %2058 = vmatpush1.bf16.msra.mxu0 0
        %2059 = vmatprep.subr.bf16.mxu0 0
        %2060 = vmatpush1.bf16.msra.mxu0 0
        %2061 = vmatprep.subr.bf16.mxu0 0
        %2062 = vmatpush1.bf16.msra.mxu0 0
        %2063 = vmatprep.subr.bf16.mxu0 0
        %2064 = vmatpush1.bf16.msra.mxu0 0
        %2065 = vmatprep.subr.bf16.mxu0 0
        %2066 = vmatpush1.bf16.msra.mxu0 0
        %2067 = vmatprep.subr.bf16.mxu0 0
        %2068 = vmatpush1.bf16.msra.mxu0 0
        %2069 = vmatprep.subr.bf16.mxu0 0
        %2070 = vmatpush1.bf16.msra.mxu0 0
        %2071 = vmatprep.subr.bf16.mxu0 0
        %2072 = vmatpush1.bf16.msra.mxu0 0
        %2073 = vmatprep.subr.bf16.mxu0 0
        %2074 = vmatpush1.bf16.msra.mxu0 0
        %2075 = vmatprep.mubr.bf16.mxu0 0
        %2076 = vmatmul.mubr.bf16.gmra.mrb[0].mxu0 %v2038
        %v2077 = vpop.f32.mrb[0].mxu0
        %v2078 = vadd.f32 0.0, %v2077
        %v2079 = vpop.f32.mrb[0].mxu0
        %v2080 = vpop.f32.mrb[0].mxu0
        %v2081 = vpop.f32.mrb[0].mxu0
        %2082 = vdwg.mxu0
        %v2083 = vadd.f32 %v1747, %v2078
        %2084 = vset.pattern.permute.xlu0 3
        %2085 = vperm.xlu0 %2084, %v1028
        %v2086 = vpop.permute.xlu0 %2085
        %2088 = vset.pattern.permute.xlu0 3
        %2089 = vperm.xlu0 %2088, %v1029
        %v2090 = vpop.permute.xlu0 %2089
        %2092 = vset.pattern.permute.xlu0 3
        %2093 = vperm.xlu0 %2092, %v1030
        %v2094 = vpop.permute.xlu0 %2093
        %2096 = vset.pattern.permute.xlu0 3
        %2097 = vperm.xlu0 %2096, %v1031
        %v2098 = vpop.permute.xlu0 %2097
        %2100 = vset.pattern.permute.xlu0 3
        %2101 = vperm.xlu0 %2100, %v1032
        %v2102 = vpop.permute.xlu0 %2101
        %2104 = vset.pattern.permute.xlu0 3
        %2105 = vperm.xlu0 %2104, %v1033
        %v2106 = vpop.permute.xlu0 %2105
        %2108 = vset.pattern.permute.xlu0 3
        %2109 = vperm.xlu0 %2108, %v1034
        %v2110 = vpop.permute.xlu0 %2109
        %2112 = vset.pattern.permute.xlu0 3
        %2113 = vperm.xlu0 %2112, %v1035
        %v2114 = vpop.permute.xlu0 %2113
        %v2116 = vmul.f32 %v2086, %v1044
        %v2117 = vmul.f32 %v2090, %v1045
        %v2118 = vmul.f32 %v2094, %v1046
        %v2119 = vmul.f32 %v2098, %v1047
        %v2120 = vmul.f32 %v2102, %v1048
        %v2121 = vmul.f32 %v2106, %v1049
        %v2122 = vmul.f32 %v2110, %v1050
        %v2123 = vmul.f32 %v2114, %v1051
        %v2124 = vadd.f32 %v2116, 0.0
        %v2125 = vadd.f32 %v2117, 0.0
        %v2126 = vadd.f32 %v2118, 0.0
        %v2127 = vadd.f32 %v2119, 0.0
        %v2128 = vadd.f32 %v2120, 0.0
        %v2129 = vadd.f32 %v2121, 0.0
        %v2130 = vadd.f32 %v2122, 0.0
        %v2131 = vadd.f32 %v2123, 0.0
        %v2140 = vrot.slane %v2116, 1
        %v2141 = vrot.slane %v2117, 1
        %v2142 = vrot.slane %v2118, 1
        %v2143 = vrot.slane %v2119, 1
        %v2144 = vrot.slane %v2120, 1
        %v2145 = vrot.slane %v2121, 1
        %v2146 = vrot.slane %v2122, 1
        %v2147 = vrot.slane %v2123, 1
        %v2156 = vadd.f32 %v2124, %v2140
        %v2157 = vadd.f32 %v2125, %v2141
        %v2158 = vadd.f32 %v2126, %v2142
        %v2159 = vadd.f32 %v2127, %v2143
        %v2160 = vadd.f32 %v2128, %v2144
        %v2161 = vadd.f32 %v2129, %v2145
        %v2162 = vadd.f32 %v2130, %v2146
        %v2163 = vadd.f32 %v2131, %v2147
        %v2164 = vrot.slane %v2116, 2
        %v2165 = vrot.slane %v2117, 2
        %v2166 = vrot.slane %v2118, 2
        %v2167 = vrot.slane %v2119, 2
        %v2168 = vrot.slane %v2120, 2
        %v2169 = vrot.slane %v2121, 2
        %v2170 = vrot.slane %v2122, 2
        %v2171 = vrot.slane %v2123, 2
        %v2180 = vadd.f32 %v2156, %v2164
        %v2181 = vadd.f32 %v2157, %v2165
        %v2182 = vadd.f32 %v2158, %v2166
        %v2183 = vadd.f32 %v2159, %v2167
        %v2184 = vadd.f32 %v2160, %v2168
        %v2185 = vadd.f32 %v2161, %v2169
        %v2186 = vadd.f32 %v2162, %v2170
        %v2187 = vadd.f32 %v2163, %v2171
        %v2188 = vrot.slane %v2116, 3
        %v2189 = vrot.slane %v2117, 3
        %v2190 = vrot.slane %v2118, 3
        %v2191 = vrot.slane %v2119, 3
        %v2192 = vrot.slane %v2120, 3
        %v2193 = vrot.slane %v2121, 3
        %v2194 = vrot.slane %v2122, 3
        %v2195 = vrot.slane %v2123, 3
        %v2204 = vadd.f32 %v2180, %v2188
        %v2205 = vadd.f32 %v2181, %v2189
        %v2206 = vadd.f32 %v2182, %v2190
        %v2207 = vadd.f32 %v2183, %v2191
        %v2208 = vadd.f32 %v2184, %v2192
        %v2209 = vadd.f32 %v2185, %v2193
        %v2210 = vadd.f32 %v2186, %v2194
        %v2211 = vadd.f32 %v2187, %v2195
        %v2212 = vrot.slane %v2116, 4
        %v2213 = vrot.slane %v2117, 4
        %v2214 = vrot.slane %v2118, 4
        %v2215 = vrot.slane %v2119, 4
        %v2216 = vrot.slane %v2120, 4
        %v2217 = vrot.slane %v2121, 4
        %v2218 = vrot.slane %v2122, 4
        %v2219 = vrot.slane %v2123, 4
        %v2228 = vadd.f32 %v2204, %v2212
        %v2229 = vadd.f32 %v2205, %v2213
        %v2230 = vadd.f32 %v2206, %v2214
        %v2231 = vadd.f32 %v2207, %v2215
        %v2232 = vadd.f32 %v2208, %v2216
        %v2233 = vadd.f32 %v2209, %v2217
        %v2234 = vadd.f32 %v2210, %v2218
        %v2235 = vadd.f32 %v2211, %v2219
        %v2236 = vrot.slane %v2116, 5
        %v2237 = vrot.slane %v2117, 5
        %v2238 = vrot.slane %v2118, 5
        %v2239 = vrot.slane %v2119, 5
        %v2240 = vrot.slane %v2120, 5
        %v2241 = vrot.slane %v2121, 5
        %v2242 = vrot.slane %v2122, 5
        %v2243 = vrot.slane %v2123, 5
        %v2252 = vadd.f32 %v2228, %v2236
        %v2253 = vadd.f32 %v2229, %v2237
        %v2254 = vadd.f32 %v2230, %v2238
        %v2255 = vadd.f32 %v2231, %v2239
        %v2256 = vadd.f32 %v2232, %v2240
        %v2257 = vadd.f32 %v2233, %v2241
        %v2258 = vadd.f32 %v2234, %v2242
        %v2259 = vadd.f32 %v2235, %v2243
        %v2260 = vrot.slane %v2116, 6
        %v2261 = vrot.slane %v2117, 6
        %v2262 = vrot.slane %v2118, 6
        %v2263 = vrot.slane %v2119, 6
        %v2264 = vrot.slane %v2120, 6
        %v2265 = vrot.slane %v2121, 6
        %v2266 = vrot.slane %v2122, 6
        %v2267 = vrot.slane %v2123, 6
        %v2276 = vadd.f32 %v2252, %v2260
        %v2277 = vadd.f32 %v2253, %v2261
        %v2278 = vadd.f32 %v2254, %v2262
        %v2279 = vadd.f32 %v2255, %v2263
        %v2280 = vadd.f32 %v2256, %v2264
        %v2281 = vadd.f32 %v2257, %v2265
        %v2282 = vadd.f32 %v2258, %v2266
        %v2283 = vadd.f32 %v2259, %v2267
        %v2284 = vrot.slane %v2116, 7
        %v2285 = vrot.slane %v2117, 7
        %v2286 = vrot.slane %v2118, 7
        %v2287 = vrot.slane %v2119, 7
        %v2288 = vrot.slane %v2120, 7
        %v2289 = vrot.slane %v2121, 7
        %v2290 = vrot.slane %v2122, 7
        %v2291 = vrot.slane %v2123, 7
        %v2300 = vadd.f32 %v2276, %v2284
        %v2301 = vadd.f32 %v2277, %v2285
        %v2302 = vadd.f32 %v2278, %v2286
        %v2303 = vadd.f32 %v2279, %v2287
        %v2304 = vadd.f32 %v2280, %v2288
        %v2305 = vadd.f32 %v2281, %v2289
        %v2306 = vadd.f32 %v2282, %v2290
        %v2307 = vadd.f32 %v2283, %v2291
        %vm2308 = vcmp.gt.f32.partialorder %v2300, 0.0
        %vm2309 = vcmp.gt.f32.partialorder %v2301, 0.0
        %vm2310 = vcmp.gt.f32.partialorder %v2302, 0.0
        %vm2311 = vcmp.gt.f32.partialorder %v2303, 0.0
        %vm2312 = vcmp.gt.f32.partialorder %v2304, 0.0
        %vm2313 = vcmp.gt.f32.partialorder %v2305, 0.0
        %vm2314 = vcmp.gt.f32.partialorder %v2306, 0.0
        %vm2315 = vcmp.gt.f32.partialorder %v2307, 0.0
        %v2316 = vmul.f32 %v2300, 0.2
        %v2317 = vmul.f32 %v2301, 0.2
        %v2318 = vmul.f32 %v2302, 0.2
        %v2319 = vmul.f32 %v2303, 0.2
        %v2320 = vmul.f32 %v2304, 0.2
        %v2321 = vmul.f32 %v2305, 0.2
        %v2322 = vmul.f32 %v2306, 0.2
        %v2323 = vmul.f32 %v2307, 0.2
        %v2324 = vsel %vm2308, %v2300, %v2316
        %v2325 = vsel %vm2309, %v2301, %v2317
        %v2326 = vsel %vm2310, %v2302, %v2318
        %v2327 = vsel %vm2311, %v2303, %v2319
        %v2328 = vsel %vm2312, %v2304, %v2320
        %v2329 = vsel %vm2313, %v2305, %v2321
        %v2330 = vsel %vm2314, %v2306, %v2322
        %v2331 = vsel %vm2315, %v2307, %v2323
        %v2332 = vpack.c.bf16 %v2324, %v2324
        %v2333 = vpack.c.bf16 %v2325, %v2325
        %v2334 = vpack.c.bf16 %v2326, %v2326
        %v2335 = vpack.c.bf16 %v2327, %v2327
        %v2336 = vpack.c.bf16 %v2328, %v2328
        %v2337 = vpack.c.bf16 %v2329, %v2329
        %v2338 = vpack.c.bf16 %v2330, %v2330
        %v2339 = vpack.c.bf16 %v2331, %v2331
        %s2340 = scalar_lea.vmem %s8, 6
        %v2341 = vld [vmem:[%s2340] sm:$0x3]
        %v2350 = vunpack.c.l.b16 %v2332
        %v2351 = vunpack.c.l.b16 %v2333
        %v2352 = vunpack.c.l.b16 %v2334
        %v2353 = vunpack.c.l.b16 %v2335
        %v2354 = vunpack.c.l.b16 %v2336
        %v2355 = vunpack.c.l.b16 %v2337
        %v2356 = vunpack.c.l.b16 %v2338
        %v2357 = vunpack.c.l.b16 %v2339
        %v2358 = vrot.slane %v2351, 7
        %v2359 = vsel %vm1342, %v2358, %v2350
        %v2360 = vrot.slane %v2352, 6
        %v2361 = vsel %vm1345, %v2360, %v2359
        %v2362 = vrot.slane %v2353, 5
        %v2363 = vsel %vm1348, %v2362, %v2361
        %v2364 = vrot.slane %v2354, 4
        %v2365 = vsel %vm1351, %v2364, %v2363
        %v2366 = vrot.slane %v2355, 3
        %v2367 = vsel %vm1354, %v2366, %v2365
        %v2368 = vrot.slane %v2356, 2
        %v2369 = vsel %vm1357, %v2368, %v2367
        %v2370 = vrot.slane %v2357, 1
        %v2371 = vsel %vm1360, %v2370, %v2369
        %v2372 = vpack.c.b16 %v2371, %v2371
        %v2374 = vsel %vm1363, %v2372, 0
        %v2377 = vsel %vm1367, %v2341, 0
        %2379 = vmatprep.subr.bf16.mxu0 0
        %2380 = vmatpush1.bf16.msra.mxu0 %v2377
        %2381 = vmatprep.subr.bf16.mxu0 0
        %2382 = vmatpush1.bf16.msra.mxu0 0
        %2383 = vmatprep.subr.bf16.mxu0 0
        %2384 = vmatpush1.bf16.msra.mxu0 0
        %2385 = vmatprep.subr.bf16.mxu0 0
        %2386 = vmatpush1.bf16.msra.mxu0 0
        %2387 = vmatprep.subr.bf16.mxu0 0
        %2388 = vmatpush1.bf16.msra.mxu0 0
        %2389 = vmatprep.subr.bf16.mxu0 0
        %2390 = vmatpush1.bf16.msra.mxu0 0
        %2391 = vmatprep.subr.bf16.mxu0 0
        %2392 = vmatpush1.bf16.msra.mxu0 0
        %2393 = vmatprep.subr.bf16.mxu0 0
        %2394 = vmatpush1.bf16.msra.mxu0 0
        %2395 = vmatprep.subr.bf16.mxu0 0
        %2396 = vmatpush1.bf16.msra.mxu0 0
        %2397 = vmatprep.subr.bf16.mxu0 0
        %2398 = vmatpush1.bf16.msra.mxu0 0
        %2399 = vmatprep.subr.bf16.mxu0 0
        %2400 = vmatpush1.bf16.msra.mxu0 0
        %2401 = vmatprep.subr.bf16.mxu0 0
        %2402 = vmatpush1.bf16.msra.mxu0 0
        %2403 = vmatprep.subr.bf16.mxu0 0
        %2404 = vmatpush1.bf16.msra.mxu0 0
        %2405 = vmatprep.subr.bf16.mxu0 0
        %2406 = vmatpush1.bf16.msra.mxu0 0
        %2407 = vmatprep.subr.bf16.mxu0 0
        %2408 = vmatpush1.bf16.msra.mxu0 0
        %2409 = vmatprep.subr.bf16.mxu0 0
        %2410 = vmatpush1.bf16.msra.mxu0 0
        %2411 = vmatprep.mubr.bf16.mxu0 0
        %2412 = vmatmul.mubr.bf16.gmra.mrb[0].mxu0 %v2374
        %v2413 = vpop.f32.mrb[0].mxu0
        %v2414 = vadd.f32 0.0, %v2413
        %v2415 = vpop.f32.mrb[0].mxu0
        %v2416 = vpop.f32.mrb[0].mxu0
        %v2417 = vpop.f32.mrb[0].mxu0
        %2418 = vdwg.mxu0
        %v2419 = vadd.f32 %v2083, %v2414
        %2420 = vset.pattern.permute.xlu0 4
        %2421 = vperm.xlu0 %2420, %v1028
        %v2422 = vpop.permute.xlu0 %2421
        %2424 = vset.pattern.permute.xlu0 4
        %2425 = vperm.xlu0 %2424, %v1029
        %v2426 = vpop.permute.xlu0 %2425
        %2428 = vset.pattern.permute.xlu0 4
        %2429 = vperm.xlu0 %2428, %v1030
        %v2430 = vpop.permute.xlu0 %2429
        %2432 = vset.pattern.permute.xlu0 4
        %2433 = vperm.xlu0 %2432, %v1031
        %v2434 = vpop.permute.xlu0 %2433
        %2436 = vset.pattern.permute.xlu0 4
        %2437 = vperm.xlu0 %2436, %v1032
        %v2438 = vpop.permute.xlu0 %2437
        %2440 = vset.pattern.permute.xlu0 4
        %2441 = vperm.xlu0 %2440, %v1033
        %v2442 = vpop.permute.xlu0 %2441
        %2444 = vset.pattern.permute.xlu0 4
        %2445 = vperm.xlu0 %2444, %v1034
        %v2446 = vpop.permute.xlu0 %2445
        %2448 = vset.pattern.permute.xlu0 4
        %2449 = vperm.xlu0 %2448, %v1035
        %v2450 = vpop.permute.xlu0 %2449
        %v2452 = vmul.f32 %v2422, %v1044
        %v2453 = vmul.f32 %v2426, %v1045
        %v2454 = vmul.f32 %v2430, %v1046
        %v2455 = vmul.f32 %v2434, %v1047
        %v2456 = vmul.f32 %v2438, %v1048
        %v2457 = vmul.f32 %v2442, %v1049
        %v2458 = vmul.f32 %v2446, %v1050
        %v2459 = vmul.f32 %v2450, %v1051
        %v2460 = vadd.f32 %v2452, 0.0
        %v2461 = vadd.f32 %v2453, 0.0
        %v2462 = vadd.f32 %v2454, 0.0
        %v2463 = vadd.f32 %v2455, 0.0
        %v2464 = vadd.f32 %v2456, 0.0
        %v2465 = vadd.f32 %v2457, 0.0
        %v2466 = vadd.f32 %v2458, 0.0
        %v2467 = vadd.f32 %v2459, 0.0
        %v2476 = vrot.slane %v2452, 1
        %v2477 = vrot.slane %v2453, 1
        %v2478 = vrot.slane %v2454, 1
        %v2479 = vrot.slane %v2455, 1
        %v2480 = vrot.slane %v2456, 1
        %v2481 = vrot.slane %v2457, 1
        %v2482 = vrot.slane %v2458, 1
        %v2483 = vrot.slane %v2459, 1
        %v2492 = vadd.f32 %v2460, %v2476
        %v2493 = vadd.f32 %v2461, %v2477
        %v2494 = vadd.f32 %v2462, %v2478
        %v2495 = vadd.f32 %v2463, %v2479
        %v2496 = vadd.f32 %v2464, %v2480
        %v2497 = vadd.f32 %v2465, %v2481
        %v2498 = vadd.f32 %v2466, %v2482
        %v2499 = vadd.f32 %v2467, %v2483
        %v2500 = vrot.slane %v2452, 2
        %v2501 = vrot.slane %v2453, 2
        %v2502 = vrot.slane %v2454, 2
        %v2503 = vrot.slane %v2455, 2
        %v2504 = vrot.slane %v2456, 2
        %v2505 = vrot.slane %v2457, 2
        %v2506 = vrot.slane %v2458, 2
        %v2507 = vrot.slane %v2459, 2
        %v2516 = vadd.f32 %v2492, %v2500
        %v2517 = vadd.f32 %v2493, %v2501
        %v2518 = vadd.f32 %v2494, %v2502
        %v2519 = vadd.f32 %v2495, %v2503
        %v2520 = vadd.f32 %v2496, %v2504
        %v2521 = vadd.f32 %v2497, %v2505
        %v2522 = vadd.f32 %v2498, %v2506
        %v2523 = vadd.f32 %v2499, %v2507
        %v2524 = vrot.slane %v2452, 3
        %v2525 = vrot.slane %v2453, 3
        %v2526 = vrot.slane %v2454, 3
        %v2527 = vrot.slane %v2455, 3
        %v2528 = vrot.slane %v2456, 3
        %v2529 = vrot.slane %v2457, 3
        %v2530 = vrot.slane %v2458, 3
        %v2531 = vrot.slane %v2459, 3
        %v2540 = vadd.f32 %v2516, %v2524
        %v2541 = vadd.f32 %v2517, %v2525
        %v2542 = vadd.f32 %v2518, %v2526
        %v2543 = vadd.f32 %v2519, %v2527
        %v2544 = vadd.f32 %v2520, %v2528
        %v2545 = vadd.f32 %v2521, %v2529
        %v2546 = vadd.f32 %v2522, %v2530
        %v2547 = vadd.f32 %v2523, %v2531
        %v2548 = vrot.slane %v2452, 4
        %v2549 = vrot.slane %v2453, 4
        %v2550 = vrot.slane %v2454, 4
        %v2551 = vrot.slane %v2455, 4
        %v2552 = vrot.slane %v2456, 4
        %v2553 = vrot.slane %v2457, 4
        %v2554 = vrot.slane %v2458, 4
        %v2555 = vrot.slane %v2459, 4
        %v2564 = vadd.f32 %v2540, %v2548
        %v2565 = vadd.f32 %v2541, %v2549
        %v2566 = vadd.f32 %v2542, %v2550
        %v2567 = vadd.f32 %v2543, %v2551
        %v2568 = vadd.f32 %v2544, %v2552
        %v2569 = vadd.f32 %v2545, %v2553
        %v2570 = vadd.f32 %v2546, %v2554
        %v2571 = vadd.f32 %v2547, %v2555
        %v2572 = vrot.slane %v2452, 5
        %v2573 = vrot.slane %v2453, 5
        %v2574 = vrot.slane %v2454, 5
        %v2575 = vrot.slane %v2455, 5
        %v2576 = vrot.slane %v2456, 5
        %v2577 = vrot.slane %v2457, 5
        %v2578 = vrot.slane %v2458, 5
        %v2579 = vrot.slane %v2459, 5
        %v2588 = vadd.f32 %v2564, %v2572
        %v2589 = vadd.f32 %v2565, %v2573
        %v2590 = vadd.f32 %v2566, %v2574
        %v2591 = vadd.f32 %v2567, %v2575
        %v2592 = vadd.f32 %v2568, %v2576
        %v2593 = vadd.f32 %v2569, %v2577
        %v2594 = vadd.f32 %v2570, %v2578
        %v2595 = vadd.f32 %v2571, %v2579
        %v2596 = vrot.slane %v2452, 6
        %v2597 = vrot.slane %v2453, 6
        %v2598 = vrot.slane %v2454, 6
        %v2599 = vrot.slane %v2455, 6
        %v2600 = vrot.slane %v2456, 6
        %v2601 = vrot.slane %v2457, 6
        %v2602 = vrot.slane %v2458, 6
        %v2603 = vrot.slane %v2459, 6
        %v2612 = vadd.f32 %v2588, %v2596
        %v2613 = vadd.f32 %v2589, %v2597
        %v2614 = vadd.f32 %v2590, %v2598
        %v2615 = vadd.f32 %v2591, %v2599
        %v2616 = vadd.f32 %v2592, %v2600
        %v2617 = vadd.f32 %v2593, %v2601
        %v2618 = vadd.f32 %v2594, %v2602
        %v2619 = vadd.f32 %v2595, %v2603
        %v2620 = vrot.slane %v2452, 7
        %v2621 = vrot.slane %v2453, 7
        %v2622 = vrot.slane %v2454, 7
        %v2623 = vrot.slane %v2455, 7
        %v2624 = vrot.slane %v2456, 7
        %v2625 = vrot.slane %v2457, 7
        %v2626 = vrot.slane %v2458, 7
        %v2627 = vrot.slane %v2459, 7
        %v2636 = vadd.f32 %v2612, %v2620
        %v2637 = vadd.f32 %v2613, %v2621
        %v2638 = vadd.f32 %v2614, %v2622
        %v2639 = vadd.f32 %v2615, %v2623
        %v2640 = vadd.f32 %v2616, %v2624
        %v2641 = vadd.f32 %v2617, %v2625
        %v2642 = vadd.f32 %v2618, %v2626
        %v2643 = vadd.f32 %v2619, %v2627
        %vm2644 = vcmp.gt.f32.partialorder %v2636, 0.0
        %vm2645 = vcmp.gt.f32.partialorder %v2637, 0.0
        %vm2646 = vcmp.gt.f32.partialorder %v2638, 0.0
        %vm2647 = vcmp.gt.f32.partialorder %v2639, 0.0
        %vm2648 = vcmp.gt.f32.partialorder %v2640, 0.0
        %vm2649 = vcmp.gt.f32.partialorder %v2641, 0.0
        %vm2650 = vcmp.gt.f32.partialorder %v2642, 0.0
        %vm2651 = vcmp.gt.f32.partialorder %v2643, 0.0
        %v2652 = vmul.f32 %v2636, 0.2
        %v2653 = vmul.f32 %v2637, 0.2
        %v2654 = vmul.f32 %v2638, 0.2
        %v2655 = vmul.f32 %v2639, 0.2
        %v2656 = vmul.f32 %v2640, 0.2
        %v2657 = vmul.f32 %v2641, 0.2
        %v2658 = vmul.f32 %v2642, 0.2
        %v2659 = vmul.f32 %v2643, 0.2
        %v2660 = vsel %vm2644, %v2636, %v2652
        %v2661 = vsel %vm2645, %v2637, %v2653
        %v2662 = vsel %vm2646, %v2638, %v2654
        %v2663 = vsel %vm2647, %v2639, %v2655
        %v2664 = vsel %vm2648, %v2640, %v2656
        %v2665 = vsel %vm2649, %v2641, %v2657
        %v2666 = vsel %vm2650, %v2642, %v2658
        %v2667 = vsel %vm2651, %v2643, %v2659
        %v2668 = vpack.c.bf16 %v2660, %v2660
        %v2669 = vpack.c.bf16 %v2661, %v2661
        %v2670 = vpack.c.bf16 %v2662, %v2662
        %v2671 = vpack.c.bf16 %v2663, %v2663
        %v2672 = vpack.c.bf16 %v2664, %v2664
        %v2673 = vpack.c.bf16 %v2665, %v2665
        %v2674 = vpack.c.bf16 %v2666, %v2666
        %v2675 = vpack.c.bf16 %v2667, %v2667
        %s2676 = scalar_lea.vmem %s8, 8
        %v2677 = vld [vmem:[%s2676] sm:$0x3]
        %v2686 = vunpack.c.l.b16 %v2668
        %v2687 = vunpack.c.l.b16 %v2669
        %v2688 = vunpack.c.l.b16 %v2670
        %v2689 = vunpack.c.l.b16 %v2671
        %v2690 = vunpack.c.l.b16 %v2672
        %v2691 = vunpack.c.l.b16 %v2673
        %v2692 = vunpack.c.l.b16 %v2674
        %v2693 = vunpack.c.l.b16 %v2675
        %v2694 = vrot.slane %v2687, 7
        %v2695 = vsel %vm1342, %v2694, %v2686
        %v2696 = vrot.slane %v2688, 6
        %v2697 = vsel %vm1345, %v2696, %v2695
        %v2698 = vrot.slane %v2689, 5
        %v2699 = vsel %vm1348, %v2698, %v2697
        %v2700 = vrot.slane %v2690, 4
        %v2701 = vsel %vm1351, %v2700, %v2699
        %v2702 = vrot.slane %v2691, 3
        %v2703 = vsel %vm1354, %v2702, %v2701
        %v2704 = vrot.slane %v2692, 2
        %v2705 = vsel %vm1357, %v2704, %v2703
        %v2706 = vrot.slane %v2693, 1
        %v2707 = vsel %vm1360, %v2706, %v2705
        %v2708 = vpack.c.b16 %v2707, %v2707
        %v2710 = vsel %vm1363, %v2708, 0
        %v2713 = vsel %vm1367, %v2677, 0
        %2715 = vmatprep.subr.bf16.mxu0 0
        %2716 = vmatpush1.bf16.msra.mxu0 %v2713
        %2717 = vmatprep.subr.bf16.mxu0 0
        %2718 = vmatpush1.bf16.msra.mxu0 0
        %2719 = vmatprep.subr.bf16.mxu0 0
        %2720 = vmatpush1.bf16.msra.mxu0 0
        %2721 = vmatprep.subr.bf16.mxu0 0
        %2722 = vmatpush1.bf16.msra.mxu0 0
        %2723 = vmatprep.subr.bf16.mxu0 0
        %2724 = vmatpush1.bf16.msra.mxu0 0
        %2725 = vmatprep.subr.bf16.mxu0 0
        %2726 = vmatpush1.bf16.msra.mxu0 0
        %2727 = vmatprep.subr.bf16.mxu0 0
        %2728 = vmatpush1.bf16.msra.mxu0 0
        %2729 = vmatprep.subr.bf16.mxu0 0
        %2730 = vmatpush1.bf16.msra.mxu0 0
        %2731 = vmatprep.subr.bf16.mxu0 0
        %2732 = vmatpush1.bf16.msra.mxu0 0
        %2733 = vmatprep.subr.bf16.mxu0 0
        %2734 = vmatpush1.bf16.msra.mxu0 0
        %2735 = vmatprep.subr.bf16.mxu0 0
        %2736 = vmatpush1.bf16.msra.mxu0 0
        %2737 = vmatprep.subr.bf16.mxu0 0
        %2738 = vmatpush1.bf16.msra.mxu0 0
        %2739 = vmatprep.subr.bf16.mxu0 0
        %2740 = vmatpush1.bf16.msra.mxu0 0
        %2741 = vmatprep.subr.bf16.mxu0 0
        %2742 = vmatpush1.bf16.msra.mxu0 0
        %2743 = vmatprep.subr.bf16.mxu0 0
        %2744 = vmatpush1.bf16.msra.mxu0 0
        %2745 = vmatprep.subr.bf16.mxu0 0
        %2746 = vmatpush1.bf16.msra.mxu0 0
        %2747 = vmatprep.mubr.bf16.mxu0 0
        %2748 = vmatmul.mubr.bf16.gmra.mrb[0].mxu0 %v2710
        %v2749 = vpop.f32.mrb[0].mxu0
        %v2750 = vadd.f32 0.0, %v2749
        %v2751 = vpop.f32.mrb[0].mxu0
        %v2752 = vpop.f32.mrb[0].mxu0
        %v2753 = vpop.f32.mrb[0].mxu0
        %2754 = vdwg.mxu0
        %v2755 = vadd.f32 %v2419, %v2750
        %2756 = vset.pattern.permute.xlu0 5
        %2757 = vperm.xlu0 %2756, %v1028
        %v2758 = vpop.permute.xlu0 %2757
        %2760 = vset.pattern.permute.xlu0 5
        %2761 = vperm.xlu0 %2760, %v1029
        %v2762 = vpop.permute.xlu0 %2761
        %2764 = vset.pattern.permute.xlu0 5
        %2765 = vperm.xlu0 %2764, %v1030
        %v2766 = vpop.permute.xlu0 %2765
        %2768 = vset.pattern.permute.xlu0 5
        %2769 = vperm.xlu0 %2768, %v1031
        %v2770 = vpop.permute.xlu0 %2769
        %2772 = vset.pattern.permute.xlu0 5
        %2773 = vperm.xlu0 %2772, %v1032
        %v2774 = vpop.permute.xlu0 %2773
        %2776 = vset.pattern.permute.xlu0 5
        %2777 = vperm.xlu0 %2776, %v1033
        %v2778 = vpop.permute.xlu0 %2777
        %2780 = vset.pattern.permute.xlu0 5
        %2781 = vperm.xlu0 %2780, %v1034
        %v2782 = vpop.permute.xlu0 %2781
        %2784 = vset.pattern.permute.xlu0 5
        %2785 = vperm.xlu0 %2784, %v1035
        %v2786 = vpop.permute.xlu0 %2785
        %v2788 = vmul.f32 %v2758, %v1044
        %v2789 = vmul.f32 %v2762, %v1045
        %v2790 = vmul.f32 %v2766, %v1046
        %v2791 = vmul.f32 %v2770, %v1047
        %v2792 = vmul.f32 %v2774, %v1048
        %v2793 = vmul.f32 %v2778, %v1049
        %v2794 = vmul.f32 %v2782, %v1050
        %v2795 = vmul.f32 %v2786, %v1051
        %v2796 = vadd.f32 %v2788, 0.0
        %v2797 = vadd.f32 %v2789, 0.0
        %v2798 = vadd.f32 %v2790, 0.0
        %v2799 = vadd.f32 %v2791, 0.0
        %v2800 = vadd.f32 %v2792, 0.0
        %v2801 = vadd.f32 %v2793, 0.0
        %v2802 = vadd.f32 %v2794, 0.0
        %v2803 = vadd.f32 %v2795, 0.0
        %v2812 = vrot.slane %v2788, 1
        %v2813 = vrot.slane %v2789, 1
        %v2814 = vrot.slane %v2790, 1
        %v2815 = vrot.slane %v2791, 1
        %v2816 = vrot.slane %v2792, 1
        %v2817 = vrot.slane %v2793, 1
        %v2818 = vrot.slane %v2794, 1
        %v2819 = vrot.slane %v2795, 1
        %v2828 = vadd.f32 %v2796, %v2812
        %v2829 = vadd.f32 %v2797, %v2813
        %v2830 = vadd.f32 %v2798, %v2814
        %v2831 = vadd.f32 %v2799, %v2815
        %v2832 = vadd.f32 %v2800, %v2816
        %v2833 = vadd.f32 %v2801, %v2817
        %v2834 = vadd.f32 %v2802, %v2818
        %v2835 = vadd.f32 %v2803, %v2819
        %v2836 = vrot.slane %v2788, 2
        %v2837 = vrot.slane %v2789, 2
        %v2838 = vrot.slane %v2790, 2
        %v2839 = vrot.slane %v2791, 2
        %v2840 = vrot.slane %v2792, 2
        %v2841 = vrot.slane %v2793, 2
        %v2842 = vrot.slane %v2794, 2
        %v2843 = vrot.slane %v2795, 2
        %v2852 = vadd.f32 %v2828, %v2836
        %v2853 = vadd.f32 %v2829, %v2837
        %v2854 = vadd.f32 %v2830, %v2838
        %v2855 = vadd.f32 %v2831, %v2839
        %v2856 = vadd.f32 %v2832, %v2840
        %v2857 = vadd.f32 %v2833, %v2841
        %v2858 = vadd.f32 %v2834, %v2842
        %v2859 = vadd.f32 %v2835, %v2843
        %v2860 = vrot.slane %v2788, 3
        %v2861 = vrot.slane %v2789, 3
        %v2862 = vrot.slane %v2790, 3
        %v2863 = vrot.slane %v2791, 3
        %v2864 = vrot.slane %v2792, 3
        %v2865 = vrot.slane %v2793, 3
        %v2866 = vrot.slane %v2794, 3
        %v2867 = vrot.slane %v2795, 3
        %v2876 = vadd.f32 %v2852, %v2860
        %v2877 = vadd.f32 %v2853, %v2861
        %v2878 = vadd.f32 %v2854, %v2862
        %v2879 = vadd.f32 %v2855, %v2863
        %v2880 = vadd.f32 %v2856, %v2864
        %v2881 = vadd.f32 %v2857, %v2865
        %v2882 = vadd.f32 %v2858, %v2866
        %v2883 = vadd.f32 %v2859, %v2867
        %v2884 = vrot.slane %v2788, 4
        %v2885 = vrot.slane %v2789, 4
        %v2886 = vrot.slane %v2790, 4
        %v2887 = vrot.slane %v2791, 4
        %v2888 = vrot.slane %v2792, 4
        %v2889 = vrot.slane %v2793, 4
        %v2890 = vrot.slane %v2794, 4
        %v2891 = vrot.slane %v2795, 4
        %v2900 = vadd.f32 %v2876, %v2884
        %v2901 = vadd.f32 %v2877, %v2885
        %v2902 = vadd.f32 %v2878, %v2886
        %v2903 = vadd.f32 %v2879, %v2887
        %v2904 = vadd.f32 %v2880, %v2888
        %v2905 = vadd.f32 %v2881, %v2889
        %v2906 = vadd.f32 %v2882, %v2890
        %v2907 = vadd.f32 %v2883, %v2891
        %v2908 = vrot.slane %v2788, 5
        %v2909 = vrot.slane %v2789, 5
        %v2910 = vrot.slane %v2790, 5
        %v2911 = vrot.slane %v2791, 5
        %v2912 = vrot.slane %v2792, 5
        %v2913 = vrot.slane %v2793, 5
        %v2914 = vrot.slane %v2794, 5
        %v2915 = vrot.slane %v2795, 5
        %v2924 = vadd.f32 %v2900, %v2908
        %v2925 = vadd.f32 %v2901, %v2909
        %v2926 = vadd.f32 %v2902, %v2910
        %v2927 = vadd.f32 %v2903, %v2911
        %v2928 = vadd.f32 %v2904, %v2912
        %v2929 = vadd.f32 %v2905, %v2913
        %v2930 = vadd.f32 %v2906, %v2914
        %v2931 = vadd.f32 %v2907, %v2915
        %v2932 = vrot.slane %v2788, 6
        %v2933 = vrot.slane %v2789, 6
        %v2934 = vrot.slane %v2790, 6
        %v2935 = vrot.slane %v2791, 6
        %v2936 = vrot.slane %v2792, 6
        %v2937 = vrot.slane %v2793, 6
        %v2938 = vrot.slane %v2794, 6
        %v2939 = vrot.slane %v2795, 6
        %v2948 = vadd.f32 %v2924, %v2932
        %v2949 = vadd.f32 %v2925, %v2933
        %v2950 = vadd.f32 %v2926, %v2934
        %v2951 = vadd.f32 %v2927, %v2935
        %v2952 = vadd.f32 %v2928, %v2936
        %v2953 = vadd.f32 %v2929, %v2937
        %v2954 = vadd.f32 %v2930, %v2938
        %v2955 = vadd.f32 %v2931, %v2939
        %v2956 = vrot.slane %v2788, 7
        %v2957 = vrot.slane %v2789, 7
        %v2958 = vrot.slane %v2790, 7
        %v2959 = vrot.slane %v2791, 7
        %v2960 = vrot.slane %v2792, 7
        %v2961 = vrot.slane %v2793, 7
        %v2962 = vrot.slane %v2794, 7
        %v2963 = vrot.slane %v2795, 7
        %v2972 = vadd.f32 %v2948, %v2956
        %v2973 = vadd.f32 %v2949, %v2957
        %v2974 = vadd.f32 %v2950, %v2958
        %v2975 = vadd.f32 %v2951, %v2959
        %v2976 = vadd.f32 %v2952, %v2960
        %v2977 = vadd.f32 %v2953, %v2961
        %v2978 = vadd.f32 %v2954, %v2962
        %v2979 = vadd.f32 %v2955, %v2963
        %vm2980 = vcmp.gt.f32.partialorder %v2972, 0.0
        %vm2981 = vcmp.gt.f32.partialorder %v2973, 0.0
        %vm2982 = vcmp.gt.f32.partialorder %v2974, 0.0
        %vm2983 = vcmp.gt.f32.partialorder %v2975, 0.0
        %vm2984 = vcmp.gt.f32.partialorder %v2976, 0.0
        %vm2985 = vcmp.gt.f32.partialorder %v2977, 0.0
        %vm2986 = vcmp.gt.f32.partialorder %v2978, 0.0
        %vm2987 = vcmp.gt.f32.partialorder %v2979, 0.0
        %v2988 = vmul.f32 %v2972, 0.2
        %v2989 = vmul.f32 %v2973, 0.2
        %v2990 = vmul.f32 %v2974, 0.2
        %v2991 = vmul.f32 %v2975, 0.2
        %v2992 = vmul.f32 %v2976, 0.2
        %v2993 = vmul.f32 %v2977, 0.2
        %v2994 = vmul.f32 %v2978, 0.2
        %v2995 = vmul.f32 %v2979, 0.2
        %v2996 = vsel %vm2980, %v2972, %v2988
        %v2997 = vsel %vm2981, %v2973, %v2989
        %v2998 = vsel %vm2982, %v2974, %v2990
        %v2999 = vsel %vm2983, %v2975, %v2991
        %v3000 = vsel %vm2984, %v2976, %v2992
        %v3001 = vsel %vm2985, %v2977, %v2993
        %v3002 = vsel %vm2986, %v2978, %v2994
        %v3003 = vsel %vm2987, %v2979, %v2995
        %v3004 = vpack.c.bf16 %v2996, %v2996
        %v3005 = vpack.c.bf16 %v2997, %v2997
        %v3006 = vpack.c.bf16 %v2998, %v2998
        %v3007 = vpack.c.bf16 %v2999, %v2999
        %v3008 = vpack.c.bf16 %v3000, %v3000
        %v3009 = vpack.c.bf16 %v3001, %v3001
        %v3010 = vpack.c.bf16 %v3002, %v3002
        %v3011 = vpack.c.bf16 %v3003, %v3003
        %s3012 = scalar_lea.vmem %s8, 10
        %v3013 = vld [vmem:[%s3012] sm:$0x3]
        %v3022 = vunpack.c.l.b16 %v3004
        %v3023 = vunpack.c.l.b16 %v3005
        %v3024 = vunpack.c.l.b16 %v3006
        %v3025 = vunpack.c.l.b16 %v3007
        %v3026 = vunpack.c.l.b16 %v3008
        %v3027 = vunpack.c.l.b16 %v3009
        %v3028 = vunpack.c.l.b16 %v3010
        %v3029 = vunpack.c.l.b16 %v3011
        %v3030 = vrot.slane %v3023, 7
        %v3031 = vsel %vm1342, %v3030, %v3022
        %v3032 = vrot.slane %v3024, 6
        %v3033 = vsel %vm1345, %v3032, %v3031
        %v3034 = vrot.slane %v3025, 5
        %v3035 = vsel %vm1348, %v3034, %v3033
        %v3036 = vrot.slane %v3026, 4
        %v3037 = vsel %vm1351, %v3036, %v3035
        %v3038 = vrot.slane %v3027, 3
        %v3039 = vsel %vm1354, %v3038, %v3037
        %v3040 = vrot.slane %v3028, 2
        %v3041 = vsel %vm1357, %v3040, %v3039
        %v3042 = vrot.slane %v3029, 1
        %v3043 = vsel %vm1360, %v3042, %v3041
        %v3044 = vpack.c.b16 %v3043, %v3043
        %v3046 = vsel %vm1363, %v3044, 0
        %v3049 = vsel %vm1367, %v3013, 0
        %3051 = vmatprep.subr.bf16.mxu0 0
        %3052 = vmatpush1.bf16.msra.mxu0 %v3049
        %3053 = vmatprep.subr.bf16.mxu0 0
        %3054 = vmatpush1.bf16.msra.mxu0 0
        %3055 = vmatprep.subr.bf16.mxu0 0
        %3056 = vmatpush1.bf16.msra.mxu0 0
        %3057 = vmatprep.subr.bf16.mxu0 0
        %3058 = vmatpush1.bf16.msra.mxu0 0
        %3059 = vmatprep.subr.bf16.mxu0 0
        %3060 = vmatpush1.bf16.msra.mxu0 0
        %3061 = vmatprep.subr.bf16.mxu0 0
        %3062 = vmatpush1.bf16.msra.mxu0 0
        %3063 = vmatprep.subr.bf16.mxu0 0
        %3064 = vmatpush1.bf16.msra.mxu0 0
        %3065 = vmatprep.subr.bf16.mxu0 0
        %3066 = vmatpush1.bf16.msra.mxu0 0
        %3067 = vmatprep.subr.bf16.mxu0 0
        %3068 = vmatpush1.bf16.msra.mxu0 0
        %3069 = vmatprep.subr.bf16.mxu0 0
        %3070 = vmatpush1.bf16.msra.mxu0 0
        %3071 = vmatprep.subr.bf16.mxu0 0
        %3072 = vmatpush1.bf16.msra.mxu0 0
        %3073 = vmatprep.subr.bf16.mxu0 0
        %3074 = vmatpush1.bf16.msra.mxu0 0
        %3075 = vmatprep.subr.bf16.mxu0 0
        %3076 = vmatpush1.bf16.msra.mxu0 0
        %3077 = vmatprep.subr.bf16.mxu0 0
        %3078 = vmatpush1.bf16.msra.mxu0 0
        %3079 = vmatprep.subr.bf16.mxu0 0
        %3080 = vmatpush1.bf16.msra.mxu0 0
        %3081 = vmatprep.subr.bf16.mxu0 0
        %3082 = vmatpush1.bf16.msra.mxu0 0
        %3083 = vmatprep.mubr.bf16.mxu0 0
        %3084 = vmatmul.mubr.bf16.gmra.mrb[0].mxu0 %v3046
        %v3085 = vpop.f32.mrb[0].mxu0
        %v3086 = vadd.f32 0.0, %v3085
        %v3087 = vpop.f32.mrb[0].mxu0
        %v3088 = vpop.f32.mrb[0].mxu0
        %v3089 = vpop.f32.mrb[0].mxu0
        %3090 = vdwg.mxu0
        %v3091 = vadd.f32 %v2755, %v3086
        %3092 = vset.pattern.permute.xlu0 6
        %3093 = vperm.xlu0 %3092, %v1028
        %v3094 = vpop.permute.xlu0 %3093
        %3096 = vset.pattern.permute.xlu0 6
        %3097 = vperm.xlu0 %3096, %v1029
        %v3098 = vpop.permute.xlu0 %3097
        %3100 = vset.pattern.permute.xlu0 6
        %3101 = vperm.xlu0 %3100, %v1030
        %v3102 = vpop.permute.xlu0 %3101
        %3104 = vset.pattern.permute.xlu0 6
        %3105 = vperm.xlu0 %3104, %v1031
        %v3106 = vpop.permute.xlu0 %3105
        %3108 = vset.pattern.permute.xlu0 6
        %3109 = vperm.xlu0 %3108, %v1032
        %v3110 = vpop.permute.xlu0 %3109
        %3112 = vset.pattern.permute.xlu0 6
        %3113 = vperm.xlu0 %3112, %v1033
        %v3114 = vpop.permute.xlu0 %3113
        %3116 = vset.pattern.permute.xlu0 6
        %3117 = vperm.xlu0 %3116, %v1034
        %v3118 = vpop.permute.xlu0 %3117
        %3120 = vset.pattern.permute.xlu0 6
        %3121 = vperm.xlu0 %3120, %v1035
        %v3122 = vpop.permute.xlu0 %3121
        %v3124 = vmul.f32 %v3094, %v1044
        %v3125 = vmul.f32 %v3098, %v1045
        %v3126 = vmul.f32 %v3102, %v1046
        %v3127 = vmul.f32 %v3106, %v1047
        %v3128 = vmul.f32 %v3110, %v1048
        %v3129 = vmul.f32 %v3114, %v1049
        %v3130 = vmul.f32 %v3118, %v1050
        %v3131 = vmul.f32 %v3122, %v1051
        %v3132 = vadd.f32 %v3124, 0.0
        %v3133 = vadd.f32 %v3125, 0.0
        %v3134 = vadd.f32 %v3126, 0.0
        %v3135 = vadd.f32 %v3127, 0.0
        %v3136 = vadd.f32 %v3128, 0.0
        %v3137 = vadd.f32 %v3129, 0.0
        %v3138 = vadd.f32 %v3130, 0.0
        %v3139 = vadd.f32 %v3131, 0.0
        %v3148 = vrot.slane %v3124, 1
        %v3149 = vrot.slane %v3125, 1
        %v3150 = vrot.slane %v3126, 1
        %v3151 = vrot.slane %v3127, 1
        %v3152 = vrot.slane %v3128, 1
        %v3153 = vrot.slane %v3129, 1
        %v3154 = vrot.slane %v3130, 1
        %v3155 = vrot.slane %v3131, 1
        %v3164 = vadd.f32 %v3132, %v3148
        %v3165 = vadd.f32 %v3133, %v3149
        %v3166 = vadd.f32 %v3134, %v3150
        %v3167 = vadd.f32 %v3135, %v3151
        %v3168 = vadd.f32 %v3136, %v3152
        %v3169 = vadd.f32 %v3137, %v3153
        %v3170 = vadd.f32 %v3138, %v3154
        %v3171 = vadd.f32 %v3139, %v3155
        %v3172 = vrot.slane %v3124, 2
        %v3173 = vrot.slane %v3125, 2
        %v3174 = vrot.slane %v3126, 2
        %v3175 = vrot.slane %v3127, 2
        %v3176 = vrot.slane %v3128, 2
        %v3177 = vrot.slane %v3129, 2
        %v3178 = vrot.slane %v3130, 2
        %v3179 = vrot.slane %v3131, 2
        %v3188 = vadd.f32 %v3164, %v3172
        %v3189 = vadd.f32 %v3165, %v3173
        %v3190 = vadd.f32 %v3166, %v3174
        %v3191 = vadd.f32 %v3167, %v3175
        %v3192 = vadd.f32 %v3168, %v3176
        %v3193 = vadd.f32 %v3169, %v3177
        %v3194 = vadd.f32 %v3170, %v3178
        %v3195 = vadd.f32 %v3171, %v3179
        %v3196 = vrot.slane %v3124, 3
        %v3197 = vrot.slane %v3125, 3
        %v3198 = vrot.slane %v3126, 3
        %v3199 = vrot.slane %v3127, 3
        %v3200 = vrot.slane %v3128, 3
        %v3201 = vrot.slane %v3129, 3
        %v3202 = vrot.slane %v3130, 3
        %v3203 = vrot.slane %v3131, 3
        %v3212 = vadd.f32 %v3188, %v3196
        %v3213 = vadd.f32 %v3189, %v3197
        %v3214 = vadd.f32 %v3190, %v3198
        %v3215 = vadd.f32 %v3191, %v3199
        %v3216 = vadd.f32 %v3192, %v3200
        %v3217 = vadd.f32 %v3193, %v3201
        %v3218 = vadd.f32 %v3194, %v3202
        %v3219 = vadd.f32 %v3195, %v3203
        %v3220 = vrot.slane %v3124, 4
        %v3221 = vrot.slane %v3125, 4
        %v3222 = vrot.slane %v3126, 4
        %v3223 = vrot.slane %v3127, 4
        %v3224 = vrot.slane %v3128, 4
        %v3225 = vrot.slane %v3129, 4
        %v3226 = vrot.slane %v3130, 4
        %v3227 = vrot.slane %v3131, 4
        %v3236 = vadd.f32 %v3212, %v3220
        %v3237 = vadd.f32 %v3213, %v3221
        %v3238 = vadd.f32 %v3214, %v3222
        %v3239 = vadd.f32 %v3215, %v3223
        %v3240 = vadd.f32 %v3216, %v3224
        %v3241 = vadd.f32 %v3217, %v3225
        %v3242 = vadd.f32 %v3218, %v3226
        %v3243 = vadd.f32 %v3219, %v3227
        %v3244 = vrot.slane %v3124, 5
        %v3245 = vrot.slane %v3125, 5
        %v3246 = vrot.slane %v3126, 5
        %v3247 = vrot.slane %v3127, 5
        %v3248 = vrot.slane %v3128, 5
        %v3249 = vrot.slane %v3129, 5
        %v3250 = vrot.slane %v3130, 5
        %v3251 = vrot.slane %v3131, 5
        %v3260 = vadd.f32 %v3236, %v3244
        %v3261 = vadd.f32 %v3237, %v3245
        %v3262 = vadd.f32 %v3238, %v3246
        %v3263 = vadd.f32 %v3239, %v3247
        %v3264 = vadd.f32 %v3240, %v3248
        %v3265 = vadd.f32 %v3241, %v3249
        %v3266 = vadd.f32 %v3242, %v3250
        %v3267 = vadd.f32 %v3243, %v3251
        %v3268 = vrot.slane %v3124, 6
        %v3269 = vrot.slane %v3125, 6
        %v3270 = vrot.slane %v3126, 6
        %v3271 = vrot.slane %v3127, 6
        %v3272 = vrot.slane %v3128, 6
        %v3273 = vrot.slane %v3129, 6
        %v3274 = vrot.slane %v3130, 6
        %v3275 = vrot.slane %v3131, 6
        %v3284 = vadd.f32 %v3260, %v3268
        %v3285 = vadd.f32 %v3261, %v3269
        %v3286 = vadd.f32 %v3262, %v3270
        %v3287 = vadd.f32 %v3263, %v3271
        %v3288 = vadd.f32 %v3264, %v3272
        %v3289 = vadd.f32 %v3265, %v3273
        %v3290 = vadd.f32 %v3266, %v3274
        %v3291 = vadd.f32 %v3267, %v3275
        %v3292 = vrot.slane %v3124, 7
        %v3293 = vrot.slane %v3125, 7
        %v3294 = vrot.slane %v3126, 7
        %v3295 = vrot.slane %v3127, 7
        %v3296 = vrot.slane %v3128, 7
        %v3297 = vrot.slane %v3129, 7
        %v3298 = vrot.slane %v3130, 7
        %v3299 = vrot.slane %v3131, 7
        %v3308 = vadd.f32 %v3284, %v3292
        %v3309 = vadd.f32 %v3285, %v3293
        %v3310 = vadd.f32 %v3286, %v3294
        %v3311 = vadd.f32 %v3287, %v3295
        %v3312 = vadd.f32 %v3288, %v3296
        %v3313 = vadd.f32 %v3289, %v3297
        %v3314 = vadd.f32 %v3290, %v3298
        %v3315 = vadd.f32 %v3291, %v3299
        %vm3316 = vcmp.gt.f32.partialorder %v3308, 0.0
        %vm3317 = vcmp.gt.f32.partialorder %v3309, 0.0
        %vm3318 = vcmp.gt.f32.partialorder %v3310, 0.0
        %vm3319 = vcmp.gt.f32.partialorder %v3311, 0.0
        %vm3320 = vcmp.gt.f32.partialorder %v3312, 0.0
        %vm3321 = vcmp.gt.f32.partialorder %v3313, 0.0
        %vm3322 = vcmp.gt.f32.partialorder %v3314, 0.0
        %vm3323 = vcmp.gt.f32.partialorder %v3315, 0.0
        %v3324 = vmul.f32 %v3308, 0.2
        %v3325 = vmul.f32 %v3309, 0.2
        %v3326 = vmul.f32 %v3310, 0.2
        %v3327 = vmul.f32 %v3311, 0.2
        %v3328 = vmul.f32 %v3312, 0.2
        %v3329 = vmul.f32 %v3313, 0.2
        %v3330 = vmul.f32 %v3314, 0.2
        %v3331 = vmul.f32 %v3315, 0.2
        %v3332 = vsel %vm3316, %v3308, %v3324
        %v3333 = vsel %vm3317, %v3309, %v3325
        %v3334 = vsel %vm3318, %v3310, %v3326
        %v3335 = vsel %vm3319, %v3311, %v3327
        %v3336 = vsel %vm3320, %v3312, %v3328
        %v3337 = vsel %vm3321, %v3313, %v3329
        %v3338 = vsel %vm3322, %v3314, %v3330
        %v3339 = vsel %vm3323, %v3315, %v3331
        %v3340 = vpack.c.bf16 %v3332, %v3332
        %v3341 = vpack.c.bf16 %v3333, %v3333
        %v3342 = vpack.c.bf16 %v3334, %v3334
        %v3343 = vpack.c.bf16 %v3335, %v3335
        %v3344 = vpack.c.bf16 %v3336, %v3336
        %v3345 = vpack.c.bf16 %v3337, %v3337
        %v3346 = vpack.c.bf16 %v3338, %v3338
        %v3347 = vpack.c.bf16 %v3339, %v3339
        %s3348 = scalar_lea.vmem %s8, 12
        %v3349 = vld [vmem:[%s3348] sm:$0x3]
        %v3358 = vunpack.c.l.b16 %v3340
        %v3359 = vunpack.c.l.b16 %v3341
        %v3360 = vunpack.c.l.b16 %v3342
        %v3361 = vunpack.c.l.b16 %v3343
        %v3362 = vunpack.c.l.b16 %v3344
        %v3363 = vunpack.c.l.b16 %v3345
        %v3364 = vunpack.c.l.b16 %v3346
        %v3365 = vunpack.c.l.b16 %v3347
        %v3366 = vrot.slane %v3359, 7
        %v3367 = vsel %vm1342, %v3366, %v3358
        %v3368 = vrot.slane %v3360, 6
        %v3369 = vsel %vm1345, %v3368, %v3367
        %v3370 = vrot.slane %v3361, 5
        %v3371 = vsel %vm1348, %v3370, %v3369
        %v3372 = vrot.slane %v3362, 4
        %v3373 = vsel %vm1351, %v3372, %v3371
        %v3374 = vrot.slane %v3363, 3
        %v3375 = vsel %vm1354, %v3374, %v3373
        %v3376 = vrot.slane %v3364, 2
        %v3377 = vsel %vm1357, %v3376, %v3375
        %v3378 = vrot.slane %v3365, 1
        %v3379 = vsel %vm1360, %v3378, %v3377
        %v3380 = vpack.c.b16 %v3379, %v3379
        %v3382 = vsel %vm1363, %v3380, 0
        %v3385 = vsel %vm1367, %v3349, 0
        %3387 = vmatprep.subr.bf16.mxu0 0
        %3388 = vmatpush1.bf16.msra.mxu0 %v3385
        %3389 = vmatprep.subr.bf16.mxu0 0
        %3390 = vmatpush1.bf16.msra.mxu0 0
        %3391 = vmatprep.subr.bf16.mxu0 0
        %3392 = vmatpush1.bf16.msra.mxu0 0
        %3393 = vmatprep.subr.bf16.mxu0 0
        %3394 = vmatpush1.bf16.msra.mxu0 0
        %3395 = vmatprep.subr.bf16.mxu0 0
        %3396 = vmatpush1.bf16.msra.mxu0 0
        %3397 = vmatprep.subr.bf16.mxu0 0
        %3398 = vmatpush1.bf16.msra.mxu0 0
        %3399 = vmatprep.subr.bf16.mxu0 0
        %3400 = vmatpush1.bf16.msra.mxu0 0
        %3401 = vmatprep.subr.bf16.mxu0 0
        %3402 = vmatpush1.bf16.msra.mxu0 0
        %3403 = vmatprep.subr.bf16.mxu0 0
        %3404 = vmatpush1.bf16.msra.mxu0 0
        %3405 = vmatprep.subr.bf16.mxu0 0
        %3406 = vmatpush1.bf16.msra.mxu0 0
        %3407 = vmatprep.subr.bf16.mxu0 0
        %3408 = vmatpush1.bf16.msra.mxu0 0
        %3409 = vmatprep.subr.bf16.mxu0 0
        %3410 = vmatpush1.bf16.msra.mxu0 0
        %3411 = vmatprep.subr.bf16.mxu0 0
        %3412 = vmatpush1.bf16.msra.mxu0 0
        %3413 = vmatprep.subr.bf16.mxu0 0
        %3414 = vmatpush1.bf16.msra.mxu0 0
        %3415 = vmatprep.subr.bf16.mxu0 0
        %3416 = vmatpush1.bf16.msra.mxu0 0
        %3417 = vmatprep.subr.bf16.mxu0 0
        %3418 = vmatpush1.bf16.msra.mxu0 0
        %3419 = vmatprep.mubr.bf16.mxu0 0
        %3420 = vmatmul.mubr.bf16.gmra.mrb[0].mxu0 %v3382
        %v3421 = vpop.f32.mrb[0].mxu0
        %v3422 = vadd.f32 0.0, %v3421
        %v3423 = vpop.f32.mrb[0].mxu0
        %v3424 = vpop.f32.mrb[0].mxu0
        %v3425 = vpop.f32.mrb[0].mxu0
        %3426 = vdwg.mxu0
        %v3427 = vadd.f32 %v3091, %v3422
        %3428 = vset.pattern.permute.xlu0 7
        %3429 = vperm.xlu0 %3428, %v1028
        %v3430 = vpop.permute.xlu0 %3429
        %3432 = vset.pattern.permute.xlu0 7
        %3433 = vperm.xlu0 %3432, %v1029
        %v3434 = vpop.permute.xlu0 %3433
        %3436 = vset.pattern.permute.xlu0 7
        %3437 = vperm.xlu0 %3436, %v1030
        %v3438 = vpop.permute.xlu0 %3437
        %3440 = vset.pattern.permute.xlu0 7
        %3441 = vperm.xlu0 %3440, %v1031
        %v3442 = vpop.permute.xlu0 %3441
        %3444 = vset.pattern.permute.xlu0 7
        %3445 = vperm.xlu0 %3444, %v1032
        %v3446 = vpop.permute.xlu0 %3445
        %3448 = vset.pattern.permute.xlu0 7
        %3449 = vperm.xlu0 %3448, %v1033
        %v3450 = vpop.permute.xlu0 %3449
        %3452 = vset.pattern.permute.xlu0 7
        %3453 = vperm.xlu0 %3452, %v1034
        %v3454 = vpop.permute.xlu0 %3453
        %3456 = vset.pattern.permute.xlu0 7
        %3457 = vperm.xlu0 %3456, %v1035
        %v3458 = vpop.permute.xlu0 %3457
        %v3460 = vmul.f32 %v3430, %v1044
        %v3461 = vmul.f32 %v3434, %v1045
        %v3462 = vmul.f32 %v3438, %v1046
        %v3463 = vmul.f32 %v3442, %v1047
        %v3464 = vmul.f32 %v3446, %v1048
        %v3465 = vmul.f32 %v3450, %v1049
        %v3466 = vmul.f32 %v3454, %v1050
        %v3467 = vmul.f32 %v3458, %v1051
        %v3468 = vadd.f32 %v3460, 0.0
        %v3469 = vadd.f32 %v3461, 0.0
        %v3470 = vadd.f32 %v3462, 0.0
        %v3471 = vadd.f32 %v3463, 0.0
        %v3472 = vadd.f32 %v3464, 0.0
        %v3473 = vadd.f32 %v3465, 0.0
        %v3474 = vadd.f32 %v3466, 0.0
        %v3475 = vadd.f32 %v3467, 0.0
        %v3484 = vrot.slane %v3460, 1
        %v3485 = vrot.slane %v3461, 1
        %v3486 = vrot.slane %v3462, 1
        %v3487 = vrot.slane %v3463, 1
        %v3488 = vrot.slane %v3464, 1
        %v3489 = vrot.slane %v3465, 1
        %v3490 = vrot.slane %v3466, 1
        %v3491 = vrot.slane %v3467, 1
        %v3500 = vadd.f32 %v3468, %v3484
        %v3501 = vadd.f32 %v3469, %v3485
        %v3502 = vadd.f32 %v3470, %v3486
        %v3503 = vadd.f32 %v3471, %v3487
        %v3504 = vadd.f32 %v3472, %v3488
        %v3505 = vadd.f32 %v3473, %v3489
        %v3506 = vadd.f32 %v3474, %v3490
        %v3507 = vadd.f32 %v3475, %v3491
        %v3508 = vrot.slane %v3460, 2
        %v3509 = vrot.slane %v3461, 2
        %v3510 = vrot.slane %v3462, 2
        %v3511 = vrot.slane %v3463, 2
        %v3512 = vrot.slane %v3464, 2
        %v3513 = vrot.slane %v3465, 2
        %v3514 = vrot.slane %v3466, 2
        %v3515 = vrot.slane %v3467, 2
        %v3524 = vadd.f32 %v3500, %v3508
        %v3525 = vadd.f32 %v3501, %v3509
        %v3526 = vadd.f32 %v3502, %v3510
        %v3527 = vadd.f32 %v3503, %v3511
        %v3528 = vadd.f32 %v3504, %v3512
        %v3529 = vadd.f32 %v3505, %v3513
        %v3530 = vadd.f32 %v3506, %v3514
        %v3531 = vadd.f32 %v3507, %v3515
        %v3532 = vrot.slane %v3460, 3
        %v3533 = vrot.slane %v3461, 3
        %v3534 = vrot.slane %v3462, 3
        %v3535 = vrot.slane %v3463, 3
        %v3536 = vrot.slane %v3464, 3
        %v3537 = vrot.slane %v3465, 3
        %v3538 = vrot.slane %v3466, 3
        %v3539 = vrot.slane %v3467, 3
        %v3548 = vadd.f32 %v3524, %v3532
        %v3549 = vadd.f32 %v3525, %v3533
        %v3550 = vadd.f32 %v3526, %v3534
        %v3551 = vadd.f32 %v3527, %v3535
        %v3552 = vadd.f32 %v3528, %v3536
        %v3553 = vadd.f32 %v3529, %v3537
        %v3554 = vadd.f32 %v3530, %v3538
        %v3555 = vadd.f32 %v3531, %v3539
        %v3556 = vrot.slane %v3460, 4
        %v3557 = vrot.slane %v3461, 4
        %v3558 = vrot.slane %v3462, 4
        %v3559 = vrot.slane %v3463, 4
        %v3560 = vrot.slane %v3464, 4
        %v3561 = vrot.slane %v3465, 4
        %v3562 = vrot.slane %v3466, 4
        %v3563 = vrot.slane %v3467, 4
        %v3572 = vadd.f32 %v3548, %v3556
        %v3573 = vadd.f32 %v3549, %v3557
        %v3574 = vadd.f32 %v3550, %v3558
        %v3575 = vadd.f32 %v3551, %v3559
        %v3576 = vadd.f32 %v3552, %v3560
        %v3577 = vadd.f32 %v3553, %v3561
        %v3578 = vadd.f32 %v3554, %v3562
        %v3579 = vadd.f32 %v3555, %v3563
        %v3580 = vrot.slane %v3460, 5
        %v3581 = vrot.slane %v3461, 5
        %v3582 = vrot.slane %v3462, 5
        %v3583 = vrot.slane %v3463, 5
        %v3584 = vrot.slane %v3464, 5
        %v3585 = vrot.slane %v3465, 5
        %v3586 = vrot.slane %v3466, 5
        %v3587 = vrot.slane %v3467, 5
        %v3596 = vadd.f32 %v3572, %v3580
        %v3597 = vadd.f32 %v3573, %v3581
        %v3598 = vadd.f32 %v3574, %v3582
        %v3599 = vadd.f32 %v3575, %v3583
        %v3600 = vadd.f32 %v3576, %v3584
        %v3601 = vadd.f32 %v3577, %v3585
        %v3602 = vadd.f32 %v3578, %v3586
        %v3603 = vadd.f32 %v3579, %v3587
        %v3604 = vrot.slane %v3460, 6
        %v3605 = vrot.slane %v3461, 6
        %v3606 = vrot.slane %v3462, 6
        %v3607 = vrot.slane %v3463, 6
        %v3608 = vrot.slane %v3464, 6
        %v3609 = vrot.slane %v3465, 6
        %v3610 = vrot.slane %v3466, 6
        %v3611 = vrot.slane %v3467, 6
        %v3620 = vadd.f32 %v3596, %v3604
        %v3621 = vadd.f32 %v3597, %v3605
        %v3622 = vadd.f32 %v3598, %v3606
        %v3623 = vadd.f32 %v3599, %v3607
        %v3624 = vadd.f32 %v3600, %v3608
        %v3625 = vadd.f32 %v3601, %v3609
        %v3626 = vadd.f32 %v3602, %v3610
        %v3627 = vadd.f32 %v3603, %v3611
        %v3628 = vrot.slane %v3460, 7
        %v3629 = vrot.slane %v3461, 7
        %v3630 = vrot.slane %v3462, 7
        %v3631 = vrot.slane %v3463, 7
        %v3632 = vrot.slane %v3464, 7
        %v3633 = vrot.slane %v3465, 7
        %v3634 = vrot.slane %v3466, 7
        %v3635 = vrot.slane %v3467, 7
        %v3644 = vadd.f32 %v3620, %v3628
        %v3645 = vadd.f32 %v3621, %v3629
        %v3646 = vadd.f32 %v3622, %v3630
        %v3647 = vadd.f32 %v3623, %v3631
        %v3648 = vadd.f32 %v3624, %v3632
        %v3649 = vadd.f32 %v3625, %v3633
        %v3650 = vadd.f32 %v3626, %v3634
        %v3651 = vadd.f32 %v3627, %v3635
        %vm3652 = vcmp.gt.f32.partialorder %v3644, 0.0
        %vm3653 = vcmp.gt.f32.partialorder %v3645, 0.0
        %vm3654 = vcmp.gt.f32.partialorder %v3646, 0.0
        %vm3655 = vcmp.gt.f32.partialorder %v3647, 0.0
        %vm3656 = vcmp.gt.f32.partialorder %v3648, 0.0
        %vm3657 = vcmp.gt.f32.partialorder %v3649, 0.0
        %vm3658 = vcmp.gt.f32.partialorder %v3650, 0.0
        %vm3659 = vcmp.gt.f32.partialorder %v3651, 0.0
        %v3660 = vmul.f32 %v3644, 0.2
        %v3661 = vmul.f32 %v3645, 0.2
        %v3662 = vmul.f32 %v3646, 0.2
        %v3663 = vmul.f32 %v3647, 0.2
        %v3664 = vmul.f32 %v3648, 0.2
        %v3665 = vmul.f32 %v3649, 0.2
        %v3666 = vmul.f32 %v3650, 0.2
        %v3667 = vmul.f32 %v3651, 0.2
        %v3668 = vsel %vm3652, %v3644, %v3660
        %v3669 = vsel %vm3653, %v3645, %v3661
        %v3670 = vsel %vm3654, %v3646, %v3662
        %v3671 = vsel %vm3655, %v3647, %v3663
        %v3672 = vsel %vm3656, %v3648, %v3664
        %v3673 = vsel %vm3657, %v3649, %v3665
        %v3674 = vsel %vm3658, %v3650, %v3666
        %v3675 = vsel %vm3659, %v3651, %v3667
        %v3676 = vpack.c.bf16 %v3668, %v3668
        %v3677 = vpack.c.bf16 %v3669, %v3669
        %v3678 = vpack.c.bf16 %v3670, %v3670
        %v3679 = vpack.c.bf16 %v3671, %v3671
        %v3680 = vpack.c.bf16 %v3672, %v3672
        %v3681 = vpack.c.bf16 %v3673, %v3673
        %v3682 = vpack.c.bf16 %v3674, %v3674
        %v3683 = vpack.c.bf16 %v3675, %v3675
        %s3684 = scalar_lea.vmem %s8, 14
        %v3685 = vld [vmem:[%s3684] sm:$0x3]
        %v3694 = vunpack.c.l.b16 %v3676
        %v3695 = vunpack.c.l.b16 %v3677
        %v3696 = vunpack.c.l.b16 %v3678
        %v3697 = vunpack.c.l.b16 %v3679
        %v3698 = vunpack.c.l.b16 %v3680
        %v3699 = vunpack.c.l.b16 %v3681
        %v3700 = vunpack.c.l.b16 %v3682
        %v3701 = vunpack.c.l.b16 %v3683
        %v3702 = vrot.slane %v3695, 7
        %v3703 = vsel %vm1342, %v3702, %v3694
        %v3704 = vrot.slane %v3696, 6
        %v3705 = vsel %vm1345, %v3704, %v3703
        %v3706 = vrot.slane %v3697, 5
        %v3707 = vsel %vm1348, %v3706, %v3705
        %v3708 = vrot.slane %v3698, 4
        %v3709 = vsel %vm1351, %v3708, %v3707
        %v3710 = vrot.slane %v3699, 3
        %v3711 = vsel %vm1354, %v3710, %v3709
        %v3712 = vrot.slane %v3700, 2
        %v3713 = vsel %vm1357, %v3712, %v3711
        %v3714 = vrot.slane %v3701, 1
        %v3715 = vsel %vm1360, %v3714, %v3713
        %v3716 = vpack.c.b16 %v3715, %v3715
        %v3718 = vsel %vm1363, %v3716, 0
        %v3721 = vsel %vm1367, %v3685, 0
        %3723 = vmatprep.subr.bf16.mxu0 0
        %3724 = vmatpush1.bf16.msra.mxu0 %v3721
        %3725 = vmatprep.subr.bf16.mxu0 0
        %3726 = vmatpush1.bf16.msra.mxu0 0
        %3727 = vmatprep.subr.bf16.mxu0 0
        %3728 = vmatpush1.bf16.msra.mxu0 0
        %3729 = vmatprep.subr.bf16.mxu0 0
        %3730 = vmatpush1.bf16.msra.mxu0 0
        %3731 = vmatprep.subr.bf16.mxu0 0
        %3732 = vmatpush1.bf16.msra.mxu0 0
        %3733 = vmatprep.subr.bf16.mxu0 0
        %3734 = vmatpush1.bf16.msra.mxu0 0
        %3735 = vmatprep.subr.bf16.mxu0 0
        %3736 = vmatpush1.bf16.msra.mxu0 0
        %3737 = vmatprep.subr.bf16.mxu0 0
        %3738 = vmatpush1.bf16.msra.mxu0 0
        %3739 = vmatprep.subr.bf16.mxu0 0
        %3740 = vmatpush1.bf16.msra.mxu0 0
        %3741 = vmatprep.subr.bf16.mxu0 0
        %3742 = vmatpush1.bf16.msra.mxu0 0
        %3743 = vmatprep.subr.bf16.mxu0 0
        %3744 = vmatpush1.bf16.msra.mxu0 0
        %3745 = vmatprep.subr.bf16.mxu0 0
        %3746 = vmatpush1.bf16.msra.mxu0 0
        %3747 = vmatprep.subr.bf16.mxu0 0
        %3748 = vmatpush1.bf16.msra.mxu0 0
        %3749 = vmatprep.subr.bf16.mxu0 0
        %3750 = vmatpush1.bf16.msra.mxu0 0
        %3751 = vmatprep.subr.bf16.mxu0 0
        %3752 = vmatpush1.bf16.msra.mxu0 0
        %3753 = vmatprep.subr.bf16.mxu0 0
        %3754 = vmatpush1.bf16.msra.mxu0 0
        %3755 = vmatprep.mubr.bf16.mxu0 0
        %3756 = vmatmul.mubr.bf16.gmra.mrb[0].mxu0 %v3718
        %v3757 = vpop.f32.mrb[0].mxu0
        %v3758 = vadd.f32 0.0, %v3757
        %v3759 = vpop.f32.mrb[0].mxu0
        %v3760 = vpop.f32.mrb[0].mxu0
        %v3761 = vpop.f32.mrb[0].mxu0
        %3762 = vdwg.mxu0
        %v3763 = vadd.f32 %v3427, %v3758
        %3764 = vset.pattern.permute.xlu0 8
        %3765 = vperm.xlu0 %3764, %v1028
        %v3766 = vpop.permute.xlu0 %3765
        %3768 = vset.pattern.permute.xlu0 8
        %3769 = vperm.xlu0 %3768, %v1029
        %v3770 = vpop.permute.xlu0 %3769
        %3772 = vset.pattern.permute.xlu0 8
        %3773 = vperm.xlu0 %3772, %v1030
        %v3774 = vpop.permute.xlu0 %3773
        %3776 = vset.pattern.permute.xlu0 8
        %3777 = vperm.xlu0 %3776, %v1031
        %v3778 = vpop.permute.xlu0 %3777
        %3780 = vset.pattern.permute.xlu0 8
        %3781 = vperm.xlu0 %3780, %v1032
        %v3782 = vpop.permute.xlu0 %3781
        %3784 = vset.pattern.permute.xlu0 8
        %3785 = vperm.xlu0 %3784, %v1033
        %v3786 = vpop.permute.xlu0 %3785
        %3788 = vset.pattern.permute.xlu0 8
        %3789 = vperm.xlu0 %3788, %v1034
        %v3790 = vpop.permute.xlu0 %3789
        %3792 = vset.pattern.permute.xlu0 8
        %3793 = vperm.xlu0 %3792, %v1035
        %v3794 = vpop.permute.xlu0 %3793
        %v3796 = vmul.f32 %v3766, %v1044
        %v3797 = vmul.f32 %v3770, %v1045
        %v3798 = vmul.f32 %v3774, %v1046
        %v3799 = vmul.f32 %v3778, %v1047
        %v3800 = vmul.f32 %v3782, %v1048
        %v3801 = vmul.f32 %v3786, %v1049
        %v3802 = vmul.f32 %v3790, %v1050
        %v3803 = vmul.f32 %v3794, %v1051
        %v3804 = vadd.f32 %v3796, 0.0
        %v3805 = vadd.f32 %v3797, 0.0
        %v3806 = vadd.f32 %v3798, 0.0
        %v3807 = vadd.f32 %v3799, 0.0
        %v3808 = vadd.f32 %v3800, 0.0
        %v3809 = vadd.f32 %v3801, 0.0
        %v3810 = vadd.f32 %v3802, 0.0
        %v3811 = vadd.f32 %v3803, 0.0
        %v3820 = vrot.slane %v3796, 1
        %v3821 = vrot.slane %v3797, 1
        %v3822 = vrot.slane %v3798, 1
        %v3823 = vrot.slane %v3799, 1
        %v3824 = vrot.slane %v3800, 1
        %v3825 = vrot.slane %v3801, 1
        %v3826 = vrot.slane %v3802, 1
        %v3827 = vrot.slane %v3803, 1
        %v3836 = vadd.f32 %v3804, %v3820
        %v3837 = vadd.f32 %v3805, %v3821
        %v3838 = vadd.f32 %v3806, %v3822
        %v3839 = vadd.f32 %v3807, %v3823
        %v3840 = vadd.f32 %v3808, %v3824
        %v3841 = vadd.f32 %v3809, %v3825
        %v3842 = vadd.f32 %v3810, %v3826
        %v3843 = vadd.f32 %v3811, %v3827
        %v3844 = vrot.slane %v3796, 2
        %v3845 = vrot.slane %v3797, 2
        %v3846 = vrot.slane %v3798, 2
        %v3847 = vrot.slane %v3799, 2
        %v3848 = vrot.slane %v3800, 2
        %v3849 = vrot.slane %v3801, 2
        %v3850 = vrot.slane %v3802, 2
        %v3851 = vrot.slane %v3803, 2
        %v3860 = vadd.f32 %v3836, %v3844
        %v3861 = vadd.f32 %v3837, %v3845
        %v3862 = vadd.f32 %v3838, %v3846
        %v3863 = vadd.f32 %v3839, %v3847
        %v3864 = vadd.f32 %v3840, %v3848
        %v3865 = vadd.f32 %v3841, %v3849
        %v3866 = vadd.f32 %v3842, %v3850
        %v3867 = vadd.f32 %v3843, %v3851
        %v3868 = vrot.slane %v3796, 3
        %v3869 = vrot.slane %v3797, 3
        %v3870 = vrot.slane %v3798, 3
        %v3871 = vrot.slane %v3799, 3
        %v3872 = vrot.slane %v3800, 3
        %v3873 = vrot.slane %v3801, 3
        %v3874 = vrot.slane %v3802, 3
        %v3875 = vrot.slane %v3803, 3
        %v3884 = vadd.f32 %v3860, %v3868
        %v3885 = vadd.f32 %v3861, %v3869
        %v3886 = vadd.f32 %v3862, %v3870
        %v3887 = vadd.f32 %v3863, %v3871
        %v3888 = vadd.f32 %v3864, %v3872
        %v3889 = vadd.f32 %v3865, %v3873
        %v3890 = vadd.f32 %v3866, %v3874
        %v3891 = vadd.f32 %v3867, %v3875
        %v3892 = vrot.slane %v3796, 4
        %v3893 = vrot.slane %v3797, 4
        %v3894 = vrot.slane %v3798, 4
        %v3895 = vrot.slane %v3799, 4
        %v3896 = vrot.slane %v3800, 4
        %v3897 = vrot.slane %v3801, 4
        %v3898 = vrot.slane %v3802, 4
        %v3899 = vrot.slane %v3803, 4
        %v3908 = vadd.f32 %v3884, %v3892
        %v3909 = vadd.f32 %v3885, %v3893
        %v3910 = vadd.f32 %v3886, %v3894
        %v3911 = vadd.f32 %v3887, %v3895
        %v3912 = vadd.f32 %v3888, %v3896
        %v3913 = vadd.f32 %v3889, %v3897
        %v3914 = vadd.f32 %v3890, %v3898
        %v3915 = vadd.f32 %v3891, %v3899
        %v3916 = vrot.slane %v3796, 5
        %v3917 = vrot.slane %v3797, 5
        %v3918 = vrot.slane %v3798, 5
        %v3919 = vrot.slane %v3799, 5
        %v3920 = vrot.slane %v3800, 5
        %v3921 = vrot.slane %v3801, 5
        %v3922 = vrot.slane %v3802, 5
        %v3923 = vrot.slane %v3803, 5
        %v3932 = vadd.f32 %v3908, %v3916
        %v3933 = vadd.f32 %v3909, %v3917
        %v3934 = vadd.f32 %v3910, %v3918
        %v3935 = vadd.f32 %v3911, %v3919
        %v3936 = vadd.f32 %v3912, %v3920
        %v3937 = vadd.f32 %v3913, %v3921
        %v3938 = vadd.f32 %v3914, %v3922
        %v3939 = vadd.f32 %v3915, %v3923
        %v3940 = vrot.slane %v3796, 6
        %v3941 = vrot.slane %v3797, 6
        %v3942 = vrot.slane %v3798, 6
        %v3943 = vrot.slane %v3799, 6
        %v3944 = vrot.slane %v3800, 6
        %v3945 = vrot.slane %v3801, 6
        %v3946 = vrot.slane %v3802, 6
        %v3947 = vrot.slane %v3803, 6
        %v3956 = vadd.f32 %v3932, %v3940
        %v3957 = vadd.f32 %v3933, %v3941
        %v3958 = vadd.f32 %v3934, %v3942
        %v3959 = vadd.f32 %v3935, %v3943
        %v3960 = vadd.f32 %v3936, %v3944
        %v3961 = vadd.f32 %v3937, %v3945
        %v3962 = vadd.f32 %v3938, %v3946
        %v3963 = vadd.f32 %v3939, %v3947
        %v3964 = vrot.slane %v3796, 7
        %v3965 = vrot.slane %v3797, 7
        %v3966 = vrot.slane %v3798, 7
        %v3967 = vrot.slane %v3799, 7
        %v3968 = vrot.slane %v3800, 7
        %v3969 = vrot.slane %v3801, 7
        %v3970 = vrot.slane %v3802, 7
        %v3971 = vrot.slane %v3803, 7
        %v3980 = vadd.f32 %v3956, %v3964
        %v3981 = vadd.f32 %v3957, %v3965
        %v3982 = vadd.f32 %v3958, %v3966
        %v3983 = vadd.f32 %v3959, %v3967
        %v3984 = vadd.f32 %v3960, %v3968
        %v3985 = vadd.f32 %v3961, %v3969
        %v3986 = vadd.f32 %v3962, %v3970
        %v3987 = vadd.f32 %v3963, %v3971
        %vm3988 = vcmp.gt.f32.partialorder %v3980, 0.0
        %vm3989 = vcmp.gt.f32.partialorder %v3981, 0.0
        %vm3990 = vcmp.gt.f32.partialorder %v3982, 0.0
        %vm3991 = vcmp.gt.f32.partialorder %v3983, 0.0
        %vm3992 = vcmp.gt.f32.partialorder %v3984, 0.0
        %vm3993 = vcmp.gt.f32.partialorder %v3985, 0.0
        %vm3994 = vcmp.gt.f32.partialorder %v3986, 0.0
        %vm3995 = vcmp.gt.f32.partialorder %v3987, 0.0
        %v3996 = vmul.f32 %v3980, 0.2
        %v3997 = vmul.f32 %v3981, 0.2
        %v3998 = vmul.f32 %v3982, 0.2
        %v3999 = vmul.f32 %v3983, 0.2
        %v4000 = vmul.f32 %v3984, 0.2
        %v4001 = vmul.f32 %v3985, 0.2
        %v4002 = vmul.f32 %v3986, 0.2
        %v4003 = vmul.f32 %v3987, 0.2
        %v4004 = vsel %vm3988, %v3980, %v3996
        %v4005 = vsel %vm3989, %v3981, %v3997
        %v4006 = vsel %vm3990, %v3982, %v3998
        %v4007 = vsel %vm3991, %v3983, %v3999
        %v4008 = vsel %vm3992, %v3984, %v4000
        %v4009 = vsel %vm3993, %v3985, %v4001
        %v4010 = vsel %vm3994, %v3986, %v4002
        %v4011 = vsel %vm3995, %v3987, %v4003
        %v4012 = vpack.c.bf16 %v4004, %v4004
        %v4013 = vpack.c.bf16 %v4005, %v4005
        %v4014 = vpack.c.bf16 %v4006, %v4006
        %v4015 = vpack.c.bf16 %v4007, %v4007
        %v4016 = vpack.c.bf16 %v4008, %v4008
        %v4017 = vpack.c.bf16 %v4009, %v4009
        %v4018 = vpack.c.bf16 %v4010, %v4010
        %v4019 = vpack.c.bf16 %v4011, %v4011
        %s4020 = scalar_lea.vmem %s8, 16
        %v4021 = vld [vmem:[%s4020] sm:$0x3]
        %v4030 = vunpack.c.l.b16 %v4012
        %v4031 = vunpack.c.l.b16 %v4013
        %v4032 = vunpack.c.l.b16 %v4014
        %v4033 = vunpack.c.l.b16 %v4015
        %v4034 = vunpack.c.l.b16 %v4016
        %v4035 = vunpack.c.l.b16 %v4017
        %v4036 = vunpack.c.l.b16 %v4018
        %v4037 = vunpack.c.l.b16 %v4019
        %v4038 = vrot.slane %v4031, 7
        %v4039 = vsel %vm1342, %v4038, %v4030
        %v4040 = vrot.slane %v4032, 6
        %v4041 = vsel %vm1345, %v4040, %v4039
        %v4042 = vrot.slane %v4033, 5
        %v4043 = vsel %vm1348, %v4042, %v4041
        %v4044 = vrot.slane %v4034, 4
        %v4045 = vsel %vm1351, %v4044, %v4043
        %v4046 = vrot.slane %v4035, 3
        %v4047 = vsel %vm1354, %v4046, %v4045
        %v4048 = vrot.slane %v4036, 2
        %v4049 = vsel %vm1357, %v4048, %v4047
        %v4050 = vrot.slane %v4037, 1
        %v4051 = vsel %vm1360, %v4050, %v4049
        %v4052 = vpack.c.b16 %v4051, %v4051
        %v4054 = vsel %vm1363, %v4052, 0
        %v4057 = vsel %vm1367, %v4021, 0
        %4059 = vmatprep.subr.bf16.mxu0 0
        %4060 = vmatpush1.bf16.msra.mxu0 %v4057
        %4061 = vmatprep.subr.bf16.mxu0 0
        %4062 = vmatpush1.bf16.msra.mxu0 0
        %4063 = vmatprep.subr.bf16.mxu0 0
        %4064 = vmatpush1.bf16.msra.mxu0 0
        %4065 = vmatprep.subr.bf16.mxu0 0
        %4066 = vmatpush1.bf16.msra.mxu0 0
        %4067 = vmatprep.subr.bf16.mxu0 0
        %4068 = vmatpush1.bf16.msra.mxu0 0
        %4069 = vmatprep.subr.bf16.mxu0 0
        %4070 = vmatpush1.bf16.msra.mxu0 0
        %4071 = vmatprep.subr.bf16.mxu0 0
        %4072 = vmatpush1.bf16.msra.mxu0 0
        %4073 = vmatprep.subr.bf16.mxu0 0
        %4074 = vmatpush1.bf16.msra.mxu0 0
        %4075 = vmatprep.subr.bf16.mxu0 0
        %4076 = vmatpush1.bf16.msra.mxu0 0
        %4077 = vmatprep.subr.bf16.mxu0 0
        %4078 = vmatpush1.bf16.msra.mxu0 0
        %4079 = vmatprep.subr.bf16.mxu0 0
        %4080 = vmatpush1.bf16.msra.mxu0 0
        %4081 = vmatprep.subr.bf16.mxu0 0
        %4082 = vmatpush1.bf16.msra.mxu0 0
        %4083 = vmatprep.subr.bf16.mxu0 0
        %4084 = vmatpush1.bf16.msra.mxu0 0
        %4085 = vmatprep.subr.bf16.mxu0 0
        %4086 = vmatpush1.bf16.msra.mxu0 0
        %4087 = vmatprep.subr.bf16.mxu0 0
        %4088 = vmatpush1.bf16.msra.mxu0 0
        %4089 = vmatprep.subr.bf16.mxu0 0
        %4090 = vmatpush1.bf16.msra.mxu0 0
        %4091 = vmatprep.mubr.bf16.mxu0 0
        %4092 = vmatmul.mubr.bf16.gmra.mrb[0].mxu0 %v4054
        %v4093 = vpop.f32.mrb[0].mxu0
        %v4094 = vadd.f32 0.0, %v4093
        %v4095 = vpop.f32.mrb[0].mxu0
        %v4096 = vpop.f32.mrb[0].mxu0
        %v4097 = vpop.f32.mrb[0].mxu0
        %4098 = vdwg.mxu0
        %v4099 = vadd.f32 %v3763, %v4094
        %4100 = vset.pattern.permute.xlu0 9
        %4101 = vperm.xlu0 %4100, %v1028
        %v4102 = vpop.permute.xlu0 %4101
        %4104 = vset.pattern.permute.xlu0 9
        %4105 = vperm.xlu0 %4104, %v1029
        %v4106 = vpop.permute.xlu0 %4105
        %4108 = vset.pattern.permute.xlu0 9
        %4109 = vperm.xlu0 %4108, %v1030
        %v4110 = vpop.permute.xlu0 %4109
        %4112 = vset.pattern.permute.xlu0 9
        %4113 = vperm.xlu0 %4112, %v1031
        %v4114 = vpop.permute.xlu0 %4113
        %4116 = vset.pattern.permute.xlu0 9
        %4117 = vperm.xlu0 %4116, %v1032
        %v4118 = vpop.permute.xlu0 %4117
        %4120 = vset.pattern.permute.xlu0 9
        %4121 = vperm.xlu0 %4120, %v1033
        %v4122 = vpop.permute.xlu0 %4121
        %4124 = vset.pattern.permute.xlu0 9
        %4125 = vperm.xlu0 %4124, %v1034
        %v4126 = vpop.permute.xlu0 %4125
        %4128 = vset.pattern.permute.xlu0 9
        %4129 = vperm.xlu0 %4128, %v1035
        %v4130 = vpop.permute.xlu0 %4129
        %v4132 = vmul.f32 %v4102, %v1044
        %v4133 = vmul.f32 %v4106, %v1045
        %v4134 = vmul.f32 %v4110, %v1046
        %v4135 = vmul.f32 %v4114, %v1047
        %v4136 = vmul.f32 %v4118, %v1048
        %v4137 = vmul.f32 %v4122, %v1049
        %v4138 = vmul.f32 %v4126, %v1050
        %v4139 = vmul.f32 %v4130, %v1051
        %v4140 = vadd.f32 %v4132, 0.0
        %v4141 = vadd.f32 %v4133, 0.0
        %v4142 = vadd.f32 %v4134, 0.0
        %v4143 = vadd.f32 %v4135, 0.0
        %v4144 = vadd.f32 %v4136, 0.0
        %v4145 = vadd.f32 %v4137, 0.0
        %v4146 = vadd.f32 %v4138, 0.0
        %v4147 = vadd.f32 %v4139, 0.0
        %v4156 = vrot.slane %v4132, 1
        %v4157 = vrot.slane %v4133, 1
        %v4158 = vrot.slane %v4134, 1
        %v4159 = vrot.slane %v4135, 1
        %v4160 = vrot.slane %v4136, 1
        %v4161 = vrot.slane %v4137, 1
        %v4162 = vrot.slane %v4138, 1
        %v4163 = vrot.slane %v4139, 1
        %v4172 = vadd.f32 %v4140, %v4156
        %v4173 = vadd.f32 %v4141, %v4157
        %v4174 = vadd.f32 %v4142, %v4158
        %v4175 = vadd.f32 %v4143, %v4159
        %v4176 = vadd.f32 %v4144, %v4160
        %v4177 = vadd.f32 %v4145, %v4161
        %v4178 = vadd.f32 %v4146, %v4162
        %v4179 = vadd.f32 %v4147, %v4163
        %v4180 = vrot.slane %v4132, 2
        %v4181 = vrot.slane %v4133, 2
        %v4182 = vrot.slane %v4134, 2
        %v4183 = vrot.slane %v4135, 2
        %v4184 = vrot.slane %v4136, 2
        %v4185 = vrot.slane %v4137, 2
        %v4186 = vrot.slane %v4138, 2
        %v4187 = vrot.slane %v4139, 2
        %v4196 = vadd.f32 %v4172, %v4180
        %v4197 = vadd.f32 %v4173, %v4181
        %v4198 = vadd.f32 %v4174, %v4182
        %v4199 = vadd.f32 %v4175, %v4183
        %v4200 = vadd.f32 %v4176, %v4184
        %v4201 = vadd.f32 %v4177, %v4185
        %v4202 = vadd.f32 %v4178, %v4186
        %v4203 = vadd.f32 %v4179, %v4187
        %v4204 = vrot.slane %v4132, 3
        %v4205 = vrot.slane %v4133, 3
        %v4206 = vrot.slane %v4134, 3
        %v4207 = vrot.slane %v4135, 3
        %v4208 = vrot.slane %v4136, 3
        %v4209 = vrot.slane %v4137, 3
        %v4210 = vrot.slane %v4138, 3
        %v4211 = vrot.slane %v4139, 3
        %v4220 = vadd.f32 %v4196, %v4204
        %v4221 = vadd.f32 %v4197, %v4205
        %v4222 = vadd.f32 %v4198, %v4206
        %v4223 = vadd.f32 %v4199, %v4207
        %v4224 = vadd.f32 %v4200, %v4208
        %v4225 = vadd.f32 %v4201, %v4209
        %v4226 = vadd.f32 %v4202, %v4210
        %v4227 = vadd.f32 %v4203, %v4211
        %v4228 = vrot.slane %v4132, 4
        %v4229 = vrot.slane %v4133, 4
        %v4230 = vrot.slane %v4134, 4
        %v4231 = vrot.slane %v4135, 4
        %v4232 = vrot.slane %v4136, 4
        %v4233 = vrot.slane %v4137, 4
        %v4234 = vrot.slane %v4138, 4
        %v4235 = vrot.slane %v4139, 4
        %v4244 = vadd.f32 %v4220, %v4228
        %v4245 = vadd.f32 %v4221, %v4229
        %v4246 = vadd.f32 %v4222, %v4230
        %v4247 = vadd.f32 %v4223, %v4231
        %v4248 = vadd.f32 %v4224, %v4232
        %v4249 = vadd.f32 %v4225, %v4233
        %v4250 = vadd.f32 %v4226, %v4234
        %v4251 = vadd.f32 %v4227, %v4235
        %v4252 = vrot.slane %v4132, 5
        %v4253 = vrot.slane %v4133, 5
        %v4254 = vrot.slane %v4134, 5
        %v4255 = vrot.slane %v4135, 5
        %v4256 = vrot.slane %v4136, 5
        %v4257 = vrot.slane %v4137, 5
        %v4258 = vrot.slane %v4138, 5
        %v4259 = vrot.slane %v4139, 5
        %v4268 = vadd.f32 %v4244, %v4252
        %v4269 = vadd.f32 %v4245, %v4253
        %v4270 = vadd.f32 %v4246, %v4254
        %v4271 = vadd.f32 %v4247, %v4255
        %v4272 = vadd.f32 %v4248, %v4256
        %v4273 = vadd.f32 %v4249, %v4257
        %v4274 = vadd.f32 %v4250, %v4258
        %v4275 = vadd.f32 %v4251, %v4259
        %v4276 = vrot.slane %v4132, 6
        %v4277 = vrot.slane %v4133, 6
        %v4278 = vrot.slane %v4134, 6
        %v4279 = vrot.slane %v4135, 6
        %v4280 = vrot.slane %v4136, 6
        %v4281 = vrot.slane %v4137, 6
        %v4282 = vrot.slane %v4138, 6
        %v4283 = vrot.slane %v4139, 6
        %v4292 = vadd.f32 %v4268, %v4276
        %v4293 = vadd.f32 %v4269, %v4277
        %v4294 = vadd.f32 %v4270, %v4278
        %v4295 = vadd.f32 %v4271, %v4279
        %v4296 = vadd.f32 %v4272, %v4280
        %v4297 = vadd.f32 %v4273, %v4281
        %v4298 = vadd.f32 %v4274, %v4282
        %v4299 = vadd.f32 %v4275, %v4283
        %v4300 = vrot.slane %v4132, 7
        %v4301 = vrot.slane %v4133, 7
        %v4302 = vrot.slane %v4134, 7
        %v4303 = vrot.slane %v4135, 7
        %v4304 = vrot.slane %v4136, 7
        %v4305 = vrot.slane %v4137, 7
        %v4306 = vrot.slane %v4138, 7
        %v4307 = vrot.slane %v4139, 7
        %v4316 = vadd.f32 %v4292, %v4300
        %v4317 = vadd.f32 %v4293, %v4301
        %v4318 = vadd.f32 %v4294, %v4302
        %v4319 = vadd.f32 %v4295, %v4303
        %v4320 = vadd.f32 %v4296, %v4304
        %v4321 = vadd.f32 %v4297, %v4305
        %v4322 = vadd.f32 %v4298, %v4306
        %v4323 = vadd.f32 %v4299, %v4307
        %vm4324 = vcmp.gt.f32.partialorder %v4316, 0.0
        %vm4325 = vcmp.gt.f32.partialorder %v4317, 0.0
        %vm4326 = vcmp.gt.f32.partialorder %v4318, 0.0
        %vm4327 = vcmp.gt.f32.partialorder %v4319, 0.0
        %vm4328 = vcmp.gt.f32.partialorder %v4320, 0.0
        %vm4329 = vcmp.gt.f32.partialorder %v4321, 0.0
        %vm4330 = vcmp.gt.f32.partialorder %v4322, 0.0
        %vm4331 = vcmp.gt.f32.partialorder %v4323, 0.0
        %v4332 = vmul.f32 %v4316, 0.2
        %v4333 = vmul.f32 %v4317, 0.2
        %v4334 = vmul.f32 %v4318, 0.2
        %v4335 = vmul.f32 %v4319, 0.2
        %v4336 = vmul.f32 %v4320, 0.2
        %v4337 = vmul.f32 %v4321, 0.2
        %v4338 = vmul.f32 %v4322, 0.2
        %v4339 = vmul.f32 %v4323, 0.2
        %v4340 = vsel %vm4324, %v4316, %v4332
        %v4341 = vsel %vm4325, %v4317, %v4333
        %v4342 = vsel %vm4326, %v4318, %v4334
        %v4343 = vsel %vm4327, %v4319, %v4335
        %v4344 = vsel %vm4328, %v4320, %v4336
        %v4345 = vsel %vm4329, %v4321, %v4337
        %v4346 = vsel %vm4330, %v4322, %v4338
        %v4347 = vsel %vm4331, %v4323, %v4339
        %v4348 = vpack.c.bf16 %v4340, %v4340
        %v4349 = vpack.c.bf16 %v4341, %v4341
        %v4350 = vpack.c.bf16 %v4342, %v4342
        %v4351 = vpack.c.bf16 %v4343, %v4343
        %v4352 = vpack.c.bf16 %v4344, %v4344
        %v4353 = vpack.c.bf16 %v4345, %v4345
        %v4354 = vpack.c.bf16 %v4346, %v4346
        %v4355 = vpack.c.bf16 %v4347, %v4347
        %s4356 = scalar_lea.vmem %s8, 18
        %v4357 = vld [vmem:[%s4356] sm:$0x3]
        %v4366 = vunpack.c.l.b16 %v4348
        %v4367 = vunpack.c.l.b16 %v4349
        %v4368 = vunpack.c.l.b16 %v4350
        %v4369 = vunpack.c.l.b16 %v4351
        %v4370 = vunpack.c.l.b16 %v4352
        %v4371 = vunpack.c.l.b16 %v4353
        %v4372 = vunpack.c.l.b16 %v4354
        %v4373 = vunpack.c.l.b16 %v4355
        %v4374 = vrot.slane %v4367, 7
        %v4375 = vsel %vm1342, %v4374, %v4366
        %v4376 = vrot.slane %v4368, 6
        %v4377 = vsel %vm1345, %v4376, %v4375
        %v4378 = vrot.slane %v4369, 5
        %v4379 = vsel %vm1348, %v4378, %v4377
        %v4380 = vrot.slane %v4370, 4
        %v4381 = vsel %vm1351, %v4380, %v4379
        %v4382 = vrot.slane %v4371, 3
        %v4383 = vsel %vm1354, %v4382, %v4381
        %v4384 = vrot.slane %v4372, 2
        %v4385 = vsel %vm1357, %v4384, %v4383
        %v4386 = vrot.slane %v4373, 1
        %v4387 = vsel %vm1360, %v4386, %v4385
        %v4388 = vpack.c.b16 %v4387, %v4387
        %v4390 = vsel %vm1363, %v4388, 0
        %v4393 = vsel %vm1367, %v4357, 0
        %4395 = vmatprep.subr.bf16.mxu0 0
        %4396 = vmatpush1.bf16.msra.mxu0 %v4393
        %4397 = vmatprep.subr.bf16.mxu0 0
        %4398 = vmatpush1.bf16.msra.mxu0 0
        %4399 = vmatprep.subr.bf16.mxu0 0
        %4400 = vmatpush1.bf16.msra.mxu0 0
        %4401 = vmatprep.subr.bf16.mxu0 0
        %4402 = vmatpush1.bf16.msra.mxu0 0
        %4403 = vmatprep.subr.bf16.mxu0 0
        %4404 = vmatpush1.bf16.msra.mxu0 0
        %4405 = vmatprep.subr.bf16.mxu0 0
        %4406 = vmatpush1.bf16.msra.mxu0 0
        %4407 = vmatprep.subr.bf16.mxu0 0
        %4408 = vmatpush1.bf16.msra.mxu0 0
        %4409 = vmatprep.subr.bf16.mxu0 0
        %4410 = vmatpush1.bf16.msra.mxu0 0
        %4411 = vmatprep.subr.bf16.mxu0 0
        %4412 = vmatpush1.bf16.msra.mxu0 0
        %4413 = vmatprep.subr.bf16.mxu0 0
        %4414 = vmatpush1.bf16.msra.mxu0 0
        %4415 = vmatprep.subr.bf16.mxu0 0
        %4416 = vmatpush1.bf16.msra.mxu0 0
        %4417 = vmatprep.subr.bf16.mxu0 0
        %4418 = vmatpush1.bf16.msra.mxu0 0
        %4419 = vmatprep.subr.bf16.mxu0 0
        %4420 = vmatpush1.bf16.msra.mxu0 0
        %4421 = vmatprep.subr.bf16.mxu0 0
        %4422 = vmatpush1.bf16.msra.mxu0 0
        %4423 = vmatprep.subr.bf16.mxu0 0
        %4424 = vmatpush1.bf16.msra.mxu0 0
        %4425 = vmatprep.subr.bf16.mxu0 0
        %4426 = vmatpush1.bf16.msra.mxu0 0
        %4427 = vmatprep.mubr.bf16.mxu0 0
        %4428 = vmatmul.mubr.bf16.gmra.mrb[0].mxu0 %v4390
        %v4429 = vpop.f32.mrb[0].mxu0
        %v4430 = vadd.f32 0.0, %v4429
        %v4431 = vpop.f32.mrb[0].mxu0
        %v4432 = vpop.f32.mrb[0].mxu0
        %v4433 = vpop.f32.mrb[0].mxu0
        %4434 = vdwg.mxu0
        %v4435 = vadd.f32 %v4099, %v4430
        %4436 = vset.pattern.permute.xlu0 10
        %4437 = vperm.xlu0 %4436, %v1028
        %v4438 = vpop.permute.xlu0 %4437
        %4440 = vset.pattern.permute.xlu0 10
        %4441 = vperm.xlu0 %4440, %v1029
        %v4442 = vpop.permute.xlu0 %4441
        %4444 = vset.pattern.permute.xlu0 10
        %4445 = vperm.xlu0 %4444, %v1030
        %v4446 = vpop.permute.xlu0 %4445
        %4448 = vset.pattern.permute.xlu0 10
        %4449 = vperm.xlu0 %4448, %v1031
        %v4450 = vpop.permute.xlu0 %4449
        %4452 = vset.pattern.permute.xlu0 10
        %4453 = vperm.xlu0 %4452, %v1032
        %v4454 = vpop.permute.xlu0 %4453
        %4456 = vset.pattern.permute.xlu0 10
        %4457 = vperm.xlu0 %4456, %v1033
        %v4458 = vpop.permute.xlu0 %4457
        %4460 = vset.pattern.permute.xlu0 10
        %4461 = vperm.xlu0 %4460, %v1034
        %v4462 = vpop.permute.xlu0 %4461
        %4464 = vset.pattern.permute.xlu0 10
        %4465 = vperm.xlu0 %4464, %v1035
        %v4466 = vpop.permute.xlu0 %4465
        %v4468 = vmul.f32 %v4438, %v1044
        %v4469 = vmul.f32 %v4442, %v1045
        %v4470 = vmul.f32 %v4446, %v1046
        %v4471 = vmul.f32 %v4450, %v1047
        %v4472 = vmul.f32 %v4454, %v1048
        %v4473 = vmul.f32 %v4458, %v1049
        %v4474 = vmul.f32 %v4462, %v1050
        %v4475 = vmul.f32 %v4466, %v1051
        %v4476 = vadd.f32 %v4468, 0.0
        %v4477 = vadd.f32 %v4469, 0.0
        %v4478 = vadd.f32 %v4470, 0.0
        %v4479 = vadd.f32 %v4471, 0.0
        %v4480 = vadd.f32 %v4472, 0.0
        %v4481 = vadd.f32 %v4473, 0.0
        %v4482 = vadd.f32 %v4474, 0.0
        %v4483 = vadd.f32 %v4475, 0.0
        %v4492 = vrot.slane %v4468, 1
        %v4493 = vrot.slane %v4469, 1
        %v4494 = vrot.slane %v4470, 1
        %v4495 = vrot.slane %v4471, 1
        %v4496 = vrot.slane %v4472, 1
        %v4497 = vrot.slane %v4473, 1
        %v4498 = vrot.slane %v4474, 1
        %v4499 = vrot.slane %v4475, 1
        %v4508 = vadd.f32 %v4476, %v4492
        %v4509 = vadd.f32 %v4477, %v4493
        %v4510 = vadd.f32 %v4478, %v4494
        %v4511 = vadd.f32 %v4479, %v4495
        %v4512 = vadd.f32 %v4480, %v4496
        %v4513 = vadd.f32 %v4481, %v4497
        %v4514 = vadd.f32 %v4482, %v4498
        %v4515 = vadd.f32 %v4483, %v4499
        %v4516 = vrot.slane %v4468, 2
        %v4517 = vrot.slane %v4469, 2
        %v4518 = vrot.slane %v4470, 2
        %v4519 = vrot.slane %v4471, 2
        %v4520 = vrot.slane %v4472, 2
        %v4521 = vrot.slane %v4473, 2
        %v4522 = vrot.slane %v4474, 2
        %v4523 = vrot.slane %v4475, 2
        %v4532 = vadd.f32 %v4508, %v4516
        %v4533 = vadd.f32 %v4509, %v4517
        %v4534 = vadd.f32 %v4510, %v4518
        %v4535 = vadd.f32 %v4511, %v4519
        %v4536 = vadd.f32 %v4512, %v4520
        %v4537 = vadd.f32 %v4513, %v4521
        %v4538 = vadd.f32 %v4514, %v4522
        %v4539 = vadd.f32 %v4515, %v4523
        %v4540 = vrot.slane %v4468, 3
        %v4541 = vrot.slane %v4469, 3
        %v4542 = vrot.slane %v4470, 3
        %v4543 = vrot.slane %v4471, 3
        %v4544 = vrot.slane %v4472, 3
        %v4545 = vrot.slane %v4473, 3
        %v4546 = vrot.slane %v4474, 3
        %v4547 = vrot.slane %v4475, 3
        %v4556 = vadd.f32 %v4532, %v4540
        %v4557 = vadd.f32 %v4533, %v4541
        %v4558 = vadd.f32 %v4534, %v4542
        %v4559 = vadd.f32 %v4535, %v4543
        %v4560 = vadd.f32 %v4536, %v4544
        %v4561 = vadd.f32 %v4537, %v4545
        %v4562 = vadd.f32 %v4538, %v4546
        %v4563 = vadd.f32 %v4539, %v4547
        %v4564 = vrot.slane %v4468, 4
        %v4565 = vrot.slane %v4469, 4
        %v4566 = vrot.slane %v4470, 4
        %v4567 = vrot.slane %v4471, 4
        %v4568 = vrot.slane %v4472, 4
        %v4569 = vrot.slane %v4473, 4
        %v4570 = vrot.slane %v4474, 4
        %v4571 = vrot.slane %v4475, 4
        %v4580 = vadd.f32 %v4556, %v4564
        %v4581 = vadd.f32 %v4557, %v4565
        %v4582 = vadd.f32 %v4558, %v4566
        %v4583 = vadd.f32 %v4559, %v4567
        %v4584 = vadd.f32 %v4560, %v4568
        %v4585 = vadd.f32 %v4561, %v4569
        %v4586 = vadd.f32 %v4562, %v4570
        %v4587 = vadd.f32 %v4563, %v4571
        %v4588 = vrot.slane %v4468, 5
        %v4589 = vrot.slane %v4469, 5
        %v4590 = vrot.slane %v4470, 5
        %v4591 = vrot.slane %v4471, 5
        %v4592 = vrot.slane %v4472, 5
        %v4593 = vrot.slane %v4473, 5
        %v4594 = vrot.slane %v4474, 5
        %v4595 = vrot.slane %v4475, 5
        %v4604 = vadd.f32 %v4580, %v4588
        %v4605 = vadd.f32 %v4581, %v4589
        %v4606 = vadd.f32 %v4582, %v4590
        %v4607 = vadd.f32 %v4583, %v4591
        %v4608 = vadd.f32 %v4584, %v4592
        %v4609 = vadd.f32 %v4585, %v4593
        %v4610 = vadd.f32 %v4586, %v4594
        %v4611 = vadd.f32 %v4587, %v4595
        %v4612 = vrot.slane %v4468, 6
        %v4613 = vrot.slane %v4469, 6
        %v4614 = vrot.slane %v4470, 6
        %v4615 = vrot.slane %v4471, 6
        %v4616 = vrot.slane %v4472, 6
        %v4617 = vrot.slane %v4473, 6
        %v4618 = vrot.slane %v4474, 6
        %v4619 = vrot.slane %v4475, 6
        %v4628 = vadd.f32 %v4604, %v4612
        %v4629 = vadd.f32 %v4605, %v4613
        %v4630 = vadd.f32 %v4606, %v4614
        %v4631 = vadd.f32 %v4607, %v4615
        %v4632 = vadd.f32 %v4608, %v4616
        %v4633 = vadd.f32 %v4609, %v4617
        %v4634 = vadd.f32 %v4610, %v4618
        %v4635 = vadd.f32 %v4611, %v4619
        %v4636 = vrot.slane %v4468, 7
        %v4637 = vrot.slane %v4469, 7
        %v4638 = vrot.slane %v4470, 7
        %v4639 = vrot.slane %v4471, 7
        %v4640 = vrot.slane %v4472, 7
        %v4641 = vrot.slane %v4473, 7
        %v4642 = vrot.slane %v4474, 7
        %v4643 = vrot.slane %v4475, 7
        %v4652 = vadd.f32 %v4628, %v4636
        %v4653 = vadd.f32 %v4629, %v4637
        %v4654 = vadd.f32 %v4630, %v4638
        %v4655 = vadd.f32 %v4631, %v4639
        %v4656 = vadd.f32 %v4632, %v4640
        %v4657 = vadd.f32 %v4633, %v4641
        %v4658 = vadd.f32 %v4634, %v4642
        %v4659 = vadd.f32 %v4635, %v4643
        %vm4660 = vcmp.gt.f32.partialorder %v4652, 0.0
        %vm4661 = vcmp.gt.f32.partialorder %v4653, 0.0
        %vm4662 = vcmp.gt.f32.partialorder %v4654, 0.0
        %vm4663 = vcmp.gt.f32.partialorder %v4655, 0.0
        %vm4664 = vcmp.gt.f32.partialorder %v4656, 0.0
        %vm4665 = vcmp.gt.f32.partialorder %v4657, 0.0
        %vm4666 = vcmp.gt.f32.partialorder %v4658, 0.0
        %vm4667 = vcmp.gt.f32.partialorder %v4659, 0.0
        %v4668 = vmul.f32 %v4652, 0.2
        %v4669 = vmul.f32 %v4653, 0.2
        %v4670 = vmul.f32 %v4654, 0.2
        %v4671 = vmul.f32 %v4655, 0.2
        %v4672 = vmul.f32 %v4656, 0.2
        %v4673 = vmul.f32 %v4657, 0.2
        %v4674 = vmul.f32 %v4658, 0.2
        %v4675 = vmul.f32 %v4659, 0.2
        %v4676 = vsel %vm4660, %v4652, %v4668
        %v4677 = vsel %vm4661, %v4653, %v4669
        %v4678 = vsel %vm4662, %v4654, %v4670
        %v4679 = vsel %vm4663, %v4655, %v4671
        %v4680 = vsel %vm4664, %v4656, %v4672
        %v4681 = vsel %vm4665, %v4657, %v4673
        %v4682 = vsel %vm4666, %v4658, %v4674
        %v4683 = vsel %vm4667, %v4659, %v4675
        %v4684 = vpack.c.bf16 %v4676, %v4676
        %v4685 = vpack.c.bf16 %v4677, %v4677
        %v4686 = vpack.c.bf16 %v4678, %v4678
        %v4687 = vpack.c.bf16 %v4679, %v4679
        %v4688 = vpack.c.bf16 %v4680, %v4680
        %v4689 = vpack.c.bf16 %v4681, %v4681
        %v4690 = vpack.c.bf16 %v4682, %v4682
        %v4691 = vpack.c.bf16 %v4683, %v4683
        %s4692 = scalar_lea.vmem %s8, 20
        %v4693 = vld [vmem:[%s4692] sm:$0x3]
        %v4702 = vunpack.c.l.b16 %v4684
        %v4703 = vunpack.c.l.b16 %v4685
        %v4704 = vunpack.c.l.b16 %v4686
        %v4705 = vunpack.c.l.b16 %v4687
        %v4706 = vunpack.c.l.b16 %v4688
        %v4707 = vunpack.c.l.b16 %v4689
        %v4708 = vunpack.c.l.b16 %v4690
        %v4709 = vunpack.c.l.b16 %v4691
        %v4710 = vrot.slane %v4703, 7
        %v4711 = vsel %vm1342, %v4710, %v4702
        %v4712 = vrot.slane %v4704, 6
        %v4713 = vsel %vm1345, %v4712, %v4711
        %v4714 = vrot.slane %v4705, 5
        %v4715 = vsel %vm1348, %v4714, %v4713
        %v4716 = vrot.slane %v4706, 4
        %v4717 = vsel %vm1351, %v4716, %v4715
        %v4718 = vrot.slane %v4707, 3
        %v4719 = vsel %vm1354, %v4718, %v4717
        %v4720 = vrot.slane %v4708, 2
        %v4721 = vsel %vm1357, %v4720, %v4719
        %v4722 = vrot.slane %v4709, 1
        %v4723 = vsel %vm1360, %v4722, %v4721
        %v4724 = vpack.c.b16 %v4723, %v4723
        %v4726 = vsel %vm1363, %v4724, 0
        %v4729 = vsel %vm1367, %v4693, 0
        %4731 = vmatprep.subr.bf16.mxu0 0
        %4732 = vmatpush1.bf16.msra.mxu0 %v4729
        %4733 = vmatprep.subr.bf16.mxu0 0
        %4734 = vmatpush1.bf16.msra.mxu0 0
        %4735 = vmatprep.subr.bf16.mxu0 0
        %4736 = vmatpush1.bf16.msra.mxu0 0
        %4737 = vmatprep.subr.bf16.mxu0 0
        %4738 = vmatpush1.bf16.msra.mxu0 0
        %4739 = vmatprep.subr.bf16.mxu0 0
        %4740 = vmatpush1.bf16.msra.mxu0 0
        %4741 = vmatprep.subr.bf16.mxu0 0
        %4742 = vmatpush1.bf16.msra.mxu0 0
        %4743 = vmatprep.subr.bf16.mxu0 0
        %4744 = vmatpush1.bf16.msra.mxu0 0
        %4745 = vmatprep.subr.bf16.mxu0 0
        %4746 = vmatpush1.bf16.msra.mxu0 0
        %4747 = vmatprep.subr.bf16.mxu0 0
        %4748 = vmatpush1.bf16.msra.mxu0 0
        %4749 = vmatprep.subr.bf16.mxu0 0
        %4750 = vmatpush1.bf16.msra.mxu0 0
        %4751 = vmatprep.subr.bf16.mxu0 0
        %4752 = vmatpush1.bf16.msra.mxu0 0
        %4753 = vmatprep.subr.bf16.mxu0 0
        %4754 = vmatpush1.bf16.msra.mxu0 0
        %4755 = vmatprep.subr.bf16.mxu0 0
        %4756 = vmatpush1.bf16.msra.mxu0 0
        %4757 = vmatprep.subr.bf16.mxu0 0
        %4758 = vmatpush1.bf16.msra.mxu0 0
        %4759 = vmatprep.subr.bf16.mxu0 0
        %4760 = vmatpush1.bf16.msra.mxu0 0
        %4761 = vmatprep.subr.bf16.mxu0 0
        %4762 = vmatpush1.bf16.msra.mxu0 0
        %4763 = vmatprep.mubr.bf16.mxu0 0
        %4764 = vmatmul.mubr.bf16.gmra.mrb[0].mxu0 %v4726
        %v4765 = vpop.f32.mrb[0].mxu0
        %v4766 = vadd.f32 0.0, %v4765
        %v4767 = vpop.f32.mrb[0].mxu0
        %v4768 = vpop.f32.mrb[0].mxu0
        %v4769 = vpop.f32.mrb[0].mxu0
        %4770 = vdwg.mxu0
        %v4771 = vadd.f32 %v4435, %v4766
        %4772 = vset.pattern.permute.xlu0 11
        %4773 = vperm.xlu0 %4772, %v1028
        %v4774 = vpop.permute.xlu0 %4773
        %4776 = vset.pattern.permute.xlu0 11
        %4777 = vperm.xlu0 %4776, %v1029
        %v4778 = vpop.permute.xlu0 %4777
        %4780 = vset.pattern.permute.xlu0 11
        %4781 = vperm.xlu0 %4780, %v1030
        %v4782 = vpop.permute.xlu0 %4781
        %4784 = vset.pattern.permute.xlu0 11
        %4785 = vperm.xlu0 %4784, %v1031
        %v4786 = vpop.permute.xlu0 %4785
        %4788 = vset.pattern.permute.xlu0 11
        %4789 = vperm.xlu0 %4788, %v1032
        %v4790 = vpop.permute.xlu0 %4789
        %4792 = vset.pattern.permute.xlu0 11
        %4793 = vperm.xlu0 %4792, %v1033
        %v4794 = vpop.permute.xlu0 %4793
        %4796 = vset.pattern.permute.xlu0 11
        %4797 = vperm.xlu0 %4796, %v1034
        %v4798 = vpop.permute.xlu0 %4797
        %4800 = vset.pattern.permute.xlu0 11
        %4801 = vperm.xlu0 %4800, %v1035
        %v4802 = vpop.permute.xlu0 %4801
        %v4804 = vmul.f32 %v4774, %v1044
        %v4805 = vmul.f32 %v4778, %v1045
        %v4806 = vmul.f32 %v4782, %v1046
        %v4807 = vmul.f32 %v4786, %v1047
        %v4808 = vmul.f32 %v4790, %v1048
        %v4809 = vmul.f32 %v4794, %v1049
        %v4810 = vmul.f32 %v4798, %v1050
        %v4811 = vmul.f32 %v4802, %v1051
        %v4812 = vadd.f32 %v4804, 0.0
        %v4813 = vadd.f32 %v4805, 0.0
        %v4814 = vadd.f32 %v4806, 0.0
        %v4815 = vadd.f32 %v4807, 0.0
        %v4816 = vadd.f32 %v4808, 0.0
        %v4817 = vadd.f32 %v4809, 0.0
        %v4818 = vadd.f32 %v4810, 0.0
        %v4819 = vadd.f32 %v4811, 0.0
        %v4828 = vrot.slane %v4804, 1
        %v4829 = vrot.slane %v4805, 1
        %v4830 = vrot.slane %v4806, 1
        %v4831 = vrot.slane %v4807, 1
        %v4832 = vrot.slane %v4808, 1
        %v4833 = vrot.slane %v4809, 1
        %v4834 = vrot.slane %v4810, 1
        %v4835 = vrot.slane %v4811, 1
        %v4844 = vadd.f32 %v4812, %v4828
        %v4845 = vadd.f32 %v4813, %v4829
        %v4846 = vadd.f32 %v4814, %v4830
        %v4847 = vadd.f32 %v4815, %v4831
        %v4848 = vadd.f32 %v4816, %v4832
        %v4849 = vadd.f32 %v4817, %v4833
        %v4850 = vadd.f32 %v4818, %v4834
        %v4851 = vadd.f32 %v4819, %v4835
        %v4852 = vrot.slane %v4804, 2
        %v4853 = vrot.slane %v4805, 2
        %v4854 = vrot.slane %v4806, 2
        %v4855 = vrot.slane %v4807, 2
        %v4856 = vrot.slane %v4808, 2
        %v4857 = vrot.slane %v4809, 2
        %v4858 = vrot.slane %v4810, 2
        %v4859 = vrot.slane %v4811, 2
        %v4868 = vadd.f32 %v4844, %v4852
        %v4869 = vadd.f32 %v4845, %v4853
        %v4870 = vadd.f32 %v4846, %v4854
        %v4871 = vadd.f32 %v4847, %v4855
        %v4872 = vadd.f32 %v4848, %v4856
        %v4873 = vadd.f32 %v4849, %v4857
        %v4874 = vadd.f32 %v4850, %v4858
        %v4875 = vadd.f32 %v4851, %v4859
        %v4876 = vrot.slane %v4804, 3
        %v4877 = vrot.slane %v4805, 3
        %v4878 = vrot.slane %v4806, 3
        %v4879 = vrot.slane %v4807, 3
        %v4880 = vrot.slane %v4808, 3
        %v4881 = vrot.slane %v4809, 3
        %v4882 = vrot.slane %v4810, 3
        %v4883 = vrot.slane %v4811, 3
        %v4892 = vadd.f32 %v4868, %v4876
        %v4893 = vadd.f32 %v4869, %v4877
        %v4894 = vadd.f32 %v4870, %v4878
        %v4895 = vadd.f32 %v4871, %v4879
        %v4896 = vadd.f32 %v4872, %v4880
        %v4897 = vadd.f32 %v4873, %v4881
        %v4898 = vadd.f32 %v4874, %v4882
        %v4899 = vadd.f32 %v4875, %v4883
        %v4900 = vrot.slane %v4804, 4
        %v4901 = vrot.slane %v4805, 4
        %v4902 = vrot.slane %v4806, 4
        %v4903 = vrot.slane %v4807, 4
        %v4904 = vrot.slane %v4808, 4
        %v4905 = vrot.slane %v4809, 4
        %v4906 = vrot.slane %v4810, 4
        %v4907 = vrot.slane %v4811, 4
        %v4916 = vadd.f32 %v4892, %v4900
        %v4917 = vadd.f32 %v4893, %v4901
        %v4918 = vadd.f32 %v4894, %v4902
        %v4919 = vadd.f32 %v4895, %v4903
        %v4920 = vadd.f32 %v4896, %v4904
        %v4921 = vadd.f32 %v4897, %v4905
        %v4922 = vadd.f32 %v4898, %v4906
        %v4923 = vadd.f32 %v4899, %v4907
        %v4924 = vrot.slane %v4804, 5
        %v4925 = vrot.slane %v4805, 5
        %v4926 = vrot.slane %v4806, 5
        %v4927 = vrot.slane %v4807, 5
        %v4928 = vrot.slane %v4808, 5
        %v4929 = vrot.slane %v4809, 5
        %v4930 = vrot.slane %v4810, 5
        %v4931 = vrot.slane %v4811, 5
        %v4940 = vadd.f32 %v4916, %v4924
        %v4941 = vadd.f32 %v4917, %v4925
        %v4942 = vadd.f32 %v4918, %v4926
        %v4943 = vadd.f32 %v4919, %v4927
        %v4944 = vadd.f32 %v4920, %v4928
        %v4945 = vadd.f32 %v4921, %v4929
        %v4946 = vadd.f32 %v4922, %v4930
        %v4947 = vadd.f32 %v4923, %v4931
        %v4948 = vrot.slane %v4804, 6
        %v4949 = vrot.slane %v4805, 6
        %v4950 = vrot.slane %v4806, 6
        %v4951 = vrot.slane %v4807, 6
        %v4952 = vrot.slane %v4808, 6
        %v4953 = vrot.slane %v4809, 6
        %v4954 = vrot.slane %v4810, 6
        %v4955 = vrot.slane %v4811, 6
        %v4964 = vadd.f32 %v4940, %v4948
        %v4965 = vadd.f32 %v4941, %v4949
        %v4966 = vadd.f32 %v4942, %v4950
        %v4967 = vadd.f32 %v4943, %v4951
        %v4968 = vadd.f32 %v4944, %v4952
        %v4969 = vadd.f32 %v4945, %v4953
        %v4970 = vadd.f32 %v4946, %v4954
        %v4971 = vadd.f32 %v4947, %v4955
        %v4972 = vrot.slane %v4804, 7
        %v4973 = vrot.slane %v4805, 7
        %v4974 = vrot.slane %v4806, 7
        %v4975 = vrot.slane %v4807, 7
        %v4976 = vrot.slane %v4808, 7
        %v4977 = vrot.slane %v4809, 7
        %v4978 = vrot.slane %v4810, 7
        %v4979 = vrot.slane %v4811, 7
        %v4988 = vadd.f32 %v4964, %v4972
        %v4989 = vadd.f32 %v4965, %v4973
        %v4990 = vadd.f32 %v4966, %v4974
        %v4991 = vadd.f32 %v4967, %v4975
        %v4992 = vadd.f32 %v4968, %v4976
        %v4993 = vadd.f32 %v4969, %v4977
        %v4994 = vadd.f32 %v4970, %v4978
        %v4995 = vadd.f32 %v4971, %v4979
        %vm4996 = vcmp.gt.f32.partialorder %v4988, 0.0
        %vm4997 = vcmp.gt.f32.partialorder %v4989, 0.0
        %vm4998 = vcmp.gt.f32.partialorder %v4990, 0.0
        %vm4999 = vcmp.gt.f32.partialorder %v4991, 0.0
        %vm5000 = vcmp.gt.f32.partialorder %v4992, 0.0
        %vm5001 = vcmp.gt.f32.partialorder %v4993, 0.0
        %vm5002 = vcmp.gt.f32.partialorder %v4994, 0.0
        %vm5003 = vcmp.gt.f32.partialorder %v4995, 0.0
        %v5004 = vmul.f32 %v4988, 0.2
        %v5005 = vmul.f32 %v4989, 0.2
        %v5006 = vmul.f32 %v4990, 0.2
        %v5007 = vmul.f32 %v4991, 0.2
        %v5008 = vmul.f32 %v4992, 0.2
        %v5009 = vmul.f32 %v4993, 0.2
        %v5010 = vmul.f32 %v4994, 0.2
        %v5011 = vmul.f32 %v4995, 0.2
        %v5012 = vsel %vm4996, %v4988, %v5004
        %v5013 = vsel %vm4997, %v4989, %v5005
        %v5014 = vsel %vm4998, %v4990, %v5006
        %v5015 = vsel %vm4999, %v4991, %v5007
        %v5016 = vsel %vm5000, %v4992, %v5008
        %v5017 = vsel %vm5001, %v4993, %v5009
        %v5018 = vsel %vm5002, %v4994, %v5010
        %v5019 = vsel %vm5003, %v4995, %v5011
        %v5020 = vpack.c.bf16 %v5012, %v5012
        %v5021 = vpack.c.bf16 %v5013, %v5013
        %v5022 = vpack.c.bf16 %v5014, %v5014
        %v5023 = vpack.c.bf16 %v5015, %v5015
        %v5024 = vpack.c.bf16 %v5016, %v5016
        %v5025 = vpack.c.bf16 %v5017, %v5017
        %v5026 = vpack.c.bf16 %v5018, %v5018
        %v5027 = vpack.c.bf16 %v5019, %v5019
        %s5028 = scalar_lea.vmem %s8, 22
        %v5029 = vld [vmem:[%s5028] sm:$0x3]
        %v5038 = vunpack.c.l.b16 %v5020
        %v5039 = vunpack.c.l.b16 %v5021
        %v5040 = vunpack.c.l.b16 %v5022
        %v5041 = vunpack.c.l.b16 %v5023
        %v5042 = vunpack.c.l.b16 %v5024
        %v5043 = vunpack.c.l.b16 %v5025
        %v5044 = vunpack.c.l.b16 %v5026
        %v5045 = vunpack.c.l.b16 %v5027
        %v5046 = vrot.slane %v5039, 7
        %v5047 = vsel %vm1342, %v5046, %v5038
        %v5048 = vrot.slane %v5040, 6
        %v5049 = vsel %vm1345, %v5048, %v5047
        %v5050 = vrot.slane %v5041, 5
        %v5051 = vsel %vm1348, %v5050, %v5049
        %v5052 = vrot.slane %v5042, 4
        %v5053 = vsel %vm1351, %v5052, %v5051
        %v5054 = vrot.slane %v5043, 3
        %v5055 = vsel %vm1354, %v5054, %v5053
        %v5056 = vrot.slane %v5044, 2
        %v5057 = vsel %vm1357, %v5056, %v5055
        %v5058 = vrot.slane %v5045, 1
        %v5059 = vsel %vm1360, %v5058, %v5057
        %v5060 = vpack.c.b16 %v5059, %v5059
        %v5062 = vsel %vm1363, %v5060, 0
        %v5065 = vsel %vm1367, %v5029, 0
        %5067 = vmatprep.subr.bf16.mxu0 0
        %5068 = vmatpush1.bf16.msra.mxu0 %v5065
        %5069 = vmatprep.subr.bf16.mxu0 0
        %5070 = vmatpush1.bf16.msra.mxu0 0
        %5071 = vmatprep.subr.bf16.mxu0 0
        %5072 = vmatpush1.bf16.msra.mxu0 0
        %5073 = vmatprep.subr.bf16.mxu0 0
        %5074 = vmatpush1.bf16.msra.mxu0 0
        %5075 = vmatprep.subr.bf16.mxu0 0
        %5076 = vmatpush1.bf16.msra.mxu0 0
        %5077 = vmatprep.subr.bf16.mxu0 0
        %5078 = vmatpush1.bf16.msra.mxu0 0
        %5079 = vmatprep.subr.bf16.mxu0 0
        %5080 = vmatpush1.bf16.msra.mxu0 0
        %5081 = vmatprep.subr.bf16.mxu0 0
        %5082 = vmatpush1.bf16.msra.mxu0 0
        %5083 = vmatprep.subr.bf16.mxu0 0
        %5084 = vmatpush1.bf16.msra.mxu0 0
        %5085 = vmatprep.subr.bf16.mxu0 0
        %5086 = vmatpush1.bf16.msra.mxu0 0
        %5087 = vmatprep.subr.bf16.mxu0 0
        %5088 = vmatpush1.bf16.msra.mxu0 0
        %5089 = vmatprep.subr.bf16.mxu0 0
        %5090 = vmatpush1.bf16.msra.mxu0 0
        %5091 = vmatprep.subr.bf16.mxu0 0
        %5092 = vmatpush1.bf16.msra.mxu0 0
        %5093 = vmatprep.subr.bf16.mxu0 0
        %5094 = vmatpush1.bf16.msra.mxu0 0
        %5095 = vmatprep.subr.bf16.mxu0 0
        %5096 = vmatpush1.bf16.msra.mxu0 0
        %5097 = vmatprep.subr.bf16.mxu0 0
        %5098 = vmatpush1.bf16.msra.mxu0 0
        %5099 = vmatprep.mubr.bf16.mxu0 0
        %5100 = vmatmul.mubr.bf16.gmra.mrb[0].mxu0 %v5062
        %v5101 = vpop.f32.mrb[0].mxu0
        %v5102 = vadd.f32 0.0, %v5101
        %v5103 = vpop.f32.mrb[0].mxu0
        %v5104 = vpop.f32.mrb[0].mxu0
        %v5105 = vpop.f32.mrb[0].mxu0
        %5106 = vdwg.mxu0
        %v5107 = vadd.f32 %v4771, %v5102
        %5108 = vset.pattern.permute.xlu0 12
        %5109 = vperm.xlu0 %5108, %v1028
        %v5110 = vpop.permute.xlu0 %5109
        %5112 = vset.pattern.permute.xlu0 12
        %5113 = vperm.xlu0 %5112, %v1029
        %v5114 = vpop.permute.xlu0 %5113
        %5116 = vset.pattern.permute.xlu0 12
        %5117 = vperm.xlu0 %5116, %v1030
        %v5118 = vpop.permute.xlu0 %5117
        %5120 = vset.pattern.permute.xlu0 12
        %5121 = vperm.xlu0 %5120, %v1031
        %v5122 = vpop.permute.xlu0 %5121
        %5124 = vset.pattern.permute.xlu0 12
        %5125 = vperm.xlu0 %5124, %v1032
        %v5126 = vpop.permute.xlu0 %5125
        %5128 = vset.pattern.permute.xlu0 12
        %5129 = vperm.xlu0 %5128, %v1033
        %v5130 = vpop.permute.xlu0 %5129
        %5132 = vset.pattern.permute.xlu0 12
        %5133 = vperm.xlu0 %5132, %v1034
        %v5134 = vpop.permute.xlu0 %5133
        %5136 = vset.pattern.permute.xlu0 12
        %5137 = vperm.xlu0 %5136, %v1035
        %v5138 = vpop.permute.xlu0 %5137
        %v5140 = vmul.f32 %v5110, %v1044
        %v5141 = vmul.f32 %v5114, %v1045
        %v5142 = vmul.f32 %v5118, %v1046
        %v5143 = vmul.f32 %v5122, %v1047
        %v5144 = vmul.f32 %v5126, %v1048
        %v5145 = vmul.f32 %v5130, %v1049
        %v5146 = vmul.f32 %v5134, %v1050
        %v5147 = vmul.f32 %v5138, %v1051
        %v5148 = vadd.f32 %v5140, 0.0
        %v5149 = vadd.f32 %v5141, 0.0
        %v5150 = vadd.f32 %v5142, 0.0
        %v5151 = vadd.f32 %v5143, 0.0
        %v5152 = vadd.f32 %v5144, 0.0
        %v5153 = vadd.f32 %v5145, 0.0
        %v5154 = vadd.f32 %v5146, 0.0
        %v5155 = vadd.f32 %v5147, 0.0
        %v5164 = vrot.slane %v5140, 1
        %v5165 = vrot.slane %v5141, 1
        %v5166 = vrot.slane %v5142, 1
        %v5167 = vrot.slane %v5143, 1
        %v5168 = vrot.slane %v5144, 1
        %v5169 = vrot.slane %v5145, 1
        %v5170 = vrot.slane %v5146, 1
        %v5171 = vrot.slane %v5147, 1
        %v5180 = vadd.f32 %v5148, %v5164
        %v5181 = vadd.f32 %v5149, %v5165
        %v5182 = vadd.f32 %v5150, %v5166
        %v5183 = vadd.f32 %v5151, %v5167
        %v5184 = vadd.f32 %v5152, %v5168
        %v5185 = vadd.f32 %v5153, %v5169
        %v5186 = vadd.f32 %v5154, %v5170
        %v5187 = vadd.f32 %v5155, %v5171
        %v5188 = vrot.slane %v5140, 2
        %v5189 = vrot.slane %v5141, 2
        %v5190 = vrot.slane %v5142, 2
        %v5191 = vrot.slane %v5143, 2
        %v5192 = vrot.slane %v5144, 2
        %v5193 = vrot.slane %v5145, 2
        %v5194 = vrot.slane %v5146, 2
        %v5195 = vrot.slane %v5147, 2
        %v5204 = vadd.f32 %v5180, %v5188
        %v5205 = vadd.f32 %v5181, %v5189
        %v5206 = vadd.f32 %v5182, %v5190
        %v5207 = vadd.f32 %v5183, %v5191
        %v5208 = vadd.f32 %v5184, %v5192
        %v5209 = vadd.f32 %v5185, %v5193
        %v5210 = vadd.f32 %v5186, %v5194
        %v5211 = vadd.f32 %v5187, %v5195
        %v5212 = vrot.slane %v5140, 3
        %v5213 = vrot.slane %v5141, 3
        %v5214 = vrot.slane %v5142, 3
        %v5215 = vrot.slane %v5143, 3
        %v5216 = vrot.slane %v5144, 3
        %v5217 = vrot.slane %v5145, 3
        %v5218 = vrot.slane %v5146, 3
        %v5219 = vrot.slane %v5147, 3
        %v5228 = vadd.f32 %v5204, %v5212
        %v5229 = vadd.f32 %v5205, %v5213
        %v5230 = vadd.f32 %v5206, %v5214
        %v5231 = vadd.f32 %v5207, %v5215
        %v5232 = vadd.f32 %v5208, %v5216
        %v5233 = vadd.f32 %v5209, %v5217
        %v5234 = vadd.f32 %v5210, %v5218
        %v5235 = vadd.f32 %v5211, %v5219
        %v5236 = vrot.slane %v5140, 4
        %v5237 = vrot.slane %v5141, 4
        %v5238 = vrot.slane %v5142, 4
        %v5239 = vrot.slane %v5143, 4
        %v5240 = vrot.slane %v5144, 4
        %v5241 = vrot.slane %v5145, 4
        %v5242 = vrot.slane %v5146, 4
        %v5243 = vrot.slane %v5147, 4
        %v5252 = vadd.f32 %v5228, %v5236
        %v5253 = vadd.f32 %v5229, %v5237
        %v5254 = vadd.f32 %v5230, %v5238
        %v5255 = vadd.f32 %v5231, %v5239
        %v5256 = vadd.f32 %v5232, %v5240
        %v5257 = vadd.f32 %v5233, %v5241
        %v5258 = vadd.f32 %v5234, %v5242
        %v5259 = vadd.f32 %v5235, %v5243
        %v5260 = vrot.slane %v5140, 5
        %v5261 = vrot.slane %v5141, 5
        %v5262 = vrot.slane %v5142, 5
        %v5263 = vrot.slane %v5143, 5
        %v5264 = vrot.slane %v5144, 5
        %v5265 = vrot.slane %v5145, 5
        %v5266 = vrot.slane %v5146, 5
        %v5267 = vrot.slane %v5147, 5
        %v5276 = vadd.f32 %v5252, %v5260
        %v5277 = vadd.f32 %v5253, %v5261
        %v5278 = vadd.f32 %v5254, %v5262
        %v5279 = vadd.f32 %v5255, %v5263
        %v5280 = vadd.f32 %v5256, %v5264
        %v5281 = vadd.f32 %v5257, %v5265
        %v5282 = vadd.f32 %v5258, %v5266
        %v5283 = vadd.f32 %v5259, %v5267
        %v5284 = vrot.slane %v5140, 6
        %v5285 = vrot.slane %v5141, 6
        %v5286 = vrot.slane %v5142, 6
        %v5287 = vrot.slane %v5143, 6
        %v5288 = vrot.slane %v5144, 6
        %v5289 = vrot.slane %v5145, 6
        %v5290 = vrot.slane %v5146, 6
        %v5291 = vrot.slane %v5147, 6
        %v5300 = vadd.f32 %v5276, %v5284
        %v5301 = vadd.f32 %v5277, %v5285
        %v5302 = vadd.f32 %v5278, %v5286
        %v5303 = vadd.f32 %v5279, %v5287
        %v5304 = vadd.f32 %v5280, %v5288
        %v5305 = vadd.f32 %v5281, %v5289
        %v5306 = vadd.f32 %v5282, %v5290
        %v5307 = vadd.f32 %v5283, %v5291
        %v5308 = vrot.slane %v5140, 7
        %v5309 = vrot.slane %v5141, 7
        %v5310 = vrot.slane %v5142, 7
        %v5311 = vrot.slane %v5143, 7
        %v5312 = vrot.slane %v5144, 7
        %v5313 = vrot.slane %v5145, 7
        %v5314 = vrot.slane %v5146, 7
        %v5315 = vrot.slane %v5147, 7
        %v5324 = vadd.f32 %v5300, %v5308
        %v5325 = vadd.f32 %v5301, %v5309
        %v5326 = vadd.f32 %v5302, %v5310
        %v5327 = vadd.f32 %v5303, %v5311
        %v5328 = vadd.f32 %v5304, %v5312
        %v5329 = vadd.f32 %v5305, %v5313
        %v5330 = vadd.f32 %v5306, %v5314
        %v5331 = vadd.f32 %v5307, %v5315
        %vm5332 = vcmp.gt.f32.partialorder %v5324, 0.0
        %vm5333 = vcmp.gt.f32.partialorder %v5325, 0.0
        %vm5334 = vcmp.gt.f32.partialorder %v5326, 0.0
        %vm5335 = vcmp.gt.f32.partialorder %v5327, 0.0
        %vm5336 = vcmp.gt.f32.partialorder %v5328, 0.0
        %vm5337 = vcmp.gt.f32.partialorder %v5329, 0.0
        %vm5338 = vcmp.gt.f32.partialorder %v5330, 0.0
        %vm5339 = vcmp.gt.f32.partialorder %v5331, 0.0
        %v5340 = vmul.f32 %v5324, 0.2
        %v5341 = vmul.f32 %v5325, 0.2
        %v5342 = vmul.f32 %v5326, 0.2
        %v5343 = vmul.f32 %v5327, 0.2
        %v5344 = vmul.f32 %v5328, 0.2
        %v5345 = vmul.f32 %v5329, 0.2
        %v5346 = vmul.f32 %v5330, 0.2
        %v5347 = vmul.f32 %v5331, 0.2
        %v5348 = vsel %vm5332, %v5324, %v5340
        %v5349 = vsel %vm5333, %v5325, %v5341
        %v5350 = vsel %vm5334, %v5326, %v5342
        %v5351 = vsel %vm5335, %v5327, %v5343
        %v5352 = vsel %vm5336, %v5328, %v5344
        %v5353 = vsel %vm5337, %v5329, %v5345
        %v5354 = vsel %vm5338, %v5330, %v5346
        %v5355 = vsel %vm5339, %v5331, %v5347
        %v5356 = vpack.c.bf16 %v5348, %v5348
        %v5357 = vpack.c.bf16 %v5349, %v5349
        %v5358 = vpack.c.bf16 %v5350, %v5350
        %v5359 = vpack.c.bf16 %v5351, %v5351
        %v5360 = vpack.c.bf16 %v5352, %v5352
        %v5361 = vpack.c.bf16 %v5353, %v5353
        %v5362 = vpack.c.bf16 %v5354, %v5354
        %v5363 = vpack.c.bf16 %v5355, %v5355
        %s5364 = scalar_lea.vmem %s8, 24
        %v5365 = vld [vmem:[%s5364] sm:$0x3]
        %v5374 = vunpack.c.l.b16 %v5356
        %v5375 = vunpack.c.l.b16 %v5357
        %v5376 = vunpack.c.l.b16 %v5358
        %v5377 = vunpack.c.l.b16 %v5359
        %v5378 = vunpack.c.l.b16 %v5360
        %v5379 = vunpack.c.l.b16 %v5361
        %v5380 = vunpack.c.l.b16 %v5362
        %v5381 = vunpack.c.l.b16 %v5363
        %v5382 = vrot.slane %v5375, 7
        %v5383 = vsel %vm1342, %v5382, %v5374
        %v5384 = vrot.slane %v5376, 6
        %v5385 = vsel %vm1345, %v5384, %v5383
        %v5386 = vrot.slane %v5377, 5
        %v5387 = vsel %vm1348, %v5386, %v5385
        %v5388 = vrot.slane %v5378, 4
        %v5389 = vsel %vm1351, %v5388, %v5387
        %v5390 = vrot.slane %v5379, 3
        %v5391 = vsel %vm1354, %v5390, %v5389
        %v5392 = vrot.slane %v5380, 2
        %v5393 = vsel %vm1357, %v5392, %v5391
        %v5394 = vrot.slane %v5381, 1
        %v5395 = vsel %vm1360, %v5394, %v5393
        %v5396 = vpack.c.b16 %v5395, %v5395
        %v5398 = vsel %vm1363, %v5396, 0
        %v5401 = vsel %vm1367, %v5365, 0
        %5403 = vmatprep.subr.bf16.mxu0 0
        %5404 = vmatpush1.bf16.msra.mxu0 %v5401
        %5405 = vmatprep.subr.bf16.mxu0 0
        %5406 = vmatpush1.bf16.msra.mxu0 0
        %5407 = vmatprep.subr.bf16.mxu0 0
        %5408 = vmatpush1.bf16.msra.mxu0 0
        %5409 = vmatprep.subr.bf16.mxu0 0
        %5410 = vmatpush1.bf16.msra.mxu0 0
        %5411 = vmatprep.subr.bf16.mxu0 0
        %5412 = vmatpush1.bf16.msra.mxu0 0
        %5413 = vmatprep.subr.bf16.mxu0 0
        %5414 = vmatpush1.bf16.msra.mxu0 0
        %5415 = vmatprep.subr.bf16.mxu0 0
        %5416 = vmatpush1.bf16.msra.mxu0 0
        %5417 = vmatprep.subr.bf16.mxu0 0
        %5418 = vmatpush1.bf16.msra.mxu0 0
        %5419 = vmatprep.subr.bf16.mxu0 0
        %5420 = vmatpush1.bf16.msra.mxu0 0
        %5421 = vmatprep.subr.bf16.mxu0 0
        %5422 = vmatpush1.bf16.msra.mxu0 0
        %5423 = vmatprep.subr.bf16.mxu0 0
        %5424 = vmatpush1.bf16.msra.mxu0 0
        %5425 = vmatprep.subr.bf16.mxu0 0
        %5426 = vmatpush1.bf16.msra.mxu0 0
        %5427 = vmatprep.subr.bf16.mxu0 0
        %5428 = vmatpush1.bf16.msra.mxu0 0
        %5429 = vmatprep.subr.bf16.mxu0 0
        %5430 = vmatpush1.bf16.msra.mxu0 0
        %5431 = vmatprep.subr.bf16.mxu0 0
        %5432 = vmatpush1.bf16.msra.mxu0 0
        %5433 = vmatprep.subr.bf16.mxu0 0
        %5434 = vmatpush1.bf16.msra.mxu0 0
        %5435 = vmatprep.mubr.bf16.mxu0 0
        %5436 = vmatmul.mubr.bf16.gmra.mrb[0].mxu0 %v5398
        %v5437 = vpop.f32.mrb[0].mxu0
        %v5438 = vadd.f32 0.0, %v5437
        %v5439 = vpop.f32.mrb[0].mxu0
        %v5440 = vpop.f32.mrb[0].mxu0
        %v5441 = vpop.f32.mrb[0].mxu0
        %5442 = vdwg.mxu0
        %v5443 = vadd.f32 %v5107, %v5438
        %5444 = vset.pattern.permute.xlu0 13
        %5445 = vperm.xlu0 %5444, %v1028
        %v5446 = vpop.permute.xlu0 %5445
        %5448 = vset.pattern.permute.xlu0 13
        %5449 = vperm.xlu0 %5448, %v1029
        %v5450 = vpop.permute.xlu0 %5449
        %5452 = vset.pattern.permute.xlu0 13
        %5453 = vperm.xlu0 %5452, %v1030
        %v5454 = vpop.permute.xlu0 %5453
        %5456 = vset.pattern.permute.xlu0 13
        %5457 = vperm.xlu0 %5456, %v1031
        %v5458 = vpop.permute.xlu0 %5457
        %5460 = vset.pattern.permute.xlu0 13
        %5461 = vperm.xlu0 %5460, %v1032
        %v5462 = vpop.permute.xlu0 %5461
        %5464 = vset.pattern.permute.xlu0 13
        %5465 = vperm.xlu0 %5464, %v1033
        %v5466 = vpop.permute.xlu0 %5465
        %5468 = vset.pattern.permute.xlu0 13
        %5469 = vperm.xlu0 %5468, %v1034
        %v5470 = vpop.permute.xlu0 %5469
        %5472 = vset.pattern.permute.xlu0 13
        %5473 = vperm.xlu0 %5472, %v1035
        %v5474 = vpop.permute.xlu0 %5473
        %v5476 = vmul.f32 %v5446, %v1044
        %v5477 = vmul.f32 %v5450, %v1045
        %v5478 = vmul.f32 %v5454, %v1046
        %v5479 = vmul.f32 %v5458, %v1047
        %v5480 = vmul.f32 %v5462, %v1048
        %v5481 = vmul.f32 %v5466, %v1049
        %v5482 = vmul.f32 %v5470, %v1050
        %v5483 = vmul.f32 %v5474, %v1051
        %v5484 = vadd.f32 %v5476, 0.0
        %v5485 = vadd.f32 %v5477, 0.0
        %v5486 = vadd.f32 %v5478, 0.0
        %v5487 = vadd.f32 %v5479, 0.0
        %v5488 = vadd.f32 %v5480, 0.0
        %v5489 = vadd.f32 %v5481, 0.0
        %v5490 = vadd.f32 %v5482, 0.0
        %v5491 = vadd.f32 %v5483, 0.0
        %v5500 = vrot.slane %v5476, 1
        %v5501 = vrot.slane %v5477, 1
        %v5502 = vrot.slane %v5478, 1
        %v5503 = vrot.slane %v5479, 1
        %v5504 = vrot.slane %v5480, 1
        %v5505 = vrot.slane %v5481, 1
        %v5506 = vrot.slane %v5482, 1
        %v5507 = vrot.slane %v5483, 1
        %v5516 = vadd.f32 %v5484, %v5500
        %v5517 = vadd.f32 %v5485, %v5501
        %v5518 = vadd.f32 %v5486, %v5502
        %v5519 = vadd.f32 %v5487, %v5503
        %v5520 = vadd.f32 %v5488, %v5504
        %v5521 = vadd.f32 %v5489, %v5505
        %v5522 = vadd.f32 %v5490, %v5506
        %v5523 = vadd.f32 %v5491, %v5507
        %v5524 = vrot.slane %v5476, 2
        %v5525 = vrot.slane %v5477, 2
        %v5526 = vrot.slane %v5478, 2
        %v5527 = vrot.slane %v5479, 2
        %v5528 = vrot.slane %v5480, 2
        %v5529 = vrot.slane %v5481, 2
        %v5530 = vrot.slane %v5482, 2
        %v5531 = vrot.slane %v5483, 2
        %v5540 = vadd.f32 %v5516, %v5524
        %v5541 = vadd.f32 %v5517, %v5525
        %v5542 = vadd.f32 %v5518, %v5526
        %v5543 = vadd.f32 %v5519, %v5527
        %v5544 = vadd.f32 %v5520, %v5528
        %v5545 = vadd.f32 %v5521, %v5529
        %v5546 = vadd.f32 %v5522, %v5530
        %v5547 = vadd.f32 %v5523, %v5531
        %v5548 = vrot.slane %v5476, 3
        %v5549 = vrot.slane %v5477, 3
        %v5550 = vrot.slane %v5478, 3
        %v5551 = vrot.slane %v5479, 3
        %v5552 = vrot.slane %v5480, 3
        %v5553 = vrot.slane %v5481, 3
        %v5554 = vrot.slane %v5482, 3
        %v5555 = vrot.slane %v5483, 3
        %v5564 = vadd.f32 %v5540, %v5548
        %v5565 = vadd.f32 %v5541, %v5549
        %v5566 = vadd.f32 %v5542, %v5550
        %v5567 = vadd.f32 %v5543, %v5551
        %v5568 = vadd.f32 %v5544, %v5552
        %v5569 = vadd.f32 %v5545, %v5553
        %v5570 = vadd.f32 %v5546, %v5554
        %v5571 = vadd.f32 %v5547, %v5555
        %v5572 = vrot.slane %v5476, 4
        %v5573 = vrot.slane %v5477, 4
        %v5574 = vrot.slane %v5478, 4
        %v5575 = vrot.slane %v5479, 4
        %v5576 = vrot.slane %v5480, 4
        %v5577 = vrot.slane %v5481, 4
        %v5578 = vrot.slane %v5482, 4
        %v5579 = vrot.slane %v5483, 4
        %v5588 = vadd.f32 %v5564, %v5572
        %v5589 = vadd.f32 %v5565, %v5573
        %v5590 = vadd.f32 %v5566, %v5574
        %v5591 = vadd.f32 %v5567, %v5575
        %v5592 = vadd.f32 %v5568, %v5576
        %v5593 = vadd.f32 %v5569, %v5577
        %v5594 = vadd.f32 %v5570, %v5578
        %v5595 = vadd.f32 %v5571, %v5579
        %v5596 = vrot.slane %v5476, 5
        %v5597 = vrot.slane %v5477, 5
        %v5598 = vrot.slane %v5478, 5
        %v5599 = vrot.slane %v5479, 5
        %v5600 = vrot.slane %v5480, 5
        %v5601 = vrot.slane %v5481, 5
        %v5602 = vrot.slane %v5482, 5
        %v5603 = vrot.slane %v5483, 5
        %v5612 = vadd.f32 %v5588, %v5596
        %v5613 = vadd.f32 %v5589, %v5597
        %v5614 = vadd.f32 %v5590, %v5598
        %v5615 = vadd.f32 %v5591, %v5599
        %v5616 = vadd.f32 %v5592, %v5600
        %v5617 = vadd.f32 %v5593, %v5601
        %v5618 = vadd.f32 %v5594, %v5602
        %v5619 = vadd.f32 %v5595, %v5603
        %v5620 = vrot.slane %v5476, 6
        %v5621 = vrot.slane %v5477, 6
        %v5622 = vrot.slane %v5478, 6
        %v5623 = vrot.slane %v5479, 6
        %v5624 = vrot.slane %v5480, 6
        %v5625 = vrot.slane %v5481, 6
        %v5626 = vrot.slane %v5482, 6
        %v5627 = vrot.slane %v5483, 6
        %v5636 = vadd.f32 %v5612, %v5620
        %v5637 = vadd.f32 %v5613, %v5621
        %v5638 = vadd.f32 %v5614, %v5622
        %v5639 = vadd.f32 %v5615, %v5623
        %v5640 = vadd.f32 %v5616, %v5624
        %v5641 = vadd.f32 %v5617, %v5625
        %v5642 = vadd.f32 %v5618, %v5626
        %v5643 = vadd.f32 %v5619, %v5627
        %v5644 = vrot.slane %v5476, 7
        %v5645 = vrot.slane %v5477, 7
        %v5646 = vrot.slane %v5478, 7
        %v5647 = vrot.slane %v5479, 7
        %v5648 = vrot.slane %v5480, 7
        %v5649 = vrot.slane %v5481, 7
        %v5650 = vrot.slane %v5482, 7
        %v5651 = vrot.slane %v5483, 7
        %v5660 = vadd.f32 %v5636, %v5644
        %v5661 = vadd.f32 %v5637, %v5645
        %v5662 = vadd.f32 %v5638, %v5646
        %v5663 = vadd.f32 %v5639, %v5647
        %v5664 = vadd.f32 %v5640, %v5648
        %v5665 = vadd.f32 %v5641, %v5649
        %v5666 = vadd.f32 %v5642, %v5650
        %v5667 = vadd.f32 %v5643, %v5651
        %vm5668 = vcmp.gt.f32.partialorder %v5660, 0.0
        %vm5669 = vcmp.gt.f32.partialorder %v5661, 0.0
        %vm5670 = vcmp.gt.f32.partialorder %v5662, 0.0
        %vm5671 = vcmp.gt.f32.partialorder %v5663, 0.0
        %vm5672 = vcmp.gt.f32.partialorder %v5664, 0.0
        %vm5673 = vcmp.gt.f32.partialorder %v5665, 0.0
        %vm5674 = vcmp.gt.f32.partialorder %v5666, 0.0
        %vm5675 = vcmp.gt.f32.partialorder %v5667, 0.0
        %v5676 = vmul.f32 %v5660, 0.2
        %v5677 = vmul.f32 %v5661, 0.2
        %v5678 = vmul.f32 %v5662, 0.2
        %v5679 = vmul.f32 %v5663, 0.2
        %v5680 = vmul.f32 %v5664, 0.2
        %v5681 = vmul.f32 %v5665, 0.2
        %v5682 = vmul.f32 %v5666, 0.2
        %v5683 = vmul.f32 %v5667, 0.2
        %v5684 = vsel %vm5668, %v5660, %v5676
        %v5685 = vsel %vm5669, %v5661, %v5677
        %v5686 = vsel %vm5670, %v5662, %v5678
        %v5687 = vsel %vm5671, %v5663, %v5679
        %v5688 = vsel %vm5672, %v5664, %v5680
        %v5689 = vsel %vm5673, %v5665, %v5681
        %v5690 = vsel %vm5674, %v5666, %v5682
        %v5691 = vsel %vm5675, %v5667, %v5683
        %v5692 = vpack.c.bf16 %v5684, %v5684
        %v5693 = vpack.c.bf16 %v5685, %v5685
        %v5694 = vpack.c.bf16 %v5686, %v5686
        %v5695 = vpack.c.bf16 %v5687, %v5687
        %v5696 = vpack.c.bf16 %v5688, %v5688
        %v5697 = vpack.c.bf16 %v5689, %v5689
        %v5698 = vpack.c.bf16 %v5690, %v5690
        %v5699 = vpack.c.bf16 %v5691, %v5691
        %s5700 = scalar_lea.vmem %s8, 26
        %v5701 = vld [vmem:[%s5700] sm:$0x3]
        %v5710 = vunpack.c.l.b16 %v5692
        %v5711 = vunpack.c.l.b16 %v5693
        %v5712 = vunpack.c.l.b16 %v5694
        %v5713 = vunpack.c.l.b16 %v5695
        %v5714 = vunpack.c.l.b16 %v5696
        %v5715 = vunpack.c.l.b16 %v5697
        %v5716 = vunpack.c.l.b16 %v5698
        %v5717 = vunpack.c.l.b16 %v5699
        %v5718 = vrot.slane %v5711, 7
        %v5719 = vsel %vm1342, %v5718, %v5710
        %v5720 = vrot.slane %v5712, 6
        %v5721 = vsel %vm1345, %v5720, %v5719
        %v5722 = vrot.slane %v5713, 5
        %v5723 = vsel %vm1348, %v5722, %v5721
        %v5724 = vrot.slane %v5714, 4
        %v5725 = vsel %vm1351, %v5724, %v5723
        %v5726 = vrot.slane %v5715, 3
        %v5727 = vsel %vm1354, %v5726, %v5725
        %v5728 = vrot.slane %v5716, 2
        %v5729 = vsel %vm1357, %v5728, %v5727
        %v5730 = vrot.slane %v5717, 1
        %v5731 = vsel %vm1360, %v5730, %v5729
        %v5732 = vpack.c.b16 %v5731, %v5731
        %v5734 = vsel %vm1363, %v5732, 0
        %v5737 = vsel %vm1367, %v5701, 0
        %5739 = vmatprep.subr.bf16.mxu0 0
        %5740 = vmatpush1.bf16.msra.mxu0 %v5737
        %5741 = vmatprep.subr.bf16.mxu0 0
        %5742 = vmatpush1.bf16.msra.mxu0 0
        %5743 = vmatprep.subr.bf16.mxu0 0
        %5744 = vmatpush1.bf16.msra.mxu0 0
        %5745 = vmatprep.subr.bf16.mxu0 0
        %5746 = vmatpush1.bf16.msra.mxu0 0
        %5747 = vmatprep.subr.bf16.mxu0 0
        %5748 = vmatpush1.bf16.msra.mxu0 0
        %5749 = vmatprep.subr.bf16.mxu0 0
        %5750 = vmatpush1.bf16.msra.mxu0 0
        %5751 = vmatprep.subr.bf16.mxu0 0
        %5752 = vmatpush1.bf16.msra.mxu0 0
        %5753 = vmatprep.subr.bf16.mxu0 0
        %5754 = vmatpush1.bf16.msra.mxu0 0
        %5755 = vmatprep.subr.bf16.mxu0 0
        %5756 = vmatpush1.bf16.msra.mxu0 0
        %5757 = vmatprep.subr.bf16.mxu0 0
        %5758 = vmatpush1.bf16.msra.mxu0 0
        %5759 = vmatprep.subr.bf16.mxu0 0
        %5760 = vmatpush1.bf16.msra.mxu0 0
        %5761 = vmatprep.subr.bf16.mxu0 0
        %5762 = vmatpush1.bf16.msra.mxu0 0
        %5763 = vmatprep.subr.bf16.mxu0 0
        %5764 = vmatpush1.bf16.msra.mxu0 0
        %5765 = vmatprep.subr.bf16.mxu0 0
        %5766 = vmatpush1.bf16.msra.mxu0 0
        %5767 = vmatprep.subr.bf16.mxu0 0
        %5768 = vmatpush1.bf16.msra.mxu0 0
        %5769 = vmatprep.subr.bf16.mxu0 0
        %5770 = vmatpush1.bf16.msra.mxu0 0
        %5771 = vmatprep.mubr.bf16.mxu0 0
        %5772 = vmatmul.mubr.bf16.gmra.mrb[0].mxu0 %v5734
        %v5773 = vpop.f32.mrb[0].mxu0
        %v5774 = vadd.f32 0.0, %v5773
        %v5775 = vpop.f32.mrb[0].mxu0
        %v5776 = vpop.f32.mrb[0].mxu0
        %v5777 = vpop.f32.mrb[0].mxu0
        %5778 = vdwg.mxu0
        %v5779 = vadd.f32 %v5443, %v5774
        %5780 = vset.pattern.permute.xlu0 14
        %5781 = vperm.xlu0 %5780, %v1028
        %v5782 = vpop.permute.xlu0 %5781
        %5784 = vset.pattern.permute.xlu0 14
        %5785 = vperm.xlu0 %5784, %v1029
        %v5786 = vpop.permute.xlu0 %5785
        %5788 = vset.pattern.permute.xlu0 14
        %5789 = vperm.xlu0 %5788, %v1030
        %v5790 = vpop.permute.xlu0 %5789
        %5792 = vset.pattern.permute.xlu0 14
        %5793 = vperm.xlu0 %5792, %v1031
        %v5794 = vpop.permute.xlu0 %5793
        %5796 = vset.pattern.permute.xlu0 14
        %5797 = vperm.xlu0 %5796, %v1032
        %v5798 = vpop.permute.xlu0 %5797
        %5800 = vset.pattern.permute.xlu0 14
        %5801 = vperm.xlu0 %5800, %v1033
        %v5802 = vpop.permute.xlu0 %5801
        %5804 = vset.pattern.permute.xlu0 14
        %5805 = vperm.xlu0 %5804, %v1034
        %v5806 = vpop.permute.xlu0 %5805
        %5808 = vset.pattern.permute.xlu0 14
        %5809 = vperm.xlu0 %5808, %v1035
        %v5810 = vpop.permute.xlu0 %5809
        %v5812 = vmul.f32 %v5782, %v1044
        %v5813 = vmul.f32 %v5786, %v1045
        %v5814 = vmul.f32 %v5790, %v1046
        %v5815 = vmul.f32 %v5794, %v1047
        %v5816 = vmul.f32 %v5798, %v1048
        %v5817 = vmul.f32 %v5802, %v1049
        %v5818 = vmul.f32 %v5806, %v1050
        %v5819 = vmul.f32 %v5810, %v1051
        %v5820 = vadd.f32 %v5812, 0.0
        %v5821 = vadd.f32 %v5813, 0.0
        %v5822 = vadd.f32 %v5814, 0.0
        %v5823 = vadd.f32 %v5815, 0.0
        %v5824 = vadd.f32 %v5816, 0.0
        %v5825 = vadd.f32 %v5817, 0.0
        %v5826 = vadd.f32 %v5818, 0.0
        %v5827 = vadd.f32 %v5819, 0.0
        %v5836 = vrot.slane %v5812, 1
        %v5837 = vrot.slane %v5813, 1
        %v5838 = vrot.slane %v5814, 1
        %v5839 = vrot.slane %v5815, 1
        %v5840 = vrot.slane %v5816, 1
        %v5841 = vrot.slane %v5817, 1
        %v5842 = vrot.slane %v5818, 1
        %v5843 = vrot.slane %v5819, 1
        %v5852 = vadd.f32 %v5820, %v5836
        %v5853 = vadd.f32 %v5821, %v5837
        %v5854 = vadd.f32 %v5822, %v5838
        %v5855 = vadd.f32 %v5823, %v5839
        %v5856 = vadd.f32 %v5824, %v5840
        %v5857 = vadd.f32 %v5825, %v5841
        %v5858 = vadd.f32 %v5826, %v5842
        %v5859 = vadd.f32 %v5827, %v5843
        %v5860 = vrot.slane %v5812, 2
        %v5861 = vrot.slane %v5813, 2
        %v5862 = vrot.slane %v5814, 2
        %v5863 = vrot.slane %v5815, 2
        %v5864 = vrot.slane %v5816, 2
        %v5865 = vrot.slane %v5817, 2
        %v5866 = vrot.slane %v5818, 2
        %v5867 = vrot.slane %v5819, 2
        %v5876 = vadd.f32 %v5852, %v5860
        %v5877 = vadd.f32 %v5853, %v5861
        %v5878 = vadd.f32 %v5854, %v5862
        %v5879 = vadd.f32 %v5855, %v5863
        %v5880 = vadd.f32 %v5856, %v5864
        %v5881 = vadd.f32 %v5857, %v5865
        %v5882 = vadd.f32 %v5858, %v5866
        %v5883 = vadd.f32 %v5859, %v5867
        %v5884 = vrot.slane %v5812, 3
        %v5885 = vrot.slane %v5813, 3
        %v5886 = vrot.slane %v5814, 3
        %v5887 = vrot.slane %v5815, 3
        %v5888 = vrot.slane %v5816, 3
        %v5889 = vrot.slane %v5817, 3
        %v5890 = vrot.slane %v5818, 3
        %v5891 = vrot.slane %v5819, 3
        %v5900 = vadd.f32 %v5876, %v5884
        %v5901 = vadd.f32 %v5877, %v5885
        %v5902 = vadd.f32 %v5878, %v5886
        %v5903 = vadd.f32 %v5879, %v5887
        %v5904 = vadd.f32 %v5880, %v5888
        %v5905 = vadd.f32 %v5881, %v5889
        %v5906 = vadd.f32 %v5882, %v5890
        %v5907 = vadd.f32 %v5883, %v5891
        %v5908 = vrot.slane %v5812, 4
        %v5909 = vrot.slane %v5813, 4
        %v5910 = vrot.slane %v5814, 4
        %v5911 = vrot.slane %v5815, 4
        %v5912 = vrot.slane %v5816, 4
        %v5913 = vrot.slane %v5817, 4
        %v5914 = vrot.slane %v5818, 4
        %v5915 = vrot.slane %v5819, 4
        %v5924 = vadd.f32 %v5900, %v5908
        %v5925 = vadd.f32 %v5901, %v5909
        %v5926 = vadd.f32 %v5902, %v5910
        %v5927 = vadd.f32 %v5903, %v5911
        %v5928 = vadd.f32 %v5904, %v5912
        %v5929 = vadd.f32 %v5905, %v5913
        %v5930 = vadd.f32 %v5906, %v5914
        %v5931 = vadd.f32 %v5907, %v5915
        %v5932 = vrot.slane %v5812, 5
        %v5933 = vrot.slane %v5813, 5
        %v5934 = vrot.slane %v5814, 5
        %v5935 = vrot.slane %v5815, 5
        %v5936 = vrot.slane %v5816, 5
        %v5937 = vrot.slane %v5817, 5
        %v5938 = vrot.slane %v5818, 5
        %v5939 = vrot.slane %v5819, 5
        %v5948 = vadd.f32 %v5924, %v5932
        %v5949 = vadd.f32 %v5925, %v5933
        %v5950 = vadd.f32 %v5926, %v5934
        %v5951 = vadd.f32 %v5927, %v5935
        %v5952 = vadd.f32 %v5928, %v5936
        %v5953 = vadd.f32 %v5929, %v5937
        %v5954 = vadd.f32 %v5930, %v5938
        %v5955 = vadd.f32 %v5931, %v5939
        %v5956 = vrot.slane %v5812, 6
        %v5957 = vrot.slane %v5813, 6
        %v5958 = vrot.slane %v5814, 6
        %v5959 = vrot.slane %v5815, 6
        %v5960 = vrot.slane %v5816, 6
        %v5961 = vrot.slane %v5817, 6
        %v5962 = vrot.slane %v5818, 6
        %v5963 = vrot.slane %v5819, 6
        %v5972 = vadd.f32 %v5948, %v5956
        %v5973 = vadd.f32 %v5949, %v5957
        %v5974 = vadd.f32 %v5950, %v5958
        %v5975 = vadd.f32 %v5951, %v5959
        %v5976 = vadd.f32 %v5952, %v5960
        %v5977 = vadd.f32 %v5953, %v5961
        %v5978 = vadd.f32 %v5954, %v5962
        %v5979 = vadd.f32 %v5955, %v5963
        %v5980 = vrot.slane %v5812, 7
        %v5981 = vrot.slane %v5813, 7
        %v5982 = vrot.slane %v5814, 7
        %v5983 = vrot.slane %v5815, 7
        %v5984 = vrot.slane %v5816, 7
        %v5985 = vrot.slane %v5817, 7
        %v5986 = vrot.slane %v5818, 7
        %v5987 = vrot.slane %v5819, 7
        %v5996 = vadd.f32 %v5972, %v5980
        %v5997 = vadd.f32 %v5973, %v5981
        %v5998 = vadd.f32 %v5974, %v5982
        %v5999 = vadd.f32 %v5975, %v5983
        %v6000 = vadd.f32 %v5976, %v5984
        %v6001 = vadd.f32 %v5977, %v5985
        %v6002 = vadd.f32 %v5978, %v5986
        %v6003 = vadd.f32 %v5979, %v5987
        %vm6004 = vcmp.gt.f32.partialorder %v5996, 0.0
        %vm6005 = vcmp.gt.f32.partialorder %v5997, 0.0
        %vm6006 = vcmp.gt.f32.partialorder %v5998, 0.0
        %vm6007 = vcmp.gt.f32.partialorder %v5999, 0.0
        %vm6008 = vcmp.gt.f32.partialorder %v6000, 0.0
        %vm6009 = vcmp.gt.f32.partialorder %v6001, 0.0
        %vm6010 = vcmp.gt.f32.partialorder %v6002, 0.0
        %vm6011 = vcmp.gt.f32.partialorder %v6003, 0.0
        %v6012 = vmul.f32 %v5996, 0.2
        %v6013 = vmul.f32 %v5997, 0.2
        %v6014 = vmul.f32 %v5998, 0.2
        %v6015 = vmul.f32 %v5999, 0.2
        %v6016 = vmul.f32 %v6000, 0.2
        %v6017 = vmul.f32 %v6001, 0.2
        %v6018 = vmul.f32 %v6002, 0.2
        %v6019 = vmul.f32 %v6003, 0.2
        %v6020 = vsel %vm6004, %v5996, %v6012
        %v6021 = vsel %vm6005, %v5997, %v6013
        %v6022 = vsel %vm6006, %v5998, %v6014
        %v6023 = vsel %vm6007, %v5999, %v6015
        %v6024 = vsel %vm6008, %v6000, %v6016
        %v6025 = vsel %vm6009, %v6001, %v6017
        %v6026 = vsel %vm6010, %v6002, %v6018
        %v6027 = vsel %vm6011, %v6003, %v6019
        %v6028 = vpack.c.bf16 %v6020, %v6020
        %v6029 = vpack.c.bf16 %v6021, %v6021
        %v6030 = vpack.c.bf16 %v6022, %v6022
        %v6031 = vpack.c.bf16 %v6023, %v6023
        %v6032 = vpack.c.bf16 %v6024, %v6024
        %v6033 = vpack.c.bf16 %v6025, %v6025
        %v6034 = vpack.c.bf16 %v6026, %v6026
        %v6035 = vpack.c.bf16 %v6027, %v6027
        %s6036 = scalar_lea.vmem %s8, 28
        %v6037 = vld [vmem:[%s6036] sm:$0x3]
        %v6046 = vunpack.c.l.b16 %v6028
        %v6047 = vunpack.c.l.b16 %v6029
        %v6048 = vunpack.c.l.b16 %v6030
        %v6049 = vunpack.c.l.b16 %v6031
        %v6050 = vunpack.c.l.b16 %v6032
        %v6051 = vunpack.c.l.b16 %v6033
        %v6052 = vunpack.c.l.b16 %v6034
        %v6053 = vunpack.c.l.b16 %v6035
        %v6054 = vrot.slane %v6047, 7
        %v6055 = vsel %vm1342, %v6054, %v6046
        %v6056 = vrot.slane %v6048, 6
        %v6057 = vsel %vm1345, %v6056, %v6055
        %v6058 = vrot.slane %v6049, 5
        %v6059 = vsel %vm1348, %v6058, %v6057
        %v6060 = vrot.slane %v6050, 4
        %v6061 = vsel %vm1351, %v6060, %v6059
        %v6062 = vrot.slane %v6051, 3
        %v6063 = vsel %vm1354, %v6062, %v6061
        %v6064 = vrot.slane %v6052, 2
        %v6065 = vsel %vm1357, %v6064, %v6063
        %v6066 = vrot.slane %v6053, 1
        %v6067 = vsel %vm1360, %v6066, %v6065
        %v6068 = vpack.c.b16 %v6067, %v6067
        %v6070 = vsel %vm1363, %v6068, 0
        %v6073 = vsel %vm1367, %v6037, 0
        %6075 = vmatprep.subr.bf16.mxu0 0
        %6076 = vmatpush1.bf16.msra.mxu0 %v6073
        %6077 = vmatprep.subr.bf16.mxu0 0
        %6078 = vmatpush1.bf16.msra.mxu0 0
        %6079 = vmatprep.subr.bf16.mxu0 0
        %6080 = vmatpush1.bf16.msra.mxu0 0
        %6081 = vmatprep.subr.bf16.mxu0 0
        %6082 = vmatpush1.bf16.msra.mxu0 0
        %6083 = vmatprep.subr.bf16.mxu0 0
        %6084 = vmatpush1.bf16.msra.mxu0 0
        %6085 = vmatprep.subr.bf16.mxu0 0
        %6086 = vmatpush1.bf16.msra.mxu0 0
        %6087 = vmatprep.subr.bf16.mxu0 0
        %6088 = vmatpush1.bf16.msra.mxu0 0
        %6089 = vmatprep.subr.bf16.mxu0 0
        %6090 = vmatpush1.bf16.msra.mxu0 0
        %6091 = vmatprep.subr.bf16.mxu0 0
        %6092 = vmatpush1.bf16.msra.mxu0 0
        %6093 = vmatprep.subr.bf16.mxu0 0
        %6094 = vmatpush1.bf16.msra.mxu0 0
        %6095 = vmatprep.subr.bf16.mxu0 0
        %6096 = vmatpush1.bf16.msra.mxu0 0
        %6097 = vmatprep.subr.bf16.mxu0 0
        %6098 = vmatpush1.bf16.msra.mxu0 0
        %6099 = vmatprep.subr.bf16.mxu0 0
        %6100 = vmatpush1.bf16.msra.mxu0 0
        %6101 = vmatprep.subr.bf16.mxu0 0
        %6102 = vmatpush1.bf16.msra.mxu0 0
        %6103 = vmatprep.subr.bf16.mxu0 0
        %6104 = vmatpush1.bf16.msra.mxu0 0
        %6105 = vmatprep.subr.bf16.mxu0 0
        %6106 = vmatpush1.bf16.msra.mxu0 0
        %6107 = vmatprep.mubr.bf16.mxu0 0
        %6108 = vmatmul.mubr.bf16.gmra.mrb[0].mxu0 %v6070
        %v6109 = vpop.f32.mrb[0].mxu0
        %v6110 = vadd.f32 0.0, %v6109
        %v6111 = vpop.f32.mrb[0].mxu0
        %v6112 = vpop.f32.mrb[0].mxu0
        %v6113 = vpop.f32.mrb[0].mxu0
        %6114 = vdwg.mxu0
        %v6115 = vadd.f32 %v5779, %v6110
        %6116 = vset.pattern.permute.xlu0 15
        %6117 = vperm.xlu0 %6116, %v1028
        %v6118 = vpop.permute.xlu0 %6117
        %6120 = vset.pattern.permute.xlu0 15
        %6121 = vperm.xlu0 %6120, %v1029
        %v6122 = vpop.permute.xlu0 %6121
        %6124 = vset.pattern.permute.xlu0 15
        %6125 = vperm.xlu0 %6124, %v1030
        %v6126 = vpop.permute.xlu0 %6125
        %6128 = vset.pattern.permute.xlu0 15
        %6129 = vperm.xlu0 %6128, %v1031
        %v6130 = vpop.permute.xlu0 %6129
        %6132 = vset.pattern.permute.xlu0 15
        %6133 = vperm.xlu0 %6132, %v1032
        %v6134 = vpop.permute.xlu0 %6133
        %6136 = vset.pattern.permute.xlu0 15
        %6137 = vperm.xlu0 %6136, %v1033
        %v6138 = vpop.permute.xlu0 %6137
        %6140 = vset.pattern.permute.xlu0 15
        %6141 = vperm.xlu0 %6140, %v1034
        %v6142 = vpop.permute.xlu0 %6141
        %6144 = vset.pattern.permute.xlu0 15
        %6145 = vperm.xlu0 %6144, %v1035
        %v6146 = vpop.permute.xlu0 %6145
        %v6148 = vmul.f32 %v6118, %v1044
        %v6149 = vmul.f32 %v6122, %v1045
        %v6150 = vmul.f32 %v6126, %v1046
        %v6151 = vmul.f32 %v6130, %v1047
        %v6152 = vmul.f32 %v6134, %v1048
        %v6153 = vmul.f32 %v6138, %v1049
        %v6154 = vmul.f32 %v6142, %v1050
        %v6155 = vmul.f32 %v6146, %v1051
        %v6156 = vadd.f32 %v6148, 0.0
        %v6157 = vadd.f32 %v6149, 0.0
        %v6158 = vadd.f32 %v6150, 0.0
        %v6159 = vadd.f32 %v6151, 0.0
        %v6160 = vadd.f32 %v6152, 0.0
        %v6161 = vadd.f32 %v6153, 0.0
        %v6162 = vadd.f32 %v6154, 0.0
        %v6163 = vadd.f32 %v6155, 0.0
        %v6172 = vrot.slane %v6148, 1
        %v6173 = vrot.slane %v6149, 1
        %v6174 = vrot.slane %v6150, 1
        %v6175 = vrot.slane %v6151, 1
        %v6176 = vrot.slane %v6152, 1
        %v6177 = vrot.slane %v6153, 1
        %v6178 = vrot.slane %v6154, 1
        %v6179 = vrot.slane %v6155, 1
        %v6188 = vadd.f32 %v6156, %v6172
        %v6189 = vadd.f32 %v6157, %v6173
        %v6190 = vadd.f32 %v6158, %v6174
        %v6191 = vadd.f32 %v6159, %v6175
        %v6192 = vadd.f32 %v6160, %v6176
        %v6193 = vadd.f32 %v6161, %v6177
        %v6194 = vadd.f32 %v6162, %v6178
        %v6195 = vadd.f32 %v6163, %v6179
        %v6196 = vrot.slane %v6148, 2
        %v6197 = vrot.slane %v6149, 2
        %v6198 = vrot.slane %v6150, 2
        %v6199 = vrot.slane %v6151, 2
        %v6200 = vrot.slane %v6152, 2
        %v6201 = vrot.slane %v6153, 2
        %v6202 = vrot.slane %v6154, 2
        %v6203 = vrot.slane %v6155, 2
        %v6212 = vadd.f32 %v6188, %v6196
        %v6213 = vadd.f32 %v6189, %v6197
        %v6214 = vadd.f32 %v6190, %v6198
        %v6215 = vadd.f32 %v6191, %v6199
        %v6216 = vadd.f32 %v6192, %v6200
        %v6217 = vadd.f32 %v6193, %v6201
        %v6218 = vadd.f32 %v6194, %v6202
        %v6219 = vadd.f32 %v6195, %v6203
        %v6220 = vrot.slane %v6148, 3
        %v6221 = vrot.slane %v6149, 3
        %v6222 = vrot.slane %v6150, 3
        %v6223 = vrot.slane %v6151, 3
        %v6224 = vrot.slane %v6152, 3
        %v6225 = vrot.slane %v6153, 3
        %v6226 = vrot.slane %v6154, 3
        %v6227 = vrot.slane %v6155, 3
        %v6236 = vadd.f32 %v6212, %v6220
        %v6237 = vadd.f32 %v6213, %v6221
        %v6238 = vadd.f32 %v6214, %v6222
        %v6239 = vadd.f32 %v6215, %v6223
        %v6240 = vadd.f32 %v6216, %v6224
        %v6241 = vadd.f32 %v6217, %v6225
        %v6242 = vadd.f32 %v6218, %v6226
        %v6243 = vadd.f32 %v6219, %v6227
        %v6244 = vrot.slane %v6148, 4
        %v6245 = vrot.slane %v6149, 4
        %v6246 = vrot.slane %v6150, 4
        %v6247 = vrot.slane %v6151, 4
        %v6248 = vrot.slane %v6152, 4
        %v6249 = vrot.slane %v6153, 4
        %v6250 = vrot.slane %v6154, 4
        %v6251 = vrot.slane %v6155, 4
        %v6260 = vadd.f32 %v6236, %v6244
        %v6261 = vadd.f32 %v6237, %v6245
        %v6262 = vadd.f32 %v6238, %v6246
        %v6263 = vadd.f32 %v6239, %v6247
        %v6264 = vadd.f32 %v6240, %v6248
        %v6265 = vadd.f32 %v6241, %v6249
        %v6266 = vadd.f32 %v6242, %v6250
        %v6267 = vadd.f32 %v6243, %v6251
        %v6268 = vrot.slane %v6148, 5
        %v6269 = vrot.slane %v6149, 5
        %v6270 = vrot.slane %v6150, 5
        %v6271 = vrot.slane %v6151, 5
        %v6272 = vrot.slane %v6152, 5
        %v6273 = vrot.slane %v6153, 5
        %v6274 = vrot.slane %v6154, 5
        %v6275 = vrot.slane %v6155, 5
        %v6284 = vadd.f32 %v6260, %v6268
        %v6285 = vadd.f32 %v6261, %v6269
        %v6286 = vadd.f32 %v6262, %v6270
        %v6287 = vadd.f32 %v6263, %v6271
        %v6288 = vadd.f32 %v6264, %v6272
        %v6289 = vadd.f32 %v6265, %v6273
        %v6290 = vadd.f32 %v6266, %v6274
        %v6291 = vadd.f32 %v6267, %v6275
        %v6292 = vrot.slane %v6148, 6
        %v6293 = vrot.slane %v6149, 6
        %v6294 = vrot.slane %v6150, 6
        %v6295 = vrot.slane %v6151, 6
        %v6296 = vrot.slane %v6152, 6
        %v6297 = vrot.slane %v6153, 6
        %v6298 = vrot.slane %v6154, 6
        %v6299 = vrot.slane %v6155, 6
        %v6308 = vadd.f32 %v6284, %v6292
        %v6309 = vadd.f32 %v6285, %v6293
        %v6310 = vadd.f32 %v6286, %v6294
        %v6311 = vadd.f32 %v6287, %v6295
        %v6312 = vadd.f32 %v6288, %v6296
        %v6313 = vadd.f32 %v6289, %v6297
        %v6314 = vadd.f32 %v6290, %v6298
        %v6315 = vadd.f32 %v6291, %v6299
        %v6316 = vrot.slane %v6148, 7
        %v6317 = vrot.slane %v6149, 7
        %v6318 = vrot.slane %v6150, 7
        %v6319 = vrot.slane %v6151, 7
        %v6320 = vrot.slane %v6152, 7
        %v6321 = vrot.slane %v6153, 7
        %v6322 = vrot.slane %v6154, 7
        %v6323 = vrot.slane %v6155, 7
        %v6332 = vadd.f32 %v6308, %v6316
        %v6333 = vadd.f32 %v6309, %v6317
        %v6334 = vadd.f32 %v6310, %v6318
        %v6335 = vadd.f32 %v6311, %v6319
        %v6336 = vadd.f32 %v6312, %v6320
        %v6337 = vadd.f32 %v6313, %v6321
        %v6338 = vadd.f32 %v6314, %v6322
        %v6339 = vadd.f32 %v6315, %v6323
        %vm6340 = vcmp.gt.f32.partialorder %v6332, 0.0
        %vm6341 = vcmp.gt.f32.partialorder %v6333, 0.0
        %vm6342 = vcmp.gt.f32.partialorder %v6334, 0.0
        %vm6343 = vcmp.gt.f32.partialorder %v6335, 0.0
        %vm6344 = vcmp.gt.f32.partialorder %v6336, 0.0
        %vm6345 = vcmp.gt.f32.partialorder %v6337, 0.0
        %vm6346 = vcmp.gt.f32.partialorder %v6338, 0.0
        %vm6347 = vcmp.gt.f32.partialorder %v6339, 0.0
        %v6348 = vmul.f32 %v6332, 0.2
        %v6349 = vmul.f32 %v6333, 0.2
        %v6350 = vmul.f32 %v6334, 0.2
        %v6351 = vmul.f32 %v6335, 0.2
        %v6352 = vmul.f32 %v6336, 0.2
        %v6353 = vmul.f32 %v6337, 0.2
        %v6354 = vmul.f32 %v6338, 0.2
        %v6355 = vmul.f32 %v6339, 0.2
        %v6356 = vsel %vm6340, %v6332, %v6348
        %v6357 = vsel %vm6341, %v6333, %v6349
        %v6358 = vsel %vm6342, %v6334, %v6350
        %v6359 = vsel %vm6343, %v6335, %v6351
        %v6360 = vsel %vm6344, %v6336, %v6352
        %v6361 = vsel %vm6345, %v6337, %v6353
        %v6362 = vsel %vm6346, %v6338, %v6354
        %v6363 = vsel %vm6347, %v6339, %v6355
        %v6364 = vpack.c.bf16 %v6356, %v6356
        %v6365 = vpack.c.bf16 %v6357, %v6357
        %v6366 = vpack.c.bf16 %v6358, %v6358
        %v6367 = vpack.c.bf16 %v6359, %v6359
        %v6368 = vpack.c.bf16 %v6360, %v6360
        %v6369 = vpack.c.bf16 %v6361, %v6361
        %v6370 = vpack.c.bf16 %v6362, %v6362
        %v6371 = vpack.c.bf16 %v6363, %v6363
        %s6372 = scalar_lea.vmem %s8, 30
        %v6373 = vld [vmem:[%s6372] sm:$0x3]
        %v6382 = vunpack.c.l.b16 %v6364
        %v6383 = vunpack.c.l.b16 %v6365
        %v6384 = vunpack.c.l.b16 %v6366
        %v6385 = vunpack.c.l.b16 %v6367
        %v6386 = vunpack.c.l.b16 %v6368
        %v6387 = vunpack.c.l.b16 %v6369
        %v6388 = vunpack.c.l.b16 %v6370
        %v6389 = vunpack.c.l.b16 %v6371
        %v6390 = vrot.slane %v6383, 7
        %v6391 = vsel %vm1342, %v6390, %v6382
        %v6392 = vrot.slane %v6384, 6
        %v6393 = vsel %vm1345, %v6392, %v6391
        %v6394 = vrot.slane %v6385, 5
        %v6395 = vsel %vm1348, %v6394, %v6393
        %v6396 = vrot.slane %v6386, 4
        %v6397 = vsel %vm1351, %v6396, %v6395
        %v6398 = vrot.slane %v6387, 3
        %v6399 = vsel %vm1354, %v6398, %v6397
        %v6400 = vrot.slane %v6388, 2
        %v6401 = vsel %vm1357, %v6400, %v6399
        %v6402 = vrot.slane %v6389, 1
        %v6403 = vsel %vm1360, %v6402, %v6401
        %v6404 = vpack.c.b16 %v6403, %v6403
        %v6406 = vsel %vm1363, %v6404, 0
        %v6409 = vsel %vm1367, %v6373, 0
        %6411 = vmatprep.subr.bf16.mxu0 0
        %6412 = vmatpush1.bf16.msra.mxu0 %v6409
        %6413 = vmatprep.subr.bf16.mxu0 0
        %6414 = vmatpush1.bf16.msra.mxu0 0
        %6415 = vmatprep.subr.bf16.mxu0 0
        %6416 = vmatpush1.bf16.msra.mxu0 0
        %6417 = vmatprep.subr.bf16.mxu0 0
        %6418 = vmatpush1.bf16.msra.mxu0 0
        %6419 = vmatprep.subr.bf16.mxu0 0
        %6420 = vmatpush1.bf16.msra.mxu0 0
        %6421 = vmatprep.subr.bf16.mxu0 0
        %6422 = vmatpush1.bf16.msra.mxu0 0
        %6423 = vmatprep.subr.bf16.mxu0 0
        %6424 = vmatpush1.bf16.msra.mxu0 0
        %6425 = vmatprep.subr.bf16.mxu0 0
        %6426 = vmatpush1.bf16.msra.mxu0 0
        %6427 = vmatprep.subr.bf16.mxu0 0
        %6428 = vmatpush1.bf16.msra.mxu0 0
        %6429 = vmatprep.subr.bf16.mxu0 0
        %6430 = vmatpush1.bf16.msra.mxu0 0
        %6431 = vmatprep.subr.bf16.mxu0 0
        %6432 = vmatpush1.bf16.msra.mxu0 0
        %6433 = vmatprep.subr.bf16.mxu0 0
        %6434 = vmatpush1.bf16.msra.mxu0 0
        %6435 = vmatprep.subr.bf16.mxu0 0
        %6436 = vmatpush1.bf16.msra.mxu0 0
        %6437 = vmatprep.subr.bf16.mxu0 0
        %6438 = vmatpush1.bf16.msra.mxu0 0
        %6439 = vmatprep.subr.bf16.mxu0 0
        %6440 = vmatpush1.bf16.msra.mxu0 0
        %6441 = vmatprep.subr.bf16.mxu0 0
        %6442 = vmatpush1.bf16.msra.mxu0 0
        %6443 = vmatprep.mubr.bf16.mxu0 0
        %6444 = vmatmul.mubr.bf16.gmra.mrb[0].mxu0 %v6406
        %v6445 = vpop.f32.mrb[0].mxu0
        %v6446 = vadd.f32 0.0, %v6445
        %v6447 = vpop.f32.mrb[0].mxu0
        %v6448 = vpop.f32.mrb[0].mxu0
        %v6449 = vpop.f32.mrb[0].mxu0
        %6450 = vdwg.mxu0
        %v6451 = vadd.f32 %v6115, %v6446
        %vm6452 = vcmp.gt.f32.partialorder %v6451, 0.0
        %v6453 = vmul.f32 %v6451, 0.2
        %v6454 = vsel %vm6452, %v6451, %v6453
        %vm6455 = vcmask 261120
        %6456 = vst.msk [vmem:[%s403] sm:$0xff] %vm6455, %v6454
        %s6457 = sand.u32 %s270, 1
        %s6458 = scalar_lea.sflag [#allocation3], %s6457
        %s6459 = sand.u32 %s270, 1
        %s6460 = smul.addr %s6459, 8
        %s6461 = scalar_lea.vmem [#allocation2], %s6460
        // Predicated region
        $region61: #{tpu_custom_call.1} parent=59 // pred_check
          %p6462 = pneg %p280
        $region62: #{tpu_custom_call.1} parent=59 // pred_check_branch
          %6464 = sbr.rel (%p6462) target = $region64
        $region63: #{tpu_custom_call.1} parent=59 // pred_region
          %s6466 = ssub.s32 128, 128
          %6467 = vsyncadd %s6458, %s6466
          %s6468 = smul.addr %s28, 2
          %s6469 = sadd.s32 %s29, %s6468
          %s6470 = smul.addr %s6469, 128
          %s6471 = scalar_lea.hbm %s10, %s6470
          %s6473 = sshll.u32 %s6461, 4
          %s6474 = int_to_ptr.vmem [resolvable:$true] %s6473
          %6476 = dma.vmem_to_hbm [thread:$0]  %s6474, 128, %s6471, %s6458
        $region64: #{tpu_custom_call.1} parent=59 // pred_fallthru
          _
      $region60: #{tpu_custom_call.1} parent=5 // pred_fallthru
        _
      %p6477 = scmp.le.s32.totalorder 2, %s19
      // Predicated region
      $region65: #{tpu_custom_call.1} parent=5 // pred_check
        %p6478 = pneg %p6477
      $region66: #{tpu_custom_call.1} parent=5 // pred_check_branch
        %6480 = sbr.rel (%p6478) target = $region68
      $region67: #{tpu_custom_call.1} parent=5 // pred_region
        %s6481 = ssub.s32 %s19, 2
        // Predicated region
        $region69: #{tpu_custom_call.1} parent=67 // pred_check
          %p6482 = pneg %p286
        $region70: #{tpu_custom_call.1} parent=67 // pred_check_branch
          %6484 = sbr.rel (%p6482) target = $region72
        $region71: #{tpu_custom_call.1} parent=67 // pred_region
          %s6485 = sand.u32 %s271, 1
          %s6486 = scalar_lea.sflag [#allocation3], %s6485
          %s6487 = sand.u32 %s271, 1
          %s6488 = smul.addr %s6487, 8
          %s6489 = scalar_lea.vmem [#allocation2], %s6488
          %6490 = dma.done %s6486, 128
        $region72: #{tpu_custom_call.1} parent=67 // pred_fallthru
          _
      $region68: #{tpu_custom_call.1} parent=5 // pred_fallthru
        _
    $region6: #{tpu_custom_call.1} parent=1 // loop_footer
      %s23 = sadd.s32 1, %s19
    $region7: #{tpu_custom_call.1} parent=1 // loop_footer_branch
      %18 = sbr.rel target = $region3
    $region8: #{tpu_custom_call.1} parent=1 // loop_exit
      _
    %6491 = vsyncpa [#allocation3], 1
    %s6492 = scalar_lea.sflag [#allocation3], 1
    %6493 = vsyncpa %s6492, 1

</llo_original>
